<compile_context>
chip_gen: v5e
topology: v5e:2x2
jax: 0.10.0
libtpu: 0.0.40
codegen_flags: <defaults>
</compile_context>

<pallas_src>
import numpy as np
import jax
import jax.numpy as jnp
from jax.experimental import pallas as pl
from jax.experimental.pallas import tpu as pltpu


# ----------------------------------------------------------------------------
# Pallas kernel: one batch element per grid step.  Channels live on lanes;
# rows of the upsampled image are ordered (wo, ho) (W-major) so that the
# H-axis upsample, the 3x3 taps and the final lane-dense store only need
# contiguous / simple strided accesses.
# ----------------------------------------------------------------------------
def decoder_block_kernel(x_ref, w1_ref, c1_ref, uwb_ref, uh_ref,
                         w2_ref, c2_ref, w3_ref, c3_ref, o_ref,
                         t3_ref, pad_ref, acc_ref):
    C4 = w1_ref.shape[1]
    H, Wo, W = uwb_ref.shape
    Ho = uh_ref.shape[0]
    Cout = w3_ref.shape[1]
    M = Wo * Ho                      # upsampled pixels, flat rows = wo*Ho + ho
    P = Ho + 1                       # zero-pad band height in the flat buffer

    # ---- conv1 (1x1, BN folded in) + ReLU -----------------------------------
    h = jnp.dot(x_ref[0], w1_ref[...], preferred_element_type=jnp.float32)
    h = jnp.maximum(h + c1_ref[...], 0.0)                    # (H*W, C4)

    # ---- bilinear x2 upsample (align_corners=True), separable ---------------
    # W axis: batched matmul over the H input rows (batch=h, contract=w).
    t3_ref[...] = jnp.einsum(
        "hqw,hwc->hqc", uwb_ref[...], h.reshape(H, W, C4),
        preferred_element_type=jnp.float32)                  # (H, Wo, C4)

    # H axis: for each output column q, (Ho,H) @ (H,C4), written straight into
    # the interior of the flat zero-padded 3x3-conv buffer.
    pad_ref[0:P, :] = jnp.zeros((P, C4), jnp.float32)            # top zero band
    pad_ref[P + M:P + M + P, :] = jnp.zeros((P, C4), jnp.float32)  # bottom band
    for q in range(Wo):
        pad_ref[P + q * Ho:P + (q + 1) * Ho, :] = jnp.dot(
            uh_ref[...], t3_ref[:, q, :], preferred_element_type=jnp.float32)

    # ---- 3x3 conv, padding=1 ------------------------------------------------
    # Tap (dy, dx) = flat read at offset s = dx*Ho + dy.  The slow (wo) borders
    # are covered by the zero bands; the fast (ho) borders by cheap VPU masks.
    # Taps accumulate into a VMEM f32 scratch (no vreg add-chain).
    p_idx = jax.lax.broadcasted_iota(jnp.int32, (M, C4), 0) % Ho
    not_last = p_idx < (Ho - 1)
    not_first = p_idx > 0
    taps = [(dy, dx) for dy in (-1, 0, 1) for dx in (-1, 0, 1)]
    for k, (dy, dx) in enumerate(taps):
        s = dx * Ho + dy
        slab = pad_ref[P + s:P + s + M, :]                   # (M, C4)
        if dy == 1:
            slab = jnp.where(not_last, slab, 0.0)
        elif dy == -1:
            slab = jnp.where(not_first, slab, 0.0)
        tap = jnp.dot(slab, w2_ref[k], preferred_element_type=jnp.float32)
        if k == 0:
            acc_ref[...] = tap
        else:
            acc_ref[...] += tap
    h2 = jnp.maximum(acc_ref[...] + c2_ref[...], 0.0)        # (M, C4)

    # ---- conv3 (1x1, BN folded in) + ReLU -----------------------------------
    y = jnp.dot(h2, w3_ref[...], preferred_element_type=jnp.float32)
    y = jnp.maximum(y + c3_ref[...], 0.0)                    # (M, Cout)

    # ---- lane-dense store: output block is (Ho, Wo*Cout) --------------------
    for q in range(Wo):
        o_ref[0, :, q * Cout:(q + 1) * Cout] = y[q * Ho:(q + 1) * Ho, :]


# ----------------------------------------------------------------------------
# Glue: interpolation matrices, BN folding, pallas_call wrapper.
# ----------------------------------------------------------------------------
def bilinear_matrix(out_size, in_size):
    """1-D linear interpolation matrix, align_corners=True convention."""
    i = np.arange(out_size, dtype=np.float64)
    if out_size > 1:
        src = i * (in_size - 1) / (out_size - 1)
    else:
        src = np.zeros_like(i)
    i0 = np.clip(np.floor(src).astype(np.int64), 0, in_size - 1)
    i1 = np.minimum(i0 + 1, in_size - 1)
    frac = src - i0
    m = np.zeros((out_size, in_size), dtype=np.float64)
    m[np.arange(out_size), i0] += 1.0 - frac
    m[np.arange(out_size), i1] += frac
    return m.astype(np.float32)


def decoder_block_pallas(x_nchw, params):
    N, Cin, H, W = x_nchw.shape
    C4 = params["w1"].shape[1]
    Cout = params["w3"].shape[1]
    Ho, Wo = 2 * H, 2 * W
    M = Wo * Ho
    P = Ho + 1

    # ---- fold BatchNorm (inference affine) + bias into the conv weights ----
    w1f = (params["w1"] * params["s1"]).astype(jnp.float32)            # (Cin,C4)
    c1 = (params["b1"] * params["s1"] + params["t1"]).astype(jnp.float32)
    w2f = (params["w2"] * params["s2"]).astype(jnp.float32).reshape(9, C4, C4)
    c2 = (params["b2"] * params["s2"] + params["t2"]).astype(jnp.float32)
    w3f = (params["w3"] * params["s3"]).astype(jnp.float32)            # (C4,Cout)
    c3 = (params["b3"] * params["s3"] + params["t3"]).astype(jnp.float32)

    # ---- separable bilinear-x2 operators (O(H*W*Wo) memory, not O((HW)^2)) --
    uh = jnp.asarray(bilinear_matrix(Ho, H))                           # (Ho, H)
    uwb = jnp.asarray(
        np.broadcast_to(bilinear_matrix(Wo, W), (H, Wo, W)).copy())    # (H,Wo,W)

    # NCHW -> NHWC -> flat rows (h*W + w), channels on lanes (done in wrapper)
    x_flat = jnp.transpose(x_nchw, (0, 2, 3, 1)).astype(jnp.float32)
    x_flat = x_flat.reshape(N, H * W, Cin)

    grid_spec = pltpu.PrefetchScalarGridSpec(
        num_scalar_prefetch=0,
        grid=(N,),
        in_specs=[
            pl.BlockSpec((1, H * W, Cin), lambda n: (n, 0, 0)),        # x
            pl.BlockSpec((Cin, C4), lambda n: (0, 0)),                 # w1 folded
            pl.BlockSpec((1, C4), lambda n: (0, 0)),                   # c1
            pl.BlockSpec((H, Wo, W), lambda n: (0, 0, 0)),             # Uw bcast
            pl.BlockSpec((Ho, H), lambda n: (0, 0)),                   # Uh
            pl.BlockSpec((9, C4, C4), lambda n: (0, 0, 0)),            # w2 folded
            pl.BlockSpec((1, C4), lambda n: (0, 0)),                   # c2
            pl.BlockSpec((C4, Cout), lambda n: (0, 0)),                # w3 folded
            pl.BlockSpec((1, Cout), lambda n: (0, 0)),                 # c3
        ],
        out_specs=pl.BlockSpec((1, Ho, Wo * Cout), lambda n: (n, 0, 0)),
        scratch_shapes=[
            pltpu.VMEM((H, Wo, C4), jnp.float32),       # W-upsampled rows
            pltpu.VMEM((M + 2 * P, C4), jnp.float32),   # flat zero-padded image
            pltpu.VMEM((M, C4), jnp.float32),           # 3x3 conv accumulator
        ],
    )

    out = pl.pallas_call(
        decoder_block_kernel,
        out_shape=jax.ShapeDtypeStruct((N, Ho, Wo * Cout), jnp.float32),
        grid_spec=grid_spec,
        compiler_params=pltpu.CompilerParams(
            dimension_semantics=("parallel",)),
    )(x_flat, w1f, c1, uwb, uh, w2f, c2, w3f, c3)

    # lane-dense (N, Ho, Wo*Cout) -> (N, Ho, Wo, Cout) -> NCHW
    return jnp.transpose(out.reshape(N, Ho, Wo, Cout), (0, 3, 1, 2))


# ----------------------------------------------------------------------------
# Pure-JAX reference (unfused BN, dense kron upsample, lax conv) — independent
# of the kernel's folded weights / separable factorization.
# ----------------------------------------------------------------------------
def decoder_block_reference(x_nchw, params):
    x = jnp.transpose(x_nchw, (0, 2, 3, 1)).astype(jnp.float32)
    N, H, W, _ = x.shape
    C4 = params["w1"].shape[1]
    h = jnp.einsum("nhwc,cd->nhwd", x, params["w1"]) + params["b1"]
    h = jnp.maximum(h * params["s1"] + params["t1"], 0.0)
    U = jnp.asarray(np.kron(bilinear_matrix(2 * H, H),
                            bilinear_matrix(2 * W, W)), dtype=jnp.float32)
    u = jnp.einsum("pq,nqc->npc", U, h.reshape(N, H * W, C4))
    u = u.reshape(N, 2 * H, 2 * W, C4)
    y = jax.lax.conv_general_dilated(
        u, params["w2"], window_strides=(1, 1), padding=((1, 1), (1, 1)),
        dimension_numbers=("NHWC", "HWIO", "NHWC"))
    y = y + params["b2"]
    y = jnp.maximum(y * params["s2"] + params["t2"], 0.0)
    z = jnp.einsum("nhwc,cf->nhwf", y, params["w3"]) + params["b3"]
    z = jnp.maximum(z * params["s3"] + params["t3"], 0.0)
    return jnp.transpose(z, (0, 3, 1, 2))


if __name__ == "__main__":
    N, Cin, H, W = 2, 16, 8, 8        # small shapes; in_channels=16
    n_filters = 8
    C4 = Cin // 4

    key = jax.random.PRNGKey(0)
    keys = jax.random.split(key, 10)

    def bn_affine(k, c, eps=1e-5):
        k1, k2, k3, k4 = jax.random.split(k, 4)
        gamma = jax.random.uniform(k1, (1, c), minval=0.5, maxval=1.5)
        beta = jax.random.normal(k2, (1, c)) * 0.1
        rmean = jax.random.normal(k3, (1, c)) * 0.1
        rvar = jax.random.uniform(k4, (1, c), minval=0.5, maxval=1.5)
        s = gamma / jnp.sqrt(rvar + eps)
        t = beta - rmean * s
        return s.astype(jnp.float32), t.astype(jnp.float32)

    s1, t1 = bn_affine(keys[0], C4)
    s2, t2 = bn_affine(keys[1], C4)
    s3, t3 = bn_affine(keys[2], n_filters)

    params = dict(
        w1=(jax.random.normal(keys[3], (Cin, C4)) * 0.2).astype(jnp.float32),
        b1=(jax.random.normal(keys[4], (1, C4)) * 0.1).astype(jnp.float32),
        w2=(jax.random.normal(keys[5], (3, 3, C4, C4)) * 0.2).astype(jnp.float32),
        b2=(jax.random.normal(keys[6], (1, C4)) * 0.1).astype(jnp.float32),
        w3=(jax.random.normal(keys[7], (C4, n_filters)) * 0.2).astype(jnp.float32),
        b3=(jax.random.normal(keys[8], (1, n_filters)) * 0.1).astype(jnp.float32),
        s1=s1, t1=t1, s2=s2, t2=t2, s3=s3, t3=t3,
    )

    # PyTorch-convention NCHW input
    x = jax.random.normal(keys[9], (N, Cin, H, W), dtype=jnp.float32)

    run = jax.jit(decoder_block_pallas)
    out = jax.block_until_ready(run(x, params))

    ref = decoder_block_reference(x, params)
    assert out.shape == (N, n_filters, 2 * H, 2 * W), out.shape
    np.testing.assert_allclose(np.asarray(out), np.asarray(ref),
                               atol=1e-4, rtol=1e-4)
    print("KERNEL_OK")
</pallas_src>

<mosaic_0001>
module attributes {stable_mosaic.version = 11 : i64} {
  func.func @decoder_block_kernel(%arg0: i32, %arg1: memref<1x64x16xf32, #tpu.memory_space<vmem>>, %arg2: memref<16x4xf32, #tpu.memory_space<vmem>>, %arg3: memref<1x4xf32, #tpu.memory_space<vmem>>, %arg4: memref<8x16x8xf32, #tpu.memory_space<vmem>>, %arg5: memref<16x8xf32, #tpu.memory_space<vmem>>, %arg6: memref<9x4x4xf32, #tpu.memory_space<vmem>>, %arg7: memref<1x4xf32, #tpu.memory_space<vmem>>, %arg8: memref<4x8xf32, #tpu.memory_space<vmem>>, %arg9: memref<1x8xf32, #tpu.memory_space<vmem>>, %arg10: memref<1x16x128xf32, #tpu.memory_space<vmem>>, %arg11: memref<8x16x4xf32, #tpu.memory_space<vmem>>, %arg12: memref<290x4xf32, #tpu.memory_space<vmem>>, %arg13: memref<256x4xf32, #tpu.memory_space<vmem>>) attributes {dimension_semantics = [#tpu.dimension_semantics<parallel>], iteration_bounds = array<i64: 2>, scalar_prefetch = 0 : i64, scratch_operands = 3 : i64, tpu.core_type = #tpu.core_type<tc>, window_params = [{transform_indices = @transform_0, window_bounds = array<i64: 1, 64, 16>}, {pipeline_mode = #tpu.pipeline_mode<synchronous>, transform_indices = @transform_1, window_bounds = array<i64: 16, 4>}, {pipeline_mode = #tpu.pipeline_mode<synchronous>, transform_indices = @transform_2, window_bounds = array<i64: 1, 4>}, {pipeline_mode = #tpu.pipeline_mode<synchronous>, transform_indices = @transform_3, window_bounds = array<i64: 8, 16, 8>}, {pipeline_mode = #tpu.pipeline_mode<synchronous>, transform_indices = @transform_4, window_bounds = array<i64: 16, 8>}, {pipeline_mode = #tpu.pipeline_mode<synchronous>, transform_indices = @transform_5, window_bounds = array<i64: 9, 4, 4>}, {pipeline_mode = #tpu.pipeline_mode<synchronous>, transform_indices = @transform_6, window_bounds = array<i64: 1, 4>}, {pipeline_mode = #tpu.pipeline_mode<synchronous>, transform_indices = @transform_7, window_bounds = array<i64: 4, 8>}, {pipeline_mode = #tpu.pipeline_mode<synchronous>, transform_indices = @transform_8, window_bounds = array<i64: 1, 8>}, {transform_indices = @transform_9, window_bounds = array<i64: 1, 16, 128>}]} {
    %c0 = arith.constant 0 : index
    %c0_0 = arith.constant 0 : index
    %c0_1 = arith.constant 0 : index
    %0 = vector.load %arg1[%c0, %c0_0, %c0_1] : memref<1x64x16xf32, #tpu.memory_space<vmem>>, vector<1x64x16xf32>
    %1 = vector.shape_cast %0 : vector<1x64x16xf32> to vector<64x16xf32>
    %c0_2 = arith.constant 0 : index
    %c0_3 = arith.constant 0 : index
    %2 = vector.load %arg2[%c0_2, %c0_3] : memref<16x4xf32, #tpu.memory_space<vmem>>, vector<16x4xf32>
    %cst = arith.constant dense<0.000000e+00> : vector<64x4xf32>
    %3 = tpu.matmul %1, %2, %cst {dimension_numbers = #tpu.dot_dimension_numbers<[1], [0], [0], [1], [0, 0, 1, 1], [], []>} : vector<64x16xf32>, vector<16x4xf32>, vector<64x4xf32> -> vector<64x4xf32>
    %c0_4 = arith.constant 0 : index
    %c0_5 = arith.constant 0 : index
    %4 = vector.load %arg3[%c0_4, %c0_5] : memref<1x4xf32, #tpu.memory_space<vmem>>, vector<1x4xf32>
    %5 = vector.broadcast %4 : vector<1x4xf32> to vector<64x4xf32>
    %6 = arith.addf %3, %5 : vector<64x4xf32>
    %cst_6 = arith.constant 0.000000e+00 : f32
    %7 = vector.broadcast %cst_6 : f32 to vector<64x4xf32>
    %8 = arith.maximumf %6, %7 : vector<64x4xf32>
    %c0_7 = arith.constant 0 : index
    %c0_8 = arith.constant 0 : index
    %c0_9 = arith.constant 0 : index
    %9 = vector.load %arg4[%c0_7, %c0_8, %c0_9] : memref<8x16x8xf32, #tpu.memory_space<vmem>>, vector<8x16x8xf32>
    %10 = vector.shape_cast %8 : vector<64x4xf32> to vector<8x8x4xf32>
    "tpu.trace_start"() <{level = 10 : i32, message = "hqw,hwc->hqc"}> : () -> ()
    %cst_10 = arith.constant dense<0.000000e+00> : vector<8x16x4xf32>
    %11 = tpu.matmul %9, %10, %cst_10 {dimension_numbers = #tpu.dot_dimension_numbers<[2], [1], [1], [2], [0, 0, 0, 1, 1, 2], [0], [0]>} : vector<8x16x8xf32>, vector<8x8x4xf32>, vector<8x16x4xf32> -> vector<8x16x4xf32>
    "tpu.trace_stop"() : () -> ()
    %c0_11 = arith.constant 0 : index
    %c0_12 = arith.constant 0 : index
    %c0_13 = arith.constant 0 : index
    %12 = vector.load %arg11[%c0_11, %c0_12, %c0_13] : memref<8x16x4xf32, #tpu.memory_space<vmem>>, vector<8x16x4xf32>
    tpu.vector_store %arg11[%c0_11, %c0_12, %c0_13], %11 {strides = array<i32>} : memref<8x16x4xf32, #tpu.memory_space<vmem>>, vector<8x16x4xf32>,
    %cst_14 = arith.constant 0.000000e+00 : f32
    %13 = vector.broadcast %cst_14 : f32 to vector<17x4xf32>
    %c0_15 = arith.constant 0 : index
    %c0_16 = arith.constant 0 : index
    %14 = vector.load %arg12[%c0_15, %c0_16] : memref<290x4xf32, #tpu.memory_space<vmem>>, vector<17x4xf32>
    tpu.vector_store %arg12[%c0_15, %c0_16], %13 {strides = array<i32>} : memref<290x4xf32, #tpu.memory_space<vmem>>, vector<17x4xf32>,
    %cst_17 = arith.constant 0.000000e+00 : f32
    %15 = vector.broadcast %cst_17 : f32 to vector<17x4xf32>
    %c273 = arith.constant 273 : index
    %c0_18 = arith.constant 0 : index
    %16 = vector.load %arg12[%c273, %c0_18] : memref<290x4xf32, #tpu.memory_space<vmem>>, vector<17x4xf32>
    tpu.vector_store %arg12[%c273, %c0_18], %15 {strides = array<i32>} : memref<290x4xf32, #tpu.memory_space<vmem>>, vector<17x4xf32>,
    %c0_19 = arith.constant 0 : index
    %c0_20 = arith.constant 0 : index
    %17 = vector.load %arg5[%c0_19, %c0_20] : memref<16x8xf32, #tpu.memory_space<vmem>>, vector<16x8xf32>
    %c0_21 = arith.constant 0 : index
    %c0_22 = arith.constant 0 : index
    %c0_23 = arith.constant 0 : index
    %18 = vector.load %arg11[%c0_21, %c0_22, %c0_23] : memref<8x16x4xf32, #tpu.memory_space<vmem>>, vector<8x1x4xf32>
    %19 = vector.shape_cast %18 : vector<8x1x4xf32> to vector<8x4xf32>
    %cst_24 = arith.constant dense<0.000000e+00> : vector<16x4xf32>
    %20 = tpu.matmul %17, %19, %cst_24 {dimension_numbers = #tpu.dot_dimension_numbers<[1], [0], [0], [1], [0, 0, 1, 1], [], []>} : vector<16x8xf32>, vector<8x4xf32>, vector<16x4xf32> -> vector<16x4xf32>
    %c17 = arith.constant 17 : index
    %c0_25 = arith.constant 0 : index
    %21 = vector.load %arg12[%c17, %c0_25] : memref<290x4xf32, #tpu.memory_space<vmem>>, vector<16x4xf32>
    tpu.vector_store %arg12[%c17, %c0_25], %20 {strides = array<i32>} : memref<290x4xf32, #tpu.memory_space<vmem>>, vector<16x4xf32>,
    %c0_26 = arith.constant 0 : index
    %c0_27 = arith.constant 0 : index
    %22 = vector.load %arg5[%c0_26, %c0_27] : memref<16x8xf32, #tpu.memory_space<vmem>>, vector<16x8xf32>
    %c0_28 = arith.constant 0 : index
    %c1 = arith.constant 1 : index
    %c0_29 = arith.constant 0 : index
    %23 = vector.load %arg11[%c0_28, %c1, %c0_29] : memref<8x16x4xf32, #tpu.memory_space<vmem>>, vector<8x1x4xf32>
    %24 = vector.shape_cast %23 : vector<8x1x4xf32> to vector<8x4xf32>
    %cst_30 = arith.constant dense<0.000000e+00> : vector<16x4xf32>
    %25 = tpu.matmul %22, %24, %cst_30 {dimension_numbers = #tpu.dot_dimension_numbers<[1], [0], [0], [1], [0, 0, 1, 1], [], []>} : vector<16x8xf32>, vector<8x4xf32>, vector<16x4xf32> -> vector<16x4xf32>
    %c33 = arith.constant 33 : index
    %c0_31 = arith.constant 0 : index
    %26 = vector.load %arg12[%c33, %c0_31] : memref<290x4xf32, #tpu.memory_space<vmem>>, vector<16x4xf32>
    tpu.vector_store %arg12[%c33, %c0_31], %25 {strides = array<i32>} : memref<290x4xf32, #tpu.memory_space<vmem>>, vector<16x4xf32>,
    %c0_32 = arith.constant 0 : index
    %c0_33 = arith.constant 0 : index
    %27 = vector.load %arg5[%c0_32, %c0_33] : memref<16x8xf32, #tpu.memory_space<vmem>>, vector<16x8xf32>
    %c0_34 = arith.constant 0 : index
    %c2 = arith.constant 2 : index
    %c0_35 = arith.constant 0 : index
    %28 = vector.load %arg11[%c0_34, %c2, %c0_35] : memref<8x16x4xf32, #tpu.memory_space<vmem>>, vector<8x1x4xf32>
    %29 = vector.shape_cast %28 : vector<8x1x4xf32> to vector<8x4xf32>
    %cst_36 = arith.constant dense<0.000000e+00> : vector<16x4xf32>
    %30 = tpu.matmul %27, %29, %cst_36 {dimension_numbers = #tpu.dot_dimension_numbers<[1], [0], [0], [1], [0, 0, 1, 1], [], []>} : vector<16x8xf32>, vector<8x4xf32>, vector<16x4xf32> -> vector<16x4xf32>
    %c49 = arith.constant 49 : index
    %c0_37 = arith.constant 0 : index
    %31 = vector.load %arg12[%c49, %c0_37] : memref<290x4xf32, #tpu.memory_space<vmem>>, vector<16x4xf32>
    tpu.vector_store %arg12[%c49, %c0_37], %30 {strides = array<i32>} : memref<290x4xf32, #tpu.memory_space<vmem>>, vector<16x4xf32>,
    %c0_38 = arith.constant 0 : index
    %c0_39 = arith.constant 0 : index
    %32 = vector.load %arg5[%c0_38, %c0_39] : memref<16x8xf32, #tpu.memory_space<vmem>>, vector<16x8xf32>
    %c0_40 = arith.constant 0 : index
    %c3 = arith.constant 3 : index
    %c0_41 = arith.constant 0 : index
    %33 = vector.load %arg11[%c0_40, %c3, %c0_41] : memref<8x16x4xf32, #tpu.memory_space<vmem>>, vector<8x1x4xf32>
    %34 = vector.shape_cast %33 : vector<8x1x4xf32> to vector<8x4xf32>
    %cst_42 = arith.constant dense<0.000000e+00> : vector<16x4xf32>
    %35 = tpu.matmul %32, %34, %cst_42 {dimension_numbers = #tpu.dot_dimension_numbers<[1], [0], [0], [1], [0, 0, 1, 1], [], []>} : vector<16x8xf32>, vector<8x4xf32>, vector<16x4xf32> -> vector<16x4xf32>
    %c65 = arith.constant 65 : index
    %c0_43 = arith.constant 0 : index
    %36 = vector.load %arg12[%c65, %c0_43] : memref<290x4xf32, #tpu.memory_space<vmem>>, vector<16x4xf32>
    tpu.vector_store %arg12[%c65, %c0_43], %35 {strides = array<i32>} : memref<290x4xf32, #tpu.memory_space<vmem>>, vector<16x4xf32>,
    %c0_44 = arith.constant 0 : index
    %c0_45 = arith.constant 0 : index
    %37 = vector.load %arg5[%c0_44, %c0_45] : memref<16x8xf32, #tpu.memory_space<vmem>>, vector<16x8xf32>
    %c0_46 = arith.constant 0 : index
    %c4 = arith.constant 4 : index
    %c0_47 = arith.constant 0 : index
    %38 = vector.load %arg11[%c0_46, %c4, %c0_47] : memref<8x16x4xf32, #tpu.memory_space<vmem>>, vector<8x1x4xf32>
    %39 = vector.shape_cast %38 : vector<8x1x4xf32> to vector<8x4xf32>
    %cst_48 = arith.constant dense<0.000000e+00> : vector<16x4xf32>
    %40 = tpu.matmul %37, %39, %cst_48 {dimension_numbers = #tpu.dot_dimension_numbers<[1], [0], [0], [1], [0, 0, 1, 1], [], []>} : vector<16x8xf32>, vector<8x4xf32>, vector<16x4xf32> -> vector<16x4xf32>
    %c81 = arith.constant 81 : index
    %c0_49 = arith.constant 0 : index
    %41 = vector.load %arg12[%c81, %c0_49] : memref<290x4xf32, #tpu.memory_space<vmem>>, vector<16x4xf32>
    tpu.vector_store %arg12[%c81, %c0_49], %40 {strides = array<i32>} : memref<290x4xf32, #tpu.memory_space<vmem>>, vector<16x4xf32>,
    %c0_50 = arith.constant 0 : index
    %c0_51 = arith.constant 0 : index
    %42 = vector.load %arg5[%c0_50, %c0_51] : memref<16x8xf32, #tpu.memory_space<vmem>>, vector<16x8xf32>
    %c0_52 = arith.constant 0 : index
    %c5 = arith.constant 5 : index
    %c0_53 = arith.constant 0 : index
    %43 = vector.load %arg11[%c0_52, %c5, %c0_53] : memref<8x16x4xf32, #tpu.memory_space<vmem>>, vector<8x1x4xf32>
    %44 = vector.shape_cast %43 : vector<8x1x4xf32> to vector<8x4xf32>
    %cst_54 = arith.constant dense<0.000000e+00> : vector<16x4xf32>
    %45 = tpu.matmul %42, %44, %cst_54 {dimension_numbers = #tpu.dot_dimension_numbers<[1], [0], [0], [1], [0, 0, 1, 1], [], []>} : vector<16x8xf32>, vector<8x4xf32>, vector<16x4xf32> -> vector<16x4xf32>
    %c97 = arith.constant 97 : index
    %c0_55 = arith.constant 0 : index
    %46 = vector.load %arg12[%c97, %c0_55] : memref<290x4xf32, #tpu.memory_space<vmem>>, vector<16x4xf32>
    tpu.vector_store %arg12[%c97, %c0_55], %45 {strides = array<i32>} : memref<290x4xf32, #tpu.memory_space<vmem>>, vector<16x4xf32>,
    %c0_56 = arith.constant 0 : index
    %c0_57 = arith.constant 0 : index
    %47 = vector.load %arg5[%c0_56, %c0_57] : memref<16x8xf32, #tpu.memory_space<vmem>>, vector<16x8xf32>
    %c0_58 = arith.constant 0 : index
    %c6 = arith.constant 6 : index
    %c0_59 = arith.constant 0 : index
    %48 = vector.load %arg11[%c0_58, %c6, %c0_59] : memref<8x16x4xf32, #tpu.memory_space<vmem>>, vector<8x1x4xf32>
    %49 = vector.shape_cast %48 : vector<8x1x4xf32> to vector<8x4xf32>
    %cst_60 = arith.constant dense<0.000000e+00> : vector<16x4xf32>
    %50 = tpu.matmul %47, %49, %cst_60 {dimension_numbers = #tpu.dot_dimension_numbers<[1], [0], [0], [1], [0, 0, 1, 1], [], []>} : vector<16x8xf32>, vector<8x4xf32>, vector<16x4xf32> -> vector<16x4xf32>
    %c113 = arith.constant 113 : index
    %c0_61 = arith.constant 0 : index
    %51 = vector.load %arg12[%c113, %c0_61] : memref<290x4xf32, #tpu.memory_space<vmem>>, vector<16x4xf32>
    tpu.vector_store %arg12[%c113, %c0_61], %50 {strides = array<i32>} : memref<290x4xf32, #tpu.memory_space<vmem>>, vector<16x4xf32>,
    %c0_62 = arith.constant 0 : index
    %c0_63 = arith.constant 0 : index
    %52 = vector.load %arg5[%c0_62, %c0_63] : memref<16x8xf32, #tpu.memory_space<vmem>>, vector<16x8xf32>
    %c0_64 = arith.constant 0 : index
    %c7 = arith.constant 7 : index
    %c0_65 = arith.constant 0 : index
    %53 = vector.load %arg11[%c0_64, %c7, %c0_65] : memref<8x16x4xf32, #tpu.memory_space<vmem>>, vector<8x1x4xf32>
    %54 = vector.shape_cast %53 : vector<8x1x4xf32> to vector<8x4xf32>
    %cst_66 = arith.constant dense<0.000000e+00> : vector<16x4xf32>
    %55 = tpu.matmul %52, %54, %cst_66 {dimension_numbers = #tpu.dot_dimension_numbers<[1], [0], [0], [1], [0, 0, 1, 1], [], []>} : vector<16x8xf32>, vector<8x4xf32>, vector<16x4xf32> -> vector<16x4xf32>
    %c129 = arith.constant 129 : index
    %c0_67 = arith.constant 0 : index
    %56 = vector.load %arg12[%c129, %c0_67] : memref<290x4xf32, #tpu.memory_space<vmem>>, vector<16x4xf32>
    tpu.vector_store %arg12[%c129, %c0_67], %55 {strides = array<i32>} : memref<290x4xf32, #tpu.memory_space<vmem>>, vector<16x4xf32>,
    %c0_68 = arith.constant 0 : index
    %c0_69 = arith.constant 0 : index
    %57 = vector.load %arg5[%c0_68, %c0_69] : memref<16x8xf32, #tpu.memory_space<vmem>>, vector<16x8xf32>
    %c0_70 = arith.constant 0 : index
    %c8 = arith.constant 8 : index
    %c0_71 = arith.constant 0 : index
    %58 = vector.load %arg11[%c0_70, %c8, %c0_71] : memref<8x16x4xf32, #tpu.memory_space<vmem>>, vector<8x1x4xf32>
    %59 = vector.shape_cast %58 : vector<8x1x4xf32> to vector<8x4xf32>
    %cst_72 = arith.constant dense<0.000000e+00> : vector<16x4xf32>
    %60 = tpu.matmul %57, %59, %cst_72 {dimension_numbers = #tpu.dot_dimension_numbers<[1], [0], [0], [1], [0, 0, 1, 1], [], []>} : vector<16x8xf32>, vector<8x4xf32>, vector<16x4xf32> -> vector<16x4xf32>
    %c145 = arith.constant 145 : index
    %c0_73 = arith.constant 0 : index
    %61 = vector.load %arg12[%c145, %c0_73] : memref<290x4xf32, #tpu.memory_space<vmem>>, vector<16x4xf32>
    tpu.vector_store %arg12[%c145, %c0_73], %60 {strides = array<i32>} : memref<290x4xf32, #tpu.memory_space<vmem>>, vector<16x4xf32>,
    %c0_74 = arith.constant 0 : index
    %c0_75 = arith.constant 0 : index
    %62 = vector.load %arg5[%c0_74, %c0_75] : memref<16x8xf32, #tpu.memory_space<vmem>>, vector<16x8xf32>
    %c0_76 = arith.constant 0 : index
    %c9 = arith.constant 9 : index
    %c0_77 = arith.constant 0 : index
    %63 = vector.load %arg11[%c0_76, %c9, %c0_77] : memref<8x16x4xf32, #tpu.memory_space<vmem>>, vector<8x1x4xf32>
    %64 = vector.shape_cast %63 : vector<8x1x4xf32> to vector<8x4xf32>
    %cst_78 = arith.constant dense<0.000000e+00> : vector<16x4xf32>
    %65 = tpu.matmul %62, %64, %cst_78 {dimension_numbers = #tpu.dot_dimension_numbers<[1], [0], [0], [1], [0, 0, 1, 1], [], []>} : vector<16x8xf32>, vector<8x4xf32>, vector<16x4xf32> -> vector<16x4xf32>
    %c161 = arith.constant 161 : index
    %c0_79 = arith.constant 0 : index
    %66 = vector.load %arg12[%c161, %c0_79] : memref<290x4xf32, #tpu.memory_space<vmem>>, vector<16x4xf32>
    tpu.vector_store %arg12[%c161, %c0_79], %65 {strides = array<i32>} : memref<290x4xf32, #tpu.memory_space<vmem>>, vector<16x4xf32>,
    %c0_80 = arith.constant 0 : index
    %c0_81 = arith.constant 0 : index
    %67 = vector.load %arg5[%c0_80, %c0_81] : memref<16x8xf32, #tpu.memory_space<vmem>>, vector<16x8xf32>
    %c0_82 = arith.constant 0 : index
    %c10 = arith.constant 10 : index
    %c0_83 = arith.constant 0 : index
    %68 = vector.load %arg11[%c0_82, %c10, %c0_83] : memref<8x16x4xf32, #tpu.memory_space<vmem>>, vector<8x1x4xf32>
    %69 = vector.shape_cast %68 : vector<8x1x4xf32> to vector<8x4xf32>
    %cst_84 = arith.constant dense<0.000000e+00> : vector<16x4xf32>
    %70 = tpu.matmul %67, %69, %cst_84 {dimension_numbers = #tpu.dot_dimension_numbers<[1], [0], [0], [1], [0, 0, 1, 1], [], []>} : vector<16x8xf32>, vector<8x4xf32>, vector<16x4xf32> -> vector<16x4xf32>
    %c177 = arith.constant 177 : index
    %c0_85 = arith.constant 0 : index
    %71 = vector.load %arg12[%c177, %c0_85] : memref<290x4xf32, #tpu.memory_space<vmem>>, vector<16x4xf32>
    tpu.vector_store %arg12[%c177, %c0_85], %70 {strides = array<i32>} : memref<290x4xf32, #tpu.memory_space<vmem>>, vector<16x4xf32>,
    %c0_86 = arith.constant 0 : index
    %c0_87 = arith.constant 0 : index
    %72 = vector.load %arg5[%c0_86, %c0_87] : memref<16x8xf32, #tpu.memory_space<vmem>>, vector<16x8xf32>
    %c0_88 = arith.constant 0 : index
    %c11 = arith.constant 11 : index
    %c0_89 = arith.constant 0 : index
    %73 = vector.load %arg11[%c0_88, %c11, %c0_89] : memref<8x16x4xf32, #tpu.memory_space<vmem>>, vector<8x1x4xf32>
    %74 = vector.shape_cast %73 : vector<8x1x4xf32> to vector<8x4xf32>
    %cst_90 = arith.constant dense<0.000000e+00> : vector<16x4xf32>
    %75 = tpu.matmul %72, %74, %cst_90 {dimension_numbers = #tpu.dot_dimension_numbers<[1], [0], [0], [1], [0, 0, 1, 1], [], []>} : vector<16x8xf32>, vector<8x4xf32>, vector<16x4xf32> -> vector<16x4xf32>
    %c193 = arith.constant 193 : index
    %c0_91 = arith.constant 0 : index
    %76 = vector.load %arg12[%c193, %c0_91] : memref<290x4xf32, #tpu.memory_space<vmem>>, vector<16x4xf32>
    tpu.vector_store %arg12[%c193, %c0_91], %75 {strides = array<i32>} : memref<290x4xf32, #tpu.memory_space<vmem>>, vector<16x4xf32>,
    %c0_92 = arith.constant 0 : index
    %c0_93 = arith.constant 0 : index
    %77 = vector.load %arg5[%c0_92, %c0_93] : memref<16x8xf32, #tpu.memory_space<vmem>>, vector<16x8xf32>
    %c0_94 = arith.constant 0 : index
    %c12 = arith.constant 12 : index
    %c0_95 = arith.constant 0 : index
    %78 = vector.load %arg11[%c0_94, %c12, %c0_95] : memref<8x16x4xf32, #tpu.memory_space<vmem>>, vector<8x1x4xf32>
    %79 = vector.shape_cast %78 : vector<8x1x4xf32> to vector<8x4xf32>
    %cst_96 = arith.constant dense<0.000000e+00> : vector<16x4xf32>
    %80 = tpu.matmul %77, %79, %cst_96 {dimension_numbers = #tpu.dot_dimension_numbers<[1], [0], [0], [1], [0, 0, 1, 1], [], []>} : vector<16x8xf32>, vector<8x4xf32>, vector<16x4xf32> -> vector<16x4xf32>
    %c209 = arith.constant 209 : index
    %c0_97 = arith.constant 0 : index
    %81 = vector.load %arg12[%c209, %c0_97] : memref<290x4xf32, #tpu.memory_space<vmem>>, vector<16x4xf32>
    tpu.vector_store %arg12[%c209, %c0_97], %80 {strides = array<i32>} : memref<290x4xf32, #tpu.memory_space<vmem>>, vector<16x4xf32>,
    %c0_98 = arith.constant 0 : index
    %c0_99 = arith.constant 0 : index
    %82 = vector.load %arg5[%c0_98, %c0_99] : memref<16x8xf32, #tpu.memory_space<vmem>>, vector<16x8xf32>
    %c0_100 = arith.constant 0 : index
    %c13 = arith.constant 13 : index
    %c0_101 = arith.constant 0 : index
    %83 = vector.load %arg11[%c0_100, %c13, %c0_101] : memref<8x16x4xf32, #tpu.memory_space<vmem>>, vector<8x1x4xf32>
    %84 = vector.shape_cast %83 : vector<8x1x4xf32> to vector<8x4xf32>
    %cst_102 = arith.constant dense<0.000000e+00> : vector<16x4xf32>
    %85 = tpu.matmul %82, %84, %cst_102 {dimension_numbers = #tpu.dot_dimension_numbers<[1], [0], [0], [1], [0, 0, 1, 1], [], []>} : vector<16x8xf32>, vector<8x4xf32>, vector<16x4xf32> -> vector<16x4xf32>
    %c225 = arith.constant 225 : index
    %c0_103 = arith.constant 0 : index
    %86 = vector.load %arg12[%c225, %c0_103] : memref<290x4xf32, #tpu.memory_space<vmem>>, vector<16x4xf32>
    tpu.vector_store %arg12[%c225, %c0_103], %85 {strides = array<i32>} : memref<290x4xf32, #tpu.memory_space<vmem>>, vector<16x4xf32>,
    %c0_104 = arith.constant 0 : index
    %c0_105 = arith.constant 0 : index
    %87 = vector.load %arg5[%c0_104, %c0_105] : memref<16x8xf32, #tpu.memory_space<vmem>>, vector<16x8xf32>
    %c0_106 = arith.constant 0 : index
    %c14 = arith.constant 14 : index
    %c0_107 = arith.constant 0 : index
    %88 = vector.load %arg11[%c0_106, %c14, %c0_107] : memref<8x16x4xf32, #tpu.memory_space<vmem>>, vector<8x1x4xf32>
    %89 = vector.shape_cast %88 : vector<8x1x4xf32> to vector<8x4xf32>
    %cst_108 = arith.constant dense<0.000000e+00> : vector<16x4xf32>
    %90 = tpu.matmul %87, %89, %cst_108 {dimension_numbers = #tpu.dot_dimension_numbers<[1], [0], [0], [1], [0, 0, 1, 1], [], []>} : vector<16x8xf32>, vector<8x4xf32>, vector<16x4xf32> -> vector<16x4xf32>
    %c241 = arith.constant 241 : index
    %c0_109 = arith.constant 0 : index
    %91 = vector.load %arg12[%c241, %c0_109] : memref<290x4xf32, #tpu.memory_space<vmem>>, vector<16x4xf32>
    tpu.vector_store %arg12[%c241, %c0_109], %90 {strides = array<i32>} : memref<290x4xf32, #tpu.memory_space<vmem>>, vector<16x4xf32>,
    %c0_110 = arith.constant 0 : index
    %c0_111 = arith.constant 0 : index
    %92 = vector.load %arg5[%c0_110, %c0_111] : memref<16x8xf32, #tpu.memory_space<vmem>>, vector<16x8xf32>
    %c0_112 = arith.constant 0 : index
    %c15 = arith.constant 15 : index
    %c0_113 = arith.constant 0 : index
    %93 = vector.load %arg11[%c0_112, %c15, %c0_113] : memref<8x16x4xf32, #tpu.memory_space<vmem>>, vector<8x1x4xf32>
    %94 = vector.shape_cast %93 : vector<8x1x4xf32> to vector<8x4xf32>
    %cst_114 = arith.constant dense<0.000000e+00> : vector<16x4xf32>
    %95 = tpu.matmul %92, %94, %cst_114 {dimension_numbers = #tpu.dot_dimension_numbers<[1], [0], [0], [1], [0, 0, 1, 1], [], []>} : vector<16x8xf32>, vector<8x4xf32>, vector<16x4xf32> -> vector<16x4xf32>
    %c257 = arith.constant 257 : index
    %c0_115 = arith.constant 0 : index
    %96 = vector.load %arg12[%c257, %c0_115] : memref<290x4xf32, #tpu.memory_space<vmem>>, vector<16x4xf32>
    tpu.vector_store %arg12[%c257, %c0_115], %95 {strides = array<i32>} : memref<290x4xf32, #tpu.memory_space<vmem>>, vector<16x4xf32>,
    %97 = tpu.iota {dimensions = array<i32: 0>} : vector<256x4xi32>
    %c16_i32 = arith.constant 16 : i32
    %c0_i32 = arith.constant 0 : i32
    %98 = arith.cmpi eq, %c16_i32, %c0_i32 : i32
    %c1_i32 = arith.constant 1 : i32
    %99 = arith.select %98, %c1_i32, %c16_i32 : i32
    %100 = vector.broadcast %99 : i32 to vector<256x4xi32>
    %101 = arith.remsi %97, %100 : vector<256x4xi32>
    %c0_i32_116 = arith.constant 0 : i32
    %102 = vector.broadcast %c0_i32_116 : i32 to vector<256x4xi32>
    %103 = arith.cmpi ne, %101, %102 : vector<256x4xi32>
    %c0_i32_117 = arith.constant 0 : i32
    %104 = vector.broadcast %c0_i32_117 : i32 to vector<256x4xi32>
    %105 = arith.cmpi slt, %101, %104 : vector<256x4xi32>
    %c0_i32_118 = arith.constant 0 : i32
    %106 = arith.cmpi slt, %99, %c0_i32_118 : i32
    %107 = vector.broadcast %106 : i1 to vector<256x4xi1>
    %108 = vector.broadcast %107 : vector<256x4xi1> to vector<256x4xi1>
    %109 = arith.xori %105, %108 : vector<256x4xi1>
    %110 = arith.andi %109, %103 : vector<256x4xi1>
    %111 = vector.broadcast %99 : i32 to vector<256x4xi32>
    %112 = arith.addi %101, %111 : vector<256x4xi32>
    %113 = arith.select %110, %112, %101 : vector<256x4xi1>, vector<256x4xi32>
    %c15_i32 = arith.constant 15 : i32
    %114 = vector.broadcast %c15_i32 : i32 to vector<256x4xi32>
    %115 = arith.cmpi slt, %113, %114 : vector<256x4xi32>
    %c0_i32_119 = arith.constant 0 : i32
    %116 = vector.broadcast %c0_i32_119 : i32 to vector<256x4xi32>
    %117 = arith.cmpi sgt, %113, %116 : vector<256x4xi32>
    %c0_120 = arith.constant 0 : index
    %c0_121 = arith.constant 0 : index
    %118 = vector.load %arg12[%c0_120, %c0_121] : memref<290x4xf32, #tpu.memory_space<vmem>>, vector<256x4xf32>
    %cst_122 = arith.constant 0.000000e+00 : f32
    %119 = vector.broadcast %cst_122 : f32 to vector<256x4xf32>
    %120 = arith.select %117, %118, %119 : vector<256x4xi1>, vector<256x4xf32>
    %c0_123 = arith.constant 0 : index
    %c0_124 = arith.constant 0 : index
    %c0_125 = arith.constant 0 : index
    %121 = vector.load %arg6[%c0_123, %c0_124, %c0_125] : memref<9x4x4xf32, #tpu.memory_space<vmem>>, vector<1x4x4xf32>
    %122 = vector.shape_cast %121 : vector<1x4x4xf32> to vector<4x4xf32>
    %cst_126 = arith.constant dense<0.000000e+00> : vector<256x4xf32>
    %123 = tpu.matmul %120, %122, %cst_126 {dimension_numbers = #tpu.dot_dimension_numbers<[1], [0], [0], [1], [0, 0, 1, 1], [], []>} : vector<256x4xf32>, vector<4x4xf32>, vector<256x4xf32> -> vector<256x4xf32>
    %c0_127 = arith.constant 0 : index
    %c0_128 = arith.constant 0 : index
    %124 = vector.load %arg13[%c0_127, %c0_128] : memref<256x4xf32, #tpu.memory_space<vmem>>, vector<256x4xf32>
    tpu.vector_store %arg13[%c0_127, %c0_128], %123 {strides = array<i32>} : memref<256x4xf32, #tpu.memory_space<vmem>>, vector<256x4xf32>,
    %c16 = arith.constant 16 : index
    %c0_129 = arith.constant 0 : index
    %125 = vector.load %arg12[%c16, %c0_129] : memref<290x4xf32, #tpu.memory_space<vmem>>, vector<256x4xf32>
    %cst_130 = arith.constant 0.000000e+00 : f32
    %126 = vector.broadcast %cst_130 : f32 to vector<256x4xf32>
    %127 = arith.select %117, %125, %126 : vector<256x4xi1>, vector<256x4xf32>
    %c1_131 = arith.constant 1 : index
    %c0_132 = arith.constant 0 : index
    %c0_133 = arith.constant 0 : index
    %128 = vector.load %arg6[%c1_131, %c0_132, %c0_133] : memref<9x4x4xf32, #tpu.memory_space<vmem>>, vector<1x4x4xf32>
    %129 = vector.shape_cast %128 : vector<1x4x4xf32> to vector<4x4xf32>
    %cst_134 = arith.constant dense<0.000000e+00> : vector<256x4xf32>
    %130 = tpu.matmul %127, %129, %cst_134 {dimension_numbers = #tpu.dot_dimension_numbers<[1], [0], [0], [1], [0, 0, 1, 1], [], []>} : vector<256x4xf32>, vector<4x4xf32>, vector<256x4xf32> -> vector<256x4xf32>
    %c0_135 = arith.constant 0 : index
    %c0_136 = arith.constant 0 : index
    %131 = vector.load %arg13[%c0_135, %c0_136] : memref<256x4xf32, #tpu.memory_space<vmem>>, vector<256x4xf32>
    %132 = arith.addf %131, %130 : vector<256x4xf32>
    %c0_137 = arith.constant 0 : index
    %c0_138 = arith.constant 0 : index
    %133 = vector.load %arg13[%c0_137, %c0_138] : memref<256x4xf32, #tpu.memory_space<vmem>>, vector<256x4xf32>
    tpu.vector_store %arg13[%c0_137, %c0_138], %132 {strides = array<i32>} : memref<256x4xf32, #tpu.memory_space<vmem>>, vector<256x4xf32>,
    %c32 = arith.constant 32 : index
    %c0_139 = arith.constant 0 : index
    %134 = vector.load %arg12[%c32, %c0_139] : memref<290x4xf32, #tpu.memory_space<vmem>>, vector<256x4xf32>
    %cst_140 = arith.constant 0.000000e+00 : f32
    %135 = vector.broadcast %cst_140 : f32 to vector<256x4xf32>
    %136 = arith.select %117, %134, %135 : vector<256x4xi1>, vector<256x4xf32>
    %c2_141 = arith.constant 2 : index
    %c0_142 = arith.constant 0 : index
    %c0_143 = arith.constant 0 : index
    %137 = vector.load %arg6[%c2_141, %c0_142, %c0_143] : memref<9x4x4xf32, #tpu.memory_space<vmem>>, vector<1x4x4xf32>
    %138 = vector.shape_cast %137 : vector<1x4x4xf32> to vector<4x4xf32>
    %cst_144 = arith.constant dense<0.000000e+00> : vector<256x4xf32>
    %139 = tpu.matmul %136, %138, %cst_144 {dimension_numbers = #tpu.dot_dimension_numbers<[1], [0], [0], [1], [0, 0, 1, 1], [], []>} : vector<256x4xf32>, vector<4x4xf32>, vector<256x4xf32> -> vector<256x4xf32>
    %c0_145 = arith.constant 0 : index
    %c0_146 = arith.constant 0 : index
    %140 = vector.load %arg13[%c0_145, %c0_146] : memref<256x4xf32, #tpu.memory_space<vmem>>, vector<256x4xf32>
    %141 = arith.addf %140, %139 : vector<256x4xf32>
    %c0_147 = arith.constant 0 : index
    %c0_148 = arith.constant 0 : index
    %142 = vector.load %arg13[%c0_147, %c0_148] : memref<256x4xf32, #tpu.memory_space<vmem>>, vector<256x4xf32>
    tpu.vector_store %arg13[%c0_147, %c0_148], %141 {strides = array<i32>} : memref<256x4xf32, #tpu.memory_space<vmem>>, vector<256x4xf32>,
    %c1_149 = arith.constant 1 : index
    %c0_150 = arith.constant 0 : index
    %143 = vector.load %arg12[%c1_149, %c0_150] : memref<290x4xf32, #tpu.memory_space<vmem>>, vector<256x4xf32>
    %c3_151 = arith.constant 3 : index
    %c0_152 = arith.constant 0 : index
    %c0_153 = arith.constant 0 : index
    %144 = vector.load %arg6[%c3_151, %c0_152, %c0_153] : memref<9x4x4xf32, #tpu.memory_space<vmem>>, vector<1x4x4xf32>
    %145 = vector.shape_cast %144 : vector<1x4x4xf32> to vector<4x4xf32>
    %cst_154 = arith.constant dense<0.000000e+00> : vector<256x4xf32>
    %146 = tpu.matmul %143, %145, %cst_154 {dimension_numbers = #tpu.dot_dimension_numbers<[1], [0], [0], [1], [0, 0, 1, 1], [], []>} : vector<256x4xf32>, vector<4x4xf32>, vector<256x4xf32> -> vector<256x4xf32>
    %c0_155 = arith.constant 0 : index
    %c0_156 = arith.constant 0 : index
    %147 = vector.load %arg13[%c0_155, %c0_156] : memref<256x4xf32, #tpu.memory_space<vmem>>, vector<256x4xf32>
    %148 = arith.addf %147, %146 : vector<256x4xf32>
    %c0_157 = arith.constant 0 : index
    %c0_158 = arith.constant 0 : index
    %149 = vector.load %arg13[%c0_157, %c0_158] : memref<256x4xf32, #tpu.memory_space<vmem>>, vector<256x4xf32>
    tpu.vector_store %arg13[%c0_157, %c0_158], %148 {strides = array<i32>} : memref<256x4xf32, #tpu.memory_space<vmem>>, vector<256x4xf32>,
    %c17_159 = arith.constant 17 : index
    %c0_160 = arith.constant 0 : index
    %150 = vector.load %arg12[%c17_159, %c0_160] : memref<290x4xf32, #tpu.memory_space<vmem>>, vector<256x4xf32>
    %c4_161 = arith.constant 4 : index
    %c0_162 = arith.constant 0 : index
    %c0_163 = arith.constant 0 : index
    %151 = vector.load %arg6[%c4_161, %c0_162, %c0_163] : memref<9x4x4xf32, #tpu.memory_space<vmem>>, vector<1x4x4xf32>
    %152 = vector.shape_cast %151 : vector<1x4x4xf32> to vector<4x4xf32>
    %cst_164 = arith.constant dense<0.000000e+00> : vector<256x4xf32>
    %153 = tpu.matmul %150, %152, %cst_164 {dimension_numbers = #tpu.dot_dimension_numbers<[1], [0], [0], [1], [0, 0, 1, 1], [], []>} : vector<256x4xf32>, vector<4x4xf32>, vector<256x4xf32> -> vector<256x4xf32>
    %c0_165 = arith.constant 0 : index
    %c0_166 = arith.constant 0 : index
    %154 = vector.load %arg13[%c0_165, %c0_166] : memref<256x4xf32, #tpu.memory_space<vmem>>, vector<256x4xf32>
    %155 = arith.addf %154, %153 : vector<256x4xf32>
    %c0_167 = arith.constant 0 : index
    %c0_168 = arith.constant 0 : index
    %156 = vector.load %arg13[%c0_167, %c0_168] : memref<256x4xf32, #tpu.memory_space<vmem>>, vector<256x4xf32>
    tpu.vector_store %arg13[%c0_167, %c0_168], %155 {strides = array<i32>} : memref<256x4xf32, #tpu.memory_space<vmem>>, vector<256x4xf32>,
    %c33_169 = arith.constant 33 : index
    %c0_170 = arith.constant 0 : index
    %157 = vector.load %arg12[%c33_169, %c0_170] : memref<290x4xf32, #tpu.memory_space<vmem>>, vector<256x4xf32>
    %c5_171 = arith.constant 5 : index
    %c0_172 = arith.constant 0 : index
    %c0_173 = arith.constant 0 : index
    %158 = vector.load %arg6[%c5_171, %c0_172, %c0_173] : memref<9x4x4xf32, #tpu.memory_space<vmem>>, vector<1x4x4xf32>
    %159 = vector.shape_cast %158 : vector<1x4x4xf32> to vector<4x4xf32>
    %cst_174 = arith.constant dense<0.000000e+00> : vector<256x4xf32>
    %160 = tpu.matmul %157, %159, %cst_174 {dimension_numbers = #tpu.dot_dimension_numbers<[1], [0], [0], [1], [0, 0, 1, 1], [], []>} : vector<256x4xf32>, vector<4x4xf32>, vector<256x4xf32> -> vector<256x4xf32>
    %c0_175 = arith.constant 0 : index
    %c0_176 = arith.constant 0 : index
    %161 = vector.load %arg13[%c0_175, %c0_176] : memref<256x4xf32, #tpu.memory_space<vmem>>, vector<256x4xf32>
    %162 = arith.addf %161, %160 : vector<256x4xf32>
    %c0_177 = arith.constant 0 : index
    %c0_178 = arith.constant 0 : index
    %163 = vector.load %arg13[%c0_177, %c0_178] : memref<256x4xf32, #tpu.memory_space<vmem>>, vector<256x4xf32>
    tpu.vector_store %arg13[%c0_177, %c0_178], %162 {strides = array<i32>} : memref<256x4xf32, #tpu.memory_space<vmem>>, vector<256x4xf32>,
    %c2_179 = arith.constant 2 : index
    %c0_180 = arith.constant 0 : index
    %164 = vector.load %arg12[%c2_179, %c0_180] : memref<290x4xf32, #tpu.memory_space<vmem>>, vector<256x4xf32>
    %cst_181 = arith.constant 0.000000e+00 : f32
    %165 = vector.broadcast %cst_181 : f32 to vector<256x4xf32>
    %166 = arith.select %115, %164, %165 : vector<256x4xi1>, vector<256x4xf32>
    %c6_182 = arith.constant 6 : index
    %c0_183 = arith.constant 0 : index
    %c0_184 = arith.constant 0 : index
    %167 = vector.load %arg6[%c6_182, %c0_183, %c0_184] : memref<9x4x4xf32, #tpu.memory_space<vmem>>, vector<1x4x4xf32>
    %168 = vector.shape_cast %167 : vector<1x4x4xf32> to vector<4x4xf32>
    %cst_185 = arith.constant dense<0.000000e+00> : vector<256x4xf32>
    %169 = tpu.matmul %166, %168, %cst_185 {dimension_numbers = #tpu.dot_dimension_numbers<[1], [0], [0], [1], [0, 0, 1, 1], [], []>} : vector<256x4xf32>, vector<4x4xf32>, vector<256x4xf32> -> vector<256x4xf32>
    %c0_186 = arith.constant 0 : index
    %c0_187 = arith.constant 0 : index
    %170 = vector.load %arg13[%c0_186, %c0_187] : memref<256x4xf32, #tpu.memory_space<vmem>>, vector<256x4xf32>
    %171 = arith.addf %170, %169 : vector<256x4xf32>
    %c0_188 = arith.constant 0 : index
    %c0_189 = arith.constant 0 : index
    %172 = vector.load %arg13[%c0_188, %c0_189] : memref<256x4xf32, #tpu.memory_space<vmem>>, vector<256x4xf32>
    tpu.vector_store %arg13[%c0_188, %c0_189], %171 {strides = array<i32>} : memref<256x4xf32, #tpu.memory_space<vmem>>, vector<256x4xf32>,
    %c18 = arith.constant 18 : index
    %c0_190 = arith.constant 0 : index
    %173 = vector.load %arg12[%c18, %c0_190] : memref<290x4xf32, #tpu.memory_space<vmem>>, vector<256x4xf32>
    %cst_191 = arith.constant 0.000000e+00 : f32
    %174 = vector.broadcast %cst_191 : f32 to vector<256x4xf32>
    %175 = arith.select %115, %173, %174 : vector<256x4xi1>, vector<256x4xf32>
    %c7_192 = arith.constant 7 : index
    %c0_193 = arith.constant 0 : index
    %c0_194 = arith.constant 0 : index
    %176 = vector.load %arg6[%c7_192, %c0_193, %c0_194] : memref<9x4x4xf32, #tpu.memory_space<vmem>>, vector<1x4x4xf32>
    %177 = vector.shape_cast %176 : vector<1x4x4xf32> to vector<4x4xf32>
    %cst_195 = arith.constant dense<0.000000e+00> : vector<256x4xf32>
    %178 = tpu.matmul %175, %177, %cst_195 {dimension_numbers = #tpu.dot_dimension_numbers<[1], [0], [0], [1], [0, 0, 1, 1], [], []>} : vector<256x4xf32>, vector<4x4xf32>, vector<256x4xf32> -> vector<256x4xf32>
    %c0_196 = arith.constant 0 : index
    %c0_197 = arith.constant 0 : index
    %179 = vector.load %arg13[%c0_196, %c0_197] : memref<256x4xf32, #tpu.memory_space<vmem>>, vector<256x4xf32>
    %180 = arith.addf %179, %178 : vector<256x4xf32>
    %c0_198 = arith.constant 0 : index
    %c0_199 = arith.constant 0 : index
    %181 = vector.load %arg13[%c0_198, %c0_199] : memref<256x4xf32, #tpu.memory_space<vmem>>, vector<256x4xf32>
    tpu.vector_store %arg13[%c0_198, %c0_199], %180 {strides = array<i32>} : memref<256x4xf32, #tpu.memory_space<vmem>>, vector<256x4xf32>,
    %c34 = arith.constant 34 : index
    %c0_200 = arith.constant 0 : index
    %182 = vector.load %arg12[%c34, %c0_200] : memref<290x4xf32, #tpu.memory_space<vmem>>, vector<256x4xf32>
    %cst_201 = arith.constant 0.000000e+00 : f32
    %183 = vector.broadcast %cst_201 : f32 to vector<256x4xf32>
    %184 = arith.select %115, %182, %183 : vector<256x4xi1>, vector<256x4xf32>
    %c8_202 = arith.constant 8 : index
    %c0_203 = arith.constant 0 : index
    %c0_204 = arith.constant 0 : index
    %185 = vector.load %arg6[%c8_202, %c0_203, %c0_204] : memref<9x4x4xf32, #tpu.memory_space<vmem>>, vector<1x4x4xf32>
    %186 = vector.shape_cast %185 : vector<1x4x4xf32> to vector<4x4xf32>
    %cst_205 = arith.constant dense<0.000000e+00> : vector<256x4xf32>
    %187 = tpu.matmul %184, %186, %cst_205 {dimension_numbers = #tpu.dot_dimension_numbers<[1], [0], [0], [1], [0, 0, 1, 1], [], []>} : vector<256x4xf32>, vector<4x4xf32>, vector<256x4xf32> -> vector<256x4xf32>
    %c0_206 = arith.constant 0 : index
    %c0_207 = arith.constant 0 : index
    %188 = vector.load %arg13[%c0_206, %c0_207] : memref<256x4xf32, #tpu.memory_space<vmem>>, vector<256x4xf32>
    %189 = arith.addf %188, %187 : vector<256x4xf32>
    %c0_208 = arith.constant 0 : index
    %c0_209 = arith.constant 0 : index
    %190 = vector.load %arg13[%c0_208, %c0_209] : memref<256x4xf32, #tpu.memory_space<vmem>>, vector<256x4xf32>
    tpu.vector_store %arg13[%c0_208, %c0_209], %189 {strides = array<i32>} : memref<256x4xf32, #tpu.memory_space<vmem>>, vector<256x4xf32>,
    %c0_210 = arith.constant 0 : index
    %c0_211 = arith.constant 0 : index
    %191 = vector.load %arg13[%c0_210, %c0_211] : memref<256x4xf32, #tpu.memory_space<vmem>>, vector<256x4xf32>
    %c0_212 = arith.constant 0 : index
    %c0_213 = arith.constant 0 : index
    %192 = vector.load %arg7[%c0_212, %c0_213] : memref<1x4xf32, #tpu.memory_space<vmem>>, vector<1x4xf32>
    %193 = vector.broadcast %192 : vector<1x4xf32> to vector<256x4xf32>
    %194 = arith.addf %191, %193 : vector<256x4xf32>
    %cst_214 = arith.constant 0.000000e+00 : f32
    %195 = vector.broadcast %cst_214 : f32 to vector<256x4xf32>
    %196 = arith.maximumf %194, %195 : vector<256x4xf32>
    %c0_215 = arith.constant 0 : index
    %c0_216 = arith.constant 0 : index
    %197 = vector.load %arg8[%c0_215, %c0_216] : memref<4x8xf32, #tpu.memory_space<vmem>>, vector<4x8xf32>
    %cst_217 = arith.constant dense<0.000000e+00> : vector<256x8xf32>
    %198 = tpu.matmul %196, %197, %cst_217 {dimension_numbers = #tpu.dot_dimension_numbers<[1], [0], [0], [1], [0, 0, 1, 1], [], []>} : vector<256x4xf32>, vector<4x8xf32>, vector<256x8xf32> -> vector<256x8xf32>
    %c0_218 = arith.constant 0 : index
    %c0_219 = arith.constant 0 : index
    %199 = vector.load %arg9[%c0_218, %c0_219] : memref<1x8xf32, #tpu.memory_space<vmem>>, vector<1x8xf32>
    %200 = vector.broadcast %199 : vector<1x8xf32> to vector<256x8xf32>
    %201 = arith.addf %198, %200 : vector<256x8xf32>
    %cst_220 = arith.constant 0.000000e+00 : f32
    %202 = vector.broadcast %cst_220 : f32 to vector<256x8xf32>
    %203 = arith.maximumf %201, %202 : vector<256x8xf32>
    %204 = vector.extract_strided_slice %203 {offsets = [0, 0], sizes = [16, 8], strides = [1, 1]} : vector<256x8xf32> to vector<16x8xf32>
    %c0_221 = arith.constant 0 : index
    %c0_222 = arith.constant 0 : index
    %c0_223 = arith.constant 0 : index
    %205 = vector.load %arg10[%c0_221, %c0_222, %c0_223] : memref<1x16x128xf32, #tpu.memory_space<vmem>>, vector<1x16x8xf32>
    %206 = vector.shape_cast %205 : vector<1x16x8xf32> to vector<16x8xf32>
    %207 = vector.shape_cast %204 : vector<16x8xf32> to vector<1x16x8xf32>
    tpu.vector_store %arg10[%c0_221, %c0_222, %c0_223], %207 {strides = array<i32>} : memref<1x16x128xf32, #tpu.memory_space<vmem>>, vector<1x16x8xf32>,
    %208 = vector.extract_strided_slice %203 {offsets = [16, 0], sizes = [16, 8], strides = [1, 1]} : vector<256x8xf32> to vector<16x8xf32>
    %c0_224 = arith.constant 0 : index
    %c0_225 = arith.constant 0 : index
    %c8_226 = arith.constant 8 : index
    %209 = vector.load %arg10[%c0_224, %c0_225, %c8_226] : memref<1x16x128xf32, #tpu.memory_space<vmem>>, vector<1x16x8xf32>
    %210 = vector.shape_cast %209 : vector<1x16x8xf32> to vector<16x8xf32>
    %211 = vector.shape_cast %208 : vector<16x8xf32> to vector<1x16x8xf32>
    tpu.vector_store %arg10[%c0_224, %c0_225, %c8_226], %211 {strides = array<i32>} : memref<1x16x128xf32, #tpu.memory_space<vmem>>, vector<1x16x8xf32>,
    %212 = vector.extract_strided_slice %203 {offsets = [32, 0], sizes = [16, 8], strides = [1, 1]} : vector<256x8xf32> to vector<16x8xf32>
    %c0_227 = arith.constant 0 : index
    %c0_228 = arith.constant 0 : index
    %c16_229 = arith.constant 16 : index
    %213 = vector.load %arg10[%c0_227, %c0_228, %c16_229] : memref<1x16x128xf32, #tpu.memory_space<vmem>>, vector<1x16x8xf32>
    %214 = vector.shape_cast %213 : vector<1x16x8xf32> to vector<16x8xf32>
    %215 = vector.shape_cast %212 : vector<16x8xf32> to vector<1x16x8xf32>
    tpu.vector_store %arg10[%c0_227, %c0_228, %c16_229], %215 {strides = array<i32>} : memref<1x16x128xf32, #tpu.memory_space<vmem>>, vector<1x16x8xf32>,
    %216 = vector.extract_strided_slice %203 {offsets = [48, 0], sizes = [16, 8], strides = [1, 1]} : vector<256x8xf32> to vector<16x8xf32>
    %c0_230 = arith.constant 0 : index
    %c0_231 = arith.constant 0 : index
    %c24 = arith.constant 24 : index
    %217 = vector.load %arg10[%c0_230, %c0_231, %c24] : memref<1x16x128xf32, #tpu.memory_space<vmem>>, vector<1x16x8xf32>
    %218 = vector.shape_cast %217 : vector<1x16x8xf32> to vector<16x8xf32>
    %219 = vector.shape_cast %216 : vector<16x8xf32> to vector<1x16x8xf32>
    tpu.vector_store %arg10[%c0_230, %c0_231, %c24], %219 {strides = array<i32>} : memref<1x16x128xf32, #tpu.memory_space<vmem>>, vector<1x16x8xf32>,
    %220 = vector.extract_strided_slice %203 {offsets = [64, 0], sizes = [16, 8], strides = [1, 1]} : vector<256x8xf32> to vector<16x8xf32>
    %c0_232 = arith.constant 0 : index
    %c0_233 = arith.constant 0 : index
    %c32_234 = arith.constant 32 : index
    %221 = vector.load %arg10[%c0_232, %c0_233, %c32_234] : memref<1x16x128xf32, #tpu.memory_space<vmem>>, vector<1x16x8xf32>
    %222 = vector.shape_cast %221 : vector<1x16x8xf32> to vector<16x8xf32>
    %223 = vector.shape_cast %220 : vector<16x8xf32> to vector<1x16x8xf32>
    tpu.vector_store %arg10[%c0_232, %c0_233, %c32_234], %223 {strides = array<i32>} : memref<1x16x128xf32, #tpu.memory_space<vmem>>, vector<1x16x8xf32>,
    %224 = vector.extract_strided_slice %203 {offsets = [80, 0], sizes = [16, 8], strides = [1, 1]} : vector<256x8xf32> to vector<16x8xf32>
    %c0_235 = arith.constant 0 : index
    %c0_236 = arith.constant 0 : index
    %c40 = arith.constant 40 : index
    %225 = vector.load %arg10[%c0_235, %c0_236, %c40] : memref<1x16x128xf32, #tpu.memory_space<vmem>>, vector<1x16x8xf32>
    %226 = vector.shape_cast %225 : vector<1x16x8xf32> to vector<16x8xf32>
    %227 = vector.shape_cast %224 : vector<16x8xf32> to vector<1x16x8xf32>
    tpu.vector_store %arg10[%c0_235, %c0_236, %c40], %227 {strides = array<i32>} : memref<1x16x128xf32, #tpu.memory_space<vmem>>, vector<1x16x8xf32>,
    %228 = vector.extract_strided_slice %203 {offsets = [96, 0], sizes = [16, 8], strides = [1, 1]} : vector<256x8xf32> to vector<16x8xf32>
    %c0_237 = arith.constant 0 : index
    %c0_238 = arith.constant 0 : index
    %c48 = arith.constant 48 : index
    %229 = vector.load %arg10[%c0_237, %c0_238, %c48] : memref<1x16x128xf32, #tpu.memory_space<vmem>>, vector<1x16x8xf32>
    %230 = vector.shape_cast %229 : vector<1x16x8xf32> to vector<16x8xf32>
    %231 = vector.shape_cast %228 : vector<16x8xf32> to vector<1x16x8xf32>
    tpu.vector_store %arg10[%c0_237, %c0_238, %c48], %231 {strides = array<i32>} : memref<1x16x128xf32, #tpu.memory_space<vmem>>, vector<1x16x8xf32>,
    %232 = vector.extract_strided_slice %203 {offsets = [112, 0], sizes = [16, 8], strides = [1, 1]} : vector<256x8xf32> to vector<16x8xf32>
    %c0_239 = arith.constant 0 : index
    %c0_240 = arith.constant 0 : index
    %c56 = arith.constant 56 : index
    %233 = vector.load %arg10[%c0_239, %c0_240, %c56] : memref<1x16x128xf32, #tpu.memory_space<vmem>>, vector<1x16x8xf32>
    %234 = vector.shape_cast %233 : vector<1x16x8xf32> to vector<16x8xf32>
    %235 = vector.shape_cast %232 : vector<16x8xf32> to vector<1x16x8xf32>
    tpu.vector_store %arg10[%c0_239, %c0_240, %c56], %235 {strides = array<i32>} : memref<1x16x128xf32, #tpu.memory_space<vmem>>, vector<1x16x8xf32>,
    %236 = vector.extract_strided_slice %203 {offsets = [128, 0], sizes = [16, 8], strides = [1, 1]} : vector<256x8xf32> to vector<16x8xf32>
    %c0_241 = arith.constant 0 : index
    %c0_242 = arith.constant 0 : index
    %c64 = arith.constant 64 : index
    %237 = vector.load %arg10[%c0_241, %c0_242, %c64] : memref<1x16x128xf32, #tpu.memory_space<vmem>>, vector<1x16x8xf32>
    %238 = vector.shape_cast %237 : vector<1x16x8xf32> to vector<16x8xf32>
    %239 = vector.shape_cast %236 : vector<16x8xf32> to vector<1x16x8xf32>
    tpu.vector_store %arg10[%c0_241, %c0_242, %c64], %239 {strides = array<i32>} : memref<1x16x128xf32, #tpu.memory_space<vmem>>, vector<1x16x8xf32>,
    %240 = vector.extract_strided_slice %203 {offsets = [144, 0], sizes = [16, 8], strides = [1, 1]} : vector<256x8xf32> to vector<16x8xf32>
    %c0_243 = arith.constant 0 : index
    %c0_244 = arith.constant 0 : index
    %c72 = arith.constant 72 : index
    %241 = vector.load %arg10[%c0_243, %c0_244, %c72] : memref<1x16x128xf32, #tpu.memory_space<vmem>>, vector<1x16x8xf32>
    %242 = vector.shape_cast %241 : vector<1x16x8xf32> to vector<16x8xf32>
    %243 = vector.shape_cast %240 : vector<16x8xf32> to vector<1x16x8xf32>
    tpu.vector_store %arg10[%c0_243, %c0_244, %c72], %243 {strides = array<i32>} : memref<1x16x128xf32, #tpu.memory_space<vmem>>, vector<1x16x8xf32>,
    %244 = vector.extract_strided_slice %203 {offsets = [160, 0], sizes = [16, 8], strides = [1, 1]} : vector<256x8xf32> to vector<16x8xf32>
    %c0_245 = arith.constant 0 : index
    %c0_246 = arith.constant 0 : index
    %c80 = arith.constant 80 : index
    %245 = vector.load %arg10[%c0_245, %c0_246, %c80] : memref<1x16x128xf32, #tpu.memory_space<vmem>>, vector<1x16x8xf32>
    %246 = vector.shape_cast %245 : vector<1x16x8xf32> to vector<16x8xf32>
    %247 = vector.shape_cast %244 : vector<16x8xf32> to vector<1x16x8xf32>
    tpu.vector_store %arg10[%c0_245, %c0_246, %c80], %247 {strides = array<i32>} : memref<1x16x128xf32, #tpu.memory_space<vmem>>, vector<1x16x8xf32>,
    %248 = vector.extract_strided_slice %203 {offsets = [176, 0], sizes = [16, 8], strides = [1, 1]} : vector<256x8xf32> to vector<16x8xf32>
    %c0_247 = arith.constant 0 : index
    %c0_248 = arith.constant 0 : index
    %c88 = arith.constant 88 : index
    %249 = vector.load %arg10[%c0_247, %c0_248, %c88] : memref<1x16x128xf32, #tpu.memory_space<vmem>>, vector<1x16x8xf32>
    %250 = vector.shape_cast %249 : vector<1x16x8xf32> to vector<16x8xf32>
    %251 = vector.shape_cast %248 : vector<16x8xf32> to vector<1x16x8xf32>
    tpu.vector_store %arg10[%c0_247, %c0_248, %c88], %251 {strides = array<i32>} : memref<1x16x128xf32, #tpu.memory_space<vmem>>, vector<1x16x8xf32>,
    %252 = vector.extract_strided_slice %203 {offsets = [192, 0], sizes = [16, 8], strides = [1, 1]} : vector<256x8xf32> to vector<16x8xf32>
    %c0_249 = arith.constant 0 : index
    %c0_250 = arith.constant 0 : index
    %c96 = arith.constant 96 : index
    %253 = vector.load %arg10[%c0_249, %c0_250, %c96] : memref<1x16x128xf32, #tpu.memory_space<vmem>>, vector<1x16x8xf32>
    %254 = vector.shape_cast %253 : vector<1x16x8xf32> to vector<16x8xf32>
    %255 = vector.shape_cast %252 : vector<16x8xf32> to vector<1x16x8xf32>
    tpu.vector_store %arg10[%c0_249, %c0_250, %c96], %255 {strides = array<i32>} : memref<1x16x128xf32, #tpu.memory_space<vmem>>, vector<1x16x8xf32>,
    %256 = vector.extract_strided_slice %203 {offsets = [208, 0], sizes = [16, 8], strides = [1, 1]} : vector<256x8xf32> to vector<16x8xf32>
    %c0_251 = arith.constant 0 : index
    %c0_252 = arith.constant 0 : index
    %c104 = arith.constant 104 : index
    %257 = vector.load %arg10[%c0_251, %c0_252, %c104] : memref<1x16x128xf32, #tpu.memory_space<vmem>>, vector<1x16x8xf32>
    %258 = vector.shape_cast %257 : vector<1x16x8xf32> to vector<16x8xf32>
    %259 = vector.shape_cast %256 : vector<16x8xf32> to vector<1x16x8xf32>
    tpu.vector_store %arg10[%c0_251, %c0_252, %c104], %259 {strides = array<i32>} : memref<1x16x128xf32, #tpu.memory_space<vmem>>, vector<1x16x8xf32>,
    %260 = vector.extract_strided_slice %203 {offsets = [224, 0], sizes = [16, 8], strides = [1, 1]} : vector<256x8xf32> to vector<16x8xf32>
    %c0_253 = arith.constant 0 : index
    %c0_254 = arith.constant 0 : index
    %c112 = arith.constant 112 : index
    %261 = vector.load %arg10[%c0_253, %c0_254, %c112] : memref<1x16x128xf32, #tpu.memory_space<vmem>>, vector<1x16x8xf32>
    %262 = vector.shape_cast %261 : vector<1x16x8xf32> to vector<16x8xf32>
    %263 = vector.shape_cast %260 : vector<16x8xf32> to vector<1x16x8xf32>
    tpu.vector_store %arg10[%c0_253, %c0_254, %c112], %263 {strides = array<i32>} : memref<1x16x128xf32, #tpu.memory_space<vmem>>, vector<1x16x8xf32>,
    %264 = vector.extract_strided_slice %203 {offsets = [240, 0], sizes = [16, 8], strides = [1, 1]} : vector<256x8xf32> to vector<16x8xf32>
    %c0_255 = arith.constant 0 : index
    %c0_256 = arith.constant 0 : index
    %c120 = arith.constant 120 : index
    %265 = vector.load %arg10[%c0_255, %c0_256, %c120] : memref<1x16x128xf32, #tpu.memory_space<vmem>>, vector<1x16x8xf32>
    %266 = vector.shape_cast %265 : vector<1x16x8xf32> to vector<16x8xf32>
    %267 = vector.shape_cast %264 : vector<16x8xf32> to vector<1x16x8xf32>
    tpu.vector_store %arg10[%c0_255, %c0_256, %c120], %267 {strides = array<i32>} : memref<1x16x128xf32, #tpu.memory_space<vmem>>, vector<1x16x8xf32>,
    return
  }
  func.func @transform_0(%arg0: i32) -> (i32, i32, i32) {
    %c0_i32 = arith.constant 0 : i32
    %c0_i32_0 = arith.constant 0 : i32
    %c0_i32_1 = arith.constant 0 : i32
    return %arg0, %c0_i32, %c0_i32_0 : i32, i32, i32
  }
  func.func @transform_1(%arg0: i32) -> (i32, i32) {
    %c0_i32 = arith.constant 0 : i32
    %c0_i32_0 = arith.constant 0 : i32
    %c0_i32_1 = arith.constant 0 : i32
    return %c0_i32, %c0_i32_0 : i32, i32
  }
  func.func @transform_2(%arg0: i32) -> (i32, i32) {
    %c0_i32 = arith.constant 0 : i32
    %c0_i32_0 = arith.constant 0 : i32
    %c0_i32_1 = arith.constant 0 : i32
    return %c0_i32, %c0_i32_0 : i32, i32
  }
  func.func @transform_3(%arg0: i32) -> (i32, i32, i32) {
    %c0_i32 = arith.constant 0 : i32
    %c0_i32_0 = arith.constant 0 : i32
    %c0_i32_1 = arith.constant 0 : i32
    %c0_i32_2 = arith.constant 0 : i32
    return %c0_i32, %c0_i32_0, %c0_i32_1 : i32, i32, i32
  }
  func.func @transform_4(%arg0: i32) -> (i32, i32) {
    %c0_i32 = arith.constant 0 : i32
    %c0_i32_0 = arith.constant 0 : i32
    %c0_i32_1 = arith.constant 0 : i32
    return %c0_i32, %c0_i32_0 : i32, i32
  }
  func.func @transform_5(%arg0: i32) -> (i32, i32, i32) {
    %c0_i32 = arith.constant 0 : i32
    %c0_i32_0 = arith.constant 0 : i32
    %c0_i32_1 = arith.constant 0 : i32
    %c0_i32_2 = arith.constant 0 : i32
    return %c0_i32, %c0_i32_0, %c0_i32_1 : i32, i32, i32
  }
  func.func @transform_6(%arg0: i32) -> (i32, i32) {
    %c0_i32 = arith.constant 0 : i32
    %c0_i32_0 = arith.constant 0 : i32
    %c0_i32_1 = arith.constant 0 : i32
    return %c0_i32, %c0_i32_0 : i32, i32
  }
  func.func @transform_7(%arg0: i32) -> (i32, i32) {
    %c0_i32 = arith.constant 0 : i32
    %c0_i32_0 = arith.constant 0 : i32
    %c0_i32_1 = arith.constant 0 : i32
    return %c0_i32, %c0_i32_0 : i32, i32
  }
  func.func @transform_8(%arg0: i32) -> (i32, i32) {
    %c0_i32 = arith.constant 0 : i32
    %c0_i32_0 = arith.constant 0 : i32
    %c0_i32_1 = arith.constant 0 : i32
    return %c0_i32, %c0_i32_0 : i32, i32
  }
  func.func @transform_9(%arg0: i32) -> (i32, i32, i32) {
    %c0_i32 = arith.constant 0 : i32
    %c0_i32_0 = arith.constant 0 : i32
    %c0_i32_1 = arith.constant 0 : i32
    return %arg0, %c0_i32, %c0_i32_0 : i32, i32, i32
  }
}

</mosaic_0001>

<llo_original>
// kernel: decoder_block_pallas.1
$region0: #{decoder_block_pallas.1}
  #allocation0 [shape = 'u32[]', space=smem, size = 0x4, offset = 0x4, fixed_abs, tag = 'smem constant byte address 0x4 - core index']
  #allocation1 [shape = 'u32[72,128]{1,0:T(1,128)}', space=vmem, size = 0x9000, scoped, tag = 'internal scratch']
  #allocation2 [shape = 'f32[8,16,4]{2,1,0:T(8,128)}', space=vmem, size = 0x10000, scoped, tag = 'scratch operand']
  #allocation3 [shape = 'f32[290,4]{1,0:T(8,128)}', space=vmem, size = 0x25000, scoped, tag = 'scratch operand']
  #allocation4 [shape = 'f32[256,4]{1,0:T(8,128)}', space=vmem, size = 0x20000, scoped, tag = 'scratch operand']
  %s0 = inlined_call_operand.hbm [shape: f32[2,64,16], index: 0, kind: input, shape index: {}]
  %s1 = inlined_call_operand.vmem [shape: f32[16,4], index: 1, kind: input, shape index: {}]
  %s2 = inlined_call_operand.vmem [shape: f32[1,4], index: 2, kind: input, shape index: {}]
  %s3 = inlined_call_operand.hbm [shape: f32[8,16,8], index: 3, kind: input, shape index: {}]
  %s4 = inlined_call_operand.vmem [shape: f32[16,8], index: 4, kind: input, shape index: {}]
  %s5 = inlined_call_operand.vmem [shape: f32[9,4,4], index: 5, kind: input, shape index: {}]
  %s6 = inlined_call_operand.vmem [shape: f32[1,4], index: 6, kind: input, shape index: {}]
  %s7 = inlined_call_operand.vmem [shape: f32[4,8], index: 7, kind: input, shape index: {}]
  %s8 = inlined_call_operand.vmem [shape: f32[1,8], index: 8, kind: input, shape index: {}]
  %s9 = inlined_call_operand.vmem [shape: f32[2,16,128], index: 9, kind: output, shape index: {}]
  %s10 = sld [smem:[#allocation0]]
  $region77: #{decoder_block_pallas.1} parent=0
    _
  %s12 = ssub.s32 1, %s10
  %s13 = scalar_select 0, %s12, %s10
  $region1: #{decoder_block_pallas.1} parent=0
    #allocation5 [shape = 'u8[65536]{0}', space=vmem, size = 0x10000, scoped, tag = 'input window, operand 0']
    #allocation6 [shape = 's32[2]{0}', space=sflag, size = 0x8, scoped, tag = 'scoped memory for decoder_block_pallas.1']
    #allocation7 [shape = 'u8[65536]{0}', space=vmem, size = 0x10000, scoped, tag = 'input window, operand 3, single buffered']
    #allocation8 [shape = 's32[1]{0}', space=sflag, size = 0x4, scoped, tag = 'scoped memory for decoder_block_pallas.1']
    %14 = vsyncpa [#allocation6], 0
    %s15 = scalar_lea.sflag [#allocation6], 1
    %16 = vsyncpa %s15, 0
    %17 = vsyncpa [#allocation8], 0
    loop: start=0, step=1, limit=4
    $region2: #{decoder_block_pallas.1} parent=1 // loop_pre_header
      _
    $region3: #{decoder_block_pallas.1} parent=1 // loop_header
      %s19 = sphi 0, %s23
      %p20 = scmp.ge.s32.totalorder %s19, 4
      %s29 = sphi 0, %s31
      %s32 = sphi 0, %s29
      %s33 = sphi 0, %s32
      %s49 = sphi 0, %s33
      %s53 = sphi 0, %s53
      %s55 = sphi 0, %s53
      %s56 = sphi 0, %s55
      %s70 = sphi 0, %s56
      %s74 = sphi 0, %s74
      %s76 = sphi 0, %s74
      %s77 = sphi 0, %s76
      %s91 = sphi 0, %s77
      %s95 = sphi 0, %s95
      %s97 = sphi 0, %s95
      %s98 = sphi 0, %s97
      %s112 = sphi 0, %s98
      %s116 = sphi 0, %s116
      %s118 = sphi 0, %s116
      %s119 = sphi 0, %s118
      %s133 = sphi 0, %s119
      %s137 = sphi 0, %s137
      %s139 = sphi 0, %s137
      %s140 = sphi 0, %s139
      %s154 = sphi 0, %s140
      %s158 = sphi 0, %s158
      %s160 = sphi 0, %s158
      %s161 = sphi 0, %s160
      %s175 = sphi 0, %s161
      %s179 = sphi 0, %s179
      %s181 = sphi 0, %s179
      %s182 = sphi 0, %s181
      %s196 = sphi 0, %s182
      %s200 = sphi 0, %s200
      %s202 = sphi 0, %s200
      %s203 = sphi 0, %s202
      %s217 = sphi 0, %s203
      %s223 = sphi 0, %s225
      %s226 = sphi 0, %s223
      %s227 = sphi 0, %s226
      %s243 = sphi 0, %s227
    $region4: #{decoder_block_pallas.1} parent=1 // loop_header_branch
      %22 = sbr.rel (%p20) target = $region8
    $region5: #{decoder_block_pallas.1} parent=1 // loop_body
      %s24 = ssub.s32 %s19, 1
      %s25 = ssub.s32 %s19, 2
      %s26 = sadd.s32 %s19, 1
      %s27 = ssub.s32 %s19, %s26
      %p28 = scmp.eq.s32.totalorder %s27, 0
      %s30 = sadd.s32 %s29, 1
      %s31 = scalar_select %p28, %s29, %s30
      %p34 = pneg %p28
      %p35 = scmp.eq.s32.totalorder %s19, 1
      %p36 = por %p34, %p35
      %p37 = scmp.ne.s32.totalorder %s29, %s32
      %p38 = scmp.eq.s32.totalorder %s19, 0
      %p39 = por %p37, %p38
      %p40 = scmp.ne.s32.totalorder %s29, %s32
      %p41 = scmp.eq.s32.totalorder %s24, 1
      %p42 = por %p40, %p41
      %p43 = scmp.ne.s32.totalorder %s32, %s33
      %p44 = scmp.eq.s32.totalorder %s24, 0
      %p45 = por %p43, %p44
      %p46 = scmp.ne.s32.totalorder %s32, %s33
      %p47 = scmp.eq.s32.totalorder %s25, 1
      %p48 = por %p46, %p47
      %p50 = scmp.ne.s32.totalorder %s33, %s49
      %p51 = scmp.eq.s32.totalorder %s25, 0
      %p52 = por %p50, %p51
      %s54 = sadd.s32 %s53, 1
      %p57 = scmp.eq.s32.totalorder %s19, 1
      %p58 = scmp.ne.s32.totalorder %s53, %s55
      %p59 = scmp.eq.s32.totalorder %s19, 0
      %p60 = por %p58, %p59
      %p61 = scmp.ne.s32.totalorder %s53, %s55
      %p62 = scmp.eq.s32.totalorder %s24, 1
      %p63 = por %p61, %p62
      %p64 = scmp.ne.s32.totalorder %s55, %s56
      %p65 = scmp.eq.s32.totalorder %s24, 0
      %p66 = por %p64, %p65
      %p67 = scmp.ne.s32.totalorder %s55, %s56
      %p68 = scmp.eq.s32.totalorder %s25, 1
      %p69 = por %p67, %p68
      %p71 = scmp.ne.s32.totalorder %s56, %s70
      %p72 = scmp.eq.s32.totalorder %s25, 0
      %p73 = por %p71, %p72
      %s75 = sadd.s32 %s74, 1
      %p78 = scmp.eq.s32.totalorder %s19, 1
      %p79 = scmp.ne.s32.totalorder %s74, %s76
      %p80 = scmp.eq.s32.totalorder %s19, 0
      %p81 = por %p79, %p80
      %p82 = scmp.ne.s32.totalorder %s74, %s76
      %p83 = scmp.eq.s32.totalorder %s24, 1
      %p84 = por %p82, %p83
      %p85 = scmp.ne.s32.totalorder %s76, %s77
      %p86 = scmp.eq.s32.totalorder %s24, 0
      %p87 = por %p85, %p86
      %p88 = scmp.ne.s32.totalorder %s76, %s77
      %p89 = scmp.eq.s32.totalorder %s25, 1
      %p90 = por %p88, %p89
      %p92 = scmp.ne.s32.totalorder %s77, %s91
      %p93 = scmp.eq.s32.totalorder %s25, 0
      %p94 = por %p92, %p93
      %s96 = sadd.s32 %s95, 1
      %p99 = scmp.eq.s32.totalorder %s19, 1
      %p100 = scmp.ne.s32.totalorder %s95, %s97
      %p101 = scmp.eq.s32.totalorder %s19, 0
      %p102 = por %p100, %p101
      %p103 = scmp.ne.s32.totalorder %s95, %s97
      %p104 = scmp.eq.s32.totalorder %s24, 1
      %p105 = por %p103, %p104
      %p106 = scmp.ne.s32.totalorder %s97, %s98
      %p107 = scmp.eq.s32.totalorder %s24, 0
      %p108 = por %p106, %p107
      %p109 = scmp.ne.s32.totalorder %s97, %s98
      %p110 = scmp.eq.s32.totalorder %s25, 1
      %p111 = por %p109, %p110
      %p113 = scmp.ne.s32.totalorder %s98, %s112
      %p114 = scmp.eq.s32.totalorder %s25, 0
      %p115 = por %p113, %p114
      %s117 = sadd.s32 %s116, 1
      %p120 = scmp.eq.s32.totalorder %s19, 1
      %p121 = scmp.ne.s32.totalorder %s116, %s118
      %p122 = scmp.eq.s32.totalorder %s19, 0
      %p123 = por %p121, %p122
      %p124 = scmp.ne.s32.totalorder %s116, %s118
      %p125 = scmp.eq.s32.totalorder %s24, 1
      %p126 = por %p124, %p125
      %p127 = scmp.ne.s32.totalorder %s118, %s119
      %p128 = scmp.eq.s32.totalorder %s24, 0
      %p129 = por %p127, %p128
      %p130 = scmp.ne.s32.totalorder %s118, %s119
      %p131 = scmp.eq.s32.totalorder %s25, 1
      %p132 = por %p130, %p131
      %p134 = scmp.ne.s32.totalorder %s119, %s133
      %p135 = scmp.eq.s32.totalorder %s25, 0
      %p136 = por %p134, %p135
      %s138 = sadd.s32 %s137, 1
      %p141 = scmp.eq.s32.totalorder %s19, 1
      %p142 = scmp.ne.s32.totalorder %s137, %s139
      %p143 = scmp.eq.s32.totalorder %s19, 0
      %p144 = por %p142, %p143
      %p145 = scmp.ne.s32.totalorder %s137, %s139
      %p146 = scmp.eq.s32.totalorder %s24, 1
      %p147 = por %p145, %p146
      %p148 = scmp.ne.s32.totalorder %s139, %s140
      %p149 = scmp.eq.s32.totalorder %s24, 0
      %p150 = por %p148, %p149
      %p151 = scmp.ne.s32.totalorder %s139, %s140
      %p152 = scmp.eq.s32.totalorder %s25, 1
      %p153 = por %p151, %p152
      %p155 = scmp.ne.s32.totalorder %s140, %s154
      %p156 = scmp.eq.s32.totalorder %s25, 0
      %p157 = por %p155, %p156
      %s159 = sadd.s32 %s158, 1
      %p162 = scmp.eq.s32.totalorder %s19, 1
      %p163 = scmp.ne.s32.totalorder %s158, %s160
      %p164 = scmp.eq.s32.totalorder %s19, 0
      %p165 = por %p163, %p164
      %p166 = scmp.ne.s32.totalorder %s158, %s160
      %p167 = scmp.eq.s32.totalorder %s24, 1
      %p168 = por %p166, %p167
      %p169 = scmp.ne.s32.totalorder %s160, %s161
      %p170 = scmp.eq.s32.totalorder %s24, 0
      %p171 = por %p169, %p170
      %p172 = scmp.ne.s32.totalorder %s160, %s161
      %p173 = scmp.eq.s32.totalorder %s25, 1
      %p174 = por %p172, %p173
      %p176 = scmp.ne.s32.totalorder %s161, %s175
      %p177 = scmp.eq.s32.totalorder %s25, 0
      %p178 = por %p176, %p177
      %s180 = sadd.s32 %s179, 1
      %p183 = scmp.eq.s32.totalorder %s19, 1
      %p184 = scmp.ne.s32.totalorder %s179, %s181
      %p185 = scmp.eq.s32.totalorder %s19, 0
      %p186 = por %p184, %p185
      %p187 = scmp.ne.s32.totalorder %s179, %s181
      %p188 = scmp.eq.s32.totalorder %s24, 1
      %p189 = por %p187, %p188
      %p190 = scmp.ne.s32.totalorder %s181, %s182
      %p191 = scmp.eq.s32.totalorder %s24, 0
      %p192 = por %p190, %p191
      %p193 = scmp.ne.s32.totalorder %s181, %s182
      %p194 = scmp.eq.s32.totalorder %s25, 1
      %p195 = por %p193, %p194
      %p197 = scmp.ne.s32.totalorder %s182, %s196
      %p198 = scmp.eq.s32.totalorder %s25, 0
      %p199 = por %p197, %p198
      %s201 = sadd.s32 %s200, 1
      %p204 = scmp.eq.s32.totalorder %s19, 1
      %p205 = scmp.ne.s32.totalorder %s200, %s202
      %p206 = scmp.eq.s32.totalorder %s19, 0
      %p207 = por %p205, %p206
      %p208 = scmp.ne.s32.totalorder %s200, %s202
      %p209 = scmp.eq.s32.totalorder %s24, 1
      %p210 = por %p208, %p209
      %p211 = scmp.ne.s32.totalorder %s202, %s203
      %p212 = scmp.eq.s32.totalorder %s24, 0
      %p213 = por %p211, %p212
      %p214 = scmp.ne.s32.totalorder %s202, %s203
      %p215 = scmp.eq.s32.totalorder %s25, 1
      %p216 = por %p214, %p215
      %p218 = scmp.ne.s32.totalorder %s203, %s217
      %p219 = scmp.eq.s32.totalorder %s25, 0
      %p220 = por %p218, %p219
      %s221 = ssub.s32 %s19, %s26
      %p222 = scmp.eq.s32.totalorder %s221, 0
      %s224 = sadd.s32 %s223, 1
      %s225 = scalar_select %p222, %s223, %s224
      %p228 = pneg %p222
      %p229 = scmp.eq.s32.totalorder %s19, 1
      %p230 = por %p228, %p229
      %p231 = scmp.ne.s32.totalorder %s223, %s226
      %p232 = scmp.eq.s32.totalorder %s19, 0
      %p233 = por %p231, %p232
      %p234 = scmp.ne.s32.totalorder %s223, %s226
      %p235 = scmp.eq.s32.totalorder %s24, 1
      %p236 = por %p234, %p235
      %p237 = scmp.ne.s32.totalorder %s226, %s227
      %p238 = scmp.eq.s32.totalorder %s24, 0
      %p239 = por %p237, %p238
      %p240 = scmp.ne.s32.totalorder %s226, %s227
      %p241 = scmp.eq.s32.totalorder %s25, 1
      %p242 = por %p240, %p241
      %p244 = scmp.ne.s32.totalorder %s227, %s243
      %p245 = scmp.eq.s32.totalorder %s25, 0
      %p246 = por %p244, %p245
      %p247 = scmp.le.s32.totalorder 1, %s19
      %p248 = scmp.lt.s32.totalorder %s19, 3
      %p249 = pnand %p247, %p248
      %p250 = pneg %p249
      // Predicated region
      $region9: #{decoder_block_pallas.1} parent=5 // pred_check
        _
      $region10: #{decoder_block_pallas.1} parent=5 // pred_check_branch
        %252 = sbr.rel (%p249) target = $region12
      $region11: #{decoder_block_pallas.1} parent=5 // pred_region
        %s253 = ssub.s32 %s19, 1
        // Predicated region
        $region13: #{decoder_block_pallas.1} parent=11 // pred_check
          %p254 = pneg %p66
        $region14: #{decoder_block_pallas.1} parent=11 // pred_check_branch
          %256 = sbr.rel (%p254) target = $region16
        $region15: #{decoder_block_pallas.1} parent=11 // pred_region
          _
        $region16: #{decoder_block_pallas.1} parent=11 // pred_fallthru
          _
        // Predicated region
        $region17: #{decoder_block_pallas.1} parent=11 // pred_check
          %p257 = pneg %p87
        $region18: #{decoder_block_pallas.1} parent=11 // pred_check_branch
          %259 = sbr.rel (%p257) target = $region20
        $region19: #{decoder_block_pallas.1} parent=11 // pred_region
          _
        $region20: #{decoder_block_pallas.1} parent=11 // pred_fallthru
          _
        // Predicated region
        $region21: #{decoder_block_pallas.1} parent=11 // pred_check
          %p260 = pneg %p108
        $region22: #{decoder_block_pallas.1} parent=11 // pred_check_branch
          %262 = sbr.rel (%p260) target = $region24
        $region23: #{decoder_block_pallas.1} parent=11 // pred_region
          %264 = vsyncadd [#allocation8], 0
          %s265 = sshll.u32 %s3, 4
          %s266 = int_to_ptr.hbm [resolvable:$true] %s265
          %s267 = sshll.u32 [#allocation7], 4
          %s268 = int_to_ptr.vmem [resolvable:$true] %s267
          %273 = dma.hbm_to_vmem [thread:$0]  %s266, 2048, %s268, [#allocation8], 128, 128, 8
        $region24: #{decoder_block_pallas.1} parent=11 // pred_fallthru
          _
        // Predicated region
        $region25: #{decoder_block_pallas.1} parent=11 // pred_check
          %p274 = pneg %p129
        $region26: #{decoder_block_pallas.1} parent=11 // pred_check_branch
          %276 = sbr.rel (%p274) target = $region28
        $region27: #{decoder_block_pallas.1} parent=11 // pred_region
          _
        $region28: #{decoder_block_pallas.1} parent=11 // pred_fallthru
          _
        // Predicated region
        $region29: #{decoder_block_pallas.1} parent=11 // pred_check
          %p277 = pneg %p150
        $region30: #{decoder_block_pallas.1} parent=11 // pred_check_branch
          %279 = sbr.rel (%p277) target = $region32
        $region31: #{decoder_block_pallas.1} parent=11 // pred_region
          _
        $region32: #{decoder_block_pallas.1} parent=11 // pred_fallthru
          _
        // Predicated region
        $region33: #{decoder_block_pallas.1} parent=11 // pred_check
          %p280 = pneg %p171
        $region34: #{decoder_block_pallas.1} parent=11 // pred_check_branch
          %282 = sbr.rel (%p280) target = $region36
        $region35: #{decoder_block_pallas.1} parent=11 // pred_region
          _
        $region36: #{decoder_block_pallas.1} parent=11 // pred_fallthru
          _
        // Predicated region
        $region37: #{decoder_block_pallas.1} parent=11 // pred_check
          %p283 = pneg %p192
        $region38: #{decoder_block_pallas.1} parent=11 // pred_check_branch
          %285 = sbr.rel (%p283) target = $region40
        $region39: #{decoder_block_pallas.1} parent=11 // pred_region
          _
        $region40: #{decoder_block_pallas.1} parent=11 // pred_fallthru
          _
        // Predicated region
        $region41: #{decoder_block_pallas.1} parent=11 // pred_check
          %p286 = pneg %p213
        $region42: #{decoder_block_pallas.1} parent=11 // pred_check_branch
          %288 = sbr.rel (%p286) target = $region44
        $region43: #{decoder_block_pallas.1} parent=11 // pred_region
          _
        $region44: #{decoder_block_pallas.1} parent=11 // pred_fallthru
          _
      $region12: #{decoder_block_pallas.1} parent=5 // pred_fallthru
        _
      %p289 = scmp.lt.s32.totalorder %s19, 2
      // Predicated region
      $region45: #{decoder_block_pallas.1} parent=5 // pred_check
        %p290 = pneg %p289
      $region46: #{decoder_block_pallas.1} parent=5 // pred_check_branch
        %292 = sbr.rel (%p290) target = $region48
      $region47: #{decoder_block_pallas.1} parent=5 // pred_region
        // Predicated region
        $region49: #{decoder_block_pallas.1} parent=47 // pred_check
          %p293 = pneg %p39
        $region50: #{decoder_block_pallas.1} parent=47 // pred_check_branch
          %295 = sbr.rel (%p293) target = $region52
        $region51: #{decoder_block_pallas.1} parent=47 // pred_region
          %s296 = sand.u32 %s29, 1
          %s297 = scalar_lea.sflag [#allocation6], %s296
          %s298 = sand.u32 %s29, 1
          %s299 = smul.addr %s298, 64
          %s300 = scalar_lea.vmem [#allocation5], %s299
          %302 = vsyncadd %s297, 0
          %s303 = smul.addr %s19, 8
          %s304 = smul.addr %s303, 8
          %s305 = scalar_lea.hbm %s0, %s304
          %s306 = sshll.u32 %s305, 4
          %s307 = int_to_ptr.hbm [resolvable:$true] %s306
          %s308 = sshll.u32 %s300, 4
          %s309 = int_to_ptr.vmem [resolvable:$true] %s308
          %314 = dma.hbm_to_vmem [thread:$0]  %s307, 1024, %s309, %s297, 128, 128, 8
        $region52: #{decoder_block_pallas.1} parent=47 // pred_fallthru
          _
      $region48: #{decoder_block_pallas.1} parent=5 // pred_fallthru
        _
      %p315 = scmp.le.s32.totalorder 1, %s19
      %p316 = scmp.lt.s32.totalorder %s19, 3
      %p317 = pnand %p315, %p316
      %p318 = pneg %p317
      // Predicated region
      $region53: #{decoder_block_pallas.1} parent=5 // pred_check
        _
      $region54: #{decoder_block_pallas.1} parent=5 // pred_check_branch
        %320 = sbr.rel (%p317) target = $region56
      $region55: #{decoder_block_pallas.1} parent=5 // pred_region
        %s321 = ssub.s32 %s19, 1
        %s322 = sand.u32 %s32, 1
        %s323 = scalar_lea.sflag [#allocation6], %s322
        %s324 = sand.u32 %s32, 1
        %s325 = smul.addr %s324, 64
        %s326 = scalar_lea.vmem [#allocation5], %s325
        // Predicated region
        $region57: #{decoder_block_pallas.1} parent=55 // pred_check
          %p327 = pneg %p45
        $region58: #{decoder_block_pallas.1} parent=55 // pred_check_branch
          %329 = sbr.rel (%p327) target = $region60
        $region59: #{decoder_block_pallas.1} parent=55 // pred_region
          %331 = dma.done %s323, 1024
        $region60: #{decoder_block_pallas.1} parent=55 // pred_fallthru
          _
        // Predicated region
        $region61: #{decoder_block_pallas.1} parent=55 // pred_check
          %p332 = pneg %p108
        $region62: #{decoder_block_pallas.1} parent=55 // pred_check_branch
          %334 = sbr.rel (%p332) target = $region64
        $region63: #{decoder_block_pallas.1} parent=55 // pred_region
          %336 = dma.done [#allocation8], 2048
        $region64: #{decoder_block_pallas.1} parent=55 // pred_fallthru
          _
        %s337 = sand.u32 %s32, 1
        %s338 = scalar_lea.sflag [#allocation6], %s337
        %s339 = sand.u32 %s32, 1
        %s340 = smul.addr %s339, 64
        %s341 = scalar_lea.vmem [#allocation5], %s340
        %p342 = pneg %p45
        %p343 = pneg %p42
        %p344 = pneg %p66
        %p345 = pneg %p63
        %p346 = pneg %p87
        %p347 = pneg %p84
        %p348 = pneg %p108
        %p349 = pneg %p105
        %p350 = pneg %p129
        %p351 = pneg %p126
        %p352 = pneg %p150
        %p353 = pneg %p147
        %p354 = pneg %p171
        %p355 = pneg %p168
        %p356 = pneg %p192
        %p357 = pneg %p189
        %p358 = pneg %p213
        %p359 = pneg %p210
        %p360 = pneg %p239
        %p361 = pneg %p236
        %p362 = scmp.lt.s32.totalorder %s24, 1
        %s363 = scalar_select %p362, %s24, 1
        %s364 = smul.addr %s363, 2
        %s365 = smul.addr %s364, 8
        %s366 = scalar_lea.vmem %s9, %s365
        %p367 = scmp.lt.s32.totalorder %s24, 1
        %s368 = scalar_select %p367, %s24, 1
        %s369 = smul.addr %s368, 2
        %s370 = smul.addr %s369, 8
        %s371 = scalar_lea.vmem %s9, %s370
        %v372 = vld [vmem:[%s326] sm:$0xff]
        %v373 = vld [vmem:[%s326 + $0x8] sm:$0xff]
        %v374 = vld [vmem:[%s326 + $0x10] sm:$0xff]
        %v375 = vld [vmem:[%s326 + $0x18] sm:$0xff]
        %v376 = vld [vmem:[%s326 + $0x20] sm:$0xff]
        %v377 = vld [vmem:[%s326 + $0x28] sm:$0xff]
        %v378 = vld [vmem:[%s326 + $0x30] sm:$0xff]
        %v379 = vld [vmem:[%s326 + $0x38] sm:$0xff]
        %v380 = vld [vmem:[%s1] sm:$0xff]
        %v381 = vld [vmem:[%s1 + $0x8] sm:$0xff]
        %v382 = vld [vmem:[%s2] sm:$0x1]
        %v384 = vperm.slane %v382, 0
        %vm386 = vcmask 130048
        %v388 = vsel %vm386, %v372, 0
        %v391 = vsel %vm386, %v373, 0
        %v394 = vsel %vm386, %v374, 0
        %v397 = vsel %vm386, %v375, 0
        %v400 = vsel %vm386, %v376, 0
        %v403 = vsel %vm386, %v377, 0
        %v406 = vsel %vm386, %v378, 0
        %v409 = vsel %vm386, %v379, 0
        %411 = vmatpush.msra.mxu0 0.0
        %412 = vmatpush.msra.mxu0 0.0
        %413 = vmatpush.msra.mxu0 0.0
        %414 = vmatpush.msra.mxu0 0.0
        %415 = vmatpush.msra.mxu0 0.0
        %416 = vmatpush.msra.mxu0 0.0
        %417 = vmatpush.msra.mxu0 0.0
        %418 = vmatpush.msra.mxu0 0.0
        %419 = vmatpush.msra.mxu0 0.0
        %420 = vmatpush.msra.mxu0 0.0
        %421 = vmatpush.msra.mxu0 0.0
        %422 = vmatpush.msra.mxu0 0.0
        %423 = vmatpush.msra.mxu0 0.0
        %424 = vmatpush.msra.mxu0 0.0
        %425 = vmatpush.msra.mxu0 %v381
        %426 = vmatpush.msra.mxu0 %v380
        %427 = vmatmul.f32.gmra.mxu0 %v388
        %v428 = vpop.f32.mrf.mxu0
        %v429 = vadd.f32 %v384, %v428
        %430 = vmatmul.f32.gmra.mxu0 %v391
        %v431 = vpop.f32.mrf.mxu0
        %v432 = vadd.f32 %v384, %v431
        %433 = vmatmul.f32.gmra.mxu0 %v394
        %v434 = vpop.f32.mrf.mxu0
        %v435 = vadd.f32 %v384, %v434
        %436 = vmatmul.f32.gmra.mxu0 %v397
        %v437 = vpop.f32.mrf.mxu0
        %v438 = vadd.f32 %v384, %v437
        %439 = vmatmul.f32.gmra.mxu0 %v400
        %v440 = vpop.f32.mrf.mxu0
        %v441 = vadd.f32 %v384, %v440
        %442 = vmatmul.f32.gmra.mxu0 %v403
        %v443 = vpop.f32.mrf.mxu0
        %v444 = vadd.f32 %v384, %v443
        %445 = vmatmul.f32.gmra.mxu0 %v406
        %v446 = vpop.f32.mrf.mxu0
        %v447 = vadd.f32 %v384, %v446
        %448 = vmatmul.f32.gmra.mxu0 %v409
        %v449 = vpop.f32.mrf.mxu0
        %v450 = vadd.f32 %v384, %v449
        %451 = vdwg.mxu0
        %v452 = vmax.f32 %v429, 0.0
        %v453 = vmax.f32 %v432, 0.0
        %v454 = vmax.f32 %v435, 0.0
        %v455 = vmax.f32 %v438, 0.0
        %v456 = vmax.f32 %v441, 0.0
        %v457 = vmax.f32 %v444, 0.0
        %v458 = vmax.f32 %v447, 0.0
        %v459 = vmax.f32 %v450, 0.0
        %v460 = vld [vmem:[#allocation7] sm:$0xff]
        %v461 = vld [vmem:[#allocation7 + $0x8] sm:$0xff]
        %v462 = vld [vmem:[#allocation7 + $0x10] sm:$0xff]
        %v463 = vld [vmem:[#allocation7 + $0x18] sm:$0xff]
        %v464 = vld [vmem:[#allocation7 + $0x20] sm:$0xff]
        %v465 = vld [vmem:[#allocation7 + $0x28] sm:$0xff]
        %v466 = vld [vmem:[#allocation7 + $0x30] sm:$0xff]
        %v467 = vld [vmem:[#allocation7 + $0x38] sm:$0xff]
        %v468 = vld [vmem:[#allocation7 + $0x40] sm:$0xff]
        %v469 = vld [vmem:[#allocation7 + $0x48] sm:$0xff]
        %v470 = vld [vmem:[#allocation7 + $0x50] sm:$0xff]
        %v471 = vld [vmem:[#allocation7 + $0x58] sm:$0xff]
        %v472 = vld [vmem:[#allocation7 + $0x60] sm:$0xff]
        %v473 = vld [vmem:[#allocation7 + $0x68] sm:$0xff]
        %v474 = vld [vmem:[#allocation7 + $0x70] sm:$0xff]
        %v475 = vld [vmem:[#allocation7 + $0x78] sm:$0xff]
        %vm476 = vcmask 64512
        %v478 = vsel %vm476, %v460, 0
        %v481 = vsel %vm476, %v461, 0
        %483 = vmatpush.msra.mxu0 0.0
        %484 = vmatpush.msra.mxu0 0.0
        %485 = vmatpush.msra.mxu0 0.0
        %486 = vmatpush.msra.mxu0 0.0
        %487 = vmatpush.msra.mxu0 0.0
        %488 = vmatpush.msra.mxu0 0.0
        %489 = vmatpush.msra.mxu0 0.0
        %490 = vmatpush.msra.mxu0 0.0
        %491 = vmatpush.msra.mxu0 0.0
        %492 = vmatpush.msra.mxu0 0.0
        %493 = vmatpush.msra.mxu0 0.0
        %494 = vmatpush.msra.mxu0 0.0
        %495 = vmatpush.msra.mxu0 0.0
        %496 = vmatpush.msra.mxu0 0.0
        %497 = vmatpush.msra.mxu0 0.0
        %498 = vmatpush.msra.mxu0 %v452
        %499 = vmatmul.f32.gmra.mxu0 %v478
        %v500 = vpop.f32.mrf.mxu0
        %v501 = vadd.f32 0.0, %v500
        %502 = vmatmul.f32.gmra.mxu0 %v481
        %v503 = vpop.f32.mrf.mxu0
        %v504 = vadd.f32 0.0, %v503
        %505 = vdwg.mxu0
        %v507 = vsel %vm476, %v462, 0
        %v510 = vsel %vm476, %v463, 0
        %512 = vmatpush.msra.mxu0 0.0
        %513 = vmatpush.msra.mxu0 0.0
        %514 = vmatpush.msra.mxu0 0.0
        %515 = vmatpush.msra.mxu0 0.0
        %516 = vmatpush.msra.mxu0 0.0
        %517 = vmatpush.msra.mxu0 0.0
        %518 = vmatpush.msra.mxu0 0.0
        %519 = vmatpush.msra.mxu0 0.0
        %520 = vmatpush.msra.mxu0 0.0
        %521 = vmatpush.msra.mxu0 0.0
        %522 = vmatpush.msra.mxu0 0.0
        %523 = vmatpush.msra.mxu0 0.0
        %524 = vmatpush.msra.mxu0 0.0
        %525 = vmatpush.msra.mxu0 0.0
        %526 = vmatpush.msra.mxu0 0.0
        %527 = vmatpush.msra.mxu0 %v453
        %528 = vmatmul.f32.gmra.mxu0 %v507
        %v529 = vpop.f32.mrf.mxu0
        %v530 = vadd.f32 0.0, %v529
        %531 = vmatmul.f32.gmra.mxu0 %v510
        %v532 = vpop.f32.mrf.mxu0
        %v533 = vadd.f32 0.0, %v532
        %534 = vdwg.mxu0
        %v536 = vsel %vm476, %v464, 0
        %v539 = vsel %vm476, %v465, 0
        %541 = vmatpush.msra.mxu0 0.0
        %542 = vmatpush.msra.mxu0 0.0
        %543 = vmatpush.msra.mxu0 0.0
        %544 = vmatpush.msra.mxu0 0.0
        %545 = vmatpush.msra.mxu0 0.0
        %546 = vmatpush.msra.mxu0 0.0
        %547 = vmatpush.msra.mxu0 0.0
        %548 = vmatpush.msra.mxu0 0.0
        %549 = vmatpush.msra.mxu0 0.0
        %550 = vmatpush.msra.mxu0 0.0
        %551 = vmatpush.msra.mxu0 0.0
        %552 = vmatpush.msra.mxu0 0.0
        %553 = vmatpush.msra.mxu0 0.0
        %554 = vmatpush.msra.mxu0 0.0
        %555 = vmatpush.msra.mxu0 0.0
        %556 = vmatpush.msra.mxu0 %v454
        %557 = vmatmul.f32.gmra.mxu0 %v536
        %v558 = vpop.f32.mrf.mxu0
        %v559 = vadd.f32 0.0, %v558
        %560 = vmatmul.f32.gmra.mxu0 %v539
        %v561 = vpop.f32.mrf.mxu0
        %v562 = vadd.f32 0.0, %v561
        %563 = vdwg.mxu0
        %v565 = vsel %vm476, %v466, 0
        %v568 = vsel %vm476, %v467, 0
        %570 = vmatpush.msra.mxu0 0.0
        %571 = vmatpush.msra.mxu0 0.0
        %572 = vmatpush.msra.mxu0 0.0
        %573 = vmatpush.msra.mxu0 0.0
        %574 = vmatpush.msra.mxu0 0.0
        %575 = vmatpush.msra.mxu0 0.0
        %576 = vmatpush.msra.mxu0 0.0
        %577 = vmatpush.msra.mxu0 0.0
        %578 = vmatpush.msra.mxu0 0.0
        %579 = vmatpush.msra.mxu0 0.0
        %580 = vmatpush.msra.mxu0 0.0
        %581 = vmatpush.msra.mxu0 0.0
        %582 = vmatpush.msra.mxu0 0.0
        %583 = vmatpush.msra.mxu0 0.0
        %584 = vmatpush.msra.mxu0 0.0
        %585 = vmatpush.msra.mxu0 %v455
        %586 = vmatmul.f32.gmra.mxu0 %v565
        %v587 = vpop.f32.mrf.mxu0
        %v588 = vadd.f32 0.0, %v587
        %589 = vmatmul.f32.gmra.mxu0 %v568
        %v590 = vpop.f32.mrf.mxu0
        %v591 = vadd.f32 0.0, %v590
        %592 = vdwg.mxu0
        %v594 = vsel %vm476, %v468, 0
        %v597 = vsel %vm476, %v469, 0
        %599 = vmatpush.msra.mxu0 0.0
        %600 = vmatpush.msra.mxu0 0.0
        %601 = vmatpush.msra.mxu0 0.0
        %602 = vmatpush.msra.mxu0 0.0
        %603 = vmatpush.msra.mxu0 0.0
        %604 = vmatpush.msra.mxu0 0.0
        %605 = vmatpush.msra.mxu0 0.0
        %606 = vmatpush.msra.mxu0 0.0
        %607 = vmatpush.msra.mxu0 0.0
        %608 = vmatpush.msra.mxu0 0.0
        %609 = vmatpush.msra.mxu0 0.0
        %610 = vmatpush.msra.mxu0 0.0
        %611 = vmatpush.msra.mxu0 0.0
        %612 = vmatpush.msra.mxu0 0.0
        %613 = vmatpush.msra.mxu0 0.0
        %614 = vmatpush.msra.mxu0 %v456
        %615 = vmatmul.f32.gmra.mxu0 %v594
        %v616 = vpop.f32.mrf.mxu0
        %v617 = vadd.f32 0.0, %v616
        %618 = vmatmul.f32.gmra.mxu0 %v597
        %v619 = vpop.f32.mrf.mxu0
        %v620 = vadd.f32 0.0, %v619
        %621 = vdwg.mxu0
        %v623 = vsel %vm476, %v470, 0
        %v626 = vsel %vm476, %v471, 0
        %628 = vmatpush.msra.mxu0 0.0
        %629 = vmatpush.msra.mxu0 0.0
        %630 = vmatpush.msra.mxu0 0.0
        %631 = vmatpush.msra.mxu0 0.0
        %632 = vmatpush.msra.mxu0 0.0
        %633 = vmatpush.msra.mxu0 0.0
        %634 = vmatpush.msra.mxu0 0.0
        %635 = vmatpush.msra.mxu0 0.0
        %636 = vmatpush.msra.mxu0 0.0
        %637 = vmatpush.msra.mxu0 0.0
        %638 = vmatpush.msra.mxu0 0.0
        %639 = vmatpush.msra.mxu0 0.0
        %640 = vmatpush.msra.mxu0 0.0
        %641 = vmatpush.msra.mxu0 0.0
        %642 = vmatpush.msra.mxu0 0.0
        %643 = vmatpush.msra.mxu0 %v457
        %644 = vmatmul.f32.gmra.mxu0 %v623
        %v645 = vpop.f32.mrf.mxu0
        %v646 = vadd.f32 0.0, %v645
        %647 = vmatmul.f32.gmra.mxu0 %v626
        %v648 = vpop.f32.mrf.mxu0
        %v649 = vadd.f32 0.0, %v648
        %650 = vdwg.mxu0
        %v652 = vsel %vm476, %v472, 0
        %v655 = vsel %vm476, %v473, 0
        %657 = vmatpush.msra.mxu0 0.0
        %658 = vmatpush.msra.mxu0 0.0
        %659 = vmatpush.msra.mxu0 0.0
        %660 = vmatpush.msra.mxu0 0.0
        %661 = vmatpush.msra.mxu0 0.0
        %662 = vmatpush.msra.mxu0 0.0
        %663 = vmatpush.msra.mxu0 0.0
        %664 = vmatpush.msra.mxu0 0.0
        %665 = vmatpush.msra.mxu0 0.0
        %666 = vmatpush.msra.mxu0 0.0
        %667 = vmatpush.msra.mxu0 0.0
        %668 = vmatpush.msra.mxu0 0.0
        %669 = vmatpush.msra.mxu0 0.0
        %670 = vmatpush.msra.mxu0 0.0
        %671 = vmatpush.msra.mxu0 0.0
        %672 = vmatpush.msra.mxu0 %v458
        %673 = vmatmul.f32.gmra.mxu0 %v652
        %v674 = vpop.f32.mrf.mxu0
        %v675 = vadd.f32 0.0, %v674
        %676 = vmatmul.f32.gmra.mxu0 %v655
        %v677 = vpop.f32.mrf.mxu0
        %v678 = vadd.f32 0.0, %v677
        %679 = vdwg.mxu0
        %v681 = vsel %vm476, %v474, 0
        %v684 = vsel %vm476, %v475, 0
        %686 = vmatpush.msra.mxu0 0.0
        %687 = vmatpush.msra.mxu0 0.0
        %688 = vmatpush.msra.mxu0 0.0
        %689 = vmatpush.msra.mxu0 0.0
        %690 = vmatpush.msra.mxu0 0.0
        %691 = vmatpush.msra.mxu0 0.0
        %692 = vmatpush.msra.mxu0 0.0
        %693 = vmatpush.msra.mxu0 0.0
        %694 = vmatpush.msra.mxu0 0.0
        %695 = vmatpush.msra.mxu0 0.0
        %696 = vmatpush.msra.mxu0 0.0
        %697 = vmatpush.msra.mxu0 0.0
        %698 = vmatpush.msra.mxu0 0.0
        %699 = vmatpush.msra.mxu0 0.0
        %700 = vmatpush.msra.mxu0 0.0
        %701 = vmatpush.msra.mxu0 %v459
        %702 = vmatmul.f32.gmra.mxu0 %v681
        %v703 = vpop.f32.mrf.mxu0
        %v704 = vadd.f32 0.0, %v703
        %705 = vmatmul.f32.gmra.mxu0 %v684
        %v706 = vpop.f32.mrf.mxu0
        %v707 = vadd.f32 0.0, %v706
        %708 = vdwg.mxu0
        %vm709 = vcmask 31744
        %710 = vst.msk [vmem:[#allocation2] sm:$0xff] %vm709, %v501
        %711 = vst.msk [vmem:[#allocation2 + $0x8] sm:$0xff] %vm709, %v504
        %712 = vst.msk [vmem:[#allocation2 + $0x10] sm:$0xff] %vm709, %v530
        %713 = vst.msk [vmem:[#allocation2 + $0x18] sm:$0xff] %vm709, %v533
        %714 = vst.msk [vmem:[#allocation2 + $0x20] sm:$0xff] %vm709, %v559
        %715 = vst.msk [vmem:[#allocation2 + $0x28] sm:$0xff] %vm709, %v562
        %716 = vst.msk [vmem:[#allocation2 + $0x30] sm:$0xff] %vm709, %v588
        %717 = vst.msk [vmem:[#allocation2 + $0x38] sm:$0xff] %vm709, %v591
        %718 = vst.msk [vmem:[#allocation2 + $0x40] sm:$0xff] %vm709, %v617
        %719 = vst.msk [vmem:[#allocation2 + $0x48] sm:$0xff] %vm709, %v620
        %720 = vst.msk [vmem:[#allocation2 + $0x50] sm:$0xff] %vm709, %v646
        %721 = vst.msk [vmem:[#allocation2 + $0x58] sm:$0xff] %vm709, %v649
        %722 = vst.msk [vmem:[#allocation2 + $0x60] sm:$0xff] %vm709, %v675
        %723 = vst.msk [vmem:[#allocation2 + $0x68] sm:$0xff] %vm709, %v678
        %724 = vst.msk [vmem:[#allocation2 + $0x70] sm:$0xff] %vm709, %v704
        %725 = vst.msk [vmem:[#allocation2 + $0x78] sm:$0xff] %vm709, %v707
        %726 = vst.msk [vmem:[#allocation3] sm:$0xff] %vm709, 0.0
        %727 = vst.msk [vmem:[#allocation3 + $0x8] sm:$0xff] %vm709, 0.0
        %vm728 = vcmask 24576
        %729 = vst.msk [vmem:[#allocation3 + $0x10] sm:$0x1] %vm728, 0.0
        %730 = vst.msk [vmem:[#allocation3 + $0x111] sm:$0xff] %vm709, 0.0
        %731 = vst.msk [vmem:[#allocation3 + $0x119] sm:$0xff] %vm709, 0.0
        %732 = vst.msk [vmem:[#allocation3 + $0x121] sm:$0x1] %vm728, 0.0
        %v733 = vld [vmem:[%s4] sm:$0xff]
        %v734 = vld [vmem:[%s4 + $0x8] sm:$0xff]
        %v735 = vld [vmem:[#allocation2] sm:$0x1]
        %v736 = vld [vmem:[#allocation2 + $0x10] sm:$0x1]
        %v737 = vld [vmem:[#allocation2 + $0x20] sm:$0x1]
        %v738 = vld [vmem:[#allocation2 + $0x30] sm:$0x1]
        %v739 = vld [vmem:[#allocation2 + $0x40] sm:$0x1]
        %v740 = vld [vmem:[#allocation2 + $0x50] sm:$0x1]
        %v741 = vld [vmem:[#allocation2 + $0x60] sm:$0x1]
        %v742 = vld [vmem:[#allocation2 + $0x70] sm:$0x1]
        %v751 = vrot.slane %v736, 7
        %vm752 = vcmask 1041409
        %v753 = vsel %vm752, %v751, %v735
        %v754 = vrot.slane %v737, 6
        %vm755 = vcmask 1042434
        %v756 = vsel %vm755, %v754, %v753
        %v757 = vrot.slane %v738, 5
        %vm758 = vcmask 1043459
        %v759 = vsel %vm758, %v757, %v756
        %v760 = vrot.slane %v739, 4
        %vm761 = vcmask 1044484
        %v762 = vsel %vm761, %v760, %v759
        %v763 = vrot.slane %v740, 3
        %vm764 = vcmask 1045509
        %v765 = vsel %vm764, %v763, %v762
        %v766 = vrot.slane %v741, 2
        %vm767 = vcmask 1046534
        %v768 = vsel %vm767, %v766, %v765
        %v769 = vrot.slane %v742, 1
        %vm770 = vcmask 1047559
        %v771 = vsel %vm770, %v769, %v768
        %v774 = vsel %vm476, %v733, 0
        %v777 = vsel %vm476, %v734, 0
        %779 = vmatpush.msra.mxu0 0.0
        %780 = vmatpush.msra.mxu0 0.0
        %781 = vmatpush.msra.mxu0 0.0
        %782 = vmatpush.msra.mxu0 0.0
        %783 = vmatpush.msra.mxu0 0.0
        %784 = vmatpush.msra.mxu0 0.0
        %785 = vmatpush.msra.mxu0 0.0
        %786 = vmatpush.msra.mxu0 0.0
        %787 = vmatpush.msra.mxu0 0.0
        %788 = vmatpush.msra.mxu0 0.0
        %789 = vmatpush.msra.mxu0 0.0
        %790 = vmatpush.msra.mxu0 0.0
        %791 = vmatpush.msra.mxu0 0.0
        %792 = vmatpush.msra.mxu0 0.0
        %793 = vmatpush.msra.mxu0 0.0
        %794 = vmatpush.msra.mxu0 %v771
        %795 = vmatmul.f32.gmra.mxu0 %v774
        %v796 = vpop.f32.mrf.mxu0
        %v797 = vadd.f32 0.0, %v796
        %798 = vmatmul.f32.gmra.mxu0 %v777
        %v799 = vpop.f32.mrf.mxu0
        %v800 = vadd.f32 0.0, %v799
        %801 = vdwg.mxu0
        %802 = vst.msk [vmem:[#allocation3 + $0x11] sm:$0xff] %vm709, %v797
        %803 = vst.msk [vmem:[#allocation3 + $0x19] sm:$0xff] %vm709, %v800
        %v804 = vld [vmem:[%s4] sm:$0xff]
        %v805 = vld [vmem:[%s4 + $0x8] sm:$0xff]
        %v806 = vld [vmem:[#allocation2 + $0x1] sm:$0x1]
        %v807 = vld [vmem:[#allocation2 + $0x11] sm:$0x1]
        %v808 = vld [vmem:[#allocation2 + $0x21] sm:$0x1]
        %v809 = vld [vmem:[#allocation2 + $0x31] sm:$0x1]
        %v810 = vld [vmem:[#allocation2 + $0x41] sm:$0x1]
        %v811 = vld [vmem:[#allocation2 + $0x51] sm:$0x1]
        %v812 = vld [vmem:[#allocation2 + $0x61] sm:$0x1]
        %v813 = vld [vmem:[#allocation2 + $0x71] sm:$0x1]
        %v822 = vrot.slane %v807, 7
        %v823 = vsel %vm752, %v822, %v806
        %v824 = vrot.slane %v808, 6
        %v825 = vsel %vm755, %v824, %v823
        %v826 = vrot.slane %v809, 5
        %v827 = vsel %vm758, %v826, %v825
        %v828 = vrot.slane %v810, 4
        %v829 = vsel %vm761, %v828, %v827
        %v830 = vrot.slane %v811, 3
        %v831 = vsel %vm764, %v830, %v829
        %v832 = vrot.slane %v812, 2
        %v833 = vsel %vm767, %v832, %v831
        %v834 = vrot.slane %v813, 1
        %v835 = vsel %vm770, %v834, %v833
        %v838 = vsel %vm476, %v804, 0
        %v841 = vsel %vm476, %v805, 0
        %843 = vmatpush.msra.mxu0 0.0
        %844 = vmatpush.msra.mxu0 0.0
        %845 = vmatpush.msra.mxu0 0.0
        %846 = vmatpush.msra.mxu0 0.0
        %847 = vmatpush.msra.mxu0 0.0
        %848 = vmatpush.msra.mxu0 0.0
        %849 = vmatpush.msra.mxu0 0.0
        %850 = vmatpush.msra.mxu0 0.0
        %851 = vmatpush.msra.mxu0 0.0
        %852 = vmatpush.msra.mxu0 0.0
        %853 = vmatpush.msra.mxu0 0.0
        %854 = vmatpush.msra.mxu0 0.0
        %855 = vmatpush.msra.mxu0 0.0
        %856 = vmatpush.msra.mxu0 0.0
        %857 = vmatpush.msra.mxu0 0.0
        %858 = vmatpush.msra.mxu0 %v835
        %859 = vmatmul.f32.gmra.mxu0 %v838
        %v860 = vpop.f32.mrf.mxu0
        %v861 = vadd.f32 0.0, %v860
        %862 = vmatmul.f32.gmra.mxu0 %v841
        %v863 = vpop.f32.mrf.mxu0
        %v864 = vadd.f32 0.0, %v863
        %865 = vdwg.mxu0
        %866 = vst.msk [vmem:[#allocation3 + $0x21] sm:$0xff] %vm709, %v861
        %867 = vst.msk [vmem:[#allocation3 + $0x29] sm:$0xff] %vm709, %v864
        %v868 = vld [vmem:[%s4] sm:$0xff]
        %v869 = vld [vmem:[%s4 + $0x8] sm:$0xff]
        %v870 = vld [vmem:[#allocation2 + $0x2] sm:$0x1]
        %v871 = vld [vmem:[#allocation2 + $0x12] sm:$0x1]
        %v872 = vld [vmem:[#allocation2 + $0x22] sm:$0x1]
        %v873 = vld [vmem:[#allocation2 + $0x32] sm:$0x1]
        %v874 = vld [vmem:[#allocation2 + $0x42] sm:$0x1]
        %v875 = vld [vmem:[#allocation2 + $0x52] sm:$0x1]
        %v876 = vld [vmem:[#allocation2 + $0x62] sm:$0x1]
        %v877 = vld [vmem:[#allocation2 + $0x72] sm:$0x1]
        %v886 = vrot.slane %v871, 7
        %v887 = vsel %vm752, %v886, %v870
        %v888 = vrot.slane %v872, 6
        %v889 = vsel %vm755, %v888, %v887
        %v890 = vrot.slane %v873, 5
        %v891 = vsel %vm758, %v890, %v889
        %v892 = vrot.slane %v874, 4
        %v893 = vsel %vm761, %v892, %v891
        %v894 = vrot.slane %v875, 3
        %v895 = vsel %vm764, %v894, %v893
        %v896 = vrot.slane %v876, 2
        %v897 = vsel %vm767, %v896, %v895
        %v898 = vrot.slane %v877, 1
        %v899 = vsel %vm770, %v898, %v897
        %v902 = vsel %vm476, %v868, 0
        %v905 = vsel %vm476, %v869, 0
        %907 = vmatpush.msra.mxu0 0.0
        %908 = vmatpush.msra.mxu0 0.0
        %909 = vmatpush.msra.mxu0 0.0
        %910 = vmatpush.msra.mxu0 0.0
        %911 = vmatpush.msra.mxu0 0.0
        %912 = vmatpush.msra.mxu0 0.0
        %913 = vmatpush.msra.mxu0 0.0
        %914 = vmatpush.msra.mxu0 0.0
        %915 = vmatpush.msra.mxu0 0.0
        %916 = vmatpush.msra.mxu0 0.0
        %917 = vmatpush.msra.mxu0 0.0
        %918 = vmatpush.msra.mxu0 0.0
        %919 = vmatpush.msra.mxu0 0.0
        %920 = vmatpush.msra.mxu0 0.0
        %921 = vmatpush.msra.mxu0 0.0
        %922 = vmatpush.msra.mxu0 %v899
        %923 = vmatmul.f32.gmra.mxu0 %v902
        %v924 = vpop.f32.mrf.mxu0
        %v925 = vadd.f32 0.0, %v924
        %926 = vmatmul.f32.gmra.mxu0 %v905
        %v927 = vpop.f32.mrf.mxu0
        %v928 = vadd.f32 0.0, %v927
        %929 = vdwg.mxu0
        %930 = vst.msk [vmem:[#allocation3 + $0x31] sm:$0xff] %vm709, %v925
        %931 = vst.msk [vmem:[#allocation3 + $0x39] sm:$0xff] %vm709, %v928
        %v932 = vld [vmem:[%s4] sm:$0xff]
        %v933 = vld [vmem:[%s4 + $0x8] sm:$0xff]
        %v934 = vld [vmem:[#allocation2 + $0x3] sm:$0x1]
        %v935 = vld [vmem:[#allocation2 + $0x13] sm:$0x1]
        %v936 = vld [vmem:[#allocation2 + $0x23] sm:$0x1]
        %v937 = vld [vmem:[#allocation2 + $0x33] sm:$0x1]
        %v938 = vld [vmem:[#allocation2 + $0x43] sm:$0x1]
        %v939 = vld [vmem:[#allocation2 + $0x53] sm:$0x1]
        %v940 = vld [vmem:[#allocation2 + $0x63] sm:$0x1]
        %v941 = vld [vmem:[#allocation2 + $0x73] sm:$0x1]
        %v950 = vrot.slane %v935, 7
        %v951 = vsel %vm752, %v950, %v934
        %v952 = vrot.slane %v936, 6
        %v953 = vsel %vm755, %v952, %v951
        %v954 = vrot.slane %v937, 5
        %v955 = vsel %vm758, %v954, %v953
        %v956 = vrot.slane %v938, 4
        %v957 = vsel %vm761, %v956, %v955
        %v958 = vrot.slane %v939, 3
        %v959 = vsel %vm764, %v958, %v957
        %v960 = vrot.slane %v940, 2
        %v961 = vsel %vm767, %v960, %v959
        %v962 = vrot.slane %v941, 1
        %v963 = vsel %vm770, %v962, %v961
        %v966 = vsel %vm476, %v932, 0
        %v969 = vsel %vm476, %v933, 0
        %971 = vmatpush.msra.mxu0 0.0
        %972 = vmatpush.msra.mxu0 0.0
        %973 = vmatpush.msra.mxu0 0.0
        %974 = vmatpush.msra.mxu0 0.0
        %975 = vmatpush.msra.mxu0 0.0
        %976 = vmatpush.msra.mxu0 0.0
        %977 = vmatpush.msra.mxu0 0.0
        %978 = vmatpush.msra.mxu0 0.0
        %979 = vmatpush.msra.mxu0 0.0
        %980 = vmatpush.msra.mxu0 0.0
        %981 = vmatpush.msra.mxu0 0.0
        %982 = vmatpush.msra.mxu0 0.0
        %983 = vmatpush.msra.mxu0 0.0
        %984 = vmatpush.msra.mxu0 0.0
        %985 = vmatpush.msra.mxu0 0.0
        %986 = vmatpush.msra.mxu0 %v963
        %987 = vmatmul.f32.gmra.mxu0 %v966
        %v988 = vpop.f32.mrf.mxu0
        %v989 = vadd.f32 0.0, %v988
        %990 = vmatmul.f32.gmra.mxu0 %v969
        %v991 = vpop.f32.mrf.mxu0
        %v992 = vadd.f32 0.0, %v991
        %993 = vdwg.mxu0
        %994 = vst.msk [vmem:[#allocation3 + $0x41] sm:$0xff] %vm709, %v989
        %995 = vst.msk [vmem:[#allocation3 + $0x49] sm:$0xff] %vm709, %v992
        %v996 = vld [vmem:[%s4] sm:$0xff]
        %v997 = vld [vmem:[%s4 + $0x8] sm:$0xff]
        %v998 = vld [vmem:[#allocation2 + $0x4] sm:$0x1]
        %v999 = vld [vmem:[#allocation2 + $0x14] sm:$0x1]
        %v1000 = vld [vmem:[#allocation2 + $0x24] sm:$0x1]
        %v1001 = vld [vmem:[#allocation2 + $0x34] sm:$0x1]
        %v1002 = vld [vmem:[#allocation2 + $0x44] sm:$0x1]
        %v1003 = vld [vmem:[#allocation2 + $0x54] sm:$0x1]
        %v1004 = vld [vmem:[#allocation2 + $0x64] sm:$0x1]
        %v1005 = vld [vmem:[#allocation2 + $0x74] sm:$0x1]
        %v1014 = vrot.slane %v999, 7
        %v1015 = vsel %vm752, %v1014, %v998
        %v1016 = vrot.slane %v1000, 6
        %v1017 = vsel %vm755, %v1016, %v1015
        %v1018 = vrot.slane %v1001, 5
        %v1019 = vsel %vm758, %v1018, %v1017
        %v1020 = vrot.slane %v1002, 4
        %v1021 = vsel %vm761, %v1020, %v1019
        %v1022 = vrot.slane %v1003, 3
        %v1023 = vsel %vm764, %v1022, %v1021
        %v1024 = vrot.slane %v1004, 2
        %v1025 = vsel %vm767, %v1024, %v1023
        %v1026 = vrot.slane %v1005, 1
        %v1027 = vsel %vm770, %v1026, %v1025
        %v1030 = vsel %vm476, %v996, 0
        %v1033 = vsel %vm476, %v997, 0
        %1035 = vmatpush.msra.mxu0 0.0
        %1036 = vmatpush.msra.mxu0 0.0
        %1037 = vmatpush.msra.mxu0 0.0
        %1038 = vmatpush.msra.mxu0 0.0
        %1039 = vmatpush.msra.mxu0 0.0
        %1040 = vmatpush.msra.mxu0 0.0
        %1041 = vmatpush.msra.mxu0 0.0
        %1042 = vmatpush.msra.mxu0 0.0
        %1043 = vmatpush.msra.mxu0 0.0
        %1044 = vmatpush.msra.mxu0 0.0
        %1045 = vmatpush.msra.mxu0 0.0
        %1046 = vmatpush.msra.mxu0 0.0
        %1047 = vmatpush.msra.mxu0 0.0
        %1048 = vmatpush.msra.mxu0 0.0
        %1049 = vmatpush.msra.mxu0 0.0
        %1050 = vmatpush.msra.mxu0 %v1027
        %1051 = vmatmul.f32.gmra.mxu0 %v1030
        %v1052 = vpop.f32.mrf.mxu0
        %v1053 = vadd.f32 0.0, %v1052
        %1054 = vmatmul.f32.gmra.mxu0 %v1033
        %v1055 = vpop.f32.mrf.mxu0
        %v1056 = vadd.f32 0.0, %v1055
        %1057 = vdwg.mxu0
        %1058 = vst.msk [vmem:[#allocation3 + $0x51] sm:$0xff] %vm709, %v1053
        %1059 = vst.msk [vmem:[#allocation3 + $0x59] sm:$0xff] %vm709, %v1056
        %v1060 = vld [vmem:[%s4] sm:$0xff]
        %v1061 = vld [vmem:[%s4 + $0x8] sm:$0xff]
        %v1062 = vld [vmem:[#allocation2 + $0x5] sm:$0x1]
        %v1063 = vld [vmem:[#allocation2 + $0x15] sm:$0x1]
        %v1064 = vld [vmem:[#allocation2 + $0x25] sm:$0x1]
        %v1065 = vld [vmem:[#allocation2 + $0x35] sm:$0x1]
        %v1066 = vld [vmem:[#allocation2 + $0x45] sm:$0x1]
        %v1067 = vld [vmem:[#allocation2 + $0x55] sm:$0x1]
        %v1068 = vld [vmem:[#allocation2 + $0x65] sm:$0x1]
        %v1069 = vld [vmem:[#allocation2 + $0x75] sm:$0x1]
        %v1078 = vrot.slane %v1063, 7
        %v1079 = vsel %vm752, %v1078, %v1062
        %v1080 = vrot.slane %v1064, 6
        %v1081 = vsel %vm755, %v1080, %v1079
        %v1082 = vrot.slane %v1065, 5
        %v1083 = vsel %vm758, %v1082, %v1081
        %v1084 = vrot.slane %v1066, 4
        %v1085 = vsel %vm761, %v1084, %v1083
        %v1086 = vrot.slane %v1067, 3
        %v1087 = vsel %vm764, %v1086, %v1085
        %v1088 = vrot.slane %v1068, 2
        %v1089 = vsel %vm767, %v1088, %v1087
        %v1090 = vrot.slane %v1069, 1
        %v1091 = vsel %vm770, %v1090, %v1089
        %v1094 = vsel %vm476, %v1060, 0
        %v1097 = vsel %vm476, %v1061, 0
        %1099 = vmatpush.msra.mxu0 0.0
        %1100 = vmatpush.msra.mxu0 0.0
        %1101 = vmatpush.msra.mxu0 0.0
        %1102 = vmatpush.msra.mxu0 0.0
        %1103 = vmatpush.msra.mxu0 0.0
        %1104 = vmatpush.msra.mxu0 0.0
        %1105 = vmatpush.msra.mxu0 0.0
        %1106 = vmatpush.msra.mxu0 0.0
        %1107 = vmatpush.msra.mxu0 0.0
        %1108 = vmatpush.msra.mxu0 0.0
        %1109 = vmatpush.msra.mxu0 0.0
        %1110 = vmatpush.msra.mxu0 0.0
        %1111 = vmatpush.msra.mxu0 0.0
        %1112 = vmatpush.msra.mxu0 0.0
        %1113 = vmatpush.msra.mxu0 0.0
        %1114 = vmatpush.msra.mxu0 %v1091
        %1115 = vmatmul.f32.gmra.mxu0 %v1094
        %v1116 = vpop.f32.mrf.mxu0
        %v1117 = vadd.f32 0.0, %v1116
        %1118 = vmatmul.f32.gmra.mxu0 %v1097
        %v1119 = vpop.f32.mrf.mxu0
        %v1120 = vadd.f32 0.0, %v1119
        %1121 = vdwg.mxu0
        %1122 = vst.msk [vmem:[#allocation3 + $0x61] sm:$0xff] %vm709, %v1117
        %1123 = vst.msk [vmem:[#allocation3 + $0x69] sm:$0xff] %vm709, %v1120
        %v1124 = vld [vmem:[%s4] sm:$0xff]
        %v1125 = vld [vmem:[%s4 + $0x8] sm:$0xff]
        %v1126 = vld [vmem:[#allocation2 + $0x6] sm:$0x1]
        %v1127 = vld [vmem:[#allocation2 + $0x16] sm:$0x1]
        %v1128 = vld [vmem:[#allocation2 + $0x26] sm:$0x1]
        %v1129 = vld [vmem:[#allocation2 + $0x36] sm:$0x1]
        %v1130 = vld [vmem:[#allocation2 + $0x46] sm:$0x1]
        %v1131 = vld [vmem:[#allocation2 + $0x56] sm:$0x1]
        %v1132 = vld [vmem:[#allocation2 + $0x66] sm:$0x1]
        %v1133 = vld [vmem:[#allocation2 + $0x76] sm:$0x1]
        %v1142 = vrot.slane %v1127, 7
        %v1143 = vsel %vm752, %v1142, %v1126
        %v1144 = vrot.slane %v1128, 6
        %v1145 = vsel %vm755, %v1144, %v1143
        %v1146 = vrot.slane %v1129, 5
        %v1147 = vsel %vm758, %v1146, %v1145
        %v1148 = vrot.slane %v1130, 4
        %v1149 = vsel %vm761, %v1148, %v1147
        %v1150 = vrot.slane %v1131, 3
        %v1151 = vsel %vm764, %v1150, %v1149
        %v1152 = vrot.slane %v1132, 2
        %v1153 = vsel %vm767, %v1152, %v1151
        %v1154 = vrot.slane %v1133, 1
        %v1155 = vsel %vm770, %v1154, %v1153
        %v1158 = vsel %vm476, %v1124, 0
        %v1161 = vsel %vm476, %v1125, 0
        %1163 = vmatpush.msra.mxu0 0.0
        %1164 = vmatpush.msra.mxu0 0.0
        %1165 = vmatpush.msra.mxu0 0.0
        %1166 = vmatpush.msra.mxu0 0.0
        %1167 = vmatpush.msra.mxu0 0.0
        %1168 = vmatpush.msra.mxu0 0.0
        %1169 = vmatpush.msra.mxu0 0.0
        %1170 = vmatpush.msra.mxu0 0.0
        %1171 = vmatpush.msra.mxu0 0.0
        %1172 = vmatpush.msra.mxu0 0.0
        %1173 = vmatpush.msra.mxu0 0.0
        %1174 = vmatpush.msra.mxu0 0.0
        %1175 = vmatpush.msra.mxu0 0.0
        %1176 = vmatpush.msra.mxu0 0.0
        %1177 = vmatpush.msra.mxu0 0.0
        %1178 = vmatpush.msra.mxu0 %v1155
        %1179 = vmatmul.f32.gmra.mxu0 %v1158
        %v1180 = vpop.f32.mrf.mxu0
        %v1181 = vadd.f32 0.0, %v1180
        %1182 = vmatmul.f32.gmra.mxu0 %v1161
        %v1183 = vpop.f32.mrf.mxu0
        %v1184 = vadd.f32 0.0, %v1183
        %1185 = vdwg.mxu0
        %1186 = vst.msk [vmem:[#allocation3 + $0x71] sm:$0xff] %vm709, %v1181
        %1187 = vst.msk [vmem:[#allocation3 + $0x79] sm:$0xff] %vm709, %v1184
        %v1188 = vld [vmem:[%s4] sm:$0xff]
        %v1189 = vld [vmem:[%s4 + $0x8] sm:$0xff]
        %v1190 = vld [vmem:[#allocation2 + $0x7] sm:$0x1]
        %v1191 = vld [vmem:[#allocation2 + $0x17] sm:$0x1]
        %v1192 = vld [vmem:[#allocation2 + $0x27] sm:$0x1]
        %v1193 = vld [vmem:[#allocation2 + $0x37] sm:$0x1]
        %v1194 = vld [vmem:[#allocation2 + $0x47] sm:$0x1]
        %v1195 = vld [vmem:[#allocation2 + $0x57] sm:$0x1]
        %v1196 = vld [vmem:[#allocation2 + $0x67] sm:$0x1]
        %v1197 = vld [vmem:[#allocation2 + $0x77] sm:$0x1]
        %v1206 = vrot.slane %v1191, 7
        %v1207 = vsel %vm752, %v1206, %v1190
        %v1208 = vrot.slane %v1192, 6
        %v1209 = vsel %vm755, %v1208, %v1207
        %v1210 = vrot.slane %v1193, 5
        %v1211 = vsel %vm758, %v1210, %v1209
        %v1212 = vrot.slane %v1194, 4
        %v1213 = vsel %vm761, %v1212, %v1211
        %v1214 = vrot.slane %v1195, 3
        %v1215 = vsel %vm764, %v1214, %v1213
        %v1216 = vrot.slane %v1196, 2
        %v1217 = vsel %vm767, %v1216, %v1215
        %v1218 = vrot.slane %v1197, 1
        %v1219 = vsel %vm770, %v1218, %v1217
        %v1222 = vsel %vm476, %v1188, 0
        %v1225 = vsel %vm476, %v1189, 0
        %1227 = vmatpush.msra.mxu0 0.0
        %1228 = vmatpush.msra.mxu0 0.0
        %1229 = vmatpush.msra.mxu0 0.0
        %1230 = vmatpush.msra.mxu0 0.0
        %1231 = vmatpush.msra.mxu0 0.0
        %1232 = vmatpush.msra.mxu0 0.0
        %1233 = vmatpush.msra.mxu0 0.0
        %1234 = vmatpush.msra.mxu0 0.0
        %1235 = vmatpush.msra.mxu0 0.0
        %1236 = vmatpush.msra.mxu0 0.0
        %1237 = vmatpush.msra.mxu0 0.0
        %1238 = vmatpush.msra.mxu0 0.0
        %1239 = vmatpush.msra.mxu0 0.0
        %1240 = vmatpush.msra.mxu0 0.0
        %1241 = vmatpush.msra.mxu0 0.0
        %1242 = vmatpush.msra.mxu0 %v1219
        %1243 = vmatmul.f32.gmra.mxu0 %v1222
        %v1244 = vpop.f32.mrf.mxu0
        %v1245 = vadd.f32 0.0, %v1244
        %1246 = vmatmul.f32.gmra.mxu0 %v1225
        %v1247 = vpop.f32.mrf.mxu0
        %v1248 = vadd.f32 0.0, %v1247
        %1249 = vdwg.mxu0
        %1250 = vst.msk [vmem:[#allocation3 + $0x81] sm:$0xff] %vm709, %v1245
        %1251 = vst.msk [vmem:[#allocation3 + $0x89] sm:$0xff] %vm709, %v1248
        %v1252 = vld [vmem:[%s4] sm:$0xff]
        %v1253 = vld [vmem:[%s4 + $0x8] sm:$0xff]
        %v1254 = vld [vmem:[#allocation2 + $0x8] sm:$0x1]
        %v1255 = vld [vmem:[#allocation2 + $0x18] sm:$0x1]
        %v1256 = vld [vmem:[#allocation2 + $0x28] sm:$0x1]
        %v1257 = vld [vmem:[#allocation2 + $0x38] sm:$0x1]
        %v1258 = vld [vmem:[#allocation2 + $0x48] sm:$0x1]
        %v1259 = vld [vmem:[#allocation2 + $0x58] sm:$0x1]
        %v1260 = vld [vmem:[#allocation2 + $0x68] sm:$0x1]
        %v1261 = vld [vmem:[#allocation2 + $0x78] sm:$0x1]
        %v1270 = vrot.slane %v1255, 7
        %v1271 = vsel %vm752, %v1270, %v1254
        %v1272 = vrot.slane %v1256, 6
        %v1273 = vsel %vm755, %v1272, %v1271
        %v1274 = vrot.slane %v1257, 5
        %v1275 = vsel %vm758, %v1274, %v1273
        %v1276 = vrot.slane %v1258, 4
        %v1277 = vsel %vm761, %v1276, %v1275
        %v1278 = vrot.slane %v1259, 3
        %v1279 = vsel %vm764, %v1278, %v1277
        %v1280 = vrot.slane %v1260, 2
        %v1281 = vsel %vm767, %v1280, %v1279
        %v1282 = vrot.slane %v1261, 1
        %v1283 = vsel %vm770, %v1282, %v1281
        %v1286 = vsel %vm476, %v1252, 0
        %v1289 = vsel %vm476, %v1253, 0
        %1291 = vmatpush.msra.mxu0 0.0
        %1292 = vmatpush.msra.mxu0 0.0
        %1293 = vmatpush.msra.mxu0 0.0
        %1294 = vmatpush.msra.mxu0 0.0
        %1295 = vmatpush.msra.mxu0 0.0
        %1296 = vmatpush.msra.mxu0 0.0
        %1297 = vmatpush.msra.mxu0 0.0
        %1298 = vmatpush.msra.mxu0 0.0
        %1299 = vmatpush.msra.mxu0 0.0
        %1300 = vmatpush.msra.mxu0 0.0
        %1301 = vmatpush.msra.mxu0 0.0
        %1302 = vmatpush.msra.mxu0 0.0
        %1303 = vmatpush.msra.mxu0 0.0
        %1304 = vmatpush.msra.mxu0 0.0
        %1305 = vmatpush.msra.mxu0 0.0
        %1306 = vmatpush.msra.mxu0 %v1283
        %1307 = vmatmul.f32.gmra.mxu0 %v1286
        %v1308 = vpop.f32.mrf.mxu0
        %v1309 = vadd.f32 0.0, %v1308
        %1310 = vmatmul.f32.gmra.mxu0 %v1289
        %v1311 = vpop.f32.mrf.mxu0
        %v1312 = vadd.f32 0.0, %v1311
        %1313 = vdwg.mxu0
        %1314 = vst.msk [vmem:[#allocation3 + $0x91] sm:$0xff] %vm709, %v1309
        %1315 = vst.msk [vmem:[#allocation3 + $0x99] sm:$0xff] %vm709, %v1312
        %v1316 = vld [vmem:[%s4] sm:$0xff]
        %v1317 = vld [vmem:[%s4 + $0x8] sm:$0xff]
        %v1318 = vld [vmem:[#allocation2 + $0x9] sm:$0x1]
        %v1319 = vld [vmem:[#allocation2 + $0x19] sm:$0x1]
        %v1320 = vld [vmem:[#allocation2 + $0x29] sm:$0x1]
        %v1321 = vld [vmem:[#allocation2 + $0x39] sm:$0x1]
        %v1322 = vld [vmem:[#allocation2 + $0x49] sm:$0x1]
        %v1323 = vld [vmem:[#allocation2 + $0x59] sm:$0x1]
        %v1324 = vld [vmem:[#allocation2 + $0x69] sm:$0x1]
        %v1325 = vld [vmem:[#allocation2 + $0x79] sm:$0x1]
        %v1334 = vrot.slane %v1319, 7
        %v1335 = vsel %vm752, %v1334, %v1318
        %v1336 = vrot.slane %v1320, 6
        %v1337 = vsel %vm755, %v1336, %v1335
        %v1338 = vrot.slane %v1321, 5
        %v1339 = vsel %vm758, %v1338, %v1337
        %v1340 = vrot.slane %v1322, 4
        %v1341 = vsel %vm761, %v1340, %v1339
        %v1342 = vrot.slane %v1323, 3
        %v1343 = vsel %vm764, %v1342, %v1341
        %v1344 = vrot.slane %v1324, 2
        %v1345 = vsel %vm767, %v1344, %v1343
        %v1346 = vrot.slane %v1325, 1
        %v1347 = vsel %vm770, %v1346, %v1345
        %v1350 = vsel %vm476, %v1316, 0
        %v1353 = vsel %vm476, %v1317, 0
        %1355 = vmatpush.msra.mxu0 0.0
        %1356 = vmatpush.msra.mxu0 0.0
        %1357 = vmatpush.msra.mxu0 0.0
        %1358 = vmatpush.msra.mxu0 0.0
        %1359 = vmatpush.msra.mxu0 0.0
        %1360 = vmatpush.msra.mxu0 0.0
        %1361 = vmatpush.msra.mxu0 0.0
        %1362 = vmatpush.msra.mxu0 0.0
        %1363 = vmatpush.msra.mxu0 0.0
        %1364 = vmatpush.msra.mxu0 0.0
        %1365 = vmatpush.msra.mxu0 0.0
        %1366 = vmatpush.msra.mxu0 0.0
        %1367 = vmatpush.msra.mxu0 0.0
        %1368 = vmatpush.msra.mxu0 0.0
        %1369 = vmatpush.msra.mxu0 0.0
        %1370 = vmatpush.msra.mxu0 %v1347
        %1371 = vmatmul.f32.gmra.mxu0 %v1350
        %v1372 = vpop.f32.mrf.mxu0
        %v1373 = vadd.f32 0.0, %v1372
        %1374 = vmatmul.f32.gmra.mxu0 %v1353
        %v1375 = vpop.f32.mrf.mxu0
        %v1376 = vadd.f32 0.0, %v1375
        %1377 = vdwg.mxu0
        %1378 = vst.msk [vmem:[#allocation3 + $0xa1] sm:$0xff] %vm709, %v1373
        %1379 = vst.msk [vmem:[#allocation3 + $0xa9] sm:$0xff] %vm709, %v1376
        %v1380 = vld [vmem:[%s4] sm:$0xff]
        %v1381 = vld [vmem:[%s4 + $0x8] sm:$0xff]
        %v1382 = vld [vmem:[#allocation2 + $0xa] sm:$0x1]
        %v1383 = vld [vmem:[#allocation2 + $0x1a] sm:$0x1]
        %v1384 = vld [vmem:[#allocation2 + $0x2a] sm:$0x1]
        %v1385 = vld [vmem:[#allocation2 + $0x3a] sm:$0x1]
        %v1386 = vld [vmem:[#allocation2 + $0x4a] sm:$0x1]
        %v1387 = vld [vmem:[#allocation2 + $0x5a] sm:$0x1]
        %v1388 = vld [vmem:[#allocation2 + $0x6a] sm:$0x1]
        %v1389 = vld [vmem:[#allocation2 + $0x7a] sm:$0x1]
        %v1398 = vrot.slane %v1383, 7
        %v1399 = vsel %vm752, %v1398, %v1382
        %v1400 = vrot.slane %v1384, 6
        %v1401 = vsel %vm755, %v1400, %v1399
        %v1402 = vrot.slane %v1385, 5
        %v1403 = vsel %vm758, %v1402, %v1401
        %v1404 = vrot.slane %v1386, 4
        %v1405 = vsel %vm761, %v1404, %v1403
        %v1406 = vrot.slane %v1387, 3
        %v1407 = vsel %vm764, %v1406, %v1405
        %v1408 = vrot.slane %v1388, 2
        %v1409 = vsel %vm767, %v1408, %v1407
        %v1410 = vrot.slane %v1389, 1
        %v1411 = vsel %vm770, %v1410, %v1409
        %v1414 = vsel %vm476, %v1380, 0
        %v1417 = vsel %vm476, %v1381, 0
        %1419 = vmatpush.msra.mxu0 0.0
        %1420 = vmatpush.msra.mxu0 0.0
        %1421 = vmatpush.msra.mxu0 0.0
        %1422 = vmatpush.msra.mxu0 0.0
        %1423 = vmatpush.msra.mxu0 0.0
        %1424 = vmatpush.msra.mxu0 0.0
        %1425 = vmatpush.msra.mxu0 0.0
        %1426 = vmatpush.msra.mxu0 0.0
        %1427 = vmatpush.msra.mxu0 0.0
        %1428 = vmatpush.msra.mxu0 0.0
        %1429 = vmatpush.msra.mxu0 0.0
        %1430 = vmatpush.msra.mxu0 0.0
        %1431 = vmatpush.msra.mxu0 0.0
        %1432 = vmatpush.msra.mxu0 0.0
        %1433 = vmatpush.msra.mxu0 0.0
        %1434 = vmatpush.msra.mxu0 %v1411
        %1435 = vmatmul.f32.gmra.mxu0 %v1414
        %v1436 = vpop.f32.mrf.mxu0
        %v1437 = vadd.f32 0.0, %v1436
        %1438 = vmatmul.f32.gmra.mxu0 %v1417
        %v1439 = vpop.f32.mrf.mxu0
        %v1440 = vadd.f32 0.0, %v1439
        %1441 = vdwg.mxu0
        %1442 = vst.msk [vmem:[#allocation3 + $0xb1] sm:$0xff] %vm709, %v1437
        %1443 = vst.msk [vmem:[#allocation3 + $0xb9] sm:$0xff] %vm709, %v1440
        %v1444 = vld [vmem:[%s4] sm:$0xff]
        %v1445 = vld [vmem:[%s4 + $0x8] sm:$0xff]
        %v1446 = vld [vmem:[#allocation2 + $0xb] sm:$0x1]
        %v1447 = vld [vmem:[#allocation2 + $0x1b] sm:$0x1]
        %v1448 = vld [vmem:[#allocation2 + $0x2b] sm:$0x1]
        %v1449 = vld [vmem:[#allocation2 + $0x3b] sm:$0x1]
        %v1450 = vld [vmem:[#allocation2 + $0x4b] sm:$0x1]
        %v1451 = vld [vmem:[#allocation2 + $0x5b] sm:$0x1]
        %v1452 = vld [vmem:[#allocation2 + $0x6b] sm:$0x1]
        %v1453 = vld [vmem:[#allocation2 + $0x7b] sm:$0x1]
        %v1462 = vrot.slane %v1447, 7
        %v1463 = vsel %vm752, %v1462, %v1446
        %v1464 = vrot.slane %v1448, 6
        %v1465 = vsel %vm755, %v1464, %v1463
        %v1466 = vrot.slane %v1449, 5
        %v1467 = vsel %vm758, %v1466, %v1465
        %v1468 = vrot.slane %v1450, 4
        %v1469 = vsel %vm761, %v1468, %v1467
        %v1470 = vrot.slane %v1451, 3
        %v1471 = vsel %vm764, %v1470, %v1469
        %v1472 = vrot.slane %v1452, 2
        %v1473 = vsel %vm767, %v1472, %v1471
        %v1474 = vrot.slane %v1453, 1
        %v1475 = vsel %vm770, %v1474, %v1473
        %v1478 = vsel %vm476, %v1444, 0
        %v1481 = vsel %vm476, %v1445, 0
        %1483 = vmatpush.msra.mxu0 0.0
        %1484 = vmatpush.msra.mxu0 0.0
        %1485 = vmatpush.msra.mxu0 0.0
        %1486 = vmatpush.msra.mxu0 0.0
        %1487 = vmatpush.msra.mxu0 0.0
        %1488 = vmatpush.msra.mxu0 0.0
        %1489 = vmatpush.msra.mxu0 0.0
        %1490 = vmatpush.msra.mxu0 0.0
        %1491 = vmatpush.msra.mxu0 0.0
        %1492 = vmatpush.msra.mxu0 0.0
        %1493 = vmatpush.msra.mxu0 0.0
        %1494 = vmatpush.msra.mxu0 0.0
        %1495 = vmatpush.msra.mxu0 0.0
        %1496 = vmatpush.msra.mxu0 0.0
        %1497 = vmatpush.msra.mxu0 0.0
        %1498 = vmatpush.msra.mxu0 %v1475
        %1499 = vmatmul.f32.gmra.mxu0 %v1478
        %v1500 = vpop.f32.mrf.mxu0
        %v1501 = vadd.f32 0.0, %v1500
        %1502 = vmatmul.f32.gmra.mxu0 %v1481
        %v1503 = vpop.f32.mrf.mxu0
        %v1504 = vadd.f32 0.0, %v1503
        %1505 = vdwg.mxu0
        %1506 = vst.msk [vmem:[#allocation3 + $0xc1] sm:$0xff] %vm709, %v1501
        %1507 = vst.msk [vmem:[#allocation3 + $0xc9] sm:$0xff] %vm709, %v1504
        %v1508 = vld [vmem:[%s4] sm:$0xff]
        %v1509 = vld [vmem:[%s4 + $0x8] sm:$0xff]
        %v1510 = vld [vmem:[#allocation2 + $0xc] sm:$0x1]
        %v1511 = vld [vmem:[#allocation2 + $0x1c] sm:$0x1]
        %v1512 = vld [vmem:[#allocation2 + $0x2c] sm:$0x1]
        %v1513 = vld [vmem:[#allocation2 + $0x3c] sm:$0x1]
        %v1514 = vld [vmem:[#allocation2 + $0x4c] sm:$0x1]
        %v1515 = vld [vmem:[#allocation2 + $0x5c] sm:$0x1]
        %v1516 = vld [vmem:[#allocation2 + $0x6c] sm:$0x1]
        %v1517 = vld [vmem:[#allocation2 + $0x7c] sm:$0x1]
        %v1526 = vrot.slane %v1511, 7
        %v1527 = vsel %vm752, %v1526, %v1510
        %v1528 = vrot.slane %v1512, 6
        %v1529 = vsel %vm755, %v1528, %v1527
        %v1530 = vrot.slane %v1513, 5
        %v1531 = vsel %vm758, %v1530, %v1529
        %v1532 = vrot.slane %v1514, 4
        %v1533 = vsel %vm761, %v1532, %v1531
        %v1534 = vrot.slane %v1515, 3
        %v1535 = vsel %vm764, %v1534, %v1533
        %v1536 = vrot.slane %v1516, 2
        %v1537 = vsel %vm767, %v1536, %v1535
        %v1538 = vrot.slane %v1517, 1
        %v1539 = vsel %vm770, %v1538, %v1537
        %v1542 = vsel %vm476, %v1508, 0
        %v1545 = vsel %vm476, %v1509, 0
        %1547 = vmatpush.msra.mxu0 0.0
        %1548 = vmatpush.msra.mxu0 0.0
        %1549 = vmatpush.msra.mxu0 0.0
        %1550 = vmatpush.msra.mxu0 0.0
        %1551 = vmatpush.msra.mxu0 0.0
        %1552 = vmatpush.msra.mxu0 0.0
        %1553 = vmatpush.msra.mxu0 0.0
        %1554 = vmatpush.msra.mxu0 0.0
        %1555 = vmatpush.msra.mxu0 0.0
        %1556 = vmatpush.msra.mxu0 0.0
        %1557 = vmatpush.msra.mxu0 0.0
        %1558 = vmatpush.msra.mxu0 0.0
        %1559 = vmatpush.msra.mxu0 0.0
        %1560 = vmatpush.msra.mxu0 0.0
        %1561 = vmatpush.msra.mxu0 0.0
        %1562 = vmatpush.msra.mxu0 %v1539
        %1563 = vmatmul.f32.gmra.mxu0 %v1542
        %v1564 = vpop.f32.mrf.mxu0
        %v1565 = vadd.f32 0.0, %v1564
        %1566 = vmatmul.f32.gmra.mxu0 %v1545
        %v1567 = vpop.f32.mrf.mxu0
        %v1568 = vadd.f32 0.0, %v1567
        %1569 = vdwg.mxu0
        %1570 = vst.msk [vmem:[#allocation3 + $0xd1] sm:$0xff] %vm709, %v1565
        %1571 = vst.msk [vmem:[#allocation3 + $0xd9] sm:$0xff] %vm709, %v1568
        %v1572 = vld [vmem:[%s4] sm:$0xff]
        %v1573 = vld [vmem:[%s4 + $0x8] sm:$0xff]
        %v1574 = vld [vmem:[#allocation2 + $0xd] sm:$0x1]
        %v1575 = vld [vmem:[#allocation2 + $0x1d] sm:$0x1]
        %v1576 = vld [vmem:[#allocation2 + $0x2d] sm:$0x1]
        %v1577 = vld [vmem:[#allocation2 + $0x3d] sm:$0x1]
        %v1578 = vld [vmem:[#allocation2 + $0x4d] sm:$0x1]
        %v1579 = vld [vmem:[#allocation2 + $0x5d] sm:$0x1]
        %v1580 = vld [vmem:[#allocation2 + $0x6d] sm:$0x1]
        %v1581 = vld [vmem:[#allocation2 + $0x7d] sm:$0x1]
        %v1590 = vrot.slane %v1575, 7
        %v1591 = vsel %vm752, %v1590, %v1574
        %v1592 = vrot.slane %v1576, 6
        %v1593 = vsel %vm755, %v1592, %v1591
        %v1594 = vrot.slane %v1577, 5
        %v1595 = vsel %vm758, %v1594, %v1593
        %v1596 = vrot.slane %v1578, 4
        %v1597 = vsel %vm761, %v1596, %v1595
        %v1598 = vrot.slane %v1579, 3
        %v1599 = vsel %vm764, %v1598, %v1597
        %v1600 = vrot.slane %v1580, 2
        %v1601 = vsel %vm767, %v1600, %v1599
        %v1602 = vrot.slane %v1581, 1
        %v1603 = vsel %vm770, %v1602, %v1601
        %v1606 = vsel %vm476, %v1572, 0
        %v1609 = vsel %vm476, %v1573, 0
        %1611 = vmatpush.msra.mxu0 0.0
        %1612 = vmatpush.msra.mxu0 0.0
        %1613 = vmatpush.msra.mxu0 0.0
        %1614 = vmatpush.msra.mxu0 0.0
        %1615 = vmatpush.msra.mxu0 0.0
        %1616 = vmatpush.msra.mxu0 0.0
        %1617 = vmatpush.msra.mxu0 0.0
        %1618 = vmatpush.msra.mxu0 0.0
        %1619 = vmatpush.msra.mxu0 0.0
        %1620 = vmatpush.msra.mxu0 0.0
        %1621 = vmatpush.msra.mxu0 0.0
        %1622 = vmatpush.msra.mxu0 0.0
        %1623 = vmatpush.msra.mxu0 0.0
        %1624 = vmatpush.msra.mxu0 0.0
        %1625 = vmatpush.msra.mxu0 0.0
        %1626 = vmatpush.msra.mxu0 %v1603
        %1627 = vmatmul.f32.gmra.mxu0 %v1606
        %v1628 = vpop.f32.mrf.mxu0
        %v1629 = vadd.f32 0.0, %v1628
        %1630 = vmatmul.f32.gmra.mxu0 %v1609
        %v1631 = vpop.f32.mrf.mxu0
        %v1632 = vadd.f32 0.0, %v1631
        %1633 = vdwg.mxu0
        %1634 = vst.msk [vmem:[#allocation3 + $0xe1] sm:$0xff] %vm709, %v1629
        %1635 = vst.msk [vmem:[#allocation3 + $0xe9] sm:$0xff] %vm709, %v1632
        %v1636 = vld [vmem:[%s4] sm:$0xff]
        %v1637 = vld [vmem:[%s4 + $0x8] sm:$0xff]
        %v1638 = vld [vmem:[#allocation2 + $0xe] sm:$0x1]
        %v1639 = vld [vmem:[#allocation2 + $0x1e] sm:$0x1]
        %v1640 = vld [vmem:[#allocation2 + $0x2e] sm:$0x1]
        %v1641 = vld [vmem:[#allocation2 + $0x3e] sm:$0x1]
        %v1642 = vld [vmem:[#allocation2 + $0x4e] sm:$0x1]
        %v1643 = vld [vmem:[#allocation2 + $0x5e] sm:$0x1]
        %v1644 = vld [vmem:[#allocation2 + $0x6e] sm:$0x1]
        %v1645 = vld [vmem:[#allocation2 + $0x7e] sm:$0x1]
        %v1654 = vrot.slane %v1639, 7
        %v1655 = vsel %vm752, %v1654, %v1638
        %v1656 = vrot.slane %v1640, 6
        %v1657 = vsel %vm755, %v1656, %v1655
        %v1658 = vrot.slane %v1641, 5
        %v1659 = vsel %vm758, %v1658, %v1657
        %v1660 = vrot.slane %v1642, 4
        %v1661 = vsel %vm761, %v1660, %v1659
        %v1662 = vrot.slane %v1643, 3
        %v1663 = vsel %vm764, %v1662, %v1661
        %v1664 = vrot.slane %v1644, 2
        %v1665 = vsel %vm767, %v1664, %v1663
        %v1666 = vrot.slane %v1645, 1
        %v1667 = vsel %vm770, %v1666, %v1665
        %v1670 = vsel %vm476, %v1636, 0
        %v1673 = vsel %vm476, %v1637, 0
        %1675 = vmatpush.msra.mxu0 0.0
        %1676 = vmatpush.msra.mxu0 0.0
        %1677 = vmatpush.msra.mxu0 0.0
        %1678 = vmatpush.msra.mxu0 0.0
        %1679 = vmatpush.msra.mxu0 0.0
        %1680 = vmatpush.msra.mxu0 0.0
        %1681 = vmatpush.msra.mxu0 0.0
        %1682 = vmatpush.msra.mxu0 0.0
        %1683 = vmatpush.msra.mxu0 0.0
        %1684 = vmatpush.msra.mxu0 0.0
        %1685 = vmatpush.msra.mxu0 0.0
        %1686 = vmatpush.msra.mxu0 0.0
        %1687 = vmatpush.msra.mxu0 0.0
        %1688 = vmatpush.msra.mxu0 0.0
        %1689 = vmatpush.msra.mxu0 0.0
        %1690 = vmatpush.msra.mxu0 %v1667
        %1691 = vmatmul.f32.gmra.mxu0 %v1670
        %v1692 = vpop.f32.mrf.mxu0
        %v1693 = vadd.f32 0.0, %v1692
        %1694 = vmatmul.f32.gmra.mxu0 %v1673
        %v1695 = vpop.f32.mrf.mxu0
        %v1696 = vadd.f32 0.0, %v1695
        %1697 = vdwg.mxu0
        %1698 = vst.msk [vmem:[#allocation3 + $0xf1] sm:$0xff] %vm709, %v1693
        %1699 = vst.msk [vmem:[#allocation3 + $0xf9] sm:$0xff] %vm709, %v1696
        %v1700 = vld [vmem:[%s4] sm:$0xff]
        %v1701 = vld [vmem:[%s4 + $0x8] sm:$0xff]
        %v1702 = vld [vmem:[#allocation2 + $0xf] sm:$0x1]
        %v1703 = vld [vmem:[#allocation2 + $0x1f] sm:$0x1]
        %v1704 = vld [vmem:[#allocation2 + $0x2f] sm:$0x1]
        %v1705 = vld [vmem:[#allocation2 + $0x3f] sm:$0x1]
        %v1706 = vld [vmem:[#allocation2 + $0x4f] sm:$0x1]
        %v1707 = vld [vmem:[#allocation2 + $0x5f] sm:$0x1]
        %v1708 = vld [vmem:[#allocation2 + $0x6f] sm:$0x1]
        %v1709 = vld [vmem:[#allocation2 + $0x7f] sm:$0x1]
        %v1718 = vrot.slane %v1703, 7
        %v1719 = vsel %vm752, %v1718, %v1702
        %v1720 = vrot.slane %v1704, 6
        %v1721 = vsel %vm755, %v1720, %v1719
        %v1722 = vrot.slane %v1705, 5
        %v1723 = vsel %vm758, %v1722, %v1721
        %v1724 = vrot.slane %v1706, 4
        %v1725 = vsel %vm761, %v1724, %v1723
        %v1726 = vrot.slane %v1707, 3
        %v1727 = vsel %vm764, %v1726, %v1725
        %v1728 = vrot.slane %v1708, 2
        %v1729 = vsel %vm767, %v1728, %v1727
        %v1730 = vrot.slane %v1709, 1
        %v1731 = vsel %vm770, %v1730, %v1729
        %v1734 = vsel %vm476, %v1700, 0
        %v1737 = vsel %vm476, %v1701, 0
        %1739 = vmatpush.msra.mxu0 0.0
        %1740 = vmatpush.msra.mxu0 0.0
        %1741 = vmatpush.msra.mxu0 0.0
        %1742 = vmatpush.msra.mxu0 0.0
        %1743 = vmatpush.msra.mxu0 0.0
        %1744 = vmatpush.msra.mxu0 0.0
        %1745 = vmatpush.msra.mxu0 0.0
        %1746 = vmatpush.msra.mxu0 0.0
        %1747 = vmatpush.msra.mxu0 0.0
        %1748 = vmatpush.msra.mxu0 0.0
        %1749 = vmatpush.msra.mxu0 0.0
        %1750 = vmatpush.msra.mxu0 0.0
        %1751 = vmatpush.msra.mxu0 0.0
        %1752 = vmatpush.msra.mxu0 0.0
        %1753 = vmatpush.msra.mxu0 0.0
        %1754 = vmatpush.msra.mxu0 %v1731
        %1755 = vmatmul.f32.gmra.mxu0 %v1734
        %v1756 = vpop.f32.mrf.mxu0
        %v1757 = vadd.f32 0.0, %v1756
        %1758 = vmatmul.f32.gmra.mxu0 %v1737
        %v1759 = vpop.f32.mrf.mxu0
        %v1760 = vadd.f32 0.0, %v1759
        %1761 = vdwg.mxu0
        %1762 = vst.msk [vmem:[#allocation3 + $0x101] sm:$0xff] %vm709, %v1757
        %1763 = vst.msk [vmem:[#allocation3 + $0x109] sm:$0xff] %vm709, %v1760
        %v1764 = vlaneseq
        %v1765 = vshrl.u32 %v1764, 7
        %v1766 = vadd.s32 %v1765, 8
        %v1767 = vadd.s32 %v1765, 16
        %v1768 = vadd.s32 %v1765, 24
        %v1769 = vadd.s32 %v1765, 32
        %v1770 = vadd.s32 %v1765, 40
        %v1771 = vadd.s32 %v1765, 48
        %v1772 = vadd.s32 %v1765, 56
        %v1773 = vadd.s32 %v1765, 64
        %v1774 = vadd.s32 %v1765, 72
        %v1775 = vadd.s32 %v1765, 80
        %v1776 = vadd.s32 %v1765, 88
        %v1777 = vadd.s32 %v1765, 96
        %v1778 = vadd.s32 %v1765, 104
        %v1779 = vadd.s32 %v1765, 112
        %v1780 = vadd.s32 %v1765, 120
        %v1781 = vadd.s32 %v1765, 128
        %v1782 = vadd.s32 %v1765, 136
        %v1783 = vadd.s32 %v1765, 144
        %v1784 = vadd.s32 %v1765, 152
        %v1785 = vadd.s32 %v1765, 160
        %v1786 = vadd.s32 %v1765, 168
        %v1787 = vadd.s32 %v1765, 176
        %v1788 = vadd.s32 %v1765, 184
        %v1789 = vadd.s32 %v1765, 192
        %v1790 = vadd.s32 %v1765, 200
        %v1791 = vadd.s32 %v1765, 208
        %v1792 = vadd.s32 %v1765, 216
        %v1793 = vadd.s32 %v1765, 224
        %v1794 = vadd.s32 %v1765, 232
        %v1795 = vadd.s32 %v1765, 240
        %v1796 = vadd.s32 %v1765, 248
        %vm1797 = vcmp.lt.s32.totalorder %v1765, 0
        %v1798 = vsub.s32 0, %v1765
        %v1799 = vsel %vm1797, %v1798, %v1765
        %v1800 = vshrl.u32 %v1799, 4
        %v1801 = vand.u32 %v1799, 15
        %v1802 = vsub.s32 0, %v1801
        %v1803 = vsel %vm1797, %v1802, %v1801
        %vm1804 = vcmp.lt.s32.totalorder %v1766, 0
        %v1805 = vsub.s32 0, %v1766
        %v1806 = vsel %vm1804, %v1805, %v1766
        %v1807 = vshrl.u32 %v1806, 4
        %v1808 = vand.u32 %v1806, 15
        %v1809 = vsub.s32 0, %v1808
        %v1810 = vsel %vm1804, %v1809, %v1808
        %vm1811 = vcmp.lt.s32.totalorder %v1767, 0
        %v1812 = vsub.s32 0, %v1767
        %v1813 = vsel %vm1811, %v1812, %v1767
        %v1814 = vshrl.u32 %v1813, 4
        %v1815 = vand.u32 %v1813, 15
        %v1816 = vsub.s32 0, %v1815
        %v1817 = vsel %vm1811, %v1816, %v1815
        %vm1818 = vcmp.lt.s32.totalorder %v1768, 0
        %v1819 = vsub.s32 0, %v1768
        %v1820 = vsel %vm1818, %v1819, %v1768
        %v1821 = vshrl.u32 %v1820, 4
        %v1822 = vand.u32 %v1820, 15
        %v1823 = vsub.s32 0, %v1822
        %v1824 = vsel %vm1818, %v1823, %v1822
        %vm1825 = vcmp.lt.s32.totalorder %v1769, 0
        %v1826 = vsub.s32 0, %v1769
        %v1827 = vsel %vm1825, %v1826, %v1769
        %v1828 = vshrl.u32 %v1827, 4
        %v1829 = vand.u32 %v1827, 15
        %v1830 = vsub.s32 0, %v1829
        %v1831 = vsel %vm1825, %v1830, %v1829
        %vm1832 = vcmp.lt.s32.totalorder %v1770, 0
        %v1833 = vsub.s32 0, %v1770
        %v1834 = vsel %vm1832, %v1833, %v1770
        %v1835 = vshrl.u32 %v1834, 4
        %v1836 = vand.u32 %v1834, 15
        %v1837 = vsub.s32 0, %v1836
        %v1838 = vsel %vm1832, %v1837, %v1836
        %vm1839 = vcmp.lt.s32.totalorder %v1771, 0
        %v1840 = vsub.s32 0, %v1771
        %v1841 = vsel %vm1839, %v1840, %v1771
        %v1842 = vshrl.u32 %v1841, 4
        %v1843 = vand.u32 %v1841, 15
        %v1844 = vsub.s32 0, %v1843
        %v1845 = vsel %vm1839, %v1844, %v1843
        %vm1846 = vcmp.lt.s32.totalorder %v1772, 0
        %v1847 = vsub.s32 0, %v1772
        %v1848 = vsel %vm1846, %v1847, %v1772
        %v1849 = vshrl.u32 %v1848, 4
        %v1850 = vand.u32 %v1848, 15
        %v1851 = vsub.s32 0, %v1850
        %v1852 = vsel %vm1846, %v1851, %v1850
        %vm1853 = vcmp.lt.s32.totalorder %v1773, 0
        %v1854 = vsub.s32 0, %v1773
        %v1855 = vsel %vm1853, %v1854, %v1773
        %v1856 = vshrl.u32 %v1855, 4
        %v1857 = vand.u32 %v1855, 15
        %v1858 = vsub.s32 0, %v1857
        %v1859 = vsel %vm1853, %v1858, %v1857
        %vm1860 = vcmp.lt.s32.totalorder %v1774, 0
        %v1861 = vsub.s32 0, %v1774
        %v1862 = vsel %vm1860, %v1861, %v1774
        %v1863 = vshrl.u32 %v1862, 4
        %v1864 = vand.u32 %v1862, 15
        %v1865 = vsub.s32 0, %v1864
        %v1866 = vsel %vm1860, %v1865, %v1864
        %vm1867 = vcmp.lt.s32.totalorder %v1775, 0
        %v1868 = vsub.s32 0, %v1775
        %v1869 = vsel %vm1867, %v1868, %v1775
        %v1870 = vshrl.u32 %v1869, 4
        %v1871 = vand.u32 %v1869, 15
        %v1872 = vsub.s32 0, %v1871
        %v1873 = vsel %vm1867, %v1872, %v1871
        %vm1874 = vcmp.lt.s32.totalorder %v1776, 0
        %v1875 = vsub.s32 0, %v1776
        %v1876 = vsel %vm1874, %v1875, %v1776
        %v1877 = vshrl.u32 %v1876, 4
        %v1878 = vand.u32 %v1876, 15
        %v1879 = vsub.s32 0, %v1878
        %v1880 = vsel %vm1874, %v1879, %v1878
        %vm1881 = vcmp.lt.s32.totalorder %v1777, 0
        %v1882 = vsub.s32 0, %v1777
        %v1883 = vsel %vm1881, %v1882, %v1777
        %v1884 = vshrl.u32 %v1883, 4
        %v1885 = vand.u32 %v1883, 15
        %v1886 = vsub.s32 0, %v1885
        %v1887 = vsel %vm1881, %v1886, %v1885
        %vm1888 = vcmp.lt.s32.totalorder %v1778, 0
        %v1889 = vsub.s32 0, %v1778
        %v1890 = vsel %vm1888, %v1889, %v1778
        %v1891 = vshrl.u32 %v1890, 4
        %v1892 = vand.u32 %v1890, 15
        %v1893 = vsub.s32 0, %v1892
        %v1894 = vsel %vm1888, %v1893, %v1892
        %vm1895 = vcmp.lt.s32.totalorder %v1779, 0
        %v1896 = vsub.s32 0, %v1779
        %v1897 = vsel %vm1895, %v1896, %v1779
        %v1898 = vshrl.u32 %v1897, 4
        %v1899 = vand.u32 %v1897, 15
        %v1900 = vsub.s32 0, %v1899
        %v1901 = vsel %vm1895, %v1900, %v1899
        %vm1902 = vcmp.lt.s32.totalorder %v1780, 0
        %v1903 = vsub.s32 0, %v1780
        %v1904 = vsel %vm1902, %v1903, %v1780
        %v1905 = vshrl.u32 %v1904, 4
        %v1906 = vand.u32 %v1904, 15
        %v1907 = vsub.s32 0, %v1906
        %v1908 = vsel %vm1902, %v1907, %v1906
        %vm1909 = vcmp.lt.s32.totalorder %v1781, 0
        %v1910 = vsub.s32 0, %v1781
        %v1911 = vsel %vm1909, %v1910, %v1781
        %v1912 = vshrl.u32 %v1911, 4
        %v1913 = vand.u32 %v1911, 15
        %v1914 = vsub.s32 0, %v1913
        %v1915 = vsel %vm1909, %v1914, %v1913
        %vm1916 = vcmp.lt.s32.totalorder %v1782, 0
        %v1917 = vsub.s32 0, %v1782
        %v1918 = vsel %vm1916, %v1917, %v1782
        %v1919 = vshrl.u32 %v1918, 4
        %v1920 = vand.u32 %v1918, 15
        %v1921 = vsub.s32 0, %v1920
        %v1922 = vsel %vm1916, %v1921, %v1920
        %vm1923 = vcmp.lt.s32.totalorder %v1783, 0
        %v1924 = vsub.s32 0, %v1783
        %v1925 = vsel %vm1923, %v1924, %v1783
        %v1926 = vshrl.u32 %v1925, 4
        %v1927 = vand.u32 %v1925, 15
        %v1928 = vsub.s32 0, %v1927
        %v1929 = vsel %vm1923, %v1928, %v1927
        %vm1930 = vcmp.lt.s32.totalorder %v1784, 0
        %v1931 = vsub.s32 0, %v1784
        %v1932 = vsel %vm1930, %v1931, %v1784
        %v1933 = vshrl.u32 %v1932, 4
        %v1934 = vand.u32 %v1932, 15
        %v1935 = vsub.s32 0, %v1934
        %v1936 = vsel %vm1930, %v1935, %v1934
        %vm1937 = vcmp.lt.s32.totalorder %v1785, 0
        %v1938 = vsub.s32 0, %v1785
        %v1939 = vsel %vm1937, %v1938, %v1785
        %v1940 = vshrl.u32 %v1939, 4
        %v1941 = vand.u32 %v1939, 15
        %v1942 = vsub.s32 0, %v1941
        %v1943 = vsel %vm1937, %v1942, %v1941
        %vm1944 = vcmp.lt.s32.totalorder %v1786, 0
        %v1945 = vsub.s32 0, %v1786
        %v1946 = vsel %vm1944, %v1945, %v1786
        %v1947 = vshrl.u32 %v1946, 4
        %v1948 = vand.u32 %v1946, 15
        %v1949 = vsub.s32 0, %v1948
        %v1950 = vsel %vm1944, %v1949, %v1948
        %vm1951 = vcmp.lt.s32.totalorder %v1787, 0
        %v1952 = vsub.s32 0, %v1787
        %v1953 = vsel %vm1951, %v1952, %v1787
        %v1954 = vshrl.u32 %v1953, 4
        %v1955 = vand.u32 %v1953, 15
        %v1956 = vsub.s32 0, %v1955
        %v1957 = vsel %vm1951, %v1956, %v1955
        %vm1958 = vcmp.lt.s32.totalorder %v1788, 0
        %v1959 = vsub.s32 0, %v1788
        %v1960 = vsel %vm1958, %v1959, %v1788
        %v1961 = vshrl.u32 %v1960, 4
        %v1962 = vand.u32 %v1960, 15
        %v1963 = vsub.s32 0, %v1962
        %v1964 = vsel %vm1958, %v1963, %v1962
        %vm1965 = vcmp.lt.s32.totalorder %v1789, 0
        %v1966 = vsub.s32 0, %v1789
        %v1967 = vsel %vm1965, %v1966, %v1789
        %v1968 = vshrl.u32 %v1967, 4
        %v1969 = vand.u32 %v1967, 15
        %v1970 = vsub.s32 0, %v1969
        %v1971 = vsel %vm1965, %v1970, %v1969
        %vm1972 = vcmp.lt.s32.totalorder %v1790, 0
        %v1973 = vsub.s32 0, %v1790
        %v1974 = vsel %vm1972, %v1973, %v1790
        %v1975 = vshrl.u32 %v1974, 4
        %v1976 = vand.u32 %v1974, 15
        %v1977 = vsub.s32 0, %v1976
        %v1978 = vsel %vm1972, %v1977, %v1976
        %vm1979 = vcmp.lt.s32.totalorder %v1791, 0
        %v1980 = vsub.s32 0, %v1791
        %v1981 = vsel %vm1979, %v1980, %v1791
        %v1982 = vshrl.u32 %v1981, 4
        %v1983 = vand.u32 %v1981, 15
        %v1984 = vsub.s32 0, %v1983
        %v1985 = vsel %vm1979, %v1984, %v1983
        %vm1986 = vcmp.lt.s32.totalorder %v1792, 0
        %v1987 = vsub.s32 0, %v1792
        %v1988 = vsel %vm1986, %v1987, %v1792
        %v1989 = vshrl.u32 %v1988, 4
        %v1990 = vand.u32 %v1988, 15
        %v1991 = vsub.s32 0, %v1990
        %v1992 = vsel %vm1986, %v1991, %v1990
        %vm1993 = vcmp.lt.s32.totalorder %v1793, 0
        %v1994 = vsub.s32 0, %v1793
        %v1995 = vsel %vm1993, %v1994, %v1793
        %v1996 = vshrl.u32 %v1995, 4
        %v1997 = vand.u32 %v1995, 15
        %v1998 = vsub.s32 0, %v1997
        %v1999 = vsel %vm1993, %v1998, %v1997
        %vm2000 = vcmp.lt.s32.totalorder %v1794, 0
        %v2001 = vsub.s32 0, %v1794
        %v2002 = vsel %vm2000, %v2001, %v1794
        %v2003 = vshrl.u32 %v2002, 4
        %v2004 = vand.u32 %v2002, 15
        %v2005 = vsub.s32 0, %v2004
        %v2006 = vsel %vm2000, %v2005, %v2004
        %vm2007 = vcmp.lt.s32.totalorder %v1795, 0
        %v2008 = vsub.s32 0, %v1795
        %v2009 = vsel %vm2007, %v2008, %v1795
        %v2010 = vshrl.u32 %v2009, 4
        %v2011 = vand.u32 %v2009, 15
        %v2012 = vsub.s32 0, %v2011
        %v2013 = vsel %vm2007, %v2012, %v2011
        %vm2014 = vcmp.lt.s32.totalorder %v1796, 0
        %v2015 = vsub.s32 0, %v1796
        %v2016 = vsel %vm2014, %v2015, %v1796
        %v2017 = vshrl.u32 %v2016, 4
        %v2018 = vand.u32 %v2016, 15
        %v2019 = vsub.s32 0, %v2018
        %v2020 = vsel %vm2014, %v2019, %v2018
        %vm2021 = vcmp.ne.s32.totalorder %v1803, 0
        %vm2022 = vcmp.ne.s32.totalorder %v1810, 0
        %vm2023 = vcmp.ne.s32.totalorder %v1817, 0
        %vm2024 = vcmp.ne.s32.totalorder %v1824, 0
        %vm2025 = vcmp.ne.s32.totalorder %v1831, 0
        %vm2026 = vcmp.ne.s32.totalorder %v1838, 0
        %vm2027 = vcmp.ne.s32.totalorder %v1845, 0
        %vm2028 = vcmp.ne.s32.totalorder %v1852, 0
        %vm2029 = vcmp.ne.s32.totalorder %v1859, 0
        %vm2030 = vcmp.ne.s32.totalorder %v1866, 0
        %vm2031 = vcmp.ne.s32.totalorder %v1873, 0
        %vm2032 = vcmp.ne.s32.totalorder %v1880, 0
        %vm2033 = vcmp.ne.s32.totalorder %v1887, 0
        %vm2034 = vcmp.ne.s32.totalorder %v1894, 0
        %vm2035 = vcmp.ne.s32.totalorder %v1901, 0
        %vm2036 = vcmp.ne.s32.totalorder %v1908, 0
        %vm2037 = vcmp.ne.s32.totalorder %v1915, 0
        %vm2038 = vcmp.ne.s32.totalorder %v1922, 0
        %vm2039 = vcmp.ne.s32.totalorder %v1929, 0
        %vm2040 = vcmp.ne.s32.totalorder %v1936, 0
        %vm2041 = vcmp.ne.s32.totalorder %v1943, 0
        %vm2042 = vcmp.ne.s32.totalorder %v1950, 0
        %vm2043 = vcmp.ne.s32.totalorder %v1957, 0
        %vm2044 = vcmp.ne.s32.totalorder %v1964, 0
        %vm2045 = vcmp.ne.s32.totalorder %v1971, 0
        %vm2046 = vcmp.ne.s32.totalorder %v1978, 0
        %vm2047 = vcmp.ne.s32.totalorder %v1985, 0
        %vm2048 = vcmp.ne.s32.totalorder %v1992, 0
        %vm2049 = vcmp.ne.s32.totalorder %v1999, 0
        %vm2050 = vcmp.ne.s32.totalorder %v2006, 0
        %vm2051 = vcmp.ne.s32.totalorder %v2013, 0
        %vm2052 = vcmp.ne.s32.totalorder %v2020, 0
        %vm2053 = vcmp.lt.s32.totalorder %v1803, 0
        %vm2054 = vcmp.lt.s32.totalorder %v1810, 0
        %vm2055 = vcmp.lt.s32.totalorder %v1817, 0
        %vm2056 = vcmp.lt.s32.totalorder %v1824, 0
        %vm2057 = vcmp.lt.s32.totalorder %v1831, 0
        %vm2058 = vcmp.lt.s32.totalorder %v1838, 0
        %vm2059 = vcmp.lt.s32.totalorder %v1845, 0
        %vm2060 = vcmp.lt.s32.totalorder %v1852, 0
        %vm2061 = vcmp.lt.s32.totalorder %v1859, 0
        %vm2062 = vcmp.lt.s32.totalorder %v1866, 0
        %vm2063 = vcmp.lt.s32.totalorder %v1873, 0
        %vm2064 = vcmp.lt.s32.totalorder %v1880, 0
        %vm2065 = vcmp.lt.s32.totalorder %v1887, 0
        %vm2066 = vcmp.lt.s32.totalorder %v1894, 0
        %vm2067 = vcmp.lt.s32.totalorder %v1901, 0
        %vm2068 = vcmp.lt.s32.totalorder %v1908, 0
        %vm2069 = vcmp.lt.s32.totalorder %v1915, 0
        %vm2070 = vcmp.lt.s32.totalorder %v1922, 0
        %vm2071 = vcmp.lt.s32.totalorder %v1929, 0
        %vm2072 = vcmp.lt.s32.totalorder %v1936, 0
        %vm2073 = vcmp.lt.s32.totalorder %v1943, 0
        %vm2074 = vcmp.lt.s32.totalorder %v1950, 0
        %vm2075 = vcmp.lt.s32.totalorder %v1957, 0
        %vm2076 = vcmp.lt.s32.totalorder %v1964, 0
        %vm2077 = vcmp.lt.s32.totalorder %v1971, 0
        %vm2078 = vcmp.lt.s32.totalorder %v1978, 0
        %vm2079 = vcmp.lt.s32.totalorder %v1985, 0
        %vm2080 = vcmp.lt.s32.totalorder %v1992, 0
        %vm2081 = vcmp.lt.s32.totalorder %v1999, 0
        %vm2082 = vcmp.lt.s32.totalorder %v2006, 0
        %vm2083 = vcmp.lt.s32.totalorder %v2013, 0
        %vm2084 = vcmp.lt.s32.totalorder %v2020, 0
        %vm2085 = vmand %vm2053, %vm2021
        %vm2086 = vmand %vm2054, %vm2022
        %vm2087 = vmand %vm2055, %vm2023
        %vm2088 = vmand %vm2056, %vm2024
        %vm2089 = vmand %vm2057, %vm2025
        %vm2090 = vmand %vm2058, %vm2026
        %vm2091 = vmand %vm2059, %vm2027
        %vm2092 = vmand %vm2060, %vm2028
        %vm2093 = vmand %vm2061, %vm2029
        %vm2094 = vmand %vm2062, %vm2030
        %vm2095 = vmand %vm2063, %vm2031
        %vm2096 = vmand %vm2064, %vm2032
        %vm2097 = vmand %vm2065, %vm2033
        %vm2098 = vmand %vm2066, %vm2034
        %vm2099 = vmand %vm2067, %vm2035
        %vm2100 = vmand %vm2068, %vm2036
        %vm2101 = vmand %vm2069, %vm2037
        %vm2102 = vmand %vm2070, %vm2038
        %vm2103 = vmand %vm2071, %vm2039
        %vm2104 = vmand %vm2072, %vm2040
        %vm2105 = vmand %vm2073, %vm2041
        %vm2106 = vmand %vm2074, %vm2042
        %vm2107 = vmand %vm2075, %vm2043
        %vm2108 = vmand %vm2076, %vm2044
        %vm2109 = vmand %vm2077, %vm2045
        %vm2110 = vmand %vm2078, %vm2046
        %vm2111 = vmand %vm2079, %vm2047
        %vm2112 = vmand %vm2080, %vm2048
        %vm2113 = vmand %vm2081, %vm2049
        %vm2114 = vmand %vm2082, %vm2050
        %vm2115 = vmand %vm2083, %vm2051
        %vm2116 = vmand %vm2084, %vm2052
        %v2117 = vadd.s32 %v1803, 16
        %v2118 = vadd.s32 %v1810, 16
        %v2119 = vadd.s32 %v1817, 16
        %v2120 = vadd.s32 %v1824, 16
        %v2121 = vadd.s32 %v1831, 16
        %v2122 = vadd.s32 %v1838, 16
        %v2123 = vadd.s32 %v1845, 16
        %v2124 = vadd.s32 %v1852, 16
        %v2125 = vadd.s32 %v1859, 16
        %v2126 = vadd.s32 %v1866, 16
        %v2127 = vadd.s32 %v1873, 16
        %v2128 = vadd.s32 %v1880, 16
        %v2129 = vadd.s32 %v1887, 16
        %v2130 = vadd.s32 %v1894, 16
        %v2131 = vadd.s32 %v1901, 16
        %v2132 = vadd.s32 %v1908, 16
        %v2133 = vadd.s32 %v1915, 16
        %v2134 = vadd.s32 %v1922, 16
        %v2135 = vadd.s32 %v1929, 16
        %v2136 = vadd.s32 %v1936, 16
        %v2137 = vadd.s32 %v1943, 16
        %v2138 = vadd.s32 %v1950, 16
        %v2139 = vadd.s32 %v1957, 16
        %v2140 = vadd.s32 %v1964, 16
        %v2141 = vadd.s32 %v1971, 16
        %v2142 = vadd.s32 %v1978, 16
        %v2143 = vadd.s32 %v1985, 16
        %v2144 = vadd.s32 %v1992, 16
        %v2145 = vadd.s32 %v1999, 16
        %v2146 = vadd.s32 %v2006, 16
        %v2147 = vadd.s32 %v2013, 16
        %v2148 = vadd.s32 %v2020, 16
        %v2149 = vsel %vm2085, %v2117, %v1803
        %v2150 = vsel %vm2086, %v2118, %v1810
        %v2151 = vsel %vm2087, %v2119, %v1817
        %v2152 = vsel %vm2088, %v2120, %v1824
        %v2153 = vsel %vm2089, %v2121, %v1831
        %v2154 = vsel %vm2090, %v2122, %v1838
        %v2155 = vsel %vm2091, %v2123, %v1845
        %v2156 = vsel %vm2092, %v2124, %v1852
        %v2157 = vsel %vm2093, %v2125, %v1859
        %v2158 = vsel %vm2094, %v2126, %v1866
        %v2159 = vsel %vm2095, %v2127, %v1873
        %v2160 = vsel %vm2096, %v2128, %v1880
        %v2161 = vsel %vm2097, %v2129, %v1887
        %v2162 = vsel %vm2098, %v2130, %v1894
        %v2163 = vsel %vm2099, %v2131, %v1901
        %v2164 = vsel %vm2100, %v2132, %v1908
        %v2165 = vsel %vm2101, %v2133, %v1915
        %v2166 = vsel %vm2102, %v2134, %v1922
        %v2167 = vsel %vm2103, %v2135, %v1929
        %v2168 = vsel %vm2104, %v2136, %v1936
        %v2169 = vsel %vm2105, %v2137, %v1943
        %v2170 = vsel %vm2106, %v2138, %v1950
        %v2171 = vsel %vm2107, %v2139, %v1957
        %v2172 = vsel %vm2108, %v2140, %v1964
        %v2173 = vsel %vm2109, %v2141, %v1971
        %v2174 = vsel %vm2110, %v2142, %v1978
        %v2175 = vsel %vm2111, %v2143, %v1985
        %v2176 = vsel %vm2112, %v2144, %v1992
        %v2177 = vsel %vm2113, %v2145, %v1999
        %v2178 = vsel %vm2114, %v2146, %v2006
        %v2179 = vsel %vm2115, %v2147, %v2013
        %v2180 = vsel %vm2116, %v2148, %v2020
        %vm2181 = vcmp.lt.s32.totalorder %v2149, 15
        %vm2182 = vcmp.lt.s32.totalorder %v2150, 15
        %vm2183 = vcmp.lt.s32.totalorder %v2151, 15
        %vm2184 = vcmp.lt.s32.totalorder %v2152, 15
        %vm2185 = vcmp.lt.s32.totalorder %v2153, 15
        %vm2186 = vcmp.lt.s32.totalorder %v2154, 15
        %vm2187 = vcmp.lt.s32.totalorder %v2155, 15
        %vm2188 = vcmp.lt.s32.totalorder %v2156, 15
        %vm2189 = vcmp.lt.s32.totalorder %v2157, 15
        %vm2190 = vcmp.lt.s32.totalorder %v2158, 15
        %vm2191 = vcmp.lt.s32.totalorder %v2159, 15
        %vm2192 = vcmp.lt.s32.totalorder %v2160, 15
        %vm2193 = vcmp.lt.s32.totalorder %v2161, 15
        %vm2194 = vcmp.lt.s32.totalorder %v2162, 15
        %vm2195 = vcmp.lt.s32.totalorder %v2163, 15
        %vm2196 = vcmp.lt.s32.totalorder %v2164, 15
        %vm2197 = vcmp.lt.s32.totalorder %v2165, 15
        %vm2198 = vcmp.lt.s32.totalorder %v2166, 15
        %vm2199 = vcmp.lt.s32.totalorder %v2167, 15
        %vm2200 = vcmp.lt.s32.totalorder %v2168, 15
        %vm2201 = vcmp.lt.s32.totalorder %v2169, 15
        %vm2202 = vcmp.lt.s32.totalorder %v2170, 15
        %vm2203 = vcmp.lt.s32.totalorder %v2171, 15
        %vm2204 = vcmp.lt.s32.totalorder %v2172, 15
        %vm2205 = vcmp.lt.s32.totalorder %v2173, 15
        %vm2206 = vcmp.lt.s32.totalorder %v2174, 15
        %vm2207 = vcmp.lt.s32.totalorder %v2175, 15
        %vm2208 = vcmp.lt.s32.totalorder %v2176, 15
        %vm2209 = vcmp.lt.s32.totalorder %v2177, 15
        %vm2210 = vcmp.lt.s32.totalorder %v2178, 15
        %vm2211 = vcmp.lt.s32.totalorder %v2179, 15
        %vm2212 = vcmp.lt.s32.totalorder %v2180, 15
        %vm2213 = vcmp.gt.s32.totalorder %v2149, 0
        %vm2214 = vcmp.gt.s32.totalorder %v2150, 0
        %vm2215 = vcmp.gt.s32.totalorder %v2151, 0
        %vm2216 = vcmp.gt.s32.totalorder %v2152, 0
        %vm2217 = vcmp.gt.s32.totalorder %v2153, 0
        %vm2218 = vcmp.gt.s32.totalorder %v2154, 0
        %vm2219 = vcmp.gt.s32.totalorder %v2155, 0
        %vm2220 = vcmp.gt.s32.totalorder %v2156, 0
        %vm2221 = vcmp.gt.s32.totalorder %v2157, 0
        %vm2222 = vcmp.gt.s32.totalorder %v2158, 0
        %vm2223 = vcmp.gt.s32.totalorder %v2159, 0
        %vm2224 = vcmp.gt.s32.totalorder %v2160, 0
        %vm2225 = vcmp.gt.s32.totalorder %v2161, 0
        %vm2226 = vcmp.gt.s32.totalorder %v2162, 0
        %vm2227 = vcmp.gt.s32.totalorder %v2163, 0
        %vm2228 = vcmp.gt.s32.totalorder %v2164, 0
        %vm2229 = vcmp.gt.s32.totalorder %v2165, 0
        %vm2230 = vcmp.gt.s32.totalorder %v2166, 0
        %vm2231 = vcmp.gt.s32.totalorder %v2167, 0
        %vm2232 = vcmp.gt.s32.totalorder %v2168, 0
        %vm2233 = vcmp.gt.s32.totalorder %v2169, 0
        %vm2234 = vcmp.gt.s32.totalorder %v2170, 0
        %vm2235 = vcmp.gt.s32.totalorder %v2171, 0
        %vm2236 = vcmp.gt.s32.totalorder %v2172, 0
        %vm2237 = vcmp.gt.s32.totalorder %v2173, 0
        %vm2238 = vcmp.gt.s32.totalorder %v2174, 0
        %vm2239 = vcmp.gt.s32.totalorder %v2175, 0
        %vm2240 = vcmp.gt.s32.totalorder %v2176, 0
        %vm2241 = vcmp.gt.s32.totalorder %v2177, 0
        %vm2242 = vcmp.gt.s32.totalorder %v2178, 0
        %vm2243 = vcmp.gt.s32.totalorder %v2179, 0
        %vm2244 = vcmp.gt.s32.totalorder %v2180, 0
        %v2245 = vld [vmem:[#allocation3] sm:$0xff]
        %v2246 = vld [vmem:[#allocation3 + $0x8] sm:$0xff]
        %v2247 = vld [vmem:[#allocation3 + $0x10] sm:$0xff]
        %v2248 = vld [vmem:[#allocation3 + $0x18] sm:$0xff]
        %v2249 = vld [vmem:[#allocation3 + $0x20] sm:$0xff]
        %v2250 = vld [vmem:[#allocation3 + $0x28] sm:$0xff]
        %v2251 = vld [vmem:[#allocation3 + $0x30] sm:$0xff]
        %v2252 = vld [vmem:[#allocation3 + $0x38] sm:$0xff]
        %v2253 = vld [vmem:[#allocation3 + $0x40] sm:$0xff]
        %v2254 = vld [vmem:[#allocation3 + $0x48] sm:$0xff]
        %v2255 = vld [vmem:[#allocation3 + $0x50] sm:$0xff]
        %v2256 = vld [vmem:[#allocation3 + $0x58] sm:$0xff]
        %v2257 = vld [vmem:[#allocation3 + $0x60] sm:$0xff]
        %v2258 = vld [vmem:[#allocation3 + $0x68] sm:$0xff]
        %v2259 = vld [vmem:[#allocation3 + $0x70] sm:$0xff]
        %v2260 = vld [vmem:[#allocation3 + $0x78] sm:$0xff]
        %v2261 = vld [vmem:[#allocation3 + $0x80] sm:$0xff]
        %v2262 = vld [vmem:[#allocation3 + $0x88] sm:$0xff]
        %v2263 = vld [vmem:[#allocation3 + $0x90] sm:$0xff]
        %v2264 = vld [vmem:[#allocation3 + $0x98] sm:$0xff]
        %v2265 = vld [vmem:[#allocation3 + $0xa0] sm:$0xff]
        %v2266 = vld [vmem:[#allocation3 + $0xa8] sm:$0xff]
        %v2267 = vld [vmem:[#allocation3 + $0xb0] sm:$0xff]
        %v2268 = vld [vmem:[#allocation3 + $0xb8] sm:$0xff]
        %v2269 = vld [vmem:[#allocation3 + $0xc0] sm:$0xff]
        %v2270 = vld [vmem:[#allocation3 + $0xc8] sm:$0xff]
        %v2271 = vld [vmem:[#allocation3 + $0xd0] sm:$0xff]
        %v2272 = vld [vmem:[#allocation3 + $0xd8] sm:$0xff]
        %v2273 = vld [vmem:[#allocation3 + $0xe0] sm:$0xff]
        %v2274 = vld [vmem:[#allocation3 + $0xe8] sm:$0xff]
        %v2275 = vld [vmem:[#allocation3 + $0xf0] sm:$0xff]
        %v2276 = vld [vmem:[#allocation3 + $0xf8] sm:$0xff]
        %v2277 = vsel %vm2213, %v2245, 0.0
        %v2278 = vsel %vm2214, %v2246, 0.0
        %v2279 = vsel %vm2215, %v2247, 0.0
        %v2280 = vsel %vm2216, %v2248, 0.0
        %v2281 = vsel %vm2217, %v2249, 0.0
        %v2282 = vsel %vm2218, %v2250, 0.0
        %v2283 = vsel %vm2219, %v2251, 0.0
        %v2284 = vsel %vm2220, %v2252, 0.0
        %v2285 = vsel %vm2221, %v2253, 0.0
        %v2286 = vsel %vm2222, %v2254, 0.0
        %v2287 = vsel %vm2223, %v2255, 0.0
        %v2288 = vsel %vm2224, %v2256, 0.0
        %v2289 = vsel %vm2225, %v2257, 0.0
        %v2290 = vsel %vm2226, %v2258, 0.0
        %v2291 = vsel %vm2227, %v2259, 0.0
        %v2292 = vsel %vm2228, %v2260, 0.0
        %v2293 = vsel %vm2229, %v2261, 0.0
        %v2294 = vsel %vm2230, %v2262, 0.0
        %v2295 = vsel %vm2231, %v2263, 0.0
        %v2296 = vsel %vm2232, %v2264, 0.0
        %v2297 = vsel %vm2233, %v2265, 0.0
        %v2298 = vsel %vm2234, %v2266, 0.0
        %v2299 = vsel %vm2235, %v2267, 0.0
        %v2300 = vsel %vm2236, %v2268, 0.0
        %v2301 = vsel %vm2237, %v2269, 0.0
        %v2302 = vsel %vm2238, %v2270, 0.0
        %v2303 = vsel %vm2239, %v2271, 0.0
        %v2304 = vsel %vm2240, %v2272, 0.0
        %v2305 = vsel %vm2241, %v2273, 0.0
        %v2306 = vsel %vm2242, %v2274, 0.0
        %v2307 = vsel %vm2243, %v2275, 0.0
        %v2308 = vsel %vm2244, %v2276, 0.0
        %v2309 = vld [vmem:[%s5] sm:$0xf]
        %v2311 = vsel %vm709, %v2277, 0
        %v2314 = vsel %vm709, %v2278, 0
        %v2317 = vsel %vm709, %v2279, 0
        %v2320 = vsel %vm709, %v2280, 0
        %v2323 = vsel %vm709, %v2281, 0
        %v2326 = vsel %vm709, %v2282, 0
        %v2329 = vsel %vm709, %v2283, 0
        %v2332 = vsel %vm709, %v2284, 0
        %v2335 = vsel %vm709, %v2285, 0
        %v2338 = vsel %vm709, %v2286, 0
        %v2341 = vsel %vm709, %v2287, 0
        %v2344 = vsel %vm709, %v2288, 0
        %v2347 = vsel %vm709, %v2289, 0
        %v2350 = vsel %vm709, %v2290, 0
        %v2353 = vsel %vm709, %v2291, 0
        %v2356 = vsel %vm709, %v2292, 0
        %v2359 = vsel %vm709, %v2293, 0
        %v2362 = vsel %vm709, %v2294, 0
        %v2365 = vsel %vm709, %v2295, 0
        %v2368 = vsel %vm709, %v2296, 0
        %v2371 = vsel %vm709, %v2297, 0
        %v2374 = vsel %vm709, %v2298, 0
        %v2377 = vsel %vm709, %v2299, 0
        %v2380 = vsel %vm709, %v2300, 0
        %v2383 = vsel %vm709, %v2301, 0
        %v2386 = vsel %vm709, %v2302, 0
        %v2389 = vsel %vm709, %v2303, 0
        %v2392 = vsel %vm709, %v2304, 0
        %v2395 = vsel %vm709, %v2305, 0
        %v2398 = vsel %vm709, %v2306, 0
        %v2401 = vsel %vm709, %v2307, 0
        %v2404 = vsel %vm709, %v2308, 0
        %vm2406 = vcmask 1043456
        %v2408 = vsel %vm2406, %v2309, 0
        %2410 = vmatpush.msra.mxu0 0.0
        %2411 = vmatpush.msra.mxu0 0.0
        %2412 = vmatpush.msra.mxu0 0.0
        %2413 = vmatpush.msra.mxu0 0.0
        %2414 = vmatpush.msra.mxu0 0.0
        %2415 = vmatpush.msra.mxu0 0.0
        %2416 = vmatpush.msra.mxu0 0.0
        %2417 = vmatpush.msra.mxu0 0.0
        %2418 = vmatpush.msra.mxu0 0.0
        %2419 = vmatpush.msra.mxu0 0.0
        %2420 = vmatpush.msra.mxu0 0.0
        %2421 = vmatpush.msra.mxu0 0.0
        %2422 = vmatpush.msra.mxu0 0.0
        %2423 = vmatpush.msra.mxu0 0.0
        %2424 = vmatpush.msra.mxu0 0.0
        %2425 = vmatpush.msra.mxu0 %v2408
        %2426 = vmatmul.f32.gmra.mxu0 %v2311
        %v2427 = vpop.f32.mrf.mxu0
        %v2428 = vadd.f32 0.0, %v2427
        %2429 = vmatmul.f32.gmra.mxu0 %v2314
        %v2430 = vpop.f32.mrf.mxu0
        %v2431 = vadd.f32 0.0, %v2430
        %2432 = vmatmul.f32.gmra.mxu0 %v2317
        %v2433 = vpop.f32.mrf.mxu0
        %v2434 = vadd.f32 0.0, %v2433
        %2435 = vmatmul.f32.gmra.mxu0 %v2320
        %v2436 = vpop.f32.mrf.mxu0
        %v2437 = vadd.f32 0.0, %v2436
        %2438 = vmatmul.f32.gmra.mxu0 %v2323
        %v2439 = vpop.f32.mrf.mxu0
        %v2440 = vadd.f32 0.0, %v2439
        %2441 = vmatmul.f32.gmra.mxu0 %v2326
        %v2442 = vpop.f32.mrf.mxu0
        %v2443 = vadd.f32 0.0, %v2442
        %2444 = vmatmul.f32.gmra.mxu0 %v2329
        %v2445 = vpop.f32.mrf.mxu0
        %v2446 = vadd.f32 0.0, %v2445
        %2447 = vmatmul.f32.gmra.mxu0 %v2332
        %v2448 = vpop.f32.mrf.mxu0
        %v2449 = vadd.f32 0.0, %v2448
        %2450 = vmatmul.f32.gmra.mxu0 %v2335
        %v2451 = vpop.f32.mrf.mxu0
        %v2452 = vadd.f32 0.0, %v2451
        %2453 = vmatmul.f32.gmra.mxu0 %v2338
        %v2454 = vpop.f32.mrf.mxu0
        %v2455 = vadd.f32 0.0, %v2454
        %2456 = vmatmul.f32.gmra.mxu0 %v2341
        %v2457 = vpop.f32.mrf.mxu0
        %v2458 = vadd.f32 0.0, %v2457
        %2459 = vmatmul.f32.gmra.mxu0 %v2344
        %v2460 = vpop.f32.mrf.mxu0
        %v2461 = vadd.f32 0.0, %v2460
        %2462 = vmatmul.f32.gmra.mxu0 %v2347
        %v2463 = vpop.f32.mrf.mxu0
        %v2464 = vadd.f32 0.0, %v2463
        %2465 = vmatmul.f32.gmra.mxu0 %v2350
        %v2466 = vpop.f32.mrf.mxu0
        %v2467 = vadd.f32 0.0, %v2466
        %2468 = vmatmul.f32.gmra.mxu0 %v2353
        %v2469 = vpop.f32.mrf.mxu0
        %v2470 = vadd.f32 0.0, %v2469
        %2471 = vmatmul.f32.gmra.mxu0 %v2356
        %v2472 = vpop.f32.mrf.mxu0
        %v2473 = vadd.f32 0.0, %v2472
        %2474 = vmatmul.f32.gmra.mxu0 %v2359
        %v2475 = vpop.f32.mrf.mxu0
        %v2476 = vadd.f32 0.0, %v2475
        %2477 = vmatmul.f32.gmra.mxu0 %v2362
        %v2478 = vpop.f32.mrf.mxu0
        %v2479 = vadd.f32 0.0, %v2478
        %2480 = vmatmul.f32.gmra.mxu0 %v2365
        %v2481 = vpop.f32.mrf.mxu0
        %v2482 = vadd.f32 0.0, %v2481
        %2483 = vmatmul.f32.gmra.mxu0 %v2368
        %v2484 = vpop.f32.mrf.mxu0
        %v2485 = vadd.f32 0.0, %v2484
        %2486 = vmatmul.f32.gmra.mxu0 %v2371
        %v2487 = vpop.f32.mrf.mxu0
        %v2488 = vadd.f32 0.0, %v2487
        %2489 = vmatmul.f32.gmra.mxu0 %v2374
        %v2490 = vpop.f32.mrf.mxu0
        %v2491 = vadd.f32 0.0, %v2490
        %2492 = vmatmul.f32.gmra.mxu0 %v2377
        %v2493 = vpop.f32.mrf.mxu0
        %v2494 = vadd.f32 0.0, %v2493
        %2495 = vmatmul.f32.gmra.mxu0 %v2380
        %v2496 = vpop.f32.mrf.mxu0
        %v2497 = vadd.f32 0.0, %v2496
        %2498 = vmatmul.f32.gmra.mxu0 %v2383
        %v2499 = vpop.f32.mrf.mxu0
        %v2500 = vadd.f32 0.0, %v2499
        %2501 = vmatmul.f32.gmra.mxu0 %v2386
        %v2502 = vpop.f32.mrf.mxu0
        %v2503 = vadd.f32 0.0, %v2502
        %2504 = vmatmul.f32.gmra.mxu0 %v2389
        %v2505 = vpop.f32.mrf.mxu0
        %v2506 = vadd.f32 0.0, %v2505
        %2507 = vmatmul.f32.gmra.mxu0 %v2392
        %v2508 = vpop.f32.mrf.mxu0
        %v2509 = vadd.f32 0.0, %v2508
        %2510 = vmatmul.f32.gmra.mxu0 %v2395
        %v2511 = vpop.f32.mrf.mxu0
        %v2512 = vadd.f32 0.0, %v2511
        %2513 = vmatmul.f32.gmra.mxu0 %v2398
        %v2514 = vpop.f32.mrf.mxu0
        %v2515 = vadd.f32 0.0, %v2514
        %2516 = vmatmul.f32.gmra.mxu0 %v2401
        %v2517 = vpop.f32.mrf.mxu0
        %v2518 = vadd.f32 0.0, %v2517
        %2519 = vmatmul.f32.gmra.mxu0 %v2404
        %v2520 = vpop.f32.mrf.mxu0
        %v2521 = vadd.f32 0.0, %v2520
        %2522 = vdwg.mxu0
        %2523 = vst.msk [vmem:[#allocation4] sm:$0xff] %vm709, %v2428
        %2524 = vst.msk [vmem:[#allocation4 + $0x8] sm:$0xff] %vm709, %v2431
        %2525 = vst.msk [vmem:[#allocation4 + $0x10] sm:$0xff] %vm709, %v2434
        %2526 = vst.msk [vmem:[#allocation4 + $0x18] sm:$0xff] %vm709, %v2437
        %2527 = vst.msk [vmem:[#allocation4 + $0x20] sm:$0xff] %vm709, %v2440
        %2528 = vst.msk [vmem:[#allocation4 + $0x28] sm:$0xff] %vm709, %v2443
        %2529 = vst.msk [vmem:[#allocation4 + $0x30] sm:$0xff] %vm709, %v2446
        %2530 = vst.msk [vmem:[#allocation4 + $0x38] sm:$0xff] %vm709, %v2449
        %2531 = vst.msk [vmem:[#allocation4 + $0x40] sm:$0xff] %vm709, %v2452
        %2532 = vst.msk [vmem:[#allocation4 + $0x48] sm:$0xff] %vm709, %v2455
        %2533 = vst.msk [vmem:[#allocation4 + $0x50] sm:$0xff] %vm709, %v2458
        %2534 = vst.msk [vmem:[#allocation4 + $0x58] sm:$0xff] %vm709, %v2461
        %2535 = vst.msk [vmem:[#allocation4 + $0x60] sm:$0xff] %vm709, %v2464
        %2536 = vst.msk [vmem:[#allocation4 + $0x68] sm:$0xff] %vm709, %v2467
        %2537 = vst.msk [vmem:[#allocation4 + $0x70] sm:$0xff] %vm709, %v2470
        %2538 = vst.msk [vmem:[#allocation4 + $0x78] sm:$0xff] %vm709, %v2473
        %2539 = vst.msk [vmem:[#allocation4 + $0x80] sm:$0xff] %vm709, %v2476
        %2540 = vst.msk [vmem:[#allocation4 + $0x88] sm:$0xff] %vm709, %v2479
        %2541 = vst.msk [vmem:[#allocation4 + $0x90] sm:$0xff] %vm709, %v2482
        %2542 = vst.msk [vmem:[#allocation4 + $0x98] sm:$0xff] %vm709, %v2485
        %2543 = vst.msk [vmem:[#allocation4 + $0xa0] sm:$0xff] %vm709, %v2488
        %2544 = vst.msk [vmem:[#allocation4 + $0xa8] sm:$0xff] %vm709, %v2491
        %2545 = vst.msk [vmem:[#allocation4 + $0xb0] sm:$0xff] %vm709, %v2494
        %2546 = vst.msk [vmem:[#allocation4 + $0xb8] sm:$0xff] %vm709, %v2497
        %2547 = vst.msk [vmem:[#allocation4 + $0xc0] sm:$0xff] %vm709, %v2500
        %2548 = vst.msk [vmem:[#allocation4 + $0xc8] sm:$0xff] %vm709, %v2503
        %2549 = vst.msk [vmem:[#allocation4 + $0xd0] sm:$0xff] %vm709, %v2506
        %2550 = vst.msk [vmem:[#allocation4 + $0xd8] sm:$0xff] %vm709, %v2509
        %2551 = vst.msk [vmem:[#allocation4 + $0xe0] sm:$0xff] %vm709, %v2512
        %2552 = vst.msk [vmem:[#allocation4 + $0xe8] sm:$0xff] %vm709, %v2515
        %2553 = vst.msk [vmem:[#allocation4 + $0xf0] sm:$0xff] %vm709, %v2518
        %2554 = vst.msk [vmem:[#allocation4 + $0xf8] sm:$0xff] %vm709, %v2521
        %v2555 = vld [vmem:[#allocation3 + $0x10] sm:$0xff]
        %v2556 = vld [vmem:[#allocation3 + $0x18] sm:$0xff]
        %v2557 = vld [vmem:[#allocation3 + $0x20] sm:$0xff]
        %v2558 = vld [vmem:[#allocation3 + $0x28] sm:$0xff]
        %v2559 = vld [vmem:[#allocation3 + $0x30] sm:$0xff]
        %v2560 = vld [vmem:[#allocation3 + $0x38] sm:$0xff]
        %v2561 = vld [vmem:[#allocation3 + $0x40] sm:$0xff]
        %v2562 = vld [vmem:[#allocation3 + $0x48] sm:$0xff]
        %v2563 = vld [vmem:[#allocation3 + $0x50] sm:$0xff]
        %v2564 = vld [vmem:[#allocation3 + $0x58] sm:$0xff]
        %v2565 = vld [vmem:[#allocation3 + $0x60] sm:$0xff]
        %v2566 = vld [vmem:[#allocation3 + $0x68] sm:$0xff]
        %v2567 = vld [vmem:[#allocation3 + $0x70] sm:$0xff]
        %v2568 = vld [vmem:[#allocation3 + $0x78] sm:$0xff]
        %v2569 = vld [vmem:[#allocation3 + $0x80] sm:$0xff]
        %v2570 = vld [vmem:[#allocation3 + $0x88] sm:$0xff]
        %v2571 = vld [vmem:[#allocation3 + $0x90] sm:$0xff]
        %v2572 = vld [vmem:[#allocation3 + $0x98] sm:$0xff]
        %v2573 = vld [vmem:[#allocation3 + $0xa0] sm:$0xff]
        %v2574 = vld [vmem:[#allocation3 + $0xa8] sm:$0xff]
        %v2575 = vld [vmem:[#allocation3 + $0xb0] sm:$0xff]
        %v2576 = vld [vmem:[#allocation3 + $0xb8] sm:$0xff]
        %v2577 = vld [vmem:[#allocation3 + $0xc0] sm:$0xff]
        %v2578 = vld [vmem:[#allocation3 + $0xc8] sm:$0xff]
        %v2579 = vld [vmem:[#allocation3 + $0xd0] sm:$0xff]
        %v2580 = vld [vmem:[#allocation3 + $0xd8] sm:$0xff]
        %v2581 = vld [vmem:[#allocation3 + $0xe0] sm:$0xff]
        %v2582 = vld [vmem:[#allocation3 + $0xe8] sm:$0xff]
        %v2583 = vld [vmem:[#allocation3 + $0xf0] sm:$0xff]
        %v2584 = vld [vmem:[#allocation3 + $0xf8] sm:$0xff]
        %v2585 = vld [vmem:[#allocation3 + $0x100] sm:$0xff]
        %v2586 = vld [vmem:[#allocation3 + $0x108] sm:$0xff]
        %v2587 = vsel %vm2213, %v2555, 0.0
        %v2588 = vsel %vm2214, %v2556, 0.0
        %v2589 = vsel %vm2215, %v2557, 0.0
        %v2590 = vsel %vm2216, %v2558, 0.0
        %v2591 = vsel %vm2217, %v2559, 0.0
        %v2592 = vsel %vm2218, %v2560, 0.0
        %v2593 = vsel %vm2219, %v2561, 0.0
        %v2594 = vsel %vm2220, %v2562, 0.0
        %v2595 = vsel %vm2221, %v2563, 0.0
        %v2596 = vsel %vm2222, %v2564, 0.0
        %v2597 = vsel %vm2223, %v2565, 0.0
        %v2598 = vsel %vm2224, %v2566, 0.0
        %v2599 = vsel %vm2225, %v2567, 0.0
        %v2600 = vsel %vm2226, %v2568, 0.0
        %v2601 = vsel %vm2227, %v2569, 0.0
        %v2602 = vsel %vm2228, %v2570, 0.0
        %v2603 = vsel %vm2229, %v2571, 0.0
        %v2604 = vsel %vm2230, %v2572, 0.0
        %v2605 = vsel %vm2231, %v2573, 0.0
        %v2606 = vsel %vm2232, %v2574, 0.0
        %v2607 = vsel %vm2233, %v2575, 0.0
        %v2608 = vsel %vm2234, %v2576, 0.0
        %v2609 = vsel %vm2235, %v2577, 0.0
        %v2610 = vsel %vm2236, %v2578, 0.0
        %v2611 = vsel %vm2237, %v2579, 0.0
        %v2612 = vsel %vm2238, %v2580, 0.0
        %v2613 = vsel %vm2239, %v2581, 0.0
        %v2614 = vsel %vm2240, %v2582, 0.0
        %v2615 = vsel %vm2241, %v2583, 0.0
        %v2616 = vsel %vm2242, %v2584, 0.0
        %v2617 = vsel %vm2243, %v2585, 0.0
        %v2618 = vsel %vm2244, %v2586, 0.0
        %s2619 = scalar_lea.vmem %s5, 4
        %v2620 = vld [vmem:[%s2619] sm:$0xf]
        %v2622 = vsel %vm709, %v2587, 0
        %v2625 = vsel %vm709, %v2588, 0
        %v2628 = vsel %vm709, %v2589, 0
        %v2631 = vsel %vm709, %v2590, 0
        %v2634 = vsel %vm709, %v2591, 0
        %v2637 = vsel %vm709, %v2592, 0
        %v2640 = vsel %vm709, %v2593, 0
        %v2643 = vsel %vm709, %v2594, 0
        %v2646 = vsel %vm709, %v2595, 0
        %v2649 = vsel %vm709, %v2596, 0
        %v2652 = vsel %vm709, %v2597, 0
        %v2655 = vsel %vm709, %v2598, 0
        %v2658 = vsel %vm709, %v2599, 0
        %v2661 = vsel %vm709, %v2600, 0
        %v2664 = vsel %vm709, %v2601, 0
        %v2667 = vsel %vm709, %v2602, 0
        %v2670 = vsel %vm709, %v2603, 0
        %v2673 = vsel %vm709, %v2604, 0
        %v2676 = vsel %vm709, %v2605, 0
        %v2679 = vsel %vm709, %v2606, 0
        %v2682 = vsel %vm709, %v2607, 0
        %v2685 = vsel %vm709, %v2608, 0
        %v2688 = vsel %vm709, %v2609, 0
        %v2691 = vsel %vm709, %v2610, 0
        %v2694 = vsel %vm709, %v2611, 0
        %v2697 = vsel %vm709, %v2612, 0
        %v2700 = vsel %vm709, %v2613, 0
        %v2703 = vsel %vm709, %v2614, 0
        %v2706 = vsel %vm709, %v2615, 0
        %v2709 = vsel %vm709, %v2616, 0
        %v2712 = vsel %vm709, %v2617, 0
        %v2715 = vsel %vm709, %v2618, 0
        %v2718 = vsel %vm2406, %v2620, 0
        %2720 = vmatpush.msra.mxu0 0.0
        %2721 = vmatpush.msra.mxu0 0.0
        %2722 = vmatpush.msra.mxu0 0.0
        %2723 = vmatpush.msra.mxu0 0.0
        %2724 = vmatpush.msra.mxu0 0.0
        %2725 = vmatpush.msra.mxu0 0.0
        %2726 = vmatpush.msra.mxu0 0.0
        %2727 = vmatpush.msra.mxu0 0.0
        %2728 = vmatpush.msra.mxu0 0.0
        %2729 = vmatpush.msra.mxu0 0.0
        %2730 = vmatpush.msra.mxu0 0.0
        %2731 = vmatpush.msra.mxu0 0.0
        %2732 = vmatpush.msra.mxu0 0.0
        %2733 = vmatpush.msra.mxu0 0.0
        %2734 = vmatpush.msra.mxu0 0.0
        %2735 = vmatpush.msra.mxu0 %v2718
        %2736 = vmatmul.f32.gmra.mxu0 %v2622
        %v2737 = vpop.f32.mrf.mxu0
        %v2738 = vadd.f32 0.0, %v2737
        %2739 = vmatmul.f32.gmra.mxu0 %v2625
        %v2740 = vpop.f32.mrf.mxu0
        %v2741 = vadd.f32 0.0, %v2740
        %2742 = vmatmul.f32.gmra.mxu0 %v2628
        %v2743 = vpop.f32.mrf.mxu0
        %v2744 = vadd.f32 0.0, %v2743
        %2745 = vmatmul.f32.gmra.mxu0 %v2631
        %v2746 = vpop.f32.mrf.mxu0
        %v2747 = vadd.f32 0.0, %v2746
        %2748 = vmatmul.f32.gmra.mxu0 %v2634
        %v2749 = vpop.f32.mrf.mxu0
        %v2750 = vadd.f32 0.0, %v2749
        %2751 = vmatmul.f32.gmra.mxu0 %v2637
        %v2752 = vpop.f32.mrf.mxu0
        %v2753 = vadd.f32 0.0, %v2752
        %2754 = vmatmul.f32.gmra.mxu0 %v2640
        %v2755 = vpop.f32.mrf.mxu0
        %v2756 = vadd.f32 0.0, %v2755
        %2757 = vmatmul.f32.gmra.mxu0 %v2643
        %v2758 = vpop.f32.mrf.mxu0
        %v2759 = vadd.f32 0.0, %v2758
        %2760 = vmatmul.f32.gmra.mxu0 %v2646
        %v2761 = vpop.f32.mrf.mxu0
        %v2762 = vadd.f32 0.0, %v2761
        %2763 = vmatmul.f32.gmra.mxu0 %v2649
        %v2764 = vpop.f32.mrf.mxu0
        %v2765 = vadd.f32 0.0, %v2764
        %2766 = vmatmul.f32.gmra.mxu0 %v2652
        %v2767 = vpop.f32.mrf.mxu0
        %v2768 = vadd.f32 0.0, %v2767
        %2769 = vmatmul.f32.gmra.mxu0 %v2655
        %v2770 = vpop.f32.mrf.mxu0
        %v2771 = vadd.f32 0.0, %v2770
        %2772 = vmatmul.f32.gmra.mxu0 %v2658
        %v2773 = vpop.f32.mrf.mxu0
        %v2774 = vadd.f32 0.0, %v2773
        %2775 = vmatmul.f32.gmra.mxu0 %v2661
        %v2776 = vpop.f32.mrf.mxu0
        %v2777 = vadd.f32 0.0, %v2776
        %2778 = vmatmul.f32.gmra.mxu0 %v2664
        %v2779 = vpop.f32.mrf.mxu0
        %v2780 = vadd.f32 0.0, %v2779
        %2781 = vmatmul.f32.gmra.mxu0 %v2667
        %v2782 = vpop.f32.mrf.mxu0
        %v2783 = vadd.f32 0.0, %v2782
        %2784 = vmatmul.f32.gmra.mxu0 %v2670
        %v2785 = vpop.f32.mrf.mxu0
        %v2786 = vadd.f32 0.0, %v2785
        %2787 = vmatmul.f32.gmra.mxu0 %v2673
        %v2788 = vpop.f32.mrf.mxu0
        %v2789 = vadd.f32 0.0, %v2788
        %2790 = vmatmul.f32.gmra.mxu0 %v2676
        %v2791 = vpop.f32.mrf.mxu0
        %v2792 = vadd.f32 0.0, %v2791
        %2793 = vmatmul.f32.gmra.mxu0 %v2679
        %v2794 = vpop.f32.mrf.mxu0
        %v2795 = vadd.f32 0.0, %v2794
        %2796 = vmatmul.f32.gmra.mxu0 %v2682
        %v2797 = vpop.f32.mrf.mxu0
        %v2798 = vadd.f32 0.0, %v2797
        %2799 = vmatmul.f32.gmra.mxu0 %v2685
        %v2800 = vpop.f32.mrf.mxu0
        %v2801 = vadd.f32 0.0, %v2800
        %2802 = vmatmul.f32.gmra.mxu0 %v2688
        %v2803 = vpop.f32.mrf.mxu0
        %v2804 = vadd.f32 0.0, %v2803
        %2805 = vmatmul.f32.gmra.mxu0 %v2691
        %v2806 = vpop.f32.mrf.mxu0
        %v2807 = vadd.f32 0.0, %v2806
        %2808 = vmatmul.f32.gmra.mxu0 %v2694
        %v2809 = vpop.f32.mrf.mxu0
        %v2810 = vadd.f32 0.0, %v2809
        %2811 = vmatmul.f32.gmra.mxu0 %v2697
        %v2812 = vpop.f32.mrf.mxu0
        %v2813 = vadd.f32 0.0, %v2812
        %2814 = vmatmul.f32.gmra.mxu0 %v2700
        %v2815 = vpop.f32.mrf.mxu0
        %v2816 = vadd.f32 0.0, %v2815
        %2817 = vmatmul.f32.gmra.mxu0 %v2703
        %v2818 = vpop.f32.mrf.mxu0
        %v2819 = vadd.f32 0.0, %v2818
        %2820 = vmatmul.f32.gmra.mxu0 %v2706
        %v2821 = vpop.f32.mrf.mxu0
        %v2822 = vadd.f32 0.0, %v2821
        %2823 = vmatmul.f32.gmra.mxu0 %v2709
        %v2824 = vpop.f32.mrf.mxu0
        %v2825 = vadd.f32 0.0, %v2824
        %2826 = vmatmul.f32.gmra.mxu0 %v2712
        %v2827 = vpop.f32.mrf.mxu0
        %v2828 = vadd.f32 0.0, %v2827
        %2829 = vmatmul.f32.gmra.mxu0 %v2715
        %v2830 = vpop.f32.mrf.mxu0
        %v2831 = vadd.f32 0.0, %v2830
        %2832 = vdwg.mxu0
        %v2833 = vld [vmem:[#allocation4] sm:$0xff]
        %v2834 = vld [vmem:[#allocation4 + $0x8] sm:$0xff]
        %v2835 = vld [vmem:[#allocation4 + $0x10] sm:$0xff]
        %v2836 = vld [vmem:[#allocation4 + $0x18] sm:$0xff]
        %v2837 = vld [vmem:[#allocation4 + $0x20] sm:$0xff]
        %v2838 = vld [vmem:[#allocation4 + $0x28] sm:$0xff]
        %v2839 = vld [vmem:[#allocation4 + $0x30] sm:$0xff]
        %v2840 = vld [vmem:[#allocation4 + $0x38] sm:$0xff]
        %v2841 = vld [vmem:[#allocation4 + $0x40] sm:$0xff]
        %v2842 = vld [vmem:[#allocation4 + $0x48] sm:$0xff]
        %v2843 = vld [vmem:[#allocation4 + $0x50] sm:$0xff]
        %v2844 = vld [vmem:[#allocation4 + $0x58] sm:$0xff]
        %v2845 = vld [vmem:[#allocation4 + $0x60] sm:$0xff]
        %v2846 = vld [vmem:[#allocation4 + $0x68] sm:$0xff]
        %v2847 = vld [vmem:[#allocation4 + $0x70] sm:$0xff]
        %v2848 = vld [vmem:[#allocation4 + $0x78] sm:$0xff]
        %v2849 = vld [vmem:[#allocation4 + $0x80] sm:$0xff]
        %v2850 = vld [vmem:[#allocation4 + $0x88] sm:$0xff]
        %v2851 = vld [vmem:[#allocation4 + $0x90] sm:$0xff]
        %v2852 = vld [vmem:[#allocation4 + $0x98] sm:$0xff]
        %v2853 = vld [vmem:[#allocation4 + $0xa0] sm:$0xff]
        %v2854 = vld [vmem:[#allocation4 + $0xa8] sm:$0xff]
        %v2855 = vld [vmem:[#allocation4 + $0xb0] sm:$0xff]
        %v2856 = vld [vmem:[#allocation4 + $0xb8] sm:$0xff]
        %v2857 = vld [vmem:[#allocation4 + $0xc0] sm:$0xff]
        %v2858 = vld [vmem:[#allocation4 + $0xc8] sm:$0xff]
        %v2859 = vld [vmem:[#allocation4 + $0xd0] sm:$0xff]
        %v2860 = vld [vmem:[#allocation4 + $0xd8] sm:$0xff]
        %v2861 = vld [vmem:[#allocation4 + $0xe0] sm:$0xff]
        %v2862 = vld [vmem:[#allocation4 + $0xe8] sm:$0xff]
        %v2863 = vld [vmem:[#allocation4 + $0xf0] sm:$0xff]
        %v2864 = vld [vmem:[#allocation4 + $0xf8] sm:$0xff]
        %v2865 = vadd.f32 %v2833, %v2738
        %v2866 = vadd.f32 %v2834, %v2741
        %v2867 = vadd.f32 %v2835, %v2744
        %v2868 = vadd.f32 %v2836, %v2747
        %v2869 = vadd.f32 %v2837, %v2750
        %v2870 = vadd.f32 %v2838, %v2753
        %v2871 = vadd.f32 %v2839, %v2756
        %v2872 = vadd.f32 %v2840, %v2759
        %v2873 = vadd.f32 %v2841, %v2762
        %v2874 = vadd.f32 %v2842, %v2765
        %v2875 = vadd.f32 %v2843, %v2768
        %v2876 = vadd.f32 %v2844, %v2771
        %v2877 = vadd.f32 %v2845, %v2774
        %v2878 = vadd.f32 %v2846, %v2777
        %v2879 = vadd.f32 %v2847, %v2780
        %v2880 = vadd.f32 %v2848, %v2783
        %v2881 = vadd.f32 %v2849, %v2786
        %v2882 = vadd.f32 %v2850, %v2789
        %v2883 = vadd.f32 %v2851, %v2792
        %v2884 = vadd.f32 %v2852, %v2795
        %v2885 = vadd.f32 %v2853, %v2798
        %v2886 = vadd.f32 %v2854, %v2801
        %v2887 = vadd.f32 %v2855, %v2804
        %v2888 = vadd.f32 %v2856, %v2807
        %v2889 = vadd.f32 %v2857, %v2810
        %v2890 = vadd.f32 %v2858, %v2813
        %v2891 = vadd.f32 %v2859, %v2816
        %v2892 = vadd.f32 %v2860, %v2819
        %v2893 = vadd.f32 %v2861, %v2822
        %v2894 = vadd.f32 %v2862, %v2825
        %v2895 = vadd.f32 %v2863, %v2828
        %v2896 = vadd.f32 %v2864, %v2831
        %2897 = vst.msk [vmem:[#allocation4] sm:$0xff] %vm709, %v2865
        %2898 = vst.msk [vmem:[#allocation4 + $0x8] sm:$0xff] %vm709, %v2866
        %2899 = vst.msk [vmem:[#allocation4 + $0x10] sm:$0xff] %vm709, %v2867
        %2900 = vst.msk [vmem:[#allocation4 + $0x18] sm:$0xff] %vm709, %v2868
        %2901 = vst.msk [vmem:[#allocation4 + $0x20] sm:$0xff] %vm709, %v2869
        %2902 = vst.msk [vmem:[#allocation4 + $0x28] sm:$0xff] %vm709, %v2870
        %2903 = vst.msk [vmem:[#allocation4 + $0x30] sm:$0xff] %vm709, %v2871
        %2904 = vst.msk [vmem:[#allocation4 + $0x38] sm:$0xff] %vm709, %v2872
        %2905 = vst.msk [vmem:[#allocation4 + $0x40] sm:$0xff] %vm709, %v2873
        %2906 = vst.msk [vmem:[#allocation4 + $0x48] sm:$0xff] %vm709, %v2874
        %2907 = vst.msk [vmem:[#allocation4 + $0x50] sm:$0xff] %vm709, %v2875
        %2908 = vst.msk [vmem:[#allocation4 + $0x58] sm:$0xff] %vm709, %v2876
        %2909 = vst.msk [vmem:[#allocation4 + $0x60] sm:$0xff] %vm709, %v2877
        %2910 = vst.msk [vmem:[#allocation4 + $0x68] sm:$0xff] %vm709, %v2878
        %2911 = vst.msk [vmem:[#allocation4 + $0x70] sm:$0xff] %vm709, %v2879
        %2912 = vst.msk [vmem:[#allocation4 + $0x78] sm:$0xff] %vm709, %v2880
        %2913 = vst.msk [vmem:[#allocation4 + $0x80] sm:$0xff] %vm709, %v2881
        %2914 = vst.msk [vmem:[#allocation4 + $0x88] sm:$0xff] %vm709, %v2882
        %2915 = vst.msk [vmem:[#allocation4 + $0x90] sm:$0xff] %vm709, %v2883
        %2916 = vst.msk [vmem:[#allocation4 + $0x98] sm:$0xff] %vm709, %v2884
        %2917 = vst.msk [vmem:[#allocation4 + $0xa0] sm:$0xff] %vm709, %v2885
        %2918 = vst.msk [vmem:[#allocation4 + $0xa8] sm:$0xff] %vm709, %v2886
        %2919 = vst.msk [vmem:[#allocation4 + $0xb0] sm:$0xff] %vm709, %v2887
        %2920 = vst.msk [vmem:[#allocation4 + $0xb8] sm:$0xff] %vm709, %v2888
        %2921 = vst.msk [vmem:[#allocation4 + $0xc0] sm:$0xff] %vm709, %v2889
        %2922 = vst.msk [vmem:[#allocation4 + $0xc8] sm:$0xff] %vm709, %v2890
        %2923 = vst.msk [vmem:[#allocation4 + $0xd0] sm:$0xff] %vm709, %v2891
        %2924 = vst.msk [vmem:[#allocation4 + $0xd8] sm:$0xff] %vm709, %v2892
        %2925 = vst.msk [vmem:[#allocation4 + $0xe0] sm:$0xff] %vm709, %v2893
        %2926 = vst.msk [vmem:[#allocation4 + $0xe8] sm:$0xff] %vm709, %v2894
        %2927 = vst.msk [vmem:[#allocation4 + $0xf0] sm:$0xff] %vm709, %v2895
        %2928 = vst.msk [vmem:[#allocation4 + $0xf8] sm:$0xff] %vm709, %v2896
        %v2929 = vld [vmem:[#allocation3 + $0x20] sm:$0xff]
        %v2930 = vld [vmem:[#allocation3 + $0x28] sm:$0xff]
        %v2931 = vld [vmem:[#allocation3 + $0x30] sm:$0xff]
        %v2932 = vld [vmem:[#allocation3 + $0x38] sm:$0xff]
        %v2933 = vld [vmem:[#allocation3 + $0x40] sm:$0xff]
        %v2934 = vld [vmem:[#allocation3 + $0x48] sm:$0xff]
        %v2935 = vld [vmem:[#allocation3 + $0x50] sm:$0xff]
        %v2936 = vld [vmem:[#allocation3 + $0x58] sm:$0xff]
        %v2937 = vld [vmem:[#allocation3 + $0x60] sm:$0xff]
        %v2938 = vld [vmem:[#allocation3 + $0x68] sm:$0xff]
        %v2939 = vld [vmem:[#allocation3 + $0x70] sm:$0xff]
        %v2940 = vld [vmem:[#allocation3 + $0x78] sm:$0xff]
        %v2941 = vld [vmem:[#allocation3 + $0x80] sm:$0xff]
        %v2942 = vld [vmem:[#allocation3 + $0x88] sm:$0xff]
        %v2943 = vld [vmem:[#allocation3 + $0x90] sm:$0xff]
        %v2944 = vld [vmem:[#allocation3 + $0x98] sm:$0xff]
        %v2945 = vld [vmem:[#allocation3 + $0xa0] sm:$0xff]
        %v2946 = vld [vmem:[#allocation3 + $0xa8] sm:$0xff]
        %v2947 = vld [vmem:[#allocation3 + $0xb0] sm:$0xff]
        %v2948 = vld [vmem:[#allocation3 + $0xb8] sm:$0xff]
        %v2949 = vld [vmem:[#allocation3 + $0xc0] sm:$0xff]
        %v2950 = vld [vmem:[#allocation3 + $0xc8] sm:$0xff]
        %v2951 = vld [vmem:[#allocation3 + $0xd0] sm:$0xff]
        %v2952 = vld [vmem:[#allocation3 + $0xd8] sm:$0xff]
        %v2953 = vld [vmem:[#allocation3 + $0xe0] sm:$0xff]
        %v2954 = vld [vmem:[#allocation3 + $0xe8] sm:$0xff]
        %v2955 = vld [vmem:[#allocation3 + $0xf0] sm:$0xff]
        %v2956 = vld [vmem:[#allocation3 + $0xf8] sm:$0xff]
        %v2957 = vld [vmem:[#allocation3 + $0x100] sm:$0xff]
        %v2958 = vld [vmem:[#allocation3 + $0x108] sm:$0xff]
        %v2959 = vld [vmem:[#allocation3 + $0x110] sm:$0xff]
        %v2960 = vld [vmem:[#allocation3 + $0x118] sm:$0xff]
        %v2961 = vsel %vm2213, %v2929, 0.0
        %v2962 = vsel %vm2214, %v2930, 0.0
        %v2963 = vsel %vm2215, %v2931, 0.0
        %v2964 = vsel %vm2216, %v2932, 0.0
        %v2965 = vsel %vm2217, %v2933, 0.0
        %v2966 = vsel %vm2218, %v2934, 0.0
        %v2967 = vsel %vm2219, %v2935, 0.0
        %v2968 = vsel %vm2220, %v2936, 0.0
        %v2969 = vsel %vm2221, %v2937, 0.0
        %v2970 = vsel %vm2222, %v2938, 0.0
        %v2971 = vsel %vm2223, %v2939, 0.0
        %v2972 = vsel %vm2224, %v2940, 0.0
        %v2973 = vsel %vm2225, %v2941, 0.0
        %v2974 = vsel %vm2226, %v2942, 0.0
        %v2975 = vsel %vm2227, %v2943, 0.0
        %v2976 = vsel %vm2228, %v2944, 0.0
        %v2977 = vsel %vm2229, %v2945, 0.0
        %v2978 = vsel %vm2230, %v2946, 0.0
        %v2979 = vsel %vm2231, %v2947, 0.0
        %v2980 = vsel %vm2232, %v2948, 0.0
        %v2981 = vsel %vm2233, %v2949, 0.0
        %v2982 = vsel %vm2234, %v2950, 0.0
        %v2983 = vsel %vm2235, %v2951, 0.0
        %v2984 = vsel %vm2236, %v2952, 0.0
        %v2985 = vsel %vm2237, %v2953, 0.0
        %v2986 = vsel %vm2238, %v2954, 0.0
        %v2987 = vsel %vm2239, %v2955, 0.0
        %v2988 = vsel %vm2240, %v2956, 0.0
        %v2989 = vsel %vm2241, %v2957, 0.0
        %v2990 = vsel %vm2242, %v2958, 0.0
        %v2991 = vsel %vm2243, %v2959, 0.0
        %v2992 = vsel %vm2244, %v2960, 0.0
        %s2993 = scalar_lea.vmem %s5, 8
        %v2994 = vld [vmem:[%s2993] sm:$0xf]
        %v2996 = vsel %vm709, %v2961, 0
        %v2999 = vsel %vm709, %v2962, 0
        %v3002 = vsel %vm709, %v2963, 0
        %v3005 = vsel %vm709, %v2964, 0
        %v3008 = vsel %vm709, %v2965, 0
        %v3011 = vsel %vm709, %v2966, 0
        %v3014 = vsel %vm709, %v2967, 0
        %v3017 = vsel %vm709, %v2968, 0
        %v3020 = vsel %vm709, %v2969, 0
        %v3023 = vsel %vm709, %v2970, 0
        %v3026 = vsel %vm709, %v2971, 0
        %v3029 = vsel %vm709, %v2972, 0
        %v3032 = vsel %vm709, %v2973, 0
        %v3035 = vsel %vm709, %v2974, 0
        %v3038 = vsel %vm709, %v2975, 0
        %v3041 = vsel %vm709, %v2976, 0
        %v3044 = vsel %vm709, %v2977, 0
        %v3047 = vsel %vm709, %v2978, 0
        %v3050 = vsel %vm709, %v2979, 0
        %v3053 = vsel %vm709, %v2980, 0
        %v3056 = vsel %vm709, %v2981, 0
        %v3059 = vsel %vm709, %v2982, 0
        %v3062 = vsel %vm709, %v2983, 0
        %v3065 = vsel %vm709, %v2984, 0
        %v3068 = vsel %vm709, %v2985, 0
        %v3071 = vsel %vm709, %v2986, 0
        %v3074 = vsel %vm709, %v2987, 0
        %v3077 = vsel %vm709, %v2988, 0
        %v3080 = vsel %vm709, %v2989, 0
        %v3083 = vsel %vm709, %v2990, 0
        %v3086 = vsel %vm709, %v2991, 0
        %v3089 = vsel %vm709, %v2992, 0
        %v3092 = vsel %vm2406, %v2994, 0
        %3094 = vmatpush.msra.mxu0 0.0
        %3095 = vmatpush.msra.mxu0 0.0
        %3096 = vmatpush.msra.mxu0 0.0
        %3097 = vmatpush.msra.mxu0 0.0
        %3098 = vmatpush.msra.mxu0 0.0
        %3099 = vmatpush.msra.mxu0 0.0
        %3100 = vmatpush.msra.mxu0 0.0
        %3101 = vmatpush.msra.mxu0 0.0
        %3102 = vmatpush.msra.mxu0 0.0
        %3103 = vmatpush.msra.mxu0 0.0
        %3104 = vmatpush.msra.mxu0 0.0
        %3105 = vmatpush.msra.mxu0 0.0
        %3106 = vmatpush.msra.mxu0 0.0
        %3107 = vmatpush.msra.mxu0 0.0
        %3108 = vmatpush.msra.mxu0 0.0
        %3109 = vmatpush.msra.mxu0 %v3092
        %3110 = vmatmul.f32.gmra.mxu0 %v2996
        %v3111 = vpop.f32.mrf.mxu0
        %v3112 = vadd.f32 0.0, %v3111
        %3113 = vmatmul.f32.gmra.mxu0 %v2999
        %v3114 = vpop.f32.mrf.mxu0
        %v3115 = vadd.f32 0.0, %v3114
        %3116 = vmatmul.f32.gmra.mxu0 %v3002
        %v3117 = vpop.f32.mrf.mxu0
        %v3118 = vadd.f32 0.0, %v3117
        %3119 = vmatmul.f32.gmra.mxu0 %v3005
        %v3120 = vpop.f32.mrf.mxu0
        %v3121 = vadd.f32 0.0, %v3120
        %3122 = vmatmul.f32.gmra.mxu0 %v3008
        %v3123 = vpop.f32.mrf.mxu0
        %v3124 = vadd.f32 0.0, %v3123
        %3125 = vmatmul.f32.gmra.mxu0 %v3011
        %v3126 = vpop.f32.mrf.mxu0
        %v3127 = vadd.f32 0.0, %v3126
        %3128 = vmatmul.f32.gmra.mxu0 %v3014
        %v3129 = vpop.f32.mrf.mxu0
        %v3130 = vadd.f32 0.0, %v3129
        %3131 = vmatmul.f32.gmra.mxu0 %v3017
        %v3132 = vpop.f32.mrf.mxu0
        %v3133 = vadd.f32 0.0, %v3132
        %3134 = vmatmul.f32.gmra.mxu0 %v3020
        %v3135 = vpop.f32.mrf.mxu0
        %v3136 = vadd.f32 0.0, %v3135
        %3137 = vmatmul.f32.gmra.mxu0 %v3023
        %v3138 = vpop.f32.mrf.mxu0
        %v3139 = vadd.f32 0.0, %v3138
        %3140 = vmatmul.f32.gmra.mxu0 %v3026
        %v3141 = vpop.f32.mrf.mxu0
        %v3142 = vadd.f32 0.0, %v3141
        %3143 = vmatmul.f32.gmra.mxu0 %v3029
        %v3144 = vpop.f32.mrf.mxu0
        %v3145 = vadd.f32 0.0, %v3144
        %3146 = vmatmul.f32.gmra.mxu0 %v3032
        %v3147 = vpop.f32.mrf.mxu0
        %v3148 = vadd.f32 0.0, %v3147
        %3149 = vmatmul.f32.gmra.mxu0 %v3035
        %v3150 = vpop.f32.mrf.mxu0
        %v3151 = vadd.f32 0.0, %v3150
        %3152 = vmatmul.f32.gmra.mxu0 %v3038
        %v3153 = vpop.f32.mrf.mxu0
        %v3154 = vadd.f32 0.0, %v3153
        %3155 = vmatmul.f32.gmra.mxu0 %v3041
        %v3156 = vpop.f32.mrf.mxu0
        %v3157 = vadd.f32 0.0, %v3156
        %3158 = vmatmul.f32.gmra.mxu0 %v3044
        %v3159 = vpop.f32.mrf.mxu0
        %v3160 = vadd.f32 0.0, %v3159
        %3161 = vmatmul.f32.gmra.mxu0 %v3047
        %v3162 = vpop.f32.mrf.mxu0
        %v3163 = vadd.f32 0.0, %v3162
        %3164 = vmatmul.f32.gmra.mxu0 %v3050
        %v3165 = vpop.f32.mrf.mxu0
        %v3166 = vadd.f32 0.0, %v3165
        %3167 = vmatmul.f32.gmra.mxu0 %v3053
        %v3168 = vpop.f32.mrf.mxu0
        %v3169 = vadd.f32 0.0, %v3168
        %3170 = vmatmul.f32.gmra.mxu0 %v3056
        %v3171 = vpop.f32.mrf.mxu0
        %v3172 = vadd.f32 0.0, %v3171
        %3173 = vmatmul.f32.gmra.mxu0 %v3059
        %v3174 = vpop.f32.mrf.mxu0
        %v3175 = vadd.f32 0.0, %v3174
        %3176 = vmatmul.f32.gmra.mxu0 %v3062
        %v3177 = vpop.f32.mrf.mxu0
        %v3178 = vadd.f32 0.0, %v3177
        %3179 = vmatmul.f32.gmra.mxu0 %v3065
        %v3180 = vpop.f32.mrf.mxu0
        %v3181 = vadd.f32 0.0, %v3180
        %3182 = vmatmul.f32.gmra.mxu0 %v3068
        %v3183 = vpop.f32.mrf.mxu0
        %v3184 = vadd.f32 0.0, %v3183
        %3185 = vmatmul.f32.gmra.mxu0 %v3071
        %v3186 = vpop.f32.mrf.mxu0
        %v3187 = vadd.f32 0.0, %v3186
        %3188 = vmatmul.f32.gmra.mxu0 %v3074
        %v3189 = vpop.f32.mrf.mxu0
        %v3190 = vadd.f32 0.0, %v3189
        %3191 = vmatmul.f32.gmra.mxu0 %v3077
        %v3192 = vpop.f32.mrf.mxu0
        %v3193 = vadd.f32 0.0, %v3192
        %3194 = vmatmul.f32.gmra.mxu0 %v3080
        %v3195 = vpop.f32.mrf.mxu0
        %v3196 = vadd.f32 0.0, %v3195
        %3197 = vmatmul.f32.gmra.mxu0 %v3083
        %v3198 = vpop.f32.mrf.mxu0
        %v3199 = vadd.f32 0.0, %v3198
        %3200 = vmatmul.f32.gmra.mxu0 %v3086
        %v3201 = vpop.f32.mrf.mxu0
        %v3202 = vadd.f32 0.0, %v3201
        %3203 = vmatmul.f32.gmra.mxu0 %v3089
        %v3204 = vpop.f32.mrf.mxu0
        %v3205 = vadd.f32 0.0, %v3204
        %3206 = vdwg.mxu0
        %v3207 = vld [vmem:[#allocation4] sm:$0xff]
        %v3208 = vld [vmem:[#allocation4 + $0x8] sm:$0xff]
        %v3209 = vld [vmem:[#allocation4 + $0x10] sm:$0xff]
        %v3210 = vld [vmem:[#allocation4 + $0x18] sm:$0xff]
        %v3211 = vld [vmem:[#allocation4 + $0x20] sm:$0xff]
        %v3212 = vld [vmem:[#allocation4 + $0x28] sm:$0xff]
        %v3213 = vld [vmem:[#allocation4 + $0x30] sm:$0xff]
        %v3214 = vld [vmem:[#allocation4 + $0x38] sm:$0xff]
        %v3215 = vld [vmem:[#allocation4 + $0x40] sm:$0xff]
        %v3216 = vld [vmem:[#allocation4 + $0x48] sm:$0xff]
        %v3217 = vld [vmem:[#allocation4 + $0x50] sm:$0xff]
        %v3218 = vld [vmem:[#allocation4 + $0x58] sm:$0xff]
        %v3219 = vld [vmem:[#allocation4 + $0x60] sm:$0xff]
        %v3220 = vld [vmem:[#allocation4 + $0x68] sm:$0xff]
        %v3221 = vld [vmem:[#allocation4 + $0x70] sm:$0xff]
        %v3222 = vld [vmem:[#allocation4 + $0x78] sm:$0xff]
        %v3223 = vld [vmem:[#allocation4 + $0x80] sm:$0xff]
        %v3224 = vld [vmem:[#allocation4 + $0x88] sm:$0xff]
        %v3225 = vld [vmem:[#allocation4 + $0x90] sm:$0xff]
        %v3226 = vld [vmem:[#allocation4 + $0x98] sm:$0xff]
        %v3227 = vld [vmem:[#allocation4 + $0xa0] sm:$0xff]
        %v3228 = vld [vmem:[#allocation4 + $0xa8] sm:$0xff]
        %v3229 = vld [vmem:[#allocation4 + $0xb0] sm:$0xff]
        %v3230 = vld [vmem:[#allocation4 + $0xb8] sm:$0xff]
        %v3231 = vld [vmem:[#allocation4 + $0xc0] sm:$0xff]
        %v3232 = vld [vmem:[#allocation4 + $0xc8] sm:$0xff]
        %v3233 = vld [vmem:[#allocation4 + $0xd0] sm:$0xff]
        %v3234 = vld [vmem:[#allocation4 + $0xd8] sm:$0xff]
        %v3235 = vld [vmem:[#allocation4 + $0xe0] sm:$0xff]
        %v3236 = vld [vmem:[#allocation4 + $0xe8] sm:$0xff]
        %v3237 = vld [vmem:[#allocation4 + $0xf0] sm:$0xff]
        %v3238 = vld [vmem:[#allocation4 + $0xf8] sm:$0xff]
        %v3239 = vadd.f32 %v3207, %v3112
        %v3240 = vadd.f32 %v3208, %v3115
        %v3241 = vadd.f32 %v3209, %v3118
        %v3242 = vadd.f32 %v3210, %v3121
        %v3243 = vadd.f32 %v3211, %v3124
        %v3244 = vadd.f32 %v3212, %v3127
        %v3245 = vadd.f32 %v3213, %v3130
        %v3246 = vadd.f32 %v3214, %v3133
        %v3247 = vadd.f32 %v3215, %v3136
        %v3248 = vadd.f32 %v3216, %v3139
        %v3249 = vadd.f32 %v3217, %v3142
        %v3250 = vadd.f32 %v3218, %v3145
        %v3251 = vadd.f32 %v3219, %v3148
        %v3252 = vadd.f32 %v3220, %v3151
        %v3253 = vadd.f32 %v3221, %v3154
        %v3254 = vadd.f32 %v3222, %v3157
        %v3255 = vadd.f32 %v3223, %v3160
        %v3256 = vadd.f32 %v3224, %v3163
        %v3257 = vadd.f32 %v3225, %v3166
        %v3258 = vadd.f32 %v3226, %v3169
        %v3259 = vadd.f32 %v3227, %v3172
        %v3260 = vadd.f32 %v3228, %v3175
        %v3261 = vadd.f32 %v3229, %v3178
        %v3262 = vadd.f32 %v3230, %v3181
        %v3263 = vadd.f32 %v3231, %v3184
        %v3264 = vadd.f32 %v3232, %v3187
        %v3265 = vadd.f32 %v3233, %v3190
        %v3266 = vadd.f32 %v3234, %v3193
        %v3267 = vadd.f32 %v3235, %v3196
        %v3268 = vadd.f32 %v3236, %v3199
        %v3269 = vadd.f32 %v3237, %v3202
        %v3270 = vadd.f32 %v3238, %v3205
        %3271 = vst.msk [vmem:[#allocation4] sm:$0xff] %vm709, %v3239
        %3272 = vst.msk [vmem:[#allocation4 + $0x8] sm:$0xff] %vm709, %v3240
        %3273 = vst.msk [vmem:[#allocation4 + $0x10] sm:$0xff] %vm709, %v3241
        %3274 = vst.msk [vmem:[#allocation4 + $0x18] sm:$0xff] %vm709, %v3242
        %3275 = vst.msk [vmem:[#allocation4 + $0x20] sm:$0xff] %vm709, %v3243
        %3276 = vst.msk [vmem:[#allocation4 + $0x28] sm:$0xff] %vm709, %v3244
        %3277 = vst.msk [vmem:[#allocation4 + $0x30] sm:$0xff] %vm709, %v3245
        %3278 = vst.msk [vmem:[#allocation4 + $0x38] sm:$0xff] %vm709, %v3246
        %3279 = vst.msk [vmem:[#allocation4 + $0x40] sm:$0xff] %vm709, %v3247
        %3280 = vst.msk [vmem:[#allocation4 + $0x48] sm:$0xff] %vm709, %v3248
        %3281 = vst.msk [vmem:[#allocation4 + $0x50] sm:$0xff] %vm709, %v3249
        %3282 = vst.msk [vmem:[#allocation4 + $0x58] sm:$0xff] %vm709, %v3250
        %3283 = vst.msk [vmem:[#allocation4 + $0x60] sm:$0xff] %vm709, %v3251
        %3284 = vst.msk [vmem:[#allocation4 + $0x68] sm:$0xff] %vm709, %v3252
        %3285 = vst.msk [vmem:[#allocation4 + $0x70] sm:$0xff] %vm709, %v3253
        %3286 = vst.msk [vmem:[#allocation4 + $0x78] sm:$0xff] %vm709, %v3254
        %3287 = vst.msk [vmem:[#allocation4 + $0x80] sm:$0xff] %vm709, %v3255
        %3288 = vst.msk [vmem:[#allocation4 + $0x88] sm:$0xff] %vm709, %v3256
        %3289 = vst.msk [vmem:[#allocation4 + $0x90] sm:$0xff] %vm709, %v3257
        %3290 = vst.msk [vmem:[#allocation4 + $0x98] sm:$0xff] %vm709, %v3258
        %3291 = vst.msk [vmem:[#allocation4 + $0xa0] sm:$0xff] %vm709, %v3259
        %3292 = vst.msk [vmem:[#allocation4 + $0xa8] sm:$0xff] %vm709, %v3260
        %3293 = vst.msk [vmem:[#allocation4 + $0xb0] sm:$0xff] %vm709, %v3261
        %3294 = vst.msk [vmem:[#allocation4 + $0xb8] sm:$0xff] %vm709, %v3262
        %3295 = vst.msk [vmem:[#allocation4 + $0xc0] sm:$0xff] %vm709, %v3263
        %3296 = vst.msk [vmem:[#allocation4 + $0xc8] sm:$0xff] %vm709, %v3264
        %3297 = vst.msk [vmem:[#allocation4 + $0xd0] sm:$0xff] %vm709, %v3265
        %3298 = vst.msk [vmem:[#allocation4 + $0xd8] sm:$0xff] %vm709, %v3266
        %3299 = vst.msk [vmem:[#allocation4 + $0xe0] sm:$0xff] %vm709, %v3267
        %3300 = vst.msk [vmem:[#allocation4 + $0xe8] sm:$0xff] %vm709, %v3268
        %3301 = vst.msk [vmem:[#allocation4 + $0xf0] sm:$0xff] %vm709, %v3269
        %3302 = vst.msk [vmem:[#allocation4 + $0xf8] sm:$0xff] %vm709, %v3270
        %v3303 = vld [vmem:[#allocation3 + $0x1] sm:$0xff]
        %v3304 = vld [vmem:[#allocation3 + $0x9] sm:$0xff]
        %v3305 = vld [vmem:[#allocation3 + $0x11] sm:$0xff]
        %v3306 = vld [vmem:[#allocation3 + $0x19] sm:$0xff]
        %v3307 = vld [vmem:[#allocation3 + $0x21] sm:$0xff]
        %v3308 = vld [vmem:[#allocation3 + $0x29] sm:$0xff]
        %v3309 = vld [vmem:[#allocation3 + $0x31] sm:$0xff]
        %v3310 = vld [vmem:[#allocation3 + $0x39] sm:$0xff]
        %v3311 = vld [vmem:[#allocation3 + $0x41] sm:$0xff]
        %v3312 = vld [vmem:[#allocation3 + $0x49] sm:$0xff]
        %v3313 = vld [vmem:[#allocation3 + $0x51] sm:$0xff]
        %v3314 = vld [vmem:[#allocation3 + $0x59] sm:$0xff]
        %v3315 = vld [vmem:[#allocation3 + $0x61] sm:$0xff]
        %v3316 = vld [vmem:[#allocation3 + $0x69] sm:$0xff]
        %v3317 = vld [vmem:[#allocation3 + $0x71] sm:$0xff]
        %v3318 = vld [vmem:[#allocation3 + $0x79] sm:$0xff]
        %v3319 = vld [vmem:[#allocation3 + $0x81] sm:$0xff]
        %v3320 = vld [vmem:[#allocation3 + $0x89] sm:$0xff]
        %v3321 = vld [vmem:[#allocation3 + $0x91] sm:$0xff]
        %v3322 = vld [vmem:[#allocation3 + $0x99] sm:$0xff]
        %v3323 = vld [vmem:[#allocation3 + $0xa1] sm:$0xff]
        %v3324 = vld [vmem:[#allocation3 + $0xa9] sm:$0xff]
        %v3325 = vld [vmem:[#allocation3 + $0xb1] sm:$0xff]
        %v3326 = vld [vmem:[#allocation3 + $0xb9] sm:$0xff]
        %v3327 = vld [vmem:[#allocation3 + $0xc1] sm:$0xff]
        %v3328 = vld [vmem:[#allocation3 + $0xc9] sm:$0xff]
        %v3329 = vld [vmem:[#allocation3 + $0xd1] sm:$0xff]
        %v3330 = vld [vmem:[#allocation3 + $0xd9] sm:$0xff]
        %v3331 = vld [vmem:[#allocation3 + $0xe1] sm:$0xff]
        %v3332 = vld [vmem:[#allocation3 + $0xe9] sm:$0xff]
        %v3333 = vld [vmem:[#allocation3 + $0xf1] sm:$0xff]
        %v3334 = vld [vmem:[#allocation3 + $0xf9] sm:$0xff]
        %s3335 = scalar_lea.vmem %s5, 12
        %v3336 = vld [vmem:[%s3335] sm:$0xf]
        %v3338 = vsel %vm709, %v3303, 0
        %v3341 = vsel %vm709, %v3304, 0
        %v3344 = vsel %vm709, %v3305, 0
        %v3347 = vsel %vm709, %v3306, 0
        %v3350 = vsel %vm709, %v3307, 0
        %v3353 = vsel %vm709, %v3308, 0
        %v3356 = vsel %vm709, %v3309, 0
        %v3359 = vsel %vm709, %v3310, 0
        %v3362 = vsel %vm709, %v3311, 0
        %v3365 = vsel %vm709, %v3312, 0
        %v3368 = vsel %vm709, %v3313, 0
        %v3371 = vsel %vm709, %v3314, 0
        %v3374 = vsel %vm709, %v3315, 0
        %v3377 = vsel %vm709, %v3316, 0
        %v3380 = vsel %vm709, %v3317, 0
        %v3383 = vsel %vm709, %v3318, 0
        %v3386 = vsel %vm709, %v3319, 0
        %v3389 = vsel %vm709, %v3320, 0
        %v3392 = vsel %vm709, %v3321, 0
        %v3395 = vsel %vm709, %v3322, 0
        %v3398 = vsel %vm709, %v3323, 0
        %v3401 = vsel %vm709, %v3324, 0
        %v3404 = vsel %vm709, %v3325, 0
        %v3407 = vsel %vm709, %v3326, 0
        %v3410 = vsel %vm709, %v3327, 0
        %v3413 = vsel %vm709, %v3328, 0
        %v3416 = vsel %vm709, %v3329, 0
        %v3419 = vsel %vm709, %v3330, 0
        %v3422 = vsel %vm709, %v3331, 0
        %v3425 = vsel %vm709, %v3332, 0
        %v3428 = vsel %vm709, %v3333, 0
        %v3431 = vsel %vm709, %v3334, 0
        %v3434 = vsel %vm2406, %v3336, 0
        %3436 = vmatpush.msra.mxu0 0.0
        %3437 = vmatpush.msra.mxu0 0.0
        %3438 = vmatpush.msra.mxu0 0.0
        %3439 = vmatpush.msra.mxu0 0.0
        %3440 = vmatpush.msra.mxu0 0.0
        %3441 = vmatpush.msra.mxu0 0.0
        %3442 = vmatpush.msra.mxu0 0.0
        %3443 = vmatpush.msra.mxu0 0.0
        %3444 = vmatpush.msra.mxu0 0.0
        %3445 = vmatpush.msra.mxu0 0.0
        %3446 = vmatpush.msra.mxu0 0.0
        %3447 = vmatpush.msra.mxu0 0.0
        %3448 = vmatpush.msra.mxu0 0.0
        %3449 = vmatpush.msra.mxu0 0.0
        %3450 = vmatpush.msra.mxu0 0.0
        %3451 = vmatpush.msra.mxu0 %v3434
        %3452 = vmatmul.f32.gmra.mxu0 %v3338
        %v3453 = vpop.f32.mrf.mxu0
        %v3454 = vadd.f32 0.0, %v3453
        %3455 = vmatmul.f32.gmra.mxu0 %v3341
        %v3456 = vpop.f32.mrf.mxu0
        %v3457 = vadd.f32 0.0, %v3456
        %3458 = vmatmul.f32.gmra.mxu0 %v3344
        %v3459 = vpop.f32.mrf.mxu0
        %v3460 = vadd.f32 0.0, %v3459
        %3461 = vmatmul.f32.gmra.mxu0 %v3347
        %v3462 = vpop.f32.mrf.mxu0
        %v3463 = vadd.f32 0.0, %v3462
        %3464 = vmatmul.f32.gmra.mxu0 %v3350
        %v3465 = vpop.f32.mrf.mxu0
        %v3466 = vadd.f32 0.0, %v3465
        %3467 = vmatmul.f32.gmra.mxu0 %v3353
        %v3468 = vpop.f32.mrf.mxu0
        %v3469 = vadd.f32 0.0, %v3468
        %3470 = vmatmul.f32.gmra.mxu0 %v3356
        %v3471 = vpop.f32.mrf.mxu0
        %v3472 = vadd.f32 0.0, %v3471
        %3473 = vmatmul.f32.gmra.mxu0 %v3359
        %v3474 = vpop.f32.mrf.mxu0
        %v3475 = vadd.f32 0.0, %v3474
        %3476 = vmatmul.f32.gmra.mxu0 %v3362
        %v3477 = vpop.f32.mrf.mxu0
        %v3478 = vadd.f32 0.0, %v3477
        %3479 = vmatmul.f32.gmra.mxu0 %v3365
        %v3480 = vpop.f32.mrf.mxu0
        %v3481 = vadd.f32 0.0, %v3480
        %3482 = vmatmul.f32.gmra.mxu0 %v3368
        %v3483 = vpop.f32.mrf.mxu0
        %v3484 = vadd.f32 0.0, %v3483
        %3485 = vmatmul.f32.gmra.mxu0 %v3371
        %v3486 = vpop.f32.mrf.mxu0
        %v3487 = vadd.f32 0.0, %v3486
        %3488 = vmatmul.f32.gmra.mxu0 %v3374
        %v3489 = vpop.f32.mrf.mxu0
        %v3490 = vadd.f32 0.0, %v3489
        %3491 = vmatmul.f32.gmra.mxu0 %v3377
        %v3492 = vpop.f32.mrf.mxu0
        %v3493 = vadd.f32 0.0, %v3492
        %3494 = vmatmul.f32.gmra.mxu0 %v3380
        %v3495 = vpop.f32.mrf.mxu0
        %v3496 = vadd.f32 0.0, %v3495
        %3497 = vmatmul.f32.gmra.mxu0 %v3383
        %v3498 = vpop.f32.mrf.mxu0
        %v3499 = vadd.f32 0.0, %v3498
        %3500 = vmatmul.f32.gmra.mxu0 %v3386
        %v3501 = vpop.f32.mrf.mxu0
        %v3502 = vadd.f32 0.0, %v3501
        %3503 = vmatmul.f32.gmra.mxu0 %v3389
        %v3504 = vpop.f32.mrf.mxu0
        %v3505 = vadd.f32 0.0, %v3504
        %3506 = vmatmul.f32.gmra.mxu0 %v3392
        %v3507 = vpop.f32.mrf.mxu0
        %v3508 = vadd.f32 0.0, %v3507
        %3509 = vmatmul.f32.gmra.mxu0 %v3395
        %v3510 = vpop.f32.mrf.mxu0
        %v3511 = vadd.f32 0.0, %v3510
        %3512 = vmatmul.f32.gmra.mxu0 %v3398
        %v3513 = vpop.f32.mrf.mxu0
        %v3514 = vadd.f32 0.0, %v3513
        %3515 = vmatmul.f32.gmra.mxu0 %v3401
        %v3516 = vpop.f32.mrf.mxu0
        %v3517 = vadd.f32 0.0, %v3516
        %3518 = vmatmul.f32.gmra.mxu0 %v3404
        %v3519 = vpop.f32.mrf.mxu0
        %v3520 = vadd.f32 0.0, %v3519
        %3521 = vmatmul.f32.gmra.mxu0 %v3407
        %v3522 = vpop.f32.mrf.mxu0
        %v3523 = vadd.f32 0.0, %v3522
        %3524 = vmatmul.f32.gmra.mxu0 %v3410
        %v3525 = vpop.f32.mrf.mxu0
        %v3526 = vadd.f32 0.0, %v3525
        %3527 = vmatmul.f32.gmra.mxu0 %v3413
        %v3528 = vpop.f32.mrf.mxu0
        %v3529 = vadd.f32 0.0, %v3528
        %3530 = vmatmul.f32.gmra.mxu0 %v3416
        %v3531 = vpop.f32.mrf.mxu0
        %v3532 = vadd.f32 0.0, %v3531
        %3533 = vmatmul.f32.gmra.mxu0 %v3419
        %v3534 = vpop.f32.mrf.mxu0
        %v3535 = vadd.f32 0.0, %v3534
        %3536 = vmatmul.f32.gmra.mxu0 %v3422
        %v3537 = vpop.f32.mrf.mxu0
        %v3538 = vadd.f32 0.0, %v3537
        %3539 = vmatmul.f32.gmra.mxu0 %v3425
        %v3540 = vpop.f32.mrf.mxu0
        %v3541 = vadd.f32 0.0, %v3540
        %3542 = vmatmul.f32.gmra.mxu0 %v3428
        %v3543 = vpop.f32.mrf.mxu0
        %v3544 = vadd.f32 0.0, %v3543
        %3545 = vmatmul.f32.gmra.mxu0 %v3431
        %v3546 = vpop.f32.mrf.mxu0
        %v3547 = vadd.f32 0.0, %v3546
        %3548 = vdwg.mxu0
        %v3549 = vld [vmem:[#allocation4] sm:$0xff]
        %v3550 = vld [vmem:[#allocation4 + $0x8] sm:$0xff]
        %v3551 = vld [vmem:[#allocation4 + $0x10] sm:$0xff]
        %v3552 = vld [vmem:[#allocation4 + $0x18] sm:$0xff]
        %v3553 = vld [vmem:[#allocation4 + $0x20] sm:$0xff]
        %v3554 = vld [vmem:[#allocation4 + $0x28] sm:$0xff]
        %v3555 = vld [vmem:[#allocation4 + $0x30] sm:$0xff]
        %v3556 = vld [vmem:[#allocation4 + $0x38] sm:$0xff]
        %v3557 = vld [vmem:[#allocation4 + $0x40] sm:$0xff]
        %v3558 = vld [vmem:[#allocation4 + $0x48] sm:$0xff]
        %v3559 = vld [vmem:[#allocation4 + $0x50] sm:$0xff]
        %v3560 = vld [vmem:[#allocation4 + $0x58] sm:$0xff]
        %v3561 = vld [vmem:[#allocation4 + $0x60] sm:$0xff]
        %v3562 = vld [vmem:[#allocation4 + $0x68] sm:$0xff]
        %v3563 = vld [vmem:[#allocation4 + $0x70] sm:$0xff]
        %v3564 = vld [vmem:[#allocation4 + $0x78] sm:$0xff]
        %v3565 = vld [vmem:[#allocation4 + $0x80] sm:$0xff]
        %v3566 = vld [vmem:[#allocation4 + $0x88] sm:$0xff]
        %v3567 = vld [vmem:[#allocation4 + $0x90] sm:$0xff]
        %v3568 = vld [vmem:[#allocation4 + $0x98] sm:$0xff]
        %v3569 = vld [vmem:[#allocation4 + $0xa0] sm:$0xff]
        %v3570 = vld [vmem:[#allocation4 + $0xa8] sm:$0xff]
        %v3571 = vld [vmem:[#allocation4 + $0xb0] sm:$0xff]
        %v3572 = vld [vmem:[#allocation4 + $0xb8] sm:$0xff]
        %v3573 = vld [vmem:[#allocation4 + $0xc0] sm:$0xff]
        %v3574 = vld [vmem:[#allocation4 + $0xc8] sm:$0xff]
        %v3575 = vld [vmem:[#allocation4 + $0xd0] sm:$0xff]
        %v3576 = vld [vmem:[#allocation4 + $0xd8] sm:$0xff]
        %v3577 = vld [vmem:[#allocation4 + $0xe0] sm:$0xff]
        %v3578 = vld [vmem:[#allocation4 + $0xe8] sm:$0xff]
        %v3579 = vld [vmem:[#allocation4 + $0xf0] sm:$0xff]
        %v3580 = vld [vmem:[#allocation4 + $0xf8] sm:$0xff]
        %v3581 = vadd.f32 %v3549, %v3454
        %v3582 = vadd.f32 %v3550, %v3457
        %v3583 = vadd.f32 %v3551, %v3460
        %v3584 = vadd.f32 %v3552, %v3463
        %v3585 = vadd.f32 %v3553, %v3466
        %v3586 = vadd.f32 %v3554, %v3469
        %v3587 = vadd.f32 %v3555, %v3472
        %v3588 = vadd.f32 %v3556, %v3475
        %v3589 = vadd.f32 %v3557, %v3478
        %v3590 = vadd.f32 %v3558, %v3481
        %v3591 = vadd.f32 %v3559, %v3484
        %v3592 = vadd.f32 %v3560, %v3487
        %v3593 = vadd.f32 %v3561, %v3490
        %v3594 = vadd.f32 %v3562, %v3493
        %v3595 = vadd.f32 %v3563, %v3496
        %v3596 = vadd.f32 %v3564, %v3499
        %v3597 = vadd.f32 %v3565, %v3502
        %v3598 = vadd.f32 %v3566, %v3505
        %v3599 = vadd.f32 %v3567, %v3508
        %v3600 = vadd.f32 %v3568, %v3511
        %v3601 = vadd.f32 %v3569, %v3514
        %v3602 = vadd.f32 %v3570, %v3517
        %v3603 = vadd.f32 %v3571, %v3520
        %v3604 = vadd.f32 %v3572, %v3523
        %v3605 = vadd.f32 %v3573, %v3526
        %v3606 = vadd.f32 %v3574, %v3529
        %v3607 = vadd.f32 %v3575, %v3532
        %v3608 = vadd.f32 %v3576, %v3535
        %v3609 = vadd.f32 %v3577, %v3538
        %v3610 = vadd.f32 %v3578, %v3541
        %v3611 = vadd.f32 %v3579, %v3544
        %v3612 = vadd.f32 %v3580, %v3547
        %3613 = vst.msk [vmem:[#allocation4] sm:$0xff] %vm709, %v3581
        %3614 = vst.msk [vmem:[#allocation4 + $0x8] sm:$0xff] %vm709, %v3582
        %3615 = vst.msk [vmem:[#allocation4 + $0x10] sm:$0xff] %vm709, %v3583
        %3616 = vst.msk [vmem:[#allocation4 + $0x18] sm:$0xff] %vm709, %v3584
        %3617 = vst.msk [vmem:[#allocation4 + $0x20] sm:$0xff] %vm709, %v3585
        %3618 = vst.msk [vmem:[#allocation4 + $0x28] sm:$0xff] %vm709, %v3586
        %3619 = vst.msk [vmem:[#allocation4 + $0x30] sm:$0xff] %vm709, %v3587
        %3620 = vst.msk [vmem:[#allocation4 + $0x38] sm:$0xff] %vm709, %v3588
        %3621 = vst.msk [vmem:[#allocation4 + $0x40] sm:$0xff] %vm709, %v3589
        %3622 = vst.msk [vmem:[#allocation4 + $0x48] sm:$0xff] %vm709, %v3590
        %3623 = vst.msk [vmem:[#allocation4 + $0x50] sm:$0xff] %vm709, %v3591
        %3624 = vst.msk [vmem:[#allocation4 + $0x58] sm:$0xff] %vm709, %v3592
        %3625 = vst.msk [vmem:[#allocation4 + $0x60] sm:$0xff] %vm709, %v3593
        %3626 = vst.msk [vmem:[#allocation4 + $0x68] sm:$0xff] %vm709, %v3594
        %3627 = vst.msk [vmem:[#allocation4 + $0x70] sm:$0xff] %vm709, %v3595
        %3628 = vst.msk [vmem:[#allocation4 + $0x78] sm:$0xff] %vm709, %v3596
        %3629 = vst.msk [vmem:[#allocation4 + $0x80] sm:$0xff] %vm709, %v3597
        %3630 = vst.msk [vmem:[#allocation4 + $0x88] sm:$0xff] %vm709, %v3598
        %3631 = vst.msk [vmem:[#allocation4 + $0x90] sm:$0xff] %vm709, %v3599
        %3632 = vst.msk [vmem:[#allocation4 + $0x98] sm:$0xff] %vm709, %v3600
        %3633 = vst.msk [vmem:[#allocation4 + $0xa0] sm:$0xff] %vm709, %v3601
        %3634 = vst.msk [vmem:[#allocation4 + $0xa8] sm:$0xff] %vm709, %v3602
        %3635 = vst.msk [vmem:[#allocation4 + $0xb0] sm:$0xff] %vm709, %v3603
        %3636 = vst.msk [vmem:[#allocation4 + $0xb8] sm:$0xff] %vm709, %v3604
        %3637 = vst.msk [vmem:[#allocation4 + $0xc0] sm:$0xff] %vm709, %v3605
        %3638 = vst.msk [vmem:[#allocation4 + $0xc8] sm:$0xff] %vm709, %v3606
        %3639 = vst.msk [vmem:[#allocation4 + $0xd0] sm:$0xff] %vm709, %v3607
        %3640 = vst.msk [vmem:[#allocation4 + $0xd8] sm:$0xff] %vm709, %v3608
        %3641 = vst.msk [vmem:[#allocation4 + $0xe0] sm:$0xff] %vm709, %v3609
        %3642 = vst.msk [vmem:[#allocation4 + $0xe8] sm:$0xff] %vm709, %v3610
        %3643 = vst.msk [vmem:[#allocation4 + $0xf0] sm:$0xff] %vm709, %v3611
        %3644 = vst.msk [vmem:[#allocation4 + $0xf8] sm:$0xff] %vm709, %v3612
        %v3645 = vld [vmem:[#allocation3 + $0x11] sm:$0xff]
        %v3646 = vld [vmem:[#allocation3 + $0x19] sm:$0xff]
        %v3647 = vld [vmem:[#allocation3 + $0x21] sm:$0xff]
        %v3648 = vld [vmem:[#allocation3 + $0x29] sm:$0xff]
        %v3649 = vld [vmem:[#allocation3 + $0x31] sm:$0xff]
        %v3650 = vld [vmem:[#allocation3 + $0x39] sm:$0xff]
        %v3651 = vld [vmem:[#allocation3 + $0x41] sm:$0xff]
        %v3652 = vld [vmem:[#allocation3 + $0x49] sm:$0xff]
        %v3653 = vld [vmem:[#allocation3 + $0x51] sm:$0xff]
        %v3654 = vld [vmem:[#allocation3 + $0x59] sm:$0xff]
        %v3655 = vld [vmem:[#allocation3 + $0x61] sm:$0xff]
        %v3656 = vld [vmem:[#allocation3 + $0x69] sm:$0xff]
        %v3657 = vld [vmem:[#allocation3 + $0x71] sm:$0xff]
        %v3658 = vld [vmem:[#allocation3 + $0x79] sm:$0xff]
        %v3659 = vld [vmem:[#allocation3 + $0x81] sm:$0xff]
        %v3660 = vld [vmem:[#allocation3 + $0x89] sm:$0xff]
        %v3661 = vld [vmem:[#allocation3 + $0x91] sm:$0xff]
        %v3662 = vld [vmem:[#allocation3 + $0x99] sm:$0xff]
        %v3663 = vld [vmem:[#allocation3 + $0xa1] sm:$0xff]
        %v3664 = vld [vmem:[#allocation3 + $0xa9] sm:$0xff]
        %v3665 = vld [vmem:[#allocation3 + $0xb1] sm:$0xff]
        %v3666 = vld [vmem:[#allocation3 + $0xb9] sm:$0xff]
        %v3667 = vld [vmem:[#allocation3 + $0xc1] sm:$0xff]
        %v3668 = vld [vmem:[#allocation3 + $0xc9] sm:$0xff]
        %v3669 = vld [vmem:[#allocation3 + $0xd1] sm:$0xff]
        %v3670 = vld [vmem:[#allocation3 + $0xd9] sm:$0xff]
        %v3671 = vld [vmem:[#allocation3 + $0xe1] sm:$0xff]
        %v3672 = vld [vmem:[#allocation3 + $0xe9] sm:$0xff]
        %v3673 = vld [vmem:[#allocation3 + $0xf1] sm:$0xff]
        %v3674 = vld [vmem:[#allocation3 + $0xf9] sm:$0xff]
        %v3675 = vld [vmem:[#allocation3 + $0x101] sm:$0xff]
        %v3676 = vld [vmem:[#allocation3 + $0x109] sm:$0xff]
        %s3677 = scalar_lea.vmem %s5, 16
        %v3678 = vld [vmem:[%s3677] sm:$0xf]
        %v3680 = vsel %vm709, %v3645, 0
        %v3683 = vsel %vm709, %v3646, 0
        %v3686 = vsel %vm709, %v3647, 0
        %v3689 = vsel %vm709, %v3648, 0
        %v3692 = vsel %vm709, %v3649, 0
        %v3695 = vsel %vm709, %v3650, 0
        %v3698 = vsel %vm709, %v3651, 0
        %v3701 = vsel %vm709, %v3652, 0
        %v3704 = vsel %vm709, %v3653, 0
        %v3707 = vsel %vm709, %v3654, 0
        %v3710 = vsel %vm709, %v3655, 0
        %v3713 = vsel %vm709, %v3656, 0
        %v3716 = vsel %vm709, %v3657, 0
        %v3719 = vsel %vm709, %v3658, 0
        %v3722 = vsel %vm709, %v3659, 0
        %v3725 = vsel %vm709, %v3660, 0
        %v3728 = vsel %vm709, %v3661, 0
        %v3731 = vsel %vm709, %v3662, 0
        %v3734 = vsel %vm709, %v3663, 0
        %v3737 = vsel %vm709, %v3664, 0
        %v3740 = vsel %vm709, %v3665, 0
        %v3743 = vsel %vm709, %v3666, 0
        %v3746 = vsel %vm709, %v3667, 0
        %v3749 = vsel %vm709, %v3668, 0
        %v3752 = vsel %vm709, %v3669, 0
        %v3755 = vsel %vm709, %v3670, 0
        %v3758 = vsel %vm709, %v3671, 0
        %v3761 = vsel %vm709, %v3672, 0
        %v3764 = vsel %vm709, %v3673, 0
        %v3767 = vsel %vm709, %v3674, 0
        %v3770 = vsel %vm709, %v3675, 0
        %v3773 = vsel %vm709, %v3676, 0
        %v3776 = vsel %vm2406, %v3678, 0
        %3778 = vmatpush.msra.mxu0 0.0
        %3779 = vmatpush.msra.mxu0 0.0
        %3780 = vmatpush.msra.mxu0 0.0
        %3781 = vmatpush.msra.mxu0 0.0
        %3782 = vmatpush.msra.mxu0 0.0
        %3783 = vmatpush.msra.mxu0 0.0
        %3784 = vmatpush.msra.mxu0 0.0
        %3785 = vmatpush.msra.mxu0 0.0
        %3786 = vmatpush.msra.mxu0 0.0
        %3787 = vmatpush.msra.mxu0 0.0
        %3788 = vmatpush.msra.mxu0 0.0
        %3789 = vmatpush.msra.mxu0 0.0
        %3790 = vmatpush.msra.mxu0 0.0
        %3791 = vmatpush.msra.mxu0 0.0
        %3792 = vmatpush.msra.mxu0 0.0
        %3793 = vmatpush.msra.mxu0 %v3776
        %3794 = vmatmul.f32.gmra.mxu0 %v3680
        %v3795 = vpop.f32.mrf.mxu0
        %v3796 = vadd.f32 0.0, %v3795
        %3797 = vmatmul.f32.gmra.mxu0 %v3683
        %v3798 = vpop.f32.mrf.mxu0
        %v3799 = vadd.f32 0.0, %v3798
        %3800 = vmatmul.f32.gmra.mxu0 %v3686
        %v3801 = vpop.f32.mrf.mxu0
        %v3802 = vadd.f32 0.0, %v3801
        %3803 = vmatmul.f32.gmra.mxu0 %v3689
        %v3804 = vpop.f32.mrf.mxu0
        %v3805 = vadd.f32 0.0, %v3804
        %3806 = vmatmul.f32.gmra.mxu0 %v3692
        %v3807 = vpop.f32.mrf.mxu0
        %v3808 = vadd.f32 0.0, %v3807
        %3809 = vmatmul.f32.gmra.mxu0 %v3695
        %v3810 = vpop.f32.mrf.mxu0
        %v3811 = vadd.f32 0.0, %v3810
        %3812 = vmatmul.f32.gmra.mxu0 %v3698
        %v3813 = vpop.f32.mrf.mxu0
        %v3814 = vadd.f32 0.0, %v3813
        %3815 = vmatmul.f32.gmra.mxu0 %v3701
        %v3816 = vpop.f32.mrf.mxu0
        %v3817 = vadd.f32 0.0, %v3816
        %3818 = vmatmul.f32.gmra.mxu0 %v3704
        %v3819 = vpop.f32.mrf.mxu0
        %v3820 = vadd.f32 0.0, %v3819
        %3821 = vmatmul.f32.gmra.mxu0 %v3707
        %v3822 = vpop.f32.mrf.mxu0
        %v3823 = vadd.f32 0.0, %v3822
        %3824 = vmatmul.f32.gmra.mxu0 %v3710
        %v3825 = vpop.f32.mrf.mxu0
        %v3826 = vadd.f32 0.0, %v3825
        %3827 = vmatmul.f32.gmra.mxu0 %v3713
        %v3828 = vpop.f32.mrf.mxu0
        %v3829 = vadd.f32 0.0, %v3828
        %3830 = vmatmul.f32.gmra.mxu0 %v3716
        %v3831 = vpop.f32.mrf.mxu0
        %v3832 = vadd.f32 0.0, %v3831
        %3833 = vmatmul.f32.gmra.mxu0 %v3719
        %v3834 = vpop.f32.mrf.mxu0
        %v3835 = vadd.f32 0.0, %v3834
        %3836 = vmatmul.f32.gmra.mxu0 %v3722
        %v3837 = vpop.f32.mrf.mxu0
        %v3838 = vadd.f32 0.0, %v3837
        %3839 = vmatmul.f32.gmra.mxu0 %v3725
        %v3840 = vpop.f32.mrf.mxu0
        %v3841 = vadd.f32 0.0, %v3840
        %3842 = vmatmul.f32.gmra.mxu0 %v3728
        %v3843 = vpop.f32.mrf.mxu0
        %v3844 = vadd.f32 0.0, %v3843
        %3845 = vmatmul.f32.gmra.mxu0 %v3731
        %v3846 = vpop.f32.mrf.mxu0
        %v3847 = vadd.f32 0.0, %v3846
        %3848 = vmatmul.f32.gmra.mxu0 %v3734
        %v3849 = vpop.f32.mrf.mxu0
        %v3850 = vadd.f32 0.0, %v3849
        %3851 = vmatmul.f32.gmra.mxu0 %v3737
        %v3852 = vpop.f32.mrf.mxu0
        %v3853 = vadd.f32 0.0, %v3852
        %3854 = vmatmul.f32.gmra.mxu0 %v3740
        %v3855 = vpop.f32.mrf.mxu0
        %v3856 = vadd.f32 0.0, %v3855
        %3857 = vmatmul.f32.gmra.mxu0 %v3743
        %v3858 = vpop.f32.mrf.mxu0
        %v3859 = vadd.f32 0.0, %v3858
        %3860 = vmatmul.f32.gmra.mxu0 %v3746
        %v3861 = vpop.f32.mrf.mxu0
        %v3862 = vadd.f32 0.0, %v3861
        %3863 = vmatmul.f32.gmra.mxu0 %v3749
        %v3864 = vpop.f32.mrf.mxu0
        %v3865 = vadd.f32 0.0, %v3864
        %3866 = vmatmul.f32.gmra.mxu0 %v3752
        %v3867 = vpop.f32.mrf.mxu0
        %v3868 = vadd.f32 0.0, %v3867
        %3869 = vmatmul.f32.gmra.mxu0 %v3755
        %v3870 = vpop.f32.mrf.mxu0
        %v3871 = vadd.f32 0.0, %v3870
        %3872 = vmatmul.f32.gmra.mxu0 %v3758
        %v3873 = vpop.f32.mrf.mxu0
        %v3874 = vadd.f32 0.0, %v3873
        %3875 = vmatmul.f32.gmra.mxu0 %v3761
        %v3876 = vpop.f32.mrf.mxu0
        %v3877 = vadd.f32 0.0, %v3876
        %3878 = vmatmul.f32.gmra.mxu0 %v3764
        %v3879 = vpop.f32.mrf.mxu0
        %v3880 = vadd.f32 0.0, %v3879
        %3881 = vmatmul.f32.gmra.mxu0 %v3767
        %v3882 = vpop.f32.mrf.mxu0
        %v3883 = vadd.f32 0.0, %v3882
        %3884 = vmatmul.f32.gmra.mxu0 %v3770
        %v3885 = vpop.f32.mrf.mxu0
        %v3886 = vadd.f32 0.0, %v3885
        %3887 = vmatmul.f32.gmra.mxu0 %v3773
        %v3888 = vpop.f32.mrf.mxu0
        %v3889 = vadd.f32 0.0, %v3888
        %3890 = vdwg.mxu0
        %v3891 = vld [vmem:[#allocation4] sm:$0xff]
        %v3892 = vld [vmem:[#allocation4 + $0x8] sm:$0xff]
        %v3893 = vld [vmem:[#allocation4 + $0x10] sm:$0xff]
        %v3894 = vld [vmem:[#allocation4 + $0x18] sm:$0xff]
        %v3895 = vld [vmem:[#allocation4 + $0x20] sm:$0xff]
        %v3896 = vld [vmem:[#allocation4 + $0x28] sm:$0xff]
        %v3897 = vld [vmem:[#allocation4 + $0x30] sm:$0xff]
        %v3898 = vld [vmem:[#allocation4 + $0x38] sm:$0xff]
        %v3899 = vld [vmem:[#allocation4 + $0x40] sm:$0xff]
        %v3900 = vld [vmem:[#allocation4 + $0x48] sm:$0xff]
        %v3901 = vld [vmem:[#allocation4 + $0x50] sm:$0xff]
        %v3902 = vld [vmem:[#allocation4 + $0x58] sm:$0xff]
        %v3903 = vld [vmem:[#allocation4 + $0x60] sm:$0xff]
        %v3904 = vld [vmem:[#allocation4 + $0x68] sm:$0xff]
        %v3905 = vld [vmem:[#allocation4 + $0x70] sm:$0xff]
        %v3906 = vld [vmem:[#allocation4 + $0x78] sm:$0xff]
        %v3907 = vld [vmem:[#allocation4 + $0x80] sm:$0xff]
        %v3908 = vld [vmem:[#allocation4 + $0x88] sm:$0xff]
        %v3909 = vld [vmem:[#allocation4 + $0x90] sm:$0xff]
        %v3910 = vld [vmem:[#allocation4 + $0x98] sm:$0xff]
        %v3911 = vld [vmem:[#allocation4 + $0xa0] sm:$0xff]
        %v3912 = vld [vmem:[#allocation4 + $0xa8] sm:$0xff]
        %v3913 = vld [vmem:[#allocation4 + $0xb0] sm:$0xff]
        %v3914 = vld [vmem:[#allocation4 + $0xb8] sm:$0xff]
        %v3915 = vld [vmem:[#allocation4 + $0xc0] sm:$0xff]
        %v3916 = vld [vmem:[#allocation4 + $0xc8] sm:$0xff]
        %v3917 = vld [vmem:[#allocation4 + $0xd0] sm:$0xff]
        %v3918 = vld [vmem:[#allocation4 + $0xd8] sm:$0xff]
        %v3919 = vld [vmem:[#allocation4 + $0xe0] sm:$0xff]
        %v3920 = vld [vmem:[#allocation4 + $0xe8] sm:$0xff]
        %v3921 = vld [vmem:[#allocation4 + $0xf0] sm:$0xff]
        %v3922 = vld [vmem:[#allocation4 + $0xf8] sm:$0xff]
        %v3923 = vadd.f32 %v3891, %v3796
        %v3924 = vadd.f32 %v3892, %v3799
        %v3925 = vadd.f32 %v3893, %v3802
        %v3926 = vadd.f32 %v3894, %v3805
        %v3927 = vadd.f32 %v3895, %v3808
        %v3928 = vadd.f32 %v3896, %v3811
        %v3929 = vadd.f32 %v3897, %v3814
        %v3930 = vadd.f32 %v3898, %v3817
        %v3931 = vadd.f32 %v3899, %v3820
        %v3932 = vadd.f32 %v3900, %v3823
        %v3933 = vadd.f32 %v3901, %v3826
        %v3934 = vadd.f32 %v3902, %v3829
        %v3935 = vadd.f32 %v3903, %v3832
        %v3936 = vadd.f32 %v3904, %v3835
        %v3937 = vadd.f32 %v3905, %v3838
        %v3938 = vadd.f32 %v3906, %v3841
        %v3939 = vadd.f32 %v3907, %v3844
        %v3940 = vadd.f32 %v3908, %v3847
        %v3941 = vadd.f32 %v3909, %v3850
        %v3942 = vadd.f32 %v3910, %v3853
        %v3943 = vadd.f32 %v3911, %v3856
        %v3944 = vadd.f32 %v3912, %v3859
        %v3945 = vadd.f32 %v3913, %v3862
        %v3946 = vadd.f32 %v3914, %v3865
        %v3947 = vadd.f32 %v3915, %v3868
        %v3948 = vadd.f32 %v3916, %v3871
        %v3949 = vadd.f32 %v3917, %v3874
        %v3950 = vadd.f32 %v3918, %v3877
        %v3951 = vadd.f32 %v3919, %v3880
        %v3952 = vadd.f32 %v3920, %v3883
        %v3953 = vadd.f32 %v3921, %v3886
        %v3954 = vadd.f32 %v3922, %v3889
        %3955 = vst.msk [vmem:[#allocation4] sm:$0xff] %vm709, %v3923
        %3956 = vst.msk [vmem:[#allocation4 + $0x8] sm:$0xff] %vm709, %v3924
        %3957 = vst.msk [vmem:[#allocation4 + $0x10] sm:$0xff] %vm709, %v3925
        %3958 = vst.msk [vmem:[#allocation4 + $0x18] sm:$0xff] %vm709, %v3926
        %3959 = vst.msk [vmem:[#allocation4 + $0x20] sm:$0xff] %vm709, %v3927
        %3960 = vst.msk [vmem:[#allocation4 + $0x28] sm:$0xff] %vm709, %v3928
        %3961 = vst.msk [vmem:[#allocation4 + $0x30] sm:$0xff] %vm709, %v3929
        %3962 = vst.msk [vmem:[#allocation4 + $0x38] sm:$0xff] %vm709, %v3930
        %3963 = vst.msk [vmem:[#allocation4 + $0x40] sm:$0xff] %vm709, %v3931
        %3964 = vst.msk [vmem:[#allocation4 + $0x48] sm:$0xff] %vm709, %v3932
        %3965 = vst.msk [vmem:[#allocation4 + $0x50] sm:$0xff] %vm709, %v3933
        %3966 = vst.msk [vmem:[#allocation4 + $0x58] sm:$0xff] %vm709, %v3934
        %3967 = vst.msk [vmem:[#allocation4 + $0x60] sm:$0xff] %vm709, %v3935
        %3968 = vst.msk [vmem:[#allocation4 + $0x68] sm:$0xff] %vm709, %v3936
        %3969 = vst.msk [vmem:[#allocation4 + $0x70] sm:$0xff] %vm709, %v3937
        %3970 = vst.msk [vmem:[#allocation4 + $0x78] sm:$0xff] %vm709, %v3938
        %3971 = vst.msk [vmem:[#allocation4 + $0x80] sm:$0xff] %vm709, %v3939
        %3972 = vst.msk [vmem:[#allocation4 + $0x88] sm:$0xff] %vm709, %v3940
        %3973 = vst.msk [vmem:[#allocation4 + $0x90] sm:$0xff] %vm709, %v3941
        %3974 = vst.msk [vmem:[#allocation4 + $0x98] sm:$0xff] %vm709, %v3942
        %3975 = vst.msk [vmem:[#allocation4 + $0xa0] sm:$0xff] %vm709, %v3943
        %3976 = vst.msk [vmem:[#allocation4 + $0xa8] sm:$0xff] %vm709, %v3944
        %3977 = vst.msk [vmem:[#allocation4 + $0xb0] sm:$0xff] %vm709, %v3945
        %3978 = vst.msk [vmem:[#allocation4 + $0xb8] sm:$0xff] %vm709, %v3946
        %3979 = vst.msk [vmem:[#allocation4 + $0xc0] sm:$0xff] %vm709, %v3947
        %3980 = vst.msk [vmem:[#allocation4 + $0xc8] sm:$0xff] %vm709, %v3948
        %3981 = vst.msk [vmem:[#allocation4 + $0xd0] sm:$0xff] %vm709, %v3949
        %3982 = vst.msk [vmem:[#allocation4 + $0xd8] sm:$0xff] %vm709, %v3950
        %3983 = vst.msk [vmem:[#allocation4 + $0xe0] sm:$0xff] %vm709, %v3951
        %3984 = vst.msk [vmem:[#allocation4 + $0xe8] sm:$0xff] %vm709, %v3952
        %3985 = vst.msk [vmem:[#allocation4 + $0xf0] sm:$0xff] %vm709, %v3953
        %3986 = vst.msk [vmem:[#allocation4 + $0xf8] sm:$0xff] %vm709, %v3954
        %v3987 = vld [vmem:[#allocation3 + $0x21] sm:$0xff]
        %v3988 = vld [vmem:[#allocation3 + $0x29] sm:$0xff]
        %v3989 = vld [vmem:[#allocation3 + $0x31] sm:$0xff]
        %v3990 = vld [vmem:[#allocation3 + $0x39] sm:$0xff]
        %v3991 = vld [vmem:[#allocation3 + $0x41] sm:$0xff]
        %v3992 = vld [vmem:[#allocation3 + $0x49] sm:$0xff]
        %v3993 = vld [vmem:[#allocation3 + $0x51] sm:$0xff]
        %v3994 = vld [vmem:[#allocation3 + $0x59] sm:$0xff]
        %v3995 = vld [vmem:[#allocation3 + $0x61] sm:$0xff]
        %v3996 = vld [vmem:[#allocation3 + $0x69] sm:$0xff]
        %v3997 = vld [vmem:[#allocation3 + $0x71] sm:$0xff]
        %v3998 = vld [vmem:[#allocation3 + $0x79] sm:$0xff]
        %v3999 = vld [vmem:[#allocation3 + $0x81] sm:$0xff]
        %v4000 = vld [vmem:[#allocation3 + $0x89] sm:$0xff]
        %v4001 = vld [vmem:[#allocation3 + $0x91] sm:$0xff]
        %v4002 = vld [vmem:[#allocation3 + $0x99] sm:$0xff]
        %v4003 = vld [vmem:[#allocation3 + $0xa1] sm:$0xff]
        %v4004 = vld [vmem:[#allocation3 + $0xa9] sm:$0xff]
        %v4005 = vld [vmem:[#allocation3 + $0xb1] sm:$0xff]
        %v4006 = vld [vmem:[#allocation3 + $0xb9] sm:$0xff]
        %v4007 = vld [vmem:[#allocation3 + $0xc1] sm:$0xff]
        %v4008 = vld [vmem:[#allocation3 + $0xc9] sm:$0xff]
        %v4009 = vld [vmem:[#allocation3 + $0xd1] sm:$0xff]
        %v4010 = vld [vmem:[#allocation3 + $0xd9] sm:$0xff]
        %v4011 = vld [vmem:[#allocation3 + $0xe1] sm:$0xff]
        %v4012 = vld [vmem:[#allocation3 + $0xe9] sm:$0xff]
        %v4013 = vld [vmem:[#allocation3 + $0xf1] sm:$0xff]
        %v4014 = vld [vmem:[#allocation3 + $0xf9] sm:$0xff]
        %v4015 = vld [vmem:[#allocation3 + $0x101] sm:$0xff]
        %v4016 = vld [vmem:[#allocation3 + $0x109] sm:$0xff]
        %v4017 = vld [vmem:[#allocation3 + $0x111] sm:$0xff]
        %v4018 = vld [vmem:[#allocation3 + $0x119] sm:$0xff]
        %s4019 = scalar_lea.vmem %s5, 20
        %v4020 = vld [vmem:[%s4019] sm:$0xf]
        %v4022 = vsel %vm709, %v3987, 0
        %v4025 = vsel %vm709, %v3988, 0
        %v4028 = vsel %vm709, %v3989, 0
        %v4031 = vsel %vm709, %v3990, 0
        %v4034 = vsel %vm709, %v3991, 0
        %v4037 = vsel %vm709, %v3992, 0
        %v4040 = vsel %vm709, %v3993, 0
        %v4043 = vsel %vm709, %v3994, 0
        %v4046 = vsel %vm709, %v3995, 0
        %v4049 = vsel %vm709, %v3996, 0
        %v4052 = vsel %vm709, %v3997, 0
        %v4055 = vsel %vm709, %v3998, 0
        %v4058 = vsel %vm709, %v3999, 0
        %v4061 = vsel %vm709, %v4000, 0
        %v4064 = vsel %vm709, %v4001, 0
        %v4067 = vsel %vm709, %v4002, 0
        %v4070 = vsel %vm709, %v4003, 0
        %v4073 = vsel %vm709, %v4004, 0
        %v4076 = vsel %vm709, %v4005, 0
        %v4079 = vsel %vm709, %v4006, 0
        %v4082 = vsel %vm709, %v4007, 0
        %v4085 = vsel %vm709, %v4008, 0
        %v4088 = vsel %vm709, %v4009, 0
        %v4091 = vsel %vm709, %v4010, 0
        %v4094 = vsel %vm709, %v4011, 0
        %v4097 = vsel %vm709, %v4012, 0
        %v4100 = vsel %vm709, %v4013, 0
        %v4103 = vsel %vm709, %v4014, 0
        %v4106 = vsel %vm709, %v4015, 0
        %v4109 = vsel %vm709, %v4016, 0
        %v4112 = vsel %vm709, %v4017, 0
        %v4115 = vsel %vm709, %v4018, 0
        %v4118 = vsel %vm2406, %v4020, 0
        %4120 = vmatpush.msra.mxu0 0.0
        %4121 = vmatpush.msra.mxu0 0.0
        %4122 = vmatpush.msra.mxu0 0.0
        %4123 = vmatpush.msra.mxu0 0.0
        %4124 = vmatpush.msra.mxu0 0.0
        %4125 = vmatpush.msra.mxu0 0.0
        %4126 = vmatpush.msra.mxu0 0.0
        %4127 = vmatpush.msra.mxu0 0.0
        %4128 = vmatpush.msra.mxu0 0.0
        %4129 = vmatpush.msra.mxu0 0.0
        %4130 = vmatpush.msra.mxu0 0.0
        %4131 = vmatpush.msra.mxu0 0.0
        %4132 = vmatpush.msra.mxu0 0.0
        %4133 = vmatpush.msra.mxu0 0.0
        %4134 = vmatpush.msra.mxu0 0.0
        %4135 = vmatpush.msra.mxu0 %v4118
        %4136 = vmatmul.f32.gmra.mxu0 %v4022
        %v4137 = vpop.f32.mrf.mxu0
        %v4138 = vadd.f32 0.0, %v4137
        %4139 = vmatmul.f32.gmra.mxu0 %v4025
        %v4140 = vpop.f32.mrf.mxu0
        %v4141 = vadd.f32 0.0, %v4140
        %4142 = vmatmul.f32.gmra.mxu0 %v4028
        %v4143 = vpop.f32.mrf.mxu0
        %v4144 = vadd.f32 0.0, %v4143
        %4145 = vmatmul.f32.gmra.mxu0 %v4031
        %v4146 = vpop.f32.mrf.mxu0
        %v4147 = vadd.f32 0.0, %v4146
        %4148 = vmatmul.f32.gmra.mxu0 %v4034
        %v4149 = vpop.f32.mrf.mxu0
        %v4150 = vadd.f32 0.0, %v4149
        %4151 = vmatmul.f32.gmra.mxu0 %v4037
        %v4152 = vpop.f32.mrf.mxu0
        %v4153 = vadd.f32 0.0, %v4152
        %4154 = vmatmul.f32.gmra.mxu0 %v4040
        %v4155 = vpop.f32.mrf.mxu0
        %v4156 = vadd.f32 0.0, %v4155
        %4157 = vmatmul.f32.gmra.mxu0 %v4043
        %v4158 = vpop.f32.mrf.mxu0
        %v4159 = vadd.f32 0.0, %v4158
        %4160 = vmatmul.f32.gmra.mxu0 %v4046
        %v4161 = vpop.f32.mrf.mxu0
        %v4162 = vadd.f32 0.0, %v4161
        %4163 = vmatmul.f32.gmra.mxu0 %v4049
        %v4164 = vpop.f32.mrf.mxu0
        %v4165 = vadd.f32 0.0, %v4164
        %4166 = vmatmul.f32.gmra.mxu0 %v4052
        %v4167 = vpop.f32.mrf.mxu0
        %v4168 = vadd.f32 0.0, %v4167
        %4169 = vmatmul.f32.gmra.mxu0 %v4055
        %v4170 = vpop.f32.mrf.mxu0
        %v4171 = vadd.f32 0.0, %v4170
        %4172 = vmatmul.f32.gmra.mxu0 %v4058
        %v4173 = vpop.f32.mrf.mxu0
        %v4174 = vadd.f32 0.0, %v4173
        %4175 = vmatmul.f32.gmra.mxu0 %v4061
        %v4176 = vpop.f32.mrf.mxu0
        %v4177 = vadd.f32 0.0, %v4176
        %4178 = vmatmul.f32.gmra.mxu0 %v4064
        %v4179 = vpop.f32.mrf.mxu0
        %v4180 = vadd.f32 0.0, %v4179
        %4181 = vmatmul.f32.gmra.mxu0 %v4067
        %v4182 = vpop.f32.mrf.mxu0
        %v4183 = vadd.f32 0.0, %v4182
        %4184 = vmatmul.f32.gmra.mxu0 %v4070
        %v4185 = vpop.f32.mrf.mxu0
        %v4186 = vadd.f32 0.0, %v4185
        %4187 = vmatmul.f32.gmra.mxu0 %v4073
        %v4188 = vpop.f32.mrf.mxu0
        %v4189 = vadd.f32 0.0, %v4188
        %4190 = vmatmul.f32.gmra.mxu0 %v4076
        %v4191 = vpop.f32.mrf.mxu0
        %v4192 = vadd.f32 0.0, %v4191
        %4193 = vmatmul.f32.gmra.mxu0 %v4079
        %v4194 = vpop.f32.mrf.mxu0
        %v4195 = vadd.f32 0.0, %v4194
        %4196 = vmatmul.f32.gmra.mxu0 %v4082
        %v4197 = vpop.f32.mrf.mxu0
        %v4198 = vadd.f32 0.0, %v4197
        %4199 = vmatmul.f32.gmra.mxu0 %v4085
        %v4200 = vpop.f32.mrf.mxu0
        %v4201 = vadd.f32 0.0, %v4200
        %4202 = vmatmul.f32.gmra.mxu0 %v4088
        %v4203 = vpop.f32.mrf.mxu0
        %v4204 = vadd.f32 0.0, %v4203
        %4205 = vmatmul.f32.gmra.mxu0 %v4091
        %v4206 = vpop.f32.mrf.mxu0
        %v4207 = vadd.f32 0.0, %v4206
        %4208 = vmatmul.f32.gmra.mxu0 %v4094
        %v4209 = vpop.f32.mrf.mxu0
        %v4210 = vadd.f32 0.0, %v4209
        %4211 = vmatmul.f32.gmra.mxu0 %v4097
        %v4212 = vpop.f32.mrf.mxu0
        %v4213 = vadd.f32 0.0, %v4212
        %4214 = vmatmul.f32.gmra.mxu0 %v4100
        %v4215 = vpop.f32.mrf.mxu0
        %v4216 = vadd.f32 0.0, %v4215
        %4217 = vmatmul.f32.gmra.mxu0 %v4103
        %v4218 = vpop.f32.mrf.mxu0
        %v4219 = vadd.f32 0.0, %v4218
        %4220 = vmatmul.f32.gmra.mxu0 %v4106
        %v4221 = vpop.f32.mrf.mxu0
        %v4222 = vadd.f32 0.0, %v4221
        %4223 = vmatmul.f32.gmra.mxu0 %v4109
        %v4224 = vpop.f32.mrf.mxu0
        %v4225 = vadd.f32 0.0, %v4224
        %4226 = vmatmul.f32.gmra.mxu0 %v4112
        %v4227 = vpop.f32.mrf.mxu0
        %v4228 = vadd.f32 0.0, %v4227
        %4229 = vmatmul.f32.gmra.mxu0 %v4115
        %v4230 = vpop.f32.mrf.mxu0
        %v4231 = vadd.f32 0.0, %v4230
        %4232 = vdwg.mxu0
        %v4233 = vld [vmem:[#allocation4] sm:$0xff]
        %v4234 = vld [vmem:[#allocation4 + $0x8] sm:$0xff]
        %v4235 = vld [vmem:[#allocation4 + $0x10] sm:$0xff]
        %v4236 = vld [vmem:[#allocation4 + $0x18] sm:$0xff]
        %v4237 = vld [vmem:[#allocation4 + $0x20] sm:$0xff]
        %v4238 = vld [vmem:[#allocation4 + $0x28] sm:$0xff]
        %v4239 = vld [vmem:[#allocation4 + $0x30] sm:$0xff]
        %v4240 = vld [vmem:[#allocation4 + $0x38] sm:$0xff]
        %v4241 = vld [vmem:[#allocation4 + $0x40] sm:$0xff]
        %v4242 = vld [vmem:[#allocation4 + $0x48] sm:$0xff]
        %v4243 = vld [vmem:[#allocation4 + $0x50] sm:$0xff]
        %v4244 = vld [vmem:[#allocation4 + $0x58] sm:$0xff]
        %v4245 = vld [vmem:[#allocation4 + $0x60] sm:$0xff]
        %v4246 = vld [vmem:[#allocation4 + $0x68] sm:$0xff]
        %v4247 = vld [vmem:[#allocation4 + $0x70] sm:$0xff]
        %v4248 = vld [vmem:[#allocation4 + $0x78] sm:$0xff]
        %v4249 = vld [vmem:[#allocation4 + $0x80] sm:$0xff]
        %v4250 = vld [vmem:[#allocation4 + $0x88] sm:$0xff]
        %v4251 = vld [vmem:[#allocation4 + $0x90] sm:$0xff]
        %v4252 = vld [vmem:[#allocation4 + $0x98] sm:$0xff]
        %v4253 = vld [vmem:[#allocation4 + $0xa0] sm:$0xff]
        %v4254 = vld [vmem:[#allocation4 + $0xa8] sm:$0xff]
        %v4255 = vld [vmem:[#allocation4 + $0xb0] sm:$0xff]
        %v4256 = vld [vmem:[#allocation4 + $0xb8] sm:$0xff]
        %v4257 = vld [vmem:[#allocation4 + $0xc0] sm:$0xff]
        %v4258 = vld [vmem:[#allocation4 + $0xc8] sm:$0xff]
        %v4259 = vld [vmem:[#allocation4 + $0xd0] sm:$0xff]
        %v4260 = vld [vmem:[#allocation4 + $0xd8] sm:$0xff]
        %v4261 = vld [vmem:[#allocation4 + $0xe0] sm:$0xff]
        %v4262 = vld [vmem:[#allocation4 + $0xe8] sm:$0xff]
        %v4263 = vld [vmem:[#allocation4 + $0xf0] sm:$0xff]
        %v4264 = vld [vmem:[#allocation4 + $0xf8] sm:$0xff]
        %v4265 = vadd.f32 %v4233, %v4138
        %v4266 = vadd.f32 %v4234, %v4141
        %v4267 = vadd.f32 %v4235, %v4144
        %v4268 = vadd.f32 %v4236, %v4147
        %v4269 = vadd.f32 %v4237, %v4150
        %v4270 = vadd.f32 %v4238, %v4153
        %v4271 = vadd.f32 %v4239, %v4156
        %v4272 = vadd.f32 %v4240, %v4159
        %v4273 = vadd.f32 %v4241, %v4162
        %v4274 = vadd.f32 %v4242, %v4165
        %v4275 = vadd.f32 %v4243, %v4168
        %v4276 = vadd.f32 %v4244, %v4171
        %v4277 = vadd.f32 %v4245, %v4174
        %v4278 = vadd.f32 %v4246, %v4177
        %v4279 = vadd.f32 %v4247, %v4180
        %v4280 = vadd.f32 %v4248, %v4183
        %v4281 = vadd.f32 %v4249, %v4186
        %v4282 = vadd.f32 %v4250, %v4189
        %v4283 = vadd.f32 %v4251, %v4192
        %v4284 = vadd.f32 %v4252, %v4195
        %v4285 = vadd.f32 %v4253, %v4198
        %v4286 = vadd.f32 %v4254, %v4201
        %v4287 = vadd.f32 %v4255, %v4204
        %v4288 = vadd.f32 %v4256, %v4207
        %v4289 = vadd.f32 %v4257, %v4210
        %v4290 = vadd.f32 %v4258, %v4213
        %v4291 = vadd.f32 %v4259, %v4216
        %v4292 = vadd.f32 %v4260, %v4219
        %v4293 = vadd.f32 %v4261, %v4222
        %v4294 = vadd.f32 %v4262, %v4225
        %v4295 = vadd.f32 %v4263, %v4228
        %v4296 = vadd.f32 %v4264, %v4231
        %4297 = vst.msk [vmem:[#allocation4] sm:$0xff] %vm709, %v4265
        %4298 = vst.msk [vmem:[#allocation4 + $0x8] sm:$0xff] %vm709, %v4266
        %4299 = vst.msk [vmem:[#allocation4 + $0x10] sm:$0xff] %vm709, %v4267
        %4300 = vst.msk [vmem:[#allocation4 + $0x18] sm:$0xff] %vm709, %v4268
        %4301 = vst.msk [vmem:[#allocation4 + $0x20] sm:$0xff] %vm709, %v4269
        %4302 = vst.msk [vmem:[#allocation4 + $0x28] sm:$0xff] %vm709, %v4270
        %4303 = vst.msk [vmem:[#allocation4 + $0x30] sm:$0xff] %vm709, %v4271
        %4304 = vst.msk [vmem:[#allocation4 + $0x38] sm:$0xff] %vm709, %v4272
        %4305 = vst.msk [vmem:[#allocation4 + $0x40] sm:$0xff] %vm709, %v4273
        %4306 = vst.msk [vmem:[#allocation4 + $0x48] sm:$0xff] %vm709, %v4274
        %4307 = vst.msk [vmem:[#allocation4 + $0x50] sm:$0xff] %vm709, %v4275
        %4308 = vst.msk [vmem:[#allocation4 + $0x58] sm:$0xff] %vm709, %v4276
        %4309 = vst.msk [vmem:[#allocation4 + $0x60] sm:$0xff] %vm709, %v4277
        %4310 = vst.msk [vmem:[#allocation4 + $0x68] sm:$0xff] %vm709, %v4278
        %4311 = vst.msk [vmem:[#allocation4 + $0x70] sm:$0xff] %vm709, %v4279
        %4312 = vst.msk [vmem:[#allocation4 + $0x78] sm:$0xff] %vm709, %v4280
        %4313 = vst.msk [vmem:[#allocation4 + $0x80] sm:$0xff] %vm709, %v4281
        %4314 = vst.msk [vmem:[#allocation4 + $0x88] sm:$0xff] %vm709, %v4282
        %4315 = vst.msk [vmem:[#allocation4 + $0x90] sm:$0xff] %vm709, %v4283
        %4316 = vst.msk [vmem:[#allocation4 + $0x98] sm:$0xff] %vm709, %v4284
        %4317 = vst.msk [vmem:[#allocation4 + $0xa0] sm:$0xff] %vm709, %v4285
        %4318 = vst.msk [vmem:[#allocation4 + $0xa8] sm:$0xff] %vm709, %v4286
        %4319 = vst.msk [vmem:[#allocation4 + $0xb0] sm:$0xff] %vm709, %v4287
        %4320 = vst.msk [vmem:[#allocation4 + $0xb8] sm:$0xff] %vm709, %v4288
        %4321 = vst.msk [vmem:[#allocation4 + $0xc0] sm:$0xff] %vm709, %v4289
        %4322 = vst.msk [vmem:[#allocation4 + $0xc8] sm:$0xff] %vm709, %v4290
        %4323 = vst.msk [vmem:[#allocation4 + $0xd0] sm:$0xff] %vm709, %v4291
        %4324 = vst.msk [vmem:[#allocation4 + $0xd8] sm:$0xff] %vm709, %v4292
        %4325 = vst.msk [vmem:[#allocation4 + $0xe0] sm:$0xff] %vm709, %v4293
        %4326 = vst.msk [vmem:[#allocation4 + $0xe8] sm:$0xff] %vm709, %v4294
        %4327 = vst.msk [vmem:[#allocation4 + $0xf0] sm:$0xff] %vm709, %v4295
        %4328 = vst.msk [vmem:[#allocation4 + $0xf8] sm:$0xff] %vm709, %v4296
        %v4329 = vld [vmem:[#allocation3 + $0x2] sm:$0xff]
        %v4330 = vld [vmem:[#allocation3 + $0xa] sm:$0xff]
        %v4331 = vld [vmem:[#allocation3 + $0x12] sm:$0xff]
        %v4332 = vld [vmem:[#allocation3 + $0x1a] sm:$0xff]
        %v4333 = vld [vmem:[#allocation3 + $0x22] sm:$0xff]
        %v4334 = vld [vmem:[#allocation3 + $0x2a] sm:$0xff]
        %v4335 = vld [vmem:[#allocation3 + $0x32] sm:$0xff]
        %v4336 = vld [vmem:[#allocation3 + $0x3a] sm:$0xff]
        %v4337 = vld [vmem:[#allocation3 + $0x42] sm:$0xff]
        %v4338 = vld [vmem:[#allocation3 + $0x4a] sm:$0xff]
        %v4339 = vld [vmem:[#allocation3 + $0x52] sm:$0xff]
        %v4340 = vld [vmem:[#allocation3 + $0x5a] sm:$0xff]
        %v4341 = vld [vmem:[#allocation3 + $0x62] sm:$0xff]
        %v4342 = vld [vmem:[#allocation3 + $0x6a] sm:$0xff]
        %v4343 = vld [vmem:[#allocation3 + $0x72] sm:$0xff]
        %v4344 = vld [vmem:[#allocation3 + $0x7a] sm:$0xff]
        %v4345 = vld [vmem:[#allocation3 + $0x82] sm:$0xff]
        %v4346 = vld [vmem:[#allocation3 + $0x8a] sm:$0xff]
        %v4347 = vld [vmem:[#allocation3 + $0x92] sm:$0xff]
        %v4348 = vld [vmem:[#allocation3 + $0x9a] sm:$0xff]
        %v4349 = vld [vmem:[#allocation3 + $0xa2] sm:$0xff]
        %v4350 = vld [vmem:[#allocation3 + $0xaa] sm:$0xff]
        %v4351 = vld [vmem:[#allocation3 + $0xb2] sm:$0xff]
        %v4352 = vld [vmem:[#allocation3 + $0xba] sm:$0xff]
        %v4353 = vld [vmem:[#allocation3 + $0xc2] sm:$0xff]
        %v4354 = vld [vmem:[#allocation3 + $0xca] sm:$0xff]
        %v4355 = vld [vmem:[#allocation3 + $0xd2] sm:$0xff]
        %v4356 = vld [vmem:[#allocation3 + $0xda] sm:$0xff]
        %v4357 = vld [vmem:[#allocation3 + $0xe2] sm:$0xff]
        %v4358 = vld [vmem:[#allocation3 + $0xea] sm:$0xff]
        %v4359 = vld [vmem:[#allocation3 + $0xf2] sm:$0xff]
        %v4360 = vld [vmem:[#allocation3 + $0xfa] sm:$0xff]
        %v4361 = vsel %vm2181, %v4329, 0.0
        %v4362 = vsel %vm2182, %v4330, 0.0
        %v4363 = vsel %vm2183, %v4331, 0.0
        %v4364 = vsel %vm2184, %v4332, 0.0
        %v4365 = vsel %vm2185, %v4333, 0.0
        %v4366 = vsel %vm2186, %v4334, 0.0
        %v4367 = vsel %vm2187, %v4335, 0.0
        %v4368 = vsel %vm2188, %v4336, 0.0
        %v4369 = vsel %vm2189, %v4337, 0.0
        %v4370 = vsel %vm2190, %v4338, 0.0
        %v4371 = vsel %vm2191, %v4339, 0.0
        %v4372 = vsel %vm2192, %v4340, 0.0
        %v4373 = vsel %vm2193, %v4341, 0.0
        %v4374 = vsel %vm2194, %v4342, 0.0
        %v4375 = vsel %vm2195, %v4343, 0.0
        %v4376 = vsel %vm2196, %v4344, 0.0
        %v4377 = vsel %vm2197, %v4345, 0.0
        %v4378 = vsel %vm2198, %v4346, 0.0
        %v4379 = vsel %vm2199, %v4347, 0.0
        %v4380 = vsel %vm2200, %v4348, 0.0
        %v4381 = vsel %vm2201, %v4349, 0.0
        %v4382 = vsel %vm2202, %v4350, 0.0
        %v4383 = vsel %vm2203, %v4351, 0.0
        %v4384 = vsel %vm2204, %v4352, 0.0
        %v4385 = vsel %vm2205, %v4353, 0.0
        %v4386 = vsel %vm2206, %v4354, 0.0
        %v4387 = vsel %vm2207, %v4355, 0.0
        %v4388 = vsel %vm2208, %v4356, 0.0
        %v4389 = vsel %vm2209, %v4357, 0.0
        %v4390 = vsel %vm2210, %v4358, 0.0
        %v4391 = vsel %vm2211, %v4359, 0.0
        %v4392 = vsel %vm2212, %v4360, 0.0
        %s4393 = scalar_lea.vmem %s5, 24
        %v4394 = vld [vmem:[%s4393] sm:$0xf]
        %v4396 = vsel %vm709, %v4361, 0
        %v4399 = vsel %vm709, %v4362, 0
        %v4402 = vsel %vm709, %v4363, 0
        %v4405 = vsel %vm709, %v4364, 0
        %v4408 = vsel %vm709, %v4365, 0
        %v4411 = vsel %vm709, %v4366, 0
        %v4414 = vsel %vm709, %v4367, 0
        %v4417 = vsel %vm709, %v4368, 0
        %v4420 = vsel %vm709, %v4369, 0
        %v4423 = vsel %vm709, %v4370, 0
        %v4426 = vsel %vm709, %v4371, 0
        %v4429 = vsel %vm709, %v4372, 0
        %v4432 = vsel %vm709, %v4373, 0
        %v4435 = vsel %vm709, %v4374, 0
        %v4438 = vsel %vm709, %v4375, 0
        %v4441 = vsel %vm709, %v4376, 0
        %v4444 = vsel %vm709, %v4377, 0
        %v4447 = vsel %vm709, %v4378, 0
        %v4450 = vsel %vm709, %v4379, 0
        %v4453 = vsel %vm709, %v4380, 0
        %v4456 = vsel %vm709, %v4381, 0
        %v4459 = vsel %vm709, %v4382, 0
        %v4462 = vsel %vm709, %v4383, 0
        %v4465 = vsel %vm709, %v4384, 0
        %v4468 = vsel %vm709, %v4385, 0
        %v4471 = vsel %vm709, %v4386, 0
        %v4474 = vsel %vm709, %v4387, 0
        %v4477 = vsel %vm709, %v4388, 0
        %v4480 = vsel %vm709, %v4389, 0
        %v4483 = vsel %vm709, %v4390, 0
        %v4486 = vsel %vm709, %v4391, 0
        %v4489 = vsel %vm709, %v4392, 0
        %v4492 = vsel %vm2406, %v4394, 0
        %4494 = vmatpush.msra.mxu0 0.0
        %4495 = vmatpush.msra.mxu0 0.0
        %4496 = vmatpush.msra.mxu0 0.0
        %4497 = vmatpush.msra.mxu0 0.0
        %4498 = vmatpush.msra.mxu0 0.0
        %4499 = vmatpush.msra.mxu0 0.0
        %4500 = vmatpush.msra.mxu0 0.0
        %4501 = vmatpush.msra.mxu0 0.0
        %4502 = vmatpush.msra.mxu0 0.0
        %4503 = vmatpush.msra.mxu0 0.0
        %4504 = vmatpush.msra.mxu0 0.0
        %4505 = vmatpush.msra.mxu0 0.0
        %4506 = vmatpush.msra.mxu0 0.0
        %4507 = vmatpush.msra.mxu0 0.0
        %4508 = vmatpush.msra.mxu0 0.0
        %4509 = vmatpush.msra.mxu0 %v4492
        %4510 = vmatmul.f32.gmra.mxu0 %v4396
        %v4511 = vpop.f32.mrf.mxu0
        %v4512 = vadd.f32 0.0, %v4511
        %4513 = vmatmul.f32.gmra.mxu0 %v4399
        %v4514 = vpop.f32.mrf.mxu0
        %v4515 = vadd.f32 0.0, %v4514
        %4516 = vmatmul.f32.gmra.mxu0 %v4402
        %v4517 = vpop.f32.mrf.mxu0
        %v4518 = vadd.f32 0.0, %v4517
        %4519 = vmatmul.f32.gmra.mxu0 %v4405
        %v4520 = vpop.f32.mrf.mxu0
        %v4521 = vadd.f32 0.0, %v4520
        %4522 = vmatmul.f32.gmra.mxu0 %v4408
        %v4523 = vpop.f32.mrf.mxu0
        %v4524 = vadd.f32 0.0, %v4523
        %4525 = vmatmul.f32.gmra.mxu0 %v4411
        %v4526 = vpop.f32.mrf.mxu0
        %v4527 = vadd.f32 0.0, %v4526
        %4528 = vmatmul.f32.gmra.mxu0 %v4414
        %v4529 = vpop.f32.mrf.mxu0
        %v4530 = vadd.f32 0.0, %v4529
        %4531 = vmatmul.f32.gmra.mxu0 %v4417
        %v4532 = vpop.f32.mrf.mxu0
        %v4533 = vadd.f32 0.0, %v4532
        %4534 = vmatmul.f32.gmra.mxu0 %v4420
        %v4535 = vpop.f32.mrf.mxu0
        %v4536 = vadd.f32 0.0, %v4535
        %4537 = vmatmul.f32.gmra.mxu0 %v4423
        %v4538 = vpop.f32.mrf.mxu0
        %v4539 = vadd.f32 0.0, %v4538
        %4540 = vmatmul.f32.gmra.mxu0 %v4426
        %v4541 = vpop.f32.mrf.mxu0
        %v4542 = vadd.f32 0.0, %v4541
        %4543 = vmatmul.f32.gmra.mxu0 %v4429
        %v4544 = vpop.f32.mrf.mxu0
        %v4545 = vadd.f32 0.0, %v4544
        %4546 = vmatmul.f32.gmra.mxu0 %v4432
        %v4547 = vpop.f32.mrf.mxu0
        %v4548 = vadd.f32 0.0, %v4547
        %4549 = vmatmul.f32.gmra.mxu0 %v4435
        %v4550 = vpop.f32.mrf.mxu0
        %v4551 = vadd.f32 0.0, %v4550
        %4552 = vmatmul.f32.gmra.mxu0 %v4438
        %v4553 = vpop.f32.mrf.mxu0
        %v4554 = vadd.f32 0.0, %v4553
        %4555 = vmatmul.f32.gmra.mxu0 %v4441
        %v4556 = vpop.f32.mrf.mxu0
        %v4557 = vadd.f32 0.0, %v4556
        %4558 = vmatmul.f32.gmra.mxu0 %v4444
        %v4559 = vpop.f32.mrf.mxu0
        %v4560 = vadd.f32 0.0, %v4559
        %4561 = vmatmul.f32.gmra.mxu0 %v4447
        %v4562 = vpop.f32.mrf.mxu0
        %v4563 = vadd.f32 0.0, %v4562
        %4564 = vmatmul.f32.gmra.mxu0 %v4450
        %v4565 = vpop.f32.mrf.mxu0
        %v4566 = vadd.f32 0.0, %v4565
        %4567 = vmatmul.f32.gmra.mxu0 %v4453
        %v4568 = vpop.f32.mrf.mxu0
        %v4569 = vadd.f32 0.0, %v4568
        %4570 = vmatmul.f32.gmra.mxu0 %v4456
        %v4571 = vpop.f32.mrf.mxu0
        %v4572 = vadd.f32 0.0, %v4571
        %4573 = vmatmul.f32.gmra.mxu0 %v4459
        %v4574 = vpop.f32.mrf.mxu0
        %v4575 = vadd.f32 0.0, %v4574
        %4576 = vmatmul.f32.gmra.mxu0 %v4462
        %v4577 = vpop.f32.mrf.mxu0
        %v4578 = vadd.f32 0.0, %v4577
        %4579 = vmatmul.f32.gmra.mxu0 %v4465
        %v4580 = vpop.f32.mrf.mxu0
        %v4581 = vadd.f32 0.0, %v4580
        %4582 = vmatmul.f32.gmra.mxu0 %v4468
        %v4583 = vpop.f32.mrf.mxu0
        %v4584 = vadd.f32 0.0, %v4583
        %4585 = vmatmul.f32.gmra.mxu0 %v4471
        %v4586 = vpop.f32.mrf.mxu0
        %v4587 = vadd.f32 0.0, %v4586
        %4588 = vmatmul.f32.gmra.mxu0 %v4474
        %v4589 = vpop.f32.mrf.mxu0
        %v4590 = vadd.f32 0.0, %v4589
        %4591 = vmatmul.f32.gmra.mxu0 %v4477
        %v4592 = vpop.f32.mrf.mxu0
        %v4593 = vadd.f32 0.0, %v4592
        %4594 = vmatmul.f32.gmra.mxu0 %v4480
        %v4595 = vpop.f32.mrf.mxu0
        %v4596 = vadd.f32 0.0, %v4595
        %4597 = vmatmul.f32.gmra.mxu0 %v4483
        %v4598 = vpop.f32.mrf.mxu0
        %v4599 = vadd.f32 0.0, %v4598
        %4600 = vmatmul.f32.gmra.mxu0 %v4486
        %v4601 = vpop.f32.mrf.mxu0
        %v4602 = vadd.f32 0.0, %v4601
        %4603 = vmatmul.f32.gmra.mxu0 %v4489
        %v4604 = vpop.f32.mrf.mxu0
        %v4605 = vadd.f32 0.0, %v4604
        %4606 = vdwg.mxu0
        %v4607 = vld [vmem:[#allocation4] sm:$0xff]
        %v4608 = vld [vmem:[#allocation4 + $0x8] sm:$0xff]
        %v4609 = vld [vmem:[#allocation4 + $0x10] sm:$0xff]
        %v4610 = vld [vmem:[#allocation4 + $0x18] sm:$0xff]
        %v4611 = vld [vmem:[#allocation4 + $0x20] sm:$0xff]
        %v4612 = vld [vmem:[#allocation4 + $0x28] sm:$0xff]
        %v4613 = vld [vmem:[#allocation4 + $0x30] sm:$0xff]
        %v4614 = vld [vmem:[#allocation4 + $0x38] sm:$0xff]
        %v4615 = vld [vmem:[#allocation4 + $0x40] sm:$0xff]
        %v4616 = vld [vmem:[#allocation4 + $0x48] sm:$0xff]
        %v4617 = vld [vmem:[#allocation4 + $0x50] sm:$0xff]
        %v4618 = vld [vmem:[#allocation4 + $0x58] sm:$0xff]
        %v4619 = vld [vmem:[#allocation4 + $0x60] sm:$0xff]
        %v4620 = vld [vmem:[#allocation4 + $0x68] sm:$0xff]
        %v4621 = vld [vmem:[#allocation4 + $0x70] sm:$0xff]
        %v4622 = vld [vmem:[#allocation4 + $0x78] sm:$0xff]
        %v4623 = vld [vmem:[#allocation4 + $0x80] sm:$0xff]
        %v4624 = vld [vmem:[#allocation4 + $0x88] sm:$0xff]
        %v4625 = vld [vmem:[#allocation4 + $0x90] sm:$0xff]
        %v4626 = vld [vmem:[#allocation4 + $0x98] sm:$0xff]
        %v4627 = vld [vmem:[#allocation4 + $0xa0] sm:$0xff]
        %v4628 = vld [vmem:[#allocation4 + $0xa8] sm:$0xff]
        %v4629 = vld [vmem:[#allocation4 + $0xb0] sm:$0xff]
        %v4630 = vld [vmem:[#allocation4 + $0xb8] sm:$0xff]
        %v4631 = vld [vmem:[#allocation4 + $0xc0] sm:$0xff]
        %v4632 = vld [vmem:[#allocation4 + $0xc8] sm:$0xff]
        %v4633 = vld [vmem:[#allocation4 + $0xd0] sm:$0xff]
        %v4634 = vld [vmem:[#allocation4 + $0xd8] sm:$0xff]
        %v4635 = vld [vmem:[#allocation4 + $0xe0] sm:$0xff]
        %v4636 = vld [vmem:[#allocation4 + $0xe8] sm:$0xff]
        %v4637 = vld [vmem:[#allocation4 + $0xf0] sm:$0xff]
        %v4638 = vld [vmem:[#allocation4 + $0xf8] sm:$0xff]
        %v4639 = vadd.f32 %v4607, %v4512
        %v4640 = vadd.f32 %v4608, %v4515
        %v4641 = vadd.f32 %v4609, %v4518
        %v4642 = vadd.f32 %v4610, %v4521
        %v4643 = vadd.f32 %v4611, %v4524
        %v4644 = vadd.f32 %v4612, %v4527
        %v4645 = vadd.f32 %v4613, %v4530
        %v4646 = vadd.f32 %v4614, %v4533
        %v4647 = vadd.f32 %v4615, %v4536
        %v4648 = vadd.f32 %v4616, %v4539
        %v4649 = vadd.f32 %v4617, %v4542
        %v4650 = vadd.f32 %v4618, %v4545
        %v4651 = vadd.f32 %v4619, %v4548
        %v4652 = vadd.f32 %v4620, %v4551
        %v4653 = vadd.f32 %v4621, %v4554
        %v4654 = vadd.f32 %v4622, %v4557
        %v4655 = vadd.f32 %v4623, %v4560
        %v4656 = vadd.f32 %v4624, %v4563
        %v4657 = vadd.f32 %v4625, %v4566
        %v4658 = vadd.f32 %v4626, %v4569
        %v4659 = vadd.f32 %v4627, %v4572
        %v4660 = vadd.f32 %v4628, %v4575
        %v4661 = vadd.f32 %v4629, %v4578
        %v4662 = vadd.f32 %v4630, %v4581
        %v4663 = vadd.f32 %v4631, %v4584
        %v4664 = vadd.f32 %v4632, %v4587
        %v4665 = vadd.f32 %v4633, %v4590
        %v4666 = vadd.f32 %v4634, %v4593
        %v4667 = vadd.f32 %v4635, %v4596
        %v4668 = vadd.f32 %v4636, %v4599
        %v4669 = vadd.f32 %v4637, %v4602
        %v4670 = vadd.f32 %v4638, %v4605
        %4671 = vst.msk [vmem:[#allocation4] sm:$0xff] %vm709, %v4639
        %4672 = vst.msk [vmem:[#allocation4 + $0x8] sm:$0xff] %vm709, %v4640
        %4673 = vst.msk [vmem:[#allocation4 + $0x10] sm:$0xff] %vm709, %v4641
        %4674 = vst.msk [vmem:[#allocation4 + $0x18] sm:$0xff] %vm709, %v4642
        %4675 = vst.msk [vmem:[#allocation4 + $0x20] sm:$0xff] %vm709, %v4643
        %4676 = vst.msk [vmem:[#allocation4 + $0x28] sm:$0xff] %vm709, %v4644
        %4677 = vst.msk [vmem:[#allocation4 + $0x30] sm:$0xff] %vm709, %v4645
        %4678 = vst.msk [vmem:[#allocation4 + $0x38] sm:$0xff] %vm709, %v4646
        %4679 = vst.msk [vmem:[#allocation4 + $0x40] sm:$0xff] %vm709, %v4647
        %4680 = vst.msk [vmem:[#allocation4 + $0x48] sm:$0xff] %vm709, %v4648
        %4681 = vst.msk [vmem:[#allocation4 + $0x50] sm:$0xff] %vm709, %v4649
        %4682 = vst.msk [vmem:[#allocation4 + $0x58] sm:$0xff] %vm709, %v4650
        %4683 = vst.msk [vmem:[#allocation4 + $0x60] sm:$0xff] %vm709, %v4651
        %4684 = vst.msk [vmem:[#allocation4 + $0x68] sm:$0xff] %vm709, %v4652
        %4685 = vst.msk [vmem:[#allocation4 + $0x70] sm:$0xff] %vm709, %v4653
        %4686 = vst.msk [vmem:[#allocation4 + $0x78] sm:$0xff] %vm709, %v4654
        %4687 = vst.msk [vmem:[#allocation4 + $0x80] sm:$0xff] %vm709, %v4655
        %4688 = vst.msk [vmem:[#allocation4 + $0x88] sm:$0xff] %vm709, %v4656
        %4689 = vst.msk [vmem:[#allocation4 + $0x90] sm:$0xff] %vm709, %v4657
        %4690 = vst.msk [vmem:[#allocation4 + $0x98] sm:$0xff] %vm709, %v4658
        %4691 = vst.msk [vmem:[#allocation4 + $0xa0] sm:$0xff] %vm709, %v4659
        %4692 = vst.msk [vmem:[#allocation4 + $0xa8] sm:$0xff] %vm709, %v4660
        %4693 = vst.msk [vmem:[#allocation4 + $0xb0] sm:$0xff] %vm709, %v4661
        %4694 = vst.msk [vmem:[#allocation4 + $0xb8] sm:$0xff] %vm709, %v4662
        %4695 = vst.msk [vmem:[#allocation4 + $0xc0] sm:$0xff] %vm709, %v4663
        %4696 = vst.msk [vmem:[#allocation4 + $0xc8] sm:$0xff] %vm709, %v4664
        %4697 = vst.msk [vmem:[#allocation4 + $0xd0] sm:$0xff] %vm709, %v4665
        %4698 = vst.msk [vmem:[#allocation4 + $0xd8] sm:$0xff] %vm709, %v4666
        %4699 = vst.msk [vmem:[#allocation4 + $0xe0] sm:$0xff] %vm709, %v4667
        %4700 = vst.msk [vmem:[#allocation4 + $0xe8] sm:$0xff] %vm709, %v4668
        %4701 = vst.msk [vmem:[#allocation4 + $0xf0] sm:$0xff] %vm709, %v4669
        %4702 = vst.msk [vmem:[#allocation4 + $0xf8] sm:$0xff] %vm709, %v4670
        %v4703 = vld [vmem:[#allocation3 + $0x12] sm:$0xff]
        %v4704 = vld [vmem:[#allocation3 + $0x1a] sm:$0xff]
        %v4705 = vld [vmem:[#allocation3 + $0x22] sm:$0xff]
        %v4706 = vld [vmem:[#allocation3 + $0x2a] sm:$0xff]
        %v4707 = vld [vmem:[#allocation3 + $0x32] sm:$0xff]
        %v4708 = vld [vmem:[#allocation3 + $0x3a] sm:$0xff]
        %v4709 = vld [vmem:[#allocation3 + $0x42] sm:$0xff]
        %v4710 = vld [vmem:[#allocation3 + $0x4a] sm:$0xff]
        %v4711 = vld [vmem:[#allocation3 + $0x52] sm:$0xff]
        %v4712 = vld [vmem:[#allocation3 + $0x5a] sm:$0xff]
        %v4713 = vld [vmem:[#allocation3 + $0x62] sm:$0xff]
        %v4714 = vld [vmem:[#allocation3 + $0x6a] sm:$0xff]
        %v4715 = vld [vmem:[#allocation3 + $0x72] sm:$0xff]
        %v4716 = vld [vmem:[#allocation3 + $0x7a] sm:$0xff]
        %v4717 = vld [vmem:[#allocation3 + $0x82] sm:$0xff]
        %v4718 = vld [vmem:[#allocation3 + $0x8a] sm:$0xff]
        %v4719 = vld [vmem:[#allocation3 + $0x92] sm:$0xff]
        %v4720 = vld [vmem:[#allocation3 + $0x9a] sm:$0xff]
        %v4721 = vld [vmem:[#allocation3 + $0xa2] sm:$0xff]
        %v4722 = vld [vmem:[#allocation3 + $0xaa] sm:$0xff]
        %v4723 = vld [vmem:[#allocation3 + $0xb2] sm:$0xff]
        %v4724 = vld [vmem:[#allocation3 + $0xba] sm:$0xff]
        %v4725 = vld [vmem:[#allocation3 + $0xc2] sm:$0xff]
        %v4726 = vld [vmem:[#allocation3 + $0xca] sm:$0xff]
        %v4727 = vld [vmem:[#allocation3 + $0xd2] sm:$0xff]
        %v4728 = vld [vmem:[#allocation3 + $0xda] sm:$0xff]
        %v4729 = vld [vmem:[#allocation3 + $0xe2] sm:$0xff]
        %v4730 = vld [vmem:[#allocation3 + $0xea] sm:$0xff]
        %v4731 = vld [vmem:[#allocation3 + $0xf2] sm:$0xff]
        %v4732 = vld [vmem:[#allocation3 + $0xfa] sm:$0xff]
        %v4733 = vld [vmem:[#allocation3 + $0x102] sm:$0xff]
        %v4734 = vld [vmem:[#allocation3 + $0x10a] sm:$0xff]
        %v4735 = vsel %vm2181, %v4703, 0.0
        %v4736 = vsel %vm2182, %v4704, 0.0
        %v4737 = vsel %vm2183, %v4705, 0.0
        %v4738 = vsel %vm2184, %v4706, 0.0
        %v4739 = vsel %vm2185, %v4707, 0.0
        %v4740 = vsel %vm2186, %v4708, 0.0
        %v4741 = vsel %vm2187, %v4709, 0.0
        %v4742 = vsel %vm2188, %v4710, 0.0
        %v4743 = vsel %vm2189, %v4711, 0.0
        %v4744 = vsel %vm2190, %v4712, 0.0
        %v4745 = vsel %vm2191, %v4713, 0.0
        %v4746 = vsel %vm2192, %v4714, 0.0
        %v4747 = vsel %vm2193, %v4715, 0.0
        %v4748 = vsel %vm2194, %v4716, 0.0
        %v4749 = vsel %vm2195, %v4717, 0.0
        %v4750 = vsel %vm2196, %v4718, 0.0
        %v4751 = vsel %vm2197, %v4719, 0.0
        %v4752 = vsel %vm2198, %v4720, 0.0
        %v4753 = vsel %vm2199, %v4721, 0.0
        %v4754 = vsel %vm2200, %v4722, 0.0
        %v4755 = vsel %vm2201, %v4723, 0.0
        %v4756 = vsel %vm2202, %v4724, 0.0
        %v4757 = vsel %vm2203, %v4725, 0.0
        %v4758 = vsel %vm2204, %v4726, 0.0
        %v4759 = vsel %vm2205, %v4727, 0.0
        %v4760 = vsel %vm2206, %v4728, 0.0
        %v4761 = vsel %vm2207, %v4729, 0.0
        %v4762 = vsel %vm2208, %v4730, 0.0
        %v4763 = vsel %vm2209, %v4731, 0.0
        %v4764 = vsel %vm2210, %v4732, 0.0
        %v4765 = vsel %vm2211, %v4733, 0.0
        %v4766 = vsel %vm2212, %v4734, 0.0
        %s4767 = scalar_lea.vmem %s5, 28
        %v4768 = vld [vmem:[%s4767] sm:$0xf]
        %v4770 = vsel %vm709, %v4735, 0
        %v4773 = vsel %vm709, %v4736, 0
        %v4776 = vsel %vm709, %v4737, 0
        %v4779 = vsel %vm709, %v4738, 0
        %v4782 = vsel %vm709, %v4739, 0
        %v4785 = vsel %vm709, %v4740, 0
        %v4788 = vsel %vm709, %v4741, 0
        %v4791 = vsel %vm709, %v4742, 0
        %v4794 = vsel %vm709, %v4743, 0
        %v4797 = vsel %vm709, %v4744, 0
        %v4800 = vsel %vm709, %v4745, 0
        %v4803 = vsel %vm709, %v4746, 0
        %v4806 = vsel %vm709, %v4747, 0
        %v4809 = vsel %vm709, %v4748, 0
        %v4812 = vsel %vm709, %v4749, 0
        %v4815 = vsel %vm709, %v4750, 0
        %v4818 = vsel %vm709, %v4751, 0
        %v4821 = vsel %vm709, %v4752, 0
        %v4824 = vsel %vm709, %v4753, 0
        %v4827 = vsel %vm709, %v4754, 0
        %v4830 = vsel %vm709, %v4755, 0
        %v4833 = vsel %vm709, %v4756, 0
        %v4836 = vsel %vm709, %v4757, 0
        %v4839 = vsel %vm709, %v4758, 0
        %v4842 = vsel %vm709, %v4759, 0
        %v4845 = vsel %vm709, %v4760, 0
        %v4848 = vsel %vm709, %v4761, 0
        %v4851 = vsel %vm709, %v4762, 0
        %v4854 = vsel %vm709, %v4763, 0
        %v4857 = vsel %vm709, %v4764, 0
        %v4860 = vsel %vm709, %v4765, 0
        %v4863 = vsel %vm709, %v4766, 0
        %v4866 = vsel %vm2406, %v4768, 0
        %4868 = vmatpush.msra.mxu0 0.0
        %4869 = vmatpush.msra.mxu0 0.0
        %4870 = vmatpush.msra.mxu0 0.0
        %4871 = vmatpush.msra.mxu0 0.0
        %4872 = vmatpush.msra.mxu0 0.0
        %4873 = vmatpush.msra.mxu0 0.0
        %4874 = vmatpush.msra.mxu0 0.0
        %4875 = vmatpush.msra.mxu0 0.0
        %4876 = vmatpush.msra.mxu0 0.0
        %4877 = vmatpush.msra.mxu0 0.0
        %4878 = vmatpush.msra.mxu0 0.0
        %4879 = vmatpush.msra.mxu0 0.0
        %4880 = vmatpush.msra.mxu0 0.0
        %4881 = vmatpush.msra.mxu0 0.0
        %4882 = vmatpush.msra.mxu0 0.0
        %4883 = vmatpush.msra.mxu0 %v4866
        %4884 = vmatmul.f32.gmra.mxu0 %v4770
        %v4885 = vpop.f32.mrf.mxu0
        %v4886 = vadd.f32 0.0, %v4885
        %4887 = vmatmul.f32.gmra.mxu0 %v4773
        %v4888 = vpop.f32.mrf.mxu0
        %v4889 = vadd.f32 0.0, %v4888
        %4890 = vmatmul.f32.gmra.mxu0 %v4776
        %v4891 = vpop.f32.mrf.mxu0
        %v4892 = vadd.f32 0.0, %v4891
        %4893 = vmatmul.f32.gmra.mxu0 %v4779
        %v4894 = vpop.f32.mrf.mxu0
        %v4895 = vadd.f32 0.0, %v4894
        %4896 = vmatmul.f32.gmra.mxu0 %v4782
        %v4897 = vpop.f32.mrf.mxu0
        %v4898 = vadd.f32 0.0, %v4897
        %4899 = vmatmul.f32.gmra.mxu0 %v4785
        %v4900 = vpop.f32.mrf.mxu0
        %v4901 = vadd.f32 0.0, %v4900
        %4902 = vmatmul.f32.gmra.mxu0 %v4788
        %v4903 = vpop.f32.mrf.mxu0
        %v4904 = vadd.f32 0.0, %v4903
        %4905 = vmatmul.f32.gmra.mxu0 %v4791
        %v4906 = vpop.f32.mrf.mxu0
        %v4907 = vadd.f32 0.0, %v4906
        %4908 = vmatmul.f32.gmra.mxu0 %v4794
        %v4909 = vpop.f32.mrf.mxu0
        %v4910 = vadd.f32 0.0, %v4909
        %4911 = vmatmul.f32.gmra.mxu0 %v4797
        %v4912 = vpop.f32.mrf.mxu0
        %v4913 = vadd.f32 0.0, %v4912
        %4914 = vmatmul.f32.gmra.mxu0 %v4800
        %v4915 = vpop.f32.mrf.mxu0
        %v4916 = vadd.f32 0.0, %v4915
        %4917 = vmatmul.f32.gmra.mxu0 %v4803
        %v4918 = vpop.f32.mrf.mxu0
        %v4919 = vadd.f32 0.0, %v4918
        %4920 = vmatmul.f32.gmra.mxu0 %v4806
        %v4921 = vpop.f32.mrf.mxu0
        %v4922 = vadd.f32 0.0, %v4921
        %4923 = vmatmul.f32.gmra.mxu0 %v4809
        %v4924 = vpop.f32.mrf.mxu0
        %v4925 = vadd.f32 0.0, %v4924
        %4926 = vmatmul.f32.gmra.mxu0 %v4812
        %v4927 = vpop.f32.mrf.mxu0
        %v4928 = vadd.f32 0.0, %v4927
        %4929 = vmatmul.f32.gmra.mxu0 %v4815
        %v4930 = vpop.f32.mrf.mxu0
        %v4931 = vadd.f32 0.0, %v4930
        %4932 = vmatmul.f32.gmra.mxu0 %v4818
        %v4933 = vpop.f32.mrf.mxu0
        %v4934 = vadd.f32 0.0, %v4933
        %4935 = vmatmul.f32.gmra.mxu0 %v4821
        %v4936 = vpop.f32.mrf.mxu0
        %v4937 = vadd.f32 0.0, %v4936
        %4938 = vmatmul.f32.gmra.mxu0 %v4824
        %v4939 = vpop.f32.mrf.mxu0
        %v4940 = vadd.f32 0.0, %v4939
        %4941 = vmatmul.f32.gmra.mxu0 %v4827
        %v4942 = vpop.f32.mrf.mxu0
        %v4943 = vadd.f32 0.0, %v4942
        %4944 = vmatmul.f32.gmra.mxu0 %v4830
        %v4945 = vpop.f32.mrf.mxu0
        %v4946 = vadd.f32 0.0, %v4945
        %4947 = vmatmul.f32.gmra.mxu0 %v4833
        %v4948 = vpop.f32.mrf.mxu0
        %v4949 = vadd.f32 0.0, %v4948
        %4950 = vmatmul.f32.gmra.mxu0 %v4836
        %v4951 = vpop.f32.mrf.mxu0
        %v4952 = vadd.f32 0.0, %v4951
        %4953 = vmatmul.f32.gmra.mxu0 %v4839
        %v4954 = vpop.f32.mrf.mxu0
        %v4955 = vadd.f32 0.0, %v4954
        %4956 = vmatmul.f32.gmra.mxu0 %v4842
        %v4957 = vpop.f32.mrf.mxu0
        %v4958 = vadd.f32 0.0, %v4957
        %4959 = vmatmul.f32.gmra.mxu0 %v4845
        %v4960 = vpop.f32.mrf.mxu0
        %v4961 = vadd.f32 0.0, %v4960
        %4962 = vmatmul.f32.gmra.mxu0 %v4848
        %v4963 = vpop.f32.mrf.mxu0
        %v4964 = vadd.f32 0.0, %v4963
        %4965 = vmatmul.f32.gmra.mxu0 %v4851
        %v4966 = vpop.f32.mrf.mxu0
        %v4967 = vadd.f32 0.0, %v4966
        %4968 = vmatmul.f32.gmra.mxu0 %v4854
        %v4969 = vpop.f32.mrf.mxu0
        %v4970 = vadd.f32 0.0, %v4969
        %4971 = vmatmul.f32.gmra.mxu0 %v4857
        %v4972 = vpop.f32.mrf.mxu0
        %v4973 = vadd.f32 0.0, %v4972
        %4974 = vmatmul.f32.gmra.mxu0 %v4860
        %v4975 = vpop.f32.mrf.mxu0
        %v4976 = vadd.f32 0.0, %v4975
        %4977 = vmatmul.f32.gmra.mxu0 %v4863
        %v4978 = vpop.f32.mrf.mxu0
        %v4979 = vadd.f32 0.0, %v4978
        %4980 = vdwg.mxu0
        %v4981 = vld [vmem:[#allocation4] sm:$0xff]
        %v4982 = vld [vmem:[#allocation4 + $0x8] sm:$0xff]
        %v4983 = vld [vmem:[#allocation4 + $0x10] sm:$0xff]
        %v4984 = vld [vmem:[#allocation4 + $0x18] sm:$0xff]
        %v4985 = vld [vmem:[#allocation4 + $0x20] sm:$0xff]
        %v4986 = vld [vmem:[#allocation4 + $0x28] sm:$0xff]
        %v4987 = vld [vmem:[#allocation4 + $0x30] sm:$0xff]
        %v4988 = vld [vmem:[#allocation4 + $0x38] sm:$0xff]
        %v4989 = vld [vmem:[#allocation4 + $0x40] sm:$0xff]
        %v4990 = vld [vmem:[#allocation4 + $0x48] sm:$0xff]
        %v4991 = vld [vmem:[#allocation4 + $0x50] sm:$0xff]
        %v4992 = vld [vmem:[#allocation4 + $0x58] sm:$0xff]
        %v4993 = vld [vmem:[#allocation4 + $0x60] sm:$0xff]
        %v4994 = vld [vmem:[#allocation4 + $0x68] sm:$0xff]
        %v4995 = vld [vmem:[#allocation4 + $0x70] sm:$0xff]
        %v4996 = vld [vmem:[#allocation4 + $0x78] sm:$0xff]
        %v4997 = vld [vmem:[#allocation4 + $0x80] sm:$0xff]
        %v4998 = vld [vmem:[#allocation4 + $0x88] sm:$0xff]
        %v4999 = vld [vmem:[#allocation4 + $0x90] sm:$0xff]
        %v5000 = vld [vmem:[#allocation4 + $0x98] sm:$0xff]
        %v5001 = vld [vmem:[#allocation4 + $0xa0] sm:$0xff]
        %v5002 = vld [vmem:[#allocation4 + $0xa8] sm:$0xff]
        %v5003 = vld [vmem:[#allocation4 + $0xb0] sm:$0xff]
        %v5004 = vld [vmem:[#allocation4 + $0xb8] sm:$0xff]
        %v5005 = vld [vmem:[#allocation4 + $0xc0] sm:$0xff]
        %v5006 = vld [vmem:[#allocation4 + $0xc8] sm:$0xff]
        %v5007 = vld [vmem:[#allocation4 + $0xd0] sm:$0xff]
        %v5008 = vld [vmem:[#allocation4 + $0xd8] sm:$0xff]
        %v5009 = vld [vmem:[#allocation4 + $0xe0] sm:$0xff]
        %v5010 = vld [vmem:[#allocation4 + $0xe8] sm:$0xff]
        %v5011 = vld [vmem:[#allocation4 + $0xf0] sm:$0xff]
        %v5012 = vld [vmem:[#allocation4 + $0xf8] sm:$0xff]
        %v5013 = vadd.f32 %v4981, %v4886
        %v5014 = vadd.f32 %v4982, %v4889
        %v5015 = vadd.f32 %v4983, %v4892
        %v5016 = vadd.f32 %v4984, %v4895
        %v5017 = vadd.f32 %v4985, %v4898
        %v5018 = vadd.f32 %v4986, %v4901
        %v5019 = vadd.f32 %v4987, %v4904
        %v5020 = vadd.f32 %v4988, %v4907
        %v5021 = vadd.f32 %v4989, %v4910
        %v5022 = vadd.f32 %v4990, %v4913
        %v5023 = vadd.f32 %v4991, %v4916
        %v5024 = vadd.f32 %v4992, %v4919
        %v5025 = vadd.f32 %v4993, %v4922
        %v5026 = vadd.f32 %v4994, %v4925
        %v5027 = vadd.f32 %v4995, %v4928
        %v5028 = vadd.f32 %v4996, %v4931
        %v5029 = vadd.f32 %v4997, %v4934
        %v5030 = vadd.f32 %v4998, %v4937
        %v5031 = vadd.f32 %v4999, %v4940
        %v5032 = vadd.f32 %v5000, %v4943
        %v5033 = vadd.f32 %v5001, %v4946
        %v5034 = vadd.f32 %v5002, %v4949
        %v5035 = vadd.f32 %v5003, %v4952
        %v5036 = vadd.f32 %v5004, %v4955
        %v5037 = vadd.f32 %v5005, %v4958
        %v5038 = vadd.f32 %v5006, %v4961
        %v5039 = vadd.f32 %v5007, %v4964
        %v5040 = vadd.f32 %v5008, %v4967
        %v5041 = vadd.f32 %v5009, %v4970
        %v5042 = vadd.f32 %v5010, %v4973
        %v5043 = vadd.f32 %v5011, %v4976
        %v5044 = vadd.f32 %v5012, %v4979
        %5045 = vst.msk [vmem:[#allocation4] sm:$0xff] %vm709, %v5013
        %5046 = vst.msk [vmem:[#allocation4 + $0x8] sm:$0xff] %vm709, %v5014
        %5047 = vst.msk [vmem:[#allocation4 + $0x10] sm:$0xff] %vm709, %v5015
        %5048 = vst.msk [vmem:[#allocation4 + $0x18] sm:$0xff] %vm709, %v5016
        %5049 = vst.msk [vmem:[#allocation4 + $0x20] sm:$0xff] %vm709, %v5017
        %5050 = vst.msk [vmem:[#allocation4 + $0x28] sm:$0xff] %vm709, %v5018
        %5051 = vst.msk [vmem:[#allocation4 + $0x30] sm:$0xff] %vm709, %v5019
        %5052 = vst.msk [vmem:[#allocation4 + $0x38] sm:$0xff] %vm709, %v5020
        %5053 = vst.msk [vmem:[#allocation4 + $0x40] sm:$0xff] %vm709, %v5021
        %5054 = vst.msk [vmem:[#allocation4 + $0x48] sm:$0xff] %vm709, %v5022
        %5055 = vst.msk [vmem:[#allocation4 + $0x50] sm:$0xff] %vm709, %v5023
        %5056 = vst.msk [vmem:[#allocation4 + $0x58] sm:$0xff] %vm709, %v5024
        %5057 = vst.msk [vmem:[#allocation4 + $0x60] sm:$0xff] %vm709, %v5025
        %5058 = vst.msk [vmem:[#allocation4 + $0x68] sm:$0xff] %vm709, %v5026
        %5059 = vst.msk [vmem:[#allocation4 + $0x70] sm:$0xff] %vm709, %v5027
        %5060 = vst.msk [vmem:[#allocation4 + $0x78] sm:$0xff] %vm709, %v5028
        %5061 = vst.msk [vmem:[#allocation4 + $0x80] sm:$0xff] %vm709, %v5029
        %5062 = vst.msk [vmem:[#allocation4 + $0x88] sm:$0xff] %vm709, %v5030
        %5063 = vst.msk [vmem:[#allocation4 + $0x90] sm:$0xff] %vm709, %v5031
        %5064 = vst.msk [vmem:[#allocation4 + $0x98] sm:$0xff] %vm709, %v5032
        %5065 = vst.msk [vmem:[#allocation4 + $0xa0] sm:$0xff] %vm709, %v5033
        %5066 = vst.msk [vmem:[#allocation4 + $0xa8] sm:$0xff] %vm709, %v5034
        %5067 = vst.msk [vmem:[#allocation4 + $0xb0] sm:$0xff] %vm709, %v5035
        %5068 = vst.msk [vmem:[#allocation4 + $0xb8] sm:$0xff] %vm709, %v5036
        %5069 = vst.msk [vmem:[#allocation4 + $0xc0] sm:$0xff] %vm709, %v5037
        %5070 = vst.msk [vmem:[#allocation4 + $0xc8] sm:$0xff] %vm709, %v5038
        %5071 = vst.msk [vmem:[#allocation4 + $0xd0] sm:$0xff] %vm709, %v5039
        %5072 = vst.msk [vmem:[#allocation4 + $0xd8] sm:$0xff] %vm709, %v5040
        %5073 = vst.msk [vmem:[#allocation4 + $0xe0] sm:$0xff] %vm709, %v5041
        %5074 = vst.msk [vmem:[#allocation4 + $0xe8] sm:$0xff] %vm709, %v5042
        %5075 = vst.msk [vmem:[#allocation4 + $0xf0] sm:$0xff] %vm709, %v5043
        %5076 = vst.msk [vmem:[#allocation4 + $0xf8] sm:$0xff] %vm709, %v5044
        %v5077 = vld [vmem:[#allocation3 + $0x22] sm:$0xff]
        %v5078 = vld [vmem:[#allocation3 + $0x2a] sm:$0xff]
        %v5079 = vld [vmem:[#allocation3 + $0x32] sm:$0xff]
        %v5080 = vld [vmem:[#allocation3 + $0x3a] sm:$0xff]
        %v5081 = vld [vmem:[#allocation3 + $0x42] sm:$0xff]
        %v5082 = vld [vmem:[#allocation3 + $0x4a] sm:$0xff]
        %v5083 = vld [vmem:[#allocation3 + $0x52] sm:$0xff]
        %v5084 = vld [vmem:[#allocation3 + $0x5a] sm:$0xff]
        %v5085 = vld [vmem:[#allocation3 + $0x62] sm:$0xff]
        %v5086 = vld [vmem:[#allocation3 + $0x6a] sm:$0xff]
        %v5087 = vld [vmem:[#allocation3 + $0x72] sm:$0xff]
        %v5088 = vld [vmem:[#allocation3 + $0x7a] sm:$0xff]
        %v5089 = vld [vmem:[#allocation3 + $0x82] sm:$0xff]
        %v5090 = vld [vmem:[#allocation3 + $0x8a] sm:$0xff]
        %v5091 = vld [vmem:[#allocation3 + $0x92] sm:$0xff]
        %v5092 = vld [vmem:[#allocation3 + $0x9a] sm:$0xff]
        %v5093 = vld [vmem:[#allocation3 + $0xa2] sm:$0xff]
        %v5094 = vld [vmem:[#allocation3 + $0xaa] sm:$0xff]
        %v5095 = vld [vmem:[#allocation3 + $0xb2] sm:$0xff]
        %v5096 = vld [vmem:[#allocation3 + $0xba] sm:$0xff]
        %v5097 = vld [vmem:[#allocation3 + $0xc2] sm:$0xff]
        %v5098 = vld [vmem:[#allocation3 + $0xca] sm:$0xff]
        %v5099 = vld [vmem:[#allocation3 + $0xd2] sm:$0xff]
        %v5100 = vld [vmem:[#allocation3 + $0xda] sm:$0xff]
        %v5101 = vld [vmem:[#allocation3 + $0xe2] sm:$0xff]
        %v5102 = vld [vmem:[#allocation3 + $0xea] sm:$0xff]
        %v5103 = vld [vmem:[#allocation3 + $0xf2] sm:$0xff]
        %v5104 = vld [vmem:[#allocation3 + $0xfa] sm:$0xff]
        %v5105 = vld [vmem:[#allocation3 + $0x102] sm:$0xff]
        %v5106 = vld [vmem:[#allocation3 + $0x10a] sm:$0xff]
        %v5107 = vld [vmem:[#allocation3 + $0x112] sm:$0xff]
        %v5108 = vld [vmem:[#allocation3 + $0x11a] sm:$0xff]
        %v5109 = vsel %vm2181, %v5077, 0.0
        %v5110 = vsel %vm2182, %v5078, 0.0
        %v5111 = vsel %vm2183, %v5079, 0.0
        %v5112 = vsel %vm2184, %v5080, 0.0
        %v5113 = vsel %vm2185, %v5081, 0.0
        %v5114 = vsel %vm2186, %v5082, 0.0
        %v5115 = vsel %vm2187, %v5083, 0.0
        %v5116 = vsel %vm2188, %v5084, 0.0
        %v5117 = vsel %vm2189, %v5085, 0.0
        %v5118 = vsel %vm2190, %v5086, 0.0
        %v5119 = vsel %vm2191, %v5087, 0.0
        %v5120 = vsel %vm2192, %v5088, 0.0
        %v5121 = vsel %vm2193, %v5089, 0.0
        %v5122 = vsel %vm2194, %v5090, 0.0
        %v5123 = vsel %vm2195, %v5091, 0.0
        %v5124 = vsel %vm2196, %v5092, 0.0
        %v5125 = vsel %vm2197, %v5093, 0.0
        %v5126 = vsel %vm2198, %v5094, 0.0
        %v5127 = vsel %vm2199, %v5095, 0.0
        %v5128 = vsel %vm2200, %v5096, 0.0
        %v5129 = vsel %vm2201, %v5097, 0.0
        %v5130 = vsel %vm2202, %v5098, 0.0
        %v5131 = vsel %vm2203, %v5099, 0.0
        %v5132 = vsel %vm2204, %v5100, 0.0
        %v5133 = vsel %vm2205, %v5101, 0.0
        %v5134 = vsel %vm2206, %v5102, 0.0
        %v5135 = vsel %vm2207, %v5103, 0.0
        %v5136 = vsel %vm2208, %v5104, 0.0
        %v5137 = vsel %vm2209, %v5105, 0.0
        %v5138 = vsel %vm2210, %v5106, 0.0
        %v5139 = vsel %vm2211, %v5107, 0.0
        %v5140 = vsel %vm2212, %v5108, 0.0
        %s5141 = scalar_lea.vmem %s5, 32
        %v5142 = vld [vmem:[%s5141] sm:$0xf]
        %v5144 = vsel %vm709, %v5109, 0
        %v5147 = vsel %vm709, %v5110, 0
        %v5150 = vsel %vm709, %v5111, 0
        %v5153 = vsel %vm709, %v5112, 0
        %v5156 = vsel %vm709, %v5113, 0
        %v5159 = vsel %vm709, %v5114, 0
        %v5162 = vsel %vm709, %v5115, 0
        %v5165 = vsel %vm709, %v5116, 0
        %v5168 = vsel %vm709, %v5117, 0
        %v5171 = vsel %vm709, %v5118, 0
        %v5174 = vsel %vm709, %v5119, 0
        %v5177 = vsel %vm709, %v5120, 0
        %v5180 = vsel %vm709, %v5121, 0
        %v5183 = vsel %vm709, %v5122, 0
        %v5186 = vsel %vm709, %v5123, 0
        %v5189 = vsel %vm709, %v5124, 0
        %v5192 = vsel %vm709, %v5125, 0
        %v5195 = vsel %vm709, %v5126, 0
        %v5198 = vsel %vm709, %v5127, 0
        %v5201 = vsel %vm709, %v5128, 0
        %v5204 = vsel %vm709, %v5129, 0
        %v5207 = vsel %vm709, %v5130, 0
        %v5210 = vsel %vm709, %v5131, 0
        %v5213 = vsel %vm709, %v5132, 0
        %v5216 = vsel %vm709, %v5133, 0
        %v5219 = vsel %vm709, %v5134, 0
        %v5222 = vsel %vm709, %v5135, 0
        %v5225 = vsel %vm709, %v5136, 0
        %v5228 = vsel %vm709, %v5137, 0
        %v5231 = vsel %vm709, %v5138, 0
        %v5234 = vsel %vm709, %v5139, 0
        %v5237 = vsel %vm709, %v5140, 0
        %v5240 = vsel %vm2406, %v5142, 0
        %5242 = vmatpush.msra.mxu0 0.0
        %5243 = vmatpush.msra.mxu0 0.0
        %5244 = vmatpush.msra.mxu0 0.0
        %5245 = vmatpush.msra.mxu0 0.0
        %5246 = vmatpush.msra.mxu0 0.0
        %5247 = vmatpush.msra.mxu0 0.0
        %5248 = vmatpush.msra.mxu0 0.0
        %5249 = vmatpush.msra.mxu0 0.0
        %5250 = vmatpush.msra.mxu0 0.0
        %5251 = vmatpush.msra.mxu0 0.0
        %5252 = vmatpush.msra.mxu0 0.0
        %5253 = vmatpush.msra.mxu0 0.0
        %5254 = vmatpush.msra.mxu0 0.0
        %5255 = vmatpush.msra.mxu0 0.0
        %5256 = vmatpush.msra.mxu0 0.0
        %5257 = vmatpush.msra.mxu0 %v5240
        %5258 = vmatmul.f32.gmra.mxu0 %v5144
        %v5259 = vpop.f32.mrf.mxu0
        %v5260 = vadd.f32 0.0, %v5259
        %5261 = vmatmul.f32.gmra.mxu0 %v5147
        %v5262 = vpop.f32.mrf.mxu0
        %v5263 = vadd.f32 0.0, %v5262
        %5264 = vmatmul.f32.gmra.mxu0 %v5150
        %v5265 = vpop.f32.mrf.mxu0
        %v5266 = vadd.f32 0.0, %v5265
        %5267 = vmatmul.f32.gmra.mxu0 %v5153
        %v5268 = vpop.f32.mrf.mxu0
        %v5269 = vadd.f32 0.0, %v5268
        %5270 = vmatmul.f32.gmra.mxu0 %v5156
        %v5271 = vpop.f32.mrf.mxu0
        %v5272 = vadd.f32 0.0, %v5271
        %5273 = vmatmul.f32.gmra.mxu0 %v5159
        %v5274 = vpop.f32.mrf.mxu0
        %v5275 = vadd.f32 0.0, %v5274
        %5276 = vmatmul.f32.gmra.mxu0 %v5162
        %v5277 = vpop.f32.mrf.mxu0
        %v5278 = vadd.f32 0.0, %v5277
        %5279 = vmatmul.f32.gmra.mxu0 %v5165
        %v5280 = vpop.f32.mrf.mxu0
        %v5281 = vadd.f32 0.0, %v5280
        %5282 = vmatmul.f32.gmra.mxu0 %v5168
        %v5283 = vpop.f32.mrf.mxu0
        %v5284 = vadd.f32 0.0, %v5283
        %5285 = vmatmul.f32.gmra.mxu0 %v5171
        %v5286 = vpop.f32.mrf.mxu0
        %v5287 = vadd.f32 0.0, %v5286
        %5288 = vmatmul.f32.gmra.mxu0 %v5174
        %v5289 = vpop.f32.mrf.mxu0
        %v5290 = vadd.f32 0.0, %v5289
        %5291 = vmatmul.f32.gmra.mxu0 %v5177
        %v5292 = vpop.f32.mrf.mxu0
        %v5293 = vadd.f32 0.0, %v5292
        %5294 = vmatmul.f32.gmra.mxu0 %v5180
        %v5295 = vpop.f32.mrf.mxu0
        %v5296 = vadd.f32 0.0, %v5295
        %5297 = vmatmul.f32.gmra.mxu0 %v5183
        %v5298 = vpop.f32.mrf.mxu0
        %v5299 = vadd.f32 0.0, %v5298
        %5300 = vmatmul.f32.gmra.mxu0 %v5186
        %v5301 = vpop.f32.mrf.mxu0
        %v5302 = vadd.f32 0.0, %v5301
        %5303 = vmatmul.f32.gmra.mxu0 %v5189
        %v5304 = vpop.f32.mrf.mxu0
        %v5305 = vadd.f32 0.0, %v5304
        %5306 = vmatmul.f32.gmra.mxu0 %v5192
        %v5307 = vpop.f32.mrf.mxu0
        %v5308 = vadd.f32 0.0, %v5307
        %5309 = vmatmul.f32.gmra.mxu0 %v5195
        %v5310 = vpop.f32.mrf.mxu0
        %v5311 = vadd.f32 0.0, %v5310
        %5312 = vmatmul.f32.gmra.mxu0 %v5198
        %v5313 = vpop.f32.mrf.mxu0
        %v5314 = vadd.f32 0.0, %v5313
        %5315 = vmatmul.f32.gmra.mxu0 %v5201
        %v5316 = vpop.f32.mrf.mxu0
        %v5317 = vadd.f32 0.0, %v5316
        %5318 = vmatmul.f32.gmra.mxu0 %v5204
        %v5319 = vpop.f32.mrf.mxu0
        %v5320 = vadd.f32 0.0, %v5319
        %5321 = vmatmul.f32.gmra.mxu0 %v5207
        %v5322 = vpop.f32.mrf.mxu0
        %v5323 = vadd.f32 0.0, %v5322
        %5324 = vmatmul.f32.gmra.mxu0 %v5210
        %v5325 = vpop.f32.mrf.mxu0
        %v5326 = vadd.f32 0.0, %v5325
        %5327 = vmatmul.f32.gmra.mxu0 %v5213
        %v5328 = vpop.f32.mrf.mxu0
        %v5329 = vadd.f32 0.0, %v5328
        %5330 = vmatmul.f32.gmra.mxu0 %v5216
        %v5331 = vpop.f32.mrf.mxu0
        %v5332 = vadd.f32 0.0, %v5331
        %5333 = vmatmul.f32.gmra.mxu0 %v5219
        %v5334 = vpop.f32.mrf.mxu0
        %v5335 = vadd.f32 0.0, %v5334
        %5336 = vmatmul.f32.gmra.mxu0 %v5222
        %v5337 = vpop.f32.mrf.mxu0
        %v5338 = vadd.f32 0.0, %v5337
        %5339 = vmatmul.f32.gmra.mxu0 %v5225
        %v5340 = vpop.f32.mrf.mxu0
        %v5341 = vadd.f32 0.0, %v5340
        %5342 = vmatmul.f32.gmra.mxu0 %v5228
        %v5343 = vpop.f32.mrf.mxu0
        %v5344 = vadd.f32 0.0, %v5343
        %5345 = vmatmul.f32.gmra.mxu0 %v5231
        %v5346 = vpop.f32.mrf.mxu0
        %v5347 = vadd.f32 0.0, %v5346
        %5348 = vmatmul.f32.gmra.mxu0 %v5234
        %v5349 = vpop.f32.mrf.mxu0
        %v5350 = vadd.f32 0.0, %v5349
        %5351 = vmatmul.f32.gmra.mxu0 %v5237
        %v5352 = vpop.f32.mrf.mxu0
        %v5353 = vadd.f32 0.0, %v5352
        %5354 = vdwg.mxu0
        %v5355 = vld [vmem:[#allocation4] sm:$0xff]
        %v5356 = vld [vmem:[#allocation4 + $0x8] sm:$0xff]
        %v5357 = vld [vmem:[#allocation4 + $0x10] sm:$0xff]
        %v5358 = vld [vmem:[#allocation4 + $0x18] sm:$0xff]
        %v5359 = vld [vmem:[#allocation4 + $0x20] sm:$0xff]
        %v5360 = vld [vmem:[#allocation4 + $0x28] sm:$0xff]
        %v5361 = vld [vmem:[#allocation4 + $0x30] sm:$0xff]
        %v5362 = vld [vmem:[#allocation4 + $0x38] sm:$0xff]
        %v5363 = vld [vmem:[#allocation4 + $0x40] sm:$0xff]
        %v5364 = vld [vmem:[#allocation4 + $0x48] sm:$0xff]
        %v5365 = vld [vmem:[#allocation4 + $0x50] sm:$0xff]
        %v5366 = vld [vmem:[#allocation4 + $0x58] sm:$0xff]
        %v5367 = vld [vmem:[#allocation4 + $0x60] sm:$0xff]
        %v5368 = vld [vmem:[#allocation4 + $0x68] sm:$0xff]
        %v5369 = vld [vmem:[#allocation4 + $0x70] sm:$0xff]
        %v5370 = vld [vmem:[#allocation4 + $0x78] sm:$0xff]
        %v5371 = vld [vmem:[#allocation4 + $0x80] sm:$0xff]
        %v5372 = vld [vmem:[#allocation4 + $0x88] sm:$0xff]
        %v5373 = vld [vmem:[#allocation4 + $0x90] sm:$0xff]
        %v5374 = vld [vmem:[#allocation4 + $0x98] sm:$0xff]
        %v5375 = vld [vmem:[#allocation4 + $0xa0] sm:$0xff]
        %v5376 = vld [vmem:[#allocation4 + $0xa8] sm:$0xff]
        %v5377 = vld [vmem:[#allocation4 + $0xb0] sm:$0xff]
        %v5378 = vld [vmem:[#allocation4 + $0xb8] sm:$0xff]
        %v5379 = vld [vmem:[#allocation4 + $0xc0] sm:$0xff]
        %v5380 = vld [vmem:[#allocation4 + $0xc8] sm:$0xff]
        %v5381 = vld [vmem:[#allocation4 + $0xd0] sm:$0xff]
        %v5382 = vld [vmem:[#allocation4 + $0xd8] sm:$0xff]
        %v5383 = vld [vmem:[#allocation4 + $0xe0] sm:$0xff]
        %v5384 = vld [vmem:[#allocation4 + $0xe8] sm:$0xff]
        %v5385 = vld [vmem:[#allocation4 + $0xf0] sm:$0xff]
        %v5386 = vld [vmem:[#allocation4 + $0xf8] sm:$0xff]
        %v5387 = vadd.f32 %v5355, %v5260
        %v5388 = vadd.f32 %v5356, %v5263
        %v5389 = vadd.f32 %v5357, %v5266
        %v5390 = vadd.f32 %v5358, %v5269
        %v5391 = vadd.f32 %v5359, %v5272
        %v5392 = vadd.f32 %v5360, %v5275
        %v5393 = vadd.f32 %v5361, %v5278
        %v5394 = vadd.f32 %v5362, %v5281
        %v5395 = vadd.f32 %v5363, %v5284
        %v5396 = vadd.f32 %v5364, %v5287
        %v5397 = vadd.f32 %v5365, %v5290
        %v5398 = vadd.f32 %v5366, %v5293
        %v5399 = vadd.f32 %v5367, %v5296
        %v5400 = vadd.f32 %v5368, %v5299
        %v5401 = vadd.f32 %v5369, %v5302
        %v5402 = vadd.f32 %v5370, %v5305
        %v5403 = vadd.f32 %v5371, %v5308
        %v5404 = vadd.f32 %v5372, %v5311
        %v5405 = vadd.f32 %v5373, %v5314
        %v5406 = vadd.f32 %v5374, %v5317
        %v5407 = vadd.f32 %v5375, %v5320
        %v5408 = vadd.f32 %v5376, %v5323
        %v5409 = vadd.f32 %v5377, %v5326
        %v5410 = vadd.f32 %v5378, %v5329
        %v5411 = vadd.f32 %v5379, %v5332
        %v5412 = vadd.f32 %v5380, %v5335
        %v5413 = vadd.f32 %v5381, %v5338
        %v5414 = vadd.f32 %v5382, %v5341
        %v5415 = vadd.f32 %v5383, %v5344
        %v5416 = vadd.f32 %v5384, %v5347
        %v5417 = vadd.f32 %v5385, %v5350
        %v5418 = vadd.f32 %v5386, %v5353
        %5419 = vst.msk [vmem:[#allocation4] sm:$0xff] %vm709, %v5387
        %5420 = vst.msk [vmem:[#allocation4 + $0x8] sm:$0xff] %vm709, %v5388
        %5421 = vst.msk [vmem:[#allocation4 + $0x10] sm:$0xff] %vm709, %v5389
        %5422 = vst.msk [vmem:[#allocation4 + $0x18] sm:$0xff] %vm709, %v5390
        %5423 = vst.msk [vmem:[#allocation4 + $0x20] sm:$0xff] %vm709, %v5391
        %5424 = vst.msk [vmem:[#allocation4 + $0x28] sm:$0xff] %vm709, %v5392
        %5425 = vst.msk [vmem:[#allocation4 + $0x30] sm:$0xff] %vm709, %v5393
        %5426 = vst.msk [vmem:[#allocation4 + $0x38] sm:$0xff] %vm709, %v5394
        %5427 = vst.msk [vmem:[#allocation4 + $0x40] sm:$0xff] %vm709, %v5395
        %5428 = vst.msk [vmem:[#allocation4 + $0x48] sm:$0xff] %vm709, %v5396
        %5429 = vst.msk [vmem:[#allocation4 + $0x50] sm:$0xff] %vm709, %v5397
        %5430 = vst.msk [vmem:[#allocation4 + $0x58] sm:$0xff] %vm709, %v5398
        %5431 = vst.msk [vmem:[#allocation4 + $0x60] sm:$0xff] %vm709, %v5399
        %5432 = vst.msk [vmem:[#allocation4 + $0x68] sm:$0xff] %vm709, %v5400
        %5433 = vst.msk [vmem:[#allocation4 + $0x70] sm:$0xff] %vm709, %v5401
        %5434 = vst.msk [vmem:[#allocation4 + $0x78] sm:$0xff] %vm709, %v5402
        %5435 = vst.msk [vmem:[#allocation4 + $0x80] sm:$0xff] %vm709, %v5403
        %5436 = vst.msk [vmem:[#allocation4 + $0x88] sm:$0xff] %vm709, %v5404
        %5437 = vst.msk [vmem:[#allocation4 + $0x90] sm:$0xff] %vm709, %v5405
        %5438 = vst.msk [vmem:[#allocation4 + $0x98] sm:$0xff] %vm709, %v5406
        %5439 = vst.msk [vmem:[#allocation4 + $0xa0] sm:$0xff] %vm709, %v5407
        %5440 = vst.msk [vmem:[#allocation4 + $0xa8] sm:$0xff] %vm709, %v5408
        %5441 = vst.msk [vmem:[#allocation4 + $0xb0] sm:$0xff] %vm709, %v5409
        %5442 = vst.msk [vmem:[#allocation4 + $0xb8] sm:$0xff] %vm709, %v5410
        %5443 = vst.msk [vmem:[#allocation4 + $0xc0] sm:$0xff] %vm709, %v5411
        %5444 = vst.msk [vmem:[#allocation4 + $0xc8] sm:$0xff] %vm709, %v5412
        %5445 = vst.msk [vmem:[#allocation4 + $0xd0] sm:$0xff] %vm709, %v5413
        %5446 = vst.msk [vmem:[#allocation4 + $0xd8] sm:$0xff] %vm709, %v5414
        %5447 = vst.msk [vmem:[#allocation4 + $0xe0] sm:$0xff] %vm709, %v5415
        %5448 = vst.msk [vmem:[#allocation4 + $0xe8] sm:$0xff] %vm709, %v5416
        %5449 = vst.msk [vmem:[#allocation4 + $0xf0] sm:$0xff] %vm709, %v5417
        %5450 = vst.msk [vmem:[#allocation4 + $0xf8] sm:$0xff] %vm709, %v5418
        %v5451 = vld [vmem:[#allocation4] sm:$0xff]
        %v5452 = vld [vmem:[#allocation4 + $0x8] sm:$0xff]
        %v5453 = vld [vmem:[#allocation4 + $0x10] sm:$0xff]
        %v5454 = vld [vmem:[#allocation4 + $0x18] sm:$0xff]
        %v5455 = vld [vmem:[#allocation4 + $0x20] sm:$0xff]
        %v5456 = vld [vmem:[#allocation4 + $0x28] sm:$0xff]
        %v5457 = vld [vmem:[#allocation4 + $0x30] sm:$0xff]
        %v5458 = vld [vmem:[#allocation4 + $0x38] sm:$0xff]
        %v5459 = vld [vmem:[#allocation4 + $0x40] sm:$0xff]
        %v5460 = vld [vmem:[#allocation4 + $0x48] sm:$0xff]
        %v5461 = vld [vmem:[#allocation4 + $0x50] sm:$0xff]
        %v5462 = vld [vmem:[#allocation4 + $0x58] sm:$0xff]
        %v5463 = vld [vmem:[#allocation4 + $0x60] sm:$0xff]
        %v5464 = vld [vmem:[#allocation4 + $0x68] sm:$0xff]
        %v5465 = vld [vmem:[#allocation4 + $0x70] sm:$0xff]
        %v5466 = vld [vmem:[#allocation4 + $0x78] sm:$0xff]
        %v5467 = vld [vmem:[#allocation4 + $0x80] sm:$0xff]
        %v5468 = vld [vmem:[#allocation4 + $0x88] sm:$0xff]
        %v5469 = vld [vmem:[#allocation4 + $0x90] sm:$0xff]
        %v5470 = vld [vmem:[#allocation4 + $0x98] sm:$0xff]
        %v5471 = vld [vmem:[#allocation4 + $0xa0] sm:$0xff]
        %v5472 = vld [vmem:[#allocation4 + $0xa8] sm:$0xff]
        %v5473 = vld [vmem:[#allocation4 + $0xb0] sm:$0xff]
        %v5474 = vld [vmem:[#allocation4 + $0xb8] sm:$0xff]
        %v5475 = vld [vmem:[#allocation4 + $0xc0] sm:$0xff]
        %v5476 = vld [vmem:[#allocation4 + $0xc8] sm:$0xff]
        %v5477 = vld [vmem:[#allocation4 + $0xd0] sm:$0xff]
        %v5478 = vld [vmem:[#allocation4 + $0xd8] sm:$0xff]
        %v5479 = vld [vmem:[#allocation4 + $0xe0] sm:$0xff]
        %v5480 = vld [vmem:[#allocation4 + $0xe8] sm:$0xff]
        %v5481 = vld [vmem:[#allocation4 + $0xf0] sm:$0xff]
        %v5482 = vld [vmem:[#allocation4 + $0xf8] sm:$0xff]
        %v5483 = vld [vmem:[%s6] sm:$0x1]
        %v5485 = vperm.slane %v5483, 0
        %v5487 = vadd.f32 %v5451, %v5485
        %v5488 = vadd.f32 %v5452, %v5485
        %v5489 = vadd.f32 %v5453, %v5485
        %v5490 = vadd.f32 %v5454, %v5485
        %v5491 = vadd.f32 %v5455, %v5485
        %v5492 = vadd.f32 %v5456, %v5485
        %v5493 = vadd.f32 %v5457, %v5485
        %v5494 = vadd.f32 %v5458, %v5485
        %v5495 = vadd.f32 %v5459, %v5485
        %v5496 = vadd.f32 %v5460, %v5485
        %v5497 = vadd.f32 %v5461, %v5485
        %v5498 = vadd.f32 %v5462, %v5485
        %v5499 = vadd.f32 %v5463, %v5485
        %v5500 = vadd.f32 %v5464, %v5485
        %v5501 = vadd.f32 %v5465, %v5485
        %v5502 = vadd.f32 %v5466, %v5485
        %v5503 = vadd.f32 %v5467, %v5485
        %v5504 = vadd.f32 %v5468, %v5485
        %v5505 = vadd.f32 %v5469, %v5485
        %v5506 = vadd.f32 %v5470, %v5485
        %v5507 = vadd.f32 %v5471, %v5485
        %v5508 = vadd.f32 %v5472, %v5485
        %v5509 = vadd.f32 %v5473, %v5485
        %v5510 = vadd.f32 %v5474, %v5485
        %v5511 = vadd.f32 %v5475, %v5485
        %v5512 = vadd.f32 %v5476, %v5485
        %v5513 = vadd.f32 %v5477, %v5485
        %v5514 = vadd.f32 %v5478, %v5485
        %v5515 = vadd.f32 %v5479, %v5485
        %v5516 = vadd.f32 %v5480, %v5485
        %v5517 = vadd.f32 %v5481, %v5485
        %v5518 = vadd.f32 %v5482, %v5485
        %v5519 = vmax.f32 %v5487, 0.0
        %v5520 = vmax.f32 %v5488, 0.0
        %v5521 = vmax.f32 %v5489, 0.0
        %v5522 = vmax.f32 %v5490, 0.0
        %v5523 = vmax.f32 %v5491, 0.0
        %v5524 = vmax.f32 %v5492, 0.0
        %v5525 = vmax.f32 %v5493, 0.0
        %v5526 = vmax.f32 %v5494, 0.0
        %v5527 = vmax.f32 %v5495, 0.0
        %v5528 = vmax.f32 %v5496, 0.0
        %v5529 = vmax.f32 %v5497, 0.0
        %v5530 = vmax.f32 %v5498, 0.0
        %v5531 = vmax.f32 %v5499, 0.0
        %v5532 = vmax.f32 %v5500, 0.0
        %v5533 = vmax.f32 %v5501, 0.0
        %v5534 = vmax.f32 %v5502, 0.0
        %v5535 = vmax.f32 %v5503, 0.0
        %v5536 = vmax.f32 %v5504, 0.0
        %v5537 = vmax.f32 %v5505, 0.0
        %v5538 = vmax.f32 %v5506, 0.0
        %v5539 = vmax.f32 %v5507, 0.0
        %v5540 = vmax.f32 %v5508, 0.0
        %v5541 = vmax.f32 %v5509, 0.0
        %v5542 = vmax.f32 %v5510, 0.0
        %v5543 = vmax.f32 %v5511, 0.0
        %v5544 = vmax.f32 %v5512, 0.0
        %v5545 = vmax.f32 %v5513, 0.0
        %v5546 = vmax.f32 %v5514, 0.0
        %v5547 = vmax.f32 %v5515, 0.0
        %v5548 = vmax.f32 %v5516, 0.0
        %v5549 = vmax.f32 %v5517, 0.0
        %v5550 = vmax.f32 %v5518, 0.0
        %v5551 = vld [vmem:[%s7] sm:$0xf]
        %v5552 = vld [vmem:[%s8] sm:$0x1]
        %v5554 = vperm.slane %v5552, 0
        %v5557 = vsel %vm709, %v5519, 0
        %v5560 = vsel %vm709, %v5520, 0
        %v5563 = vsel %vm709, %v5521, 0
        %v5566 = vsel %vm709, %v5522, 0
        %v5569 = vsel %vm709, %v5523, 0
        %v5572 = vsel %vm709, %v5524, 0
        %v5575 = vsel %vm709, %v5525, 0
        %v5578 = vsel %vm709, %v5526, 0
        %v5581 = vsel %vm709, %v5527, 0
        %v5584 = vsel %vm709, %v5528, 0
        %v5587 = vsel %vm709, %v5529, 0
        %v5590 = vsel %vm709, %v5530, 0
        %v5593 = vsel %vm709, %v5531, 0
        %v5596 = vsel %vm709, %v5532, 0
        %v5599 = vsel %vm709, %v5533, 0
        %v5602 = vsel %vm709, %v5534, 0
        %v5605 = vsel %vm709, %v5535, 0
        %v5608 = vsel %vm709, %v5536, 0
        %v5611 = vsel %vm709, %v5537, 0
        %v5614 = vsel %vm709, %v5538, 0
        %v5617 = vsel %vm709, %v5539, 0
        %v5620 = vsel %vm709, %v5540, 0
        %v5623 = vsel %vm709, %v5541, 0
        %v5626 = vsel %vm709, %v5542, 0
        %v5629 = vsel %vm709, %v5543, 0
        %v5632 = vsel %vm709, %v5544, 0
        %v5635 = vsel %vm709, %v5545, 0
        %v5638 = vsel %vm709, %v5546, 0
        %v5641 = vsel %vm709, %v5547, 0
        %v5644 = vsel %vm709, %v5548, 0
        %v5647 = vsel %vm709, %v5549, 0
        %v5650 = vsel %vm709, %v5550, 0
        %v5653 = vsel %vm2406, %v5551, 0
        %5655 = vmatpush.msra.mxu0 0.0
        %5656 = vmatpush.msra.mxu0 0.0
        %5657 = vmatpush.msra.mxu0 0.0
        %5658 = vmatpush.msra.mxu0 0.0
        %5659 = vmatpush.msra.mxu0 0.0
        %5660 = vmatpush.msra.mxu0 0.0
        %5661 = vmatpush.msra.mxu0 0.0
        %5662 = vmatpush.msra.mxu0 0.0
        %5663 = vmatpush.msra.mxu0 0.0
        %5664 = vmatpush.msra.mxu0 0.0
        %5665 = vmatpush.msra.mxu0 0.0
        %5666 = vmatpush.msra.mxu0 0.0
        %5667 = vmatpush.msra.mxu0 0.0
        %5668 = vmatpush.msra.mxu0 0.0
        %5669 = vmatpush.msra.mxu0 0.0
        %5670 = vmatpush.msra.mxu0 %v5653
        %5671 = vmatmul.f32.gmra.mxu0 %v5557
        %v5672 = vpop.f32.mrf.mxu0
        %v5673 = vadd.f32 %v5554, %v5672
        %5674 = vmatmul.f32.gmra.mxu0 %v5560
        %v5675 = vpop.f32.mrf.mxu0
        %v5676 = vadd.f32 %v5554, %v5675
        %5677 = vmatmul.f32.gmra.mxu0 %v5563
        %v5678 = vpop.f32.mrf.mxu0
        %v5679 = vadd.f32 %v5554, %v5678
        %5680 = vmatmul.f32.gmra.mxu0 %v5566
        %v5681 = vpop.f32.mrf.mxu0
        %v5682 = vadd.f32 %v5554, %v5681
        %5683 = vmatmul.f32.gmra.mxu0 %v5569
        %v5684 = vpop.f32.mrf.mxu0
        %v5685 = vadd.f32 %v5554, %v5684
        %5686 = vmatmul.f32.gmra.mxu0 %v5572
        %v5687 = vpop.f32.mrf.mxu0
        %v5688 = vadd.f32 %v5554, %v5687
        %5689 = vmatmul.f32.gmra.mxu0 %v5575
        %v5690 = vpop.f32.mrf.mxu0
        %v5691 = vadd.f32 %v5554, %v5690
        %5692 = vmatmul.f32.gmra.mxu0 %v5578
        %v5693 = vpop.f32.mrf.mxu0
        %v5694 = vadd.f32 %v5554, %v5693
        %5695 = vmatmul.f32.gmra.mxu0 %v5581
        %v5696 = vpop.f32.mrf.mxu0
        %v5697 = vadd.f32 %v5554, %v5696
        %5698 = vmatmul.f32.gmra.mxu0 %v5584
        %v5699 = vpop.f32.mrf.mxu0
        %v5700 = vadd.f32 %v5554, %v5699
        %5701 = vmatmul.f32.gmra.mxu0 %v5587
        %v5702 = vpop.f32.mrf.mxu0
        %v5703 = vadd.f32 %v5554, %v5702
        %5704 = vmatmul.f32.gmra.mxu0 %v5590
        %v5705 = vpop.f32.mrf.mxu0
        %v5706 = vadd.f32 %v5554, %v5705
        %5707 = vmatmul.f32.gmra.mxu0 %v5593
        %v5708 = vpop.f32.mrf.mxu0
        %v5709 = vadd.f32 %v5554, %v5708
        %5710 = vmatmul.f32.gmra.mxu0 %v5596
        %v5711 = vpop.f32.mrf.mxu0
        %v5712 = vadd.f32 %v5554, %v5711
        %5713 = vmatmul.f32.gmra.mxu0 %v5599
        %v5714 = vpop.f32.mrf.mxu0
        %v5715 = vadd.f32 %v5554, %v5714
        %5716 = vmatmul.f32.gmra.mxu0 %v5602
        %v5717 = vpop.f32.mrf.mxu0
        %v5718 = vadd.f32 %v5554, %v5717
        %5719 = vmatmul.f32.gmra.mxu0 %v5605
        %v5720 = vpop.f32.mrf.mxu0
        %v5721 = vadd.f32 %v5554, %v5720
        %5722 = vmatmul.f32.gmra.mxu0 %v5608
        %v5723 = vpop.f32.mrf.mxu0
        %v5724 = vadd.f32 %v5554, %v5723
        %5725 = vmatmul.f32.gmra.mxu0 %v5611
        %v5726 = vpop.f32.mrf.mxu0
        %v5727 = vadd.f32 %v5554, %v5726
        %5728 = vmatmul.f32.gmra.mxu0 %v5614
        %v5729 = vpop.f32.mrf.mxu0
        %v5730 = vadd.f32 %v5554, %v5729
        %5731 = vmatmul.f32.gmra.mxu0 %v5617
        %v5732 = vpop.f32.mrf.mxu0
        %v5733 = vadd.f32 %v5554, %v5732
        %5734 = vmatmul.f32.gmra.mxu0 %v5620
        %v5735 = vpop.f32.mrf.mxu0
        %v5736 = vadd.f32 %v5554, %v5735
        %5737 = vmatmul.f32.gmra.mxu0 %v5623
        %v5738 = vpop.f32.mrf.mxu0
        %v5739 = vadd.f32 %v5554, %v5738
        %5740 = vmatmul.f32.gmra.mxu0 %v5626
        %v5741 = vpop.f32.mrf.mxu0
        %v5742 = vadd.f32 %v5554, %v5741
        %5743 = vmatmul.f32.gmra.mxu0 %v5629
        %v5744 = vpop.f32.mrf.mxu0
        %v5745 = vadd.f32 %v5554, %v5744
        %5746 = vmatmul.f32.gmra.mxu0 %v5632
        %v5747 = vpop.f32.mrf.mxu0
        %v5748 = vadd.f32 %v5554, %v5747
        %5749 = vmatmul.f32.gmra.mxu0 %v5635
        %v5750 = vpop.f32.mrf.mxu0
        %v5751 = vadd.f32 %v5554, %v5750
        %5752 = vmatmul.f32.gmra.mxu0 %v5638
        %v5753 = vpop.f32.mrf.mxu0
        %v5754 = vadd.f32 %v5554, %v5753
        %5755 = vmatmul.f32.gmra.mxu0 %v5641
        %v5756 = vpop.f32.mrf.mxu0
        %v5757 = vadd.f32 %v5554, %v5756
        %5758 = vmatmul.f32.gmra.mxu0 %v5644
        %v5759 = vpop.f32.mrf.mxu0
        %v5760 = vadd.f32 %v5554, %v5759
        %5761 = vmatmul.f32.gmra.mxu0 %v5647
        %v5762 = vpop.f32.mrf.mxu0
        %v5763 = vadd.f32 %v5554, %v5762
        %5764 = vmatmul.f32.gmra.mxu0 %v5650
        %v5765 = vpop.f32.mrf.mxu0
        %v5766 = vadd.f32 %v5554, %v5765
        %5767 = vdwg.mxu0
        %v5768 = vmax.f32 %v5673, 0.0
        %v5769 = vmax.f32 %v5676, 0.0
        %v5770 = vmax.f32 %v5679, 0.0
        %v5771 = vmax.f32 %v5682, 0.0
        %v5772 = vmax.f32 %v5685, 0.0
        %v5773 = vmax.f32 %v5688, 0.0
        %v5774 = vmax.f32 %v5691, 0.0
        %v5775 = vmax.f32 %v5694, 0.0
        %v5776 = vmax.f32 %v5697, 0.0
        %v5777 = vmax.f32 %v5700, 0.0
        %v5778 = vmax.f32 %v5703, 0.0
        %v5779 = vmax.f32 %v5706, 0.0
        %v5780 = vmax.f32 %v5709, 0.0
        %v5781 = vmax.f32 %v5712, 0.0
        %v5782 = vmax.f32 %v5715, 0.0
        %v5783 = vmax.f32 %v5718, 0.0
        %v5784 = vmax.f32 %v5721, 0.0
        %v5785 = vmax.f32 %v5724, 0.0
        %v5786 = vmax.f32 %v5727, 0.0
        %v5787 = vmax.f32 %v5730, 0.0
        %v5788 = vmax.f32 %v5733, 0.0
        %v5789 = vmax.f32 %v5736, 0.0
        %v5790 = vmax.f32 %v5739, 0.0
        %v5791 = vmax.f32 %v5742, 0.0
        %v5792 = vmax.f32 %v5745, 0.0
        %v5793 = vmax.f32 %v5748, 0.0
        %v5794 = vmax.f32 %v5751, 0.0
        %v5795 = vmax.f32 %v5754, 0.0
        %v5796 = vmax.f32 %v5757, 0.0
        %v5797 = vmax.f32 %v5760, 0.0
        %v5798 = vmax.f32 %v5763, 0.0
        %v5799 = vmax.f32 %v5766, 0.0
        %5800 = vst.msk [vmem:[%s371] sm:$0xff] %vm476, %v5768
        %5801 = vst.msk [vmem:[%s371 + $0x8] sm:$0xff] %vm476, %v5769
        %5804 = vrot.lane.b32.xlu0 %v5770, 8
        %v5805 = vpop.permute.xlu0 %5804
        %5806 = vrot.lane.b32.xlu0 %v5771, 8
        %v5807 = vpop.permute.xlu0 %5806
        %vm5810 = vcmask 130112
        %5811 = vst.msk [vmem:[%s371] sm:$0xff] %vm5810, %v5805
        %5812 = vst.msk [vmem:[%s371 + $0x8] sm:$0xff] %vm5810, %v5807
        %5815 = vrot.lane.b32.xlu0 %v5772, 16
        %v5816 = vpop.permute.xlu0 %5815
        %5817 = vrot.lane.b32.xlu0 %v5773, 16
        %v5818 = vpop.permute.xlu0 %5817
        %vm5821 = vcmask 195712
        %5822 = vst.msk [vmem:[%s371] sm:$0xff] %vm5821, %v5816
        %5823 = vst.msk [vmem:[%s371 + $0x8] sm:$0xff] %vm5821, %v5818
        %5826 = vrot.lane.b32.xlu0 %v5774, 24
        %v5827 = vpop.permute.xlu0 %5826
        %5828 = vrot.lane.b32.xlu0 %v5775, 24
        %v5829 = vpop.permute.xlu0 %5828
        %vm5832 = vcmask 261312
        %5833 = vst.msk [vmem:[%s371] sm:$0xff] %vm5832, %v5827
        %5834 = vst.msk [vmem:[%s371 + $0x8] sm:$0xff] %vm5832, %v5829
        %5837 = vrot.lane.b32.xlu0 %v5776, 32
        %v5838 = vpop.permute.xlu0 %5837
        %5839 = vrot.lane.b32.xlu0 %v5777, 32
        %v5840 = vpop.permute.xlu0 %5839
        %vm5843 = vcmask 326912
        %5844 = vst.msk [vmem:[%s371] sm:$0xff] %vm5843, %v5838
        %5845 = vst.msk [vmem:[%s371 + $0x8] sm:$0xff] %vm5843, %v5840
        %5848 = vrot.lane.b32.xlu0 %v5778, 40
        %v5849 = vpop.permute.xlu0 %5848
        %5850 = vrot.lane.b32.xlu0 %v5779, 40
        %v5851 = vpop.permute.xlu0 %5850
        %vm5854 = vcmask 392512
        %5855 = vst.msk [vmem:[%s371] sm:$0xff] %vm5854, %v5849
        %5856 = vst.msk [vmem:[%s371 + $0x8] sm:$0xff] %vm5854, %v5851
        %5859 = vrot.lane.b32.xlu0 %v5780, 48
        %v5860 = vpop.permute.xlu0 %5859
        %5861 = vrot.lane.b32.xlu0 %v5781, 48
        %v5862 = vpop.permute.xlu0 %5861
        %vm5865 = vcmask 458112
        %5866 = vst.msk [vmem:[%s371] sm:$0xff] %vm5865, %v5860
        %5867 = vst.msk [vmem:[%s371 + $0x8] sm:$0xff] %vm5865, %v5862
        %5870 = vrot.lane.b32.xlu0 %v5782, 56
        %v5871 = vpop.permute.xlu0 %5870
        %5872 = vrot.lane.b32.xlu0 %v5783, 56
        %v5873 = vpop.permute.xlu0 %5872
        %vm5876 = vcmask 523712
        %5877 = vst.msk [vmem:[%s371] sm:$0xff] %vm5876, %v5871
        %5878 = vst.msk [vmem:[%s371 + $0x8] sm:$0xff] %vm5876, %v5873
        %5881 = vrot.lane.b32.xlu0 %v5784, 64
        %v5882 = vpop.permute.xlu0 %5881
        %5883 = vrot.lane.b32.xlu0 %v5785, 64
        %v5884 = vpop.permute.xlu0 %5883
        %vm5887 = vcmask 589312
        %5888 = vst.msk [vmem:[%s371] sm:$0xff] %vm5887, %v5882
        %5889 = vst.msk [vmem:[%s371 + $0x8] sm:$0xff] %vm5887, %v5884
        %5892 = vrot.lane.b32.xlu0 %v5786, 72
        %v5893 = vpop.permute.xlu0 %5892
        %5894 = vrot.lane.b32.xlu0 %v5787, 72
        %v5895 = vpop.permute.xlu0 %5894
        %vm5898 = vcmask 654912
        %5899 = vst.msk [vmem:[%s371] sm:$0xff] %vm5898, %v5893
        %5900 = vst.msk [vmem:[%s371 + $0x8] sm:$0xff] %vm5898, %v5895
        %5903 = vrot.lane.b32.xlu0 %v5788, 80
        %v5904 = vpop.permute.xlu0 %5903
        %5905 = vrot.lane.b32.xlu0 %v5789, 80
        %v5906 = vpop.permute.xlu0 %5905
        %vm5909 = vcmask 720512
        %5910 = vst.msk [vmem:[%s371] sm:$0xff] %vm5909, %v5904
        %5911 = vst.msk [vmem:[%s371 + $0x8] sm:$0xff] %vm5909, %v5906
        %5914 = vrot.lane.b32.xlu0 %v5790, 88
        %v5915 = vpop.permute.xlu0 %5914
        %5916 = vrot.lane.b32.xlu0 %v5791, 88
        %v5917 = vpop.permute.xlu0 %5916
        %vm5920 = vcmask 786112
        %5921 = vst.msk [vmem:[%s371] sm:$0xff] %vm5920, %v5915
        %5922 = vst.msk [vmem:[%s371 + $0x8] sm:$0xff] %vm5920, %v5917
        %5925 = vrot.lane.b32.xlu0 %v5792, 96
        %v5926 = vpop.permute.xlu0 %5925
        %5927 = vrot.lane.b32.xlu0 %v5793, 96
        %v5928 = vpop.permute.xlu0 %5927
        %vm5931 = vcmask 851712
        %5932 = vst.msk [vmem:[%s371] sm:$0xff] %vm5931, %v5926
        %5933 = vst.msk [vmem:[%s371 + $0x8] sm:$0xff] %vm5931, %v5928
        %5936 = vrot.lane.b32.xlu0 %v5794, 104
        %v5937 = vpop.permute.xlu0 %5936
        %5938 = vrot.lane.b32.xlu0 %v5795, 104
        %v5939 = vpop.permute.xlu0 %5938
        %vm5942 = vcmask 917312
        %5943 = vst.msk [vmem:[%s371] sm:$0xff] %vm5942, %v5937
        %5944 = vst.msk [vmem:[%s371 + $0x8] sm:$0xff] %vm5942, %v5939
        %5947 = vrot.lane.b32.xlu0 %v5796, 112
        %v5948 = vpop.permute.xlu0 %5947
        %5949 = vrot.lane.b32.xlu0 %v5797, 112
        %v5950 = vpop.permute.xlu0 %5949
        %vm5953 = vcmask 982912
        %5954 = vst.msk [vmem:[%s371] sm:$0xff] %vm5953, %v5948
        %5955 = vst.msk [vmem:[%s371 + $0x8] sm:$0xff] %vm5953, %v5950
        %5958 = vrot.lane.b32.xlu0 %v5798, 120
        %v5959 = vpop.permute.xlu0 %5958
        %5960 = vrot.lane.b32.xlu0 %v5799, 120
        %v5961 = vpop.permute.xlu0 %5960
        %vm5964 = vcmask 1048512
        %5965 = vst.msk [vmem:[%s371] sm:$0xff] %vm5964, %v5959
        %5966 = vst.msk [vmem:[%s371 + $0x8] sm:$0xff] %vm5964, %v5961
        %p5967 = scmp.lt.s32.totalorder %s24, 1
        %s5968 = scalar_select %p5967, %s24, 1
        %s5969 = smul.addr %s5968, 2
        %s5970 = smul.addr %s5969, 8
        %s5971 = scalar_lea.vmem %s9, %s5970
        // Predicated region
        $region65: #{decoder_block_pallas.1} parent=55 // pred_check
          %p5972 = pneg %p236
        $region66: #{decoder_block_pallas.1} parent=55 // pred_check_branch
          %5974 = sbr.rel (%p5972) target = $region68
        $region67: #{decoder_block_pallas.1} parent=55 // pred_region
          _
        $region68: #{decoder_block_pallas.1} parent=55 // pred_fallthru
          _
      $region56: #{decoder_block_pallas.1} parent=5 // pred_fallthru
        _
      %p5975 = scmp.le.s32.totalorder 2, %s19
      // Predicated region
      $region69: #{decoder_block_pallas.1} parent=5 // pred_check
        %p5976 = pneg %p5975
      $region70: #{decoder_block_pallas.1} parent=5 // pred_check_branch
        %5978 = sbr.rel (%p5976) target = $region72
      $region71: #{decoder_block_pallas.1} parent=5 // pred_region
        %s5979 = ssub.s32 %s19, 2
        // Predicated region
        $region73: #{decoder_block_pallas.1} parent=71 // pred_check
          %p5980 = pneg %p242
        $region74: #{decoder_block_pallas.1} parent=71 // pred_check_branch
          %5982 = sbr.rel (%p5980) target = $region76
        $region75: #{decoder_block_pallas.1} parent=71 // pred_region
          %p5983 = scmp.lt.s32.totalorder %s25, 1
          %s5984 = scalar_select %p5983, %s25, 1
          %s5985 = smul.addr %s5984, 2
          %s5986 = smul.addr %s5985, 8
          %s5987 = scalar_lea.vmem %s9, %s5986
        $region76: #{decoder_block_pallas.1} parent=71 // pred_fallthru
          _
      $region72: #{decoder_block_pallas.1} parent=5 // pred_fallthru
        _
    $region6: #{decoder_block_pallas.1} parent=1 // loop_footer
      %s23 = sadd.s32 1, %s19
    $region7: #{decoder_block_pallas.1} parent=1 // loop_footer_branch
      %18 = sbr.rel target = $region3
    $region8: #{decoder_block_pallas.1} parent=1 // loop_exit
      _
    %5988 = vsyncpa [#allocation6], 1
    %s5989 = scalar_lea.sflag [#allocation6], 1
    %5990 = vsyncpa %s5989, 1
    %5991 = vsyncpa [#allocation8], 1

</llo_original>
